<compile_context>
chip_gen: v6e
topology: v6e:2x2x1
jax: 0.10.0
libtpu: 0.0.40
codegen_flags: <defaults>
</compile_context>

<pallas_src>
import jax
import jax.numpy as jnp
from jax.experimental import pallas as pl
from jax.experimental.pallas import tpu as pltpu


_PATCH_NAMES = ('left_eye', 'right_eye', 'nose', 'mouth')
_PATCH_HW = ((22, 28), (22, 28), (66, 46), (25, 54))


def _smem_spec():
    return pl.BlockSpec(memory_space=pltpu.MemorySpace.SMEM)


def _vmem_spec():
    return pl.BlockSpec(memory_space=pltpu.MemorySpace.VMEM)


# ---------------------------- in-kernel helpers ------------------------------

def _l1_mean(a, b):
    return jnp.sum(jnp.abs(a - b)) / float(a.size)


def _flip_w_2d(x4d):
    """Return (x2d, flip_w(x2d)) with x2d = x4d collapsed to (B*C*H, W).

    The horizontal flip is an MXU matmul with the anti-diagonal permutation
    matrix, so no flipped HBM copy / lane reverse is needed.
    """
    B, C, H, W = x4d.shape
    x2 = x4d.reshape(B * C * H, W)
    ri = jax.lax.broadcasted_iota(jnp.int32, (W, W), 0)
    ci = jax.lax.broadcasted_iota(jnp.int32, (W, W), 1)
    pmat = (ri + ci == W - 1).astype(jnp.float32)
    flipped = jnp.dot(x2, pmat, preferred_element_type=jnp.float32)
    return x2, flipped


def _sym_mean(x4d):
    x2, flipped = _flip_w_2d(x4d)
    return jnp.sum(jnp.abs(x2 - flipped)) / float(x2.size)


# ------------------------------ Pallas kernels -------------------------------

def _fused_losses_kernel(ys_ref, xs_ref,
                         fake_ref, gt_ref, dw_ref,
                         f64_ref, g64_ref, f32_ref, g32_ref,
                         le_f_ref, le_g_ref, re_f_ref, re_g_ref,
                         no_f_ref, no_g_ref, mo_f_ref, mo_g_ref,
                         logits_ref, labels_ref,
                         o_ref, gray_ref):
    """Single launch for every loss except the identity-feature matmul.

    o[0]  = L1(fake128, GT128)
    o[1]  = L1(fake128, flip_w(fake128))     (symmetry 128)
    o[2]  = total variation of fake128
    o[3]  = adversarial loss -mean_b(score)  (linear D head, VPU reduce)
    o[4..7]  = patch L1 (left_eye, right_eye, nose, mouth) via iota masks
    o[8..11] = L1(64), sym(64), L1(32), sym(32)
    o[12] = sum of the 4 local-part L1s
    o[13] = cross entropy (mean, 0-based labels)
    gray  = (2B, H, W) bf16 grayscale LHS for the identity features.
    """
    fake = fake_ref[...]                                   # (B, C, H, W)
    gt = gt_ref[...]
    B, C, H, W = fake.shape

    absdiff = jnp.abs(fake - gt)
    o_ref[0] = jnp.sum(absdiff) / float(absdiff.size)

    # symmetry 128: flip along W inside the kernel (MXU permutation matmul).
    x2 = fake.reshape(B * C * H, W)
    ri = jax.lax.broadcasted_iota(jnp.int32, (W, W), 0)
    ci = jax.lax.broadcasted_iota(jnp.int32, (W, W), 1)
    pmat = (ri + ci == W - 1).astype(jnp.float32)
    flipped = jnp.dot(x2, pmat, preferred_element_type=jnp.float32)
    o_ref[1] = jnp.sum(jnp.abs(x2 - flipped)) / float(x2.size)

    # total variation: H-direction via static sublane slices; W-direction via a
    # constant first-difference matrix on the MXU (column j = x[:,j+1]-x[:,j]).
    dmat = jnp.where(ci < W - 1,
                     (ri == ci + 1).astype(jnp.float32)
                     - (ri == ci).astype(jnp.float32),
                     0.0)
    dcol = jnp.dot(x2, dmat, preferred_element_type=jnp.float32)
    dh = jnp.abs(fake[:, :, 1:, :] - fake[:, :, :-1, :])
    o_ref[2] = (jnp.sum(dh) / float(dh.size)
                + jnp.sum(jnp.abs(dcol)) / float(B * C * H * (W - 1)))

    # adversarial: -mean_b( <fake_b, d_weight> )  (pure VPU multiply+reduce).
    o_ref[3] = -jnp.sum(fake * dw_ref[...]) / float(B)

    # patch L1s: reuse absdiff, mask each (y, x, h, w) window with iotas.
    hi = jax.lax.broadcasted_iota(jnp.int32, (H, W), 0)
    wi = jax.lax.broadcasted_iota(jnp.int32, (H, W), 1)
    for p, (ph, pw) in enumerate(_PATCH_HW):               # static loop (4)
        acc = 0.0
        for b in range(B):                                 # static loop (B)
            y = ys_ref[b, p]
            x = xs_ref[b, p]
            m = ((hi >= y) & (hi < y + ph) & (wi >= x) & (wi < x + pw))
            acc = acc + jnp.sum(jnp.where(m[None, :, :], absdiff[b], 0.0))
        o_ref[4 + p] = acc / float(B * C * ph * pw)

    # 64 / 32 global L1 + symmetry.
    f64 = f64_ref[...]
    f32v = f32_ref[...]
    o_ref[8] = _l1_mean(f64, g64_ref[...])
    o_ref[9] = _sym_mean(f64)
    o_ref[10] = _l1_mean(f32v, g32_ref[...])
    o_ref[11] = _sym_mean(f32v)

    # local part L1s (sum of the four parts).
    o_ref[12] = (_l1_mean(le_f_ref[...], le_g_ref[...])
                 + _l1_mean(re_f_ref[...], re_g_ref[...])
                 + _l1_mean(no_f_ref[...], no_g_ref[...])
                 + _l1_mean(mo_f_ref[...], mo_g_ref[...]))

    # cross entropy (mean reduction, 0-based labels).
    logits = logits_ref[...]                               # (B, NCLS) f32
    labels = labels_ref[...]                               # (B, 1) i32
    mx = jnp.max(logits, axis=1, keepdims=True)
    lse = mx + jnp.log(jnp.sum(jnp.exp(logits - mx), axis=1, keepdims=True))
    col = jax.lax.broadcasted_iota(jnp.int32, logits.shape, 1)
    picked = jnp.sum(jnp.where(col == labels, logits, 0.0), axis=1,
                     keepdims=True)
    o_ref[13] = jnp.mean(lse - picked)

    # grayscale LHS for identity features (fake on top, GT below) — written
    # straight from VMEM so img128 never has to be re-read from HBM.
    gray_f = (fake[:, 0] * 0.2126 + fake[:, 0] * 0.7152 + fake[:, 0] * 0.0722)
    gray_g = (gt[:, 0] * 0.2126 + gt[:, 0] * 0.7152 + gt[:, 0] * 0.0722)
    gray_ref[0:B] = gray_f.astype(jnp.bfloat16)
    gray_ref[B:2 * B] = gray_g.astype(jnp.bfloat16)


def _feat_matmul_kernel(x_ref, w_ref, o_ref, acc_ref):
    """(2B, K) bf16 @ (K, N) f32-weight (cast to bf16 per tile) -> f32 acc.

    Epilogue writes |feat_fake - feat_GT| directly (B, tn)."""
    @pl.when(pl.program_id(1) == 0)
    def _():
        acc_ref[...] = jnp.zeros_like(acc_ref)
    acc_ref[...] += jnp.dot(x_ref[...], w_ref[...].astype(jnp.bfloat16),
                            preferred_element_type=jnp.float32)

    @pl.when(pl.program_id(1) == pl.num_programs(1) - 1)
    def _():
        half = acc_ref.shape[0] // 2
        o_ref[...] = jnp.abs(acc_ref[0:half, :] - acc_ref[half:, :])


# -------------------------------- wrappers -----------------------------------

def _identity_feat_absdiff(gray_lhs_bf16, feat_weight_f32, *, tn=128, tk=4096):
    """Returns |feat_fake - feat_GT| of shape (B, N) f32.

    K tiled (tk<=4096 keeps weight double-buffer at 4 MiB even on v7x/v5e),
    N tiled ("parallel" -> second TensorCore on 2-TC chips). The f32 weight is
    streamed once and cast to bf16 inside the kernel."""
    M, K = gray_lhs_bf16.shape          # M = 2B
    Kw, N = feat_weight_f32.shape
    assert K == Kw and M % 2 == 0
    if N % tn != 0:
        tn = N
    tk = min(tk, K)
    if K % tk != 0:
        tk = K
    grid = (N // tn, K // tk)
    return pl.pallas_call(
        _feat_matmul_kernel,
        out_shape=jax.ShapeDtypeStruct((M // 2, N), jnp.float32),
        grid_spec=pltpu.PrefetchScalarGridSpec(
            num_scalar_prefetch=0,
            grid=grid,
            in_specs=[pl.BlockSpec((M, tk), lambda n, k: (0, k)),
                      pl.BlockSpec((tk, tn), lambda n, k: (k, n))],
            out_specs=pl.BlockSpec((M // 2, tn), lambda n, k: (0, n)),
            scratch_shapes=[pltpu.VMEM((M, tn), jnp.float32)]),
        compiler_params=pltpu.CompilerParams(
            dimension_semantics=("parallel", "arbitrary")),
    )(gray_lhs_bf16, feat_weight_f32)


# ------------------------ LossGenerator forward pass -------------------------

def loss_generator_forward(d_weight, feat_weight,
                           img128_fake, img64_fake, img32_fake,
                           encoder_predict,
                           left_eye_fake, right_eye_fake, nose_fake, mouth_fake,
                           batch):
    B, C, H, W = img128_fake.shape

    # patch offsets -> (B, 4) int32, consumed from SMEM inside the kernel
    ys = jnp.stack([batch['patches'][n]['y'] for n in _PATCH_NAMES],
                   axis=1).astype(jnp.int32)
    xs = jnp.stack([batch['patches'][n]['x'] for n in _PATCH_NAMES],
                   axis=1).astype(jnp.int32)

    # TODO(synk): external discriminator D modeled as a synthetic linear head.
    dw3 = d_weight.reshape(C, H, W).astype(jnp.float32)
    labels0 = (batch['id'].astype(jnp.int32) - 1).reshape(-1, 1)

    scalars, gray = pl.pallas_call(
        _fused_losses_kernel,
        out_shape=(jax.ShapeDtypeStruct((14,), jnp.float32),
                   jax.ShapeDtypeStruct((2 * B, H, W), jnp.bfloat16)),
        in_specs=[_smem_spec(), _smem_spec()] + [_vmem_spec()] * 17,
        out_specs=(_smem_spec(), _vmem_spec()),
    )(ys, xs,
      img128_fake.astype(jnp.float32), batch['img128GT'].astype(jnp.float32),
      dw3,
      img64_fake.astype(jnp.float32), batch['img64GT'].astype(jnp.float32),
      img32_fake.astype(jnp.float32), batch['img32GT'].astype(jnp.float32),
      left_eye_fake.astype(jnp.float32),
      batch['left_eyeGT'].astype(jnp.float32),
      right_eye_fake.astype(jnp.float32),
      batch['right_eyeGT'].astype(jnp.float32),
      nose_fake.astype(jnp.float32), batch['noseGT'].astype(jnp.float32),
      mouth_fake.astype(jnp.float32), batch['mouthGT'].astype(jnp.float32),
      encoder_predict.astype(jnp.float32), labels0)

    l128, sym128, tv_loss, adv_loss = (scalars[0], scalars[1],
                                       scalars[2], scalars[3])
    local2 = scalars[4] + scalars[5] + scalars[6] + scalars[7]
    l64, sym64, l32, sym32 = scalars[8], scalars[9], scalars[10], scalars[11]
    local1, ce_raw = scalars[12], scalars[13]

    # identity preserving loss
    # TODO(synk): pretrained LightCNN_29Layers_v2 replaced by a deterministic
    # synthetic linear feature extractor (256-d); real weights not available.
    gray_lhs = gray.reshape(2 * B, H * W)                  # bf16 (2B, H*W)
    feat_absdiff = _identity_feat_absdiff(gray_lhs,
                                          feat_weight.astype(jnp.float32))
    ip_loss = jnp.mean(feat_absdiff)

    global_loss = l128 + l64 + 1.5 * l32
    pw_loss = global_loss + 3.0 * local1 + 3.0 * local2
    sym_loss = sym128 + sym64 + 1.5 * sym32

    L_syn = (pw_loss + 0.3 * sym_loss + 0.001 * adv_loss
             + 0.003 * ip_loss + 0.0001 * tv_loss)
    ce_loss = ce_raw
    total = L_syn + 0.1 * ce_loss
    return total, {'pw_loss': pw_loss, 'sym_loss': 0.3 * sym_loss,
                   'adv_loss': 0.001 * adv_loss, 'ip_loss': 0.003 * ip_loss,
                   'tv_loss': 0.0001 * tv_loss, 'L_syn': L_syn,
                   'ce_loss': 0.1 * ce_loss, 'total': total}


loss_generator_forward_jit = jax.jit(loss_generator_forward)


# ---------------------------------- driver -----------------------------------

if __name__ == "__main__":
    key = jax.random.PRNGKey(0)
    ks = jax.random.split(key, 24)
    B, C = 2, 3
    NUM_CLASSES = 512
    FEAT_DIM = 256

    img128_fake = jax.random.normal(ks[0], (B, C, 128, 128), jnp.float32)
    img64_fake = jax.random.normal(ks[1], (B, C, 64, 64), jnp.float32)
    img32_fake = jax.random.normal(ks[2], (B, C, 32, 32), jnp.float32)
    left_eye_fake = jax.random.normal(ks[3], (B, C, 22, 28), jnp.float32)
    right_eye_fake = jax.random.normal(ks[4], (B, C, 22, 28), jnp.float32)
    nose_fake = jax.random.normal(ks[5], (B, C, 66, 46), jnp.float32)
    mouth_fake = jax.random.normal(ks[6], (B, C, 25, 54), jnp.float32)
    encoder_predict = jax.random.normal(ks[7], (B, NUM_CLASSES), jnp.float32)

    batch = {
        'img128GT': jax.random.normal(ks[8], (B, C, 128, 128), jnp.float32),
        'img64GT': jax.random.normal(ks[9], (B, C, 64, 64), jnp.float32),
        'img32GT': jax.random.normal(ks[10], (B, C, 32, 32), jnp.float32),
        'left_eyeGT': jax.random.normal(ks[11], (B, C, 22, 28), jnp.float32),
        'right_eyeGT': jax.random.normal(ks[12], (B, C, 22, 28), jnp.float32),
        'noseGT': jax.random.normal(ks[13], (B, C, 66, 46), jnp.float32),
        'mouthGT': jax.random.normal(ks[14], (B, C, 25, 54), jnp.float32),
        'id': jnp.array([5, 17], dtype=jnp.int32),          # 1-based ids
        'patches': {
            'left_eye': {'y': jnp.array([40, 36], jnp.int32),
                         'x': jnp.array([30, 28], jnp.int32)},
            'right_eye': {'y': jnp.array([40, 38], jnp.int32),
                          'x': jnp.array([70, 72], jnp.int32)},
            'nose': {'y': jnp.array([50, 48], jnp.int32),
                     'x': jnp.array([40, 41], jnp.int32)},
            'mouth': {'y': jnp.array([90, 92], jnp.int32),
                      'x': jnp.array([37, 36], jnp.int32)},
        },
    }

    # Deterministic synthetic parameters (stand-ins for external D / LightCNN).
    d_weight = 0.01 * jax.random.normal(ks[15], (C * 128 * 128, 1), jnp.float32)
    feat_weight = 0.01 * jax.random.normal(ks[16], (128 * 128, FEAT_DIM),
                                           jnp.float32)

    total, parts = loss_generator_forward_jit(
        d_weight, feat_weight,
        img128_fake, img64_fake, img32_fake, encoder_predict,
        left_eye_fake, right_eye_fake, nose_fake, mouth_fake, batch)

    jax.block_until_ready(total)
    jax.block_until_ready(parts['total'])
    print("KERNEL_OK")
</pallas_src>

<mosaic_0001>
module attributes {stable_mosaic.version = 11 : i64} {
  func.func @_fused_losses_kernel(%arg0: memref<2x4xi32, #tpu.memory_space<smem>>, %arg1: memref<2x4xi32, #tpu.memory_space<smem>>, %arg2: memref<2x3x128x128xf32, #tpu.memory_space<vmem>>, %arg3: memref<2x3x128x128xf32, #tpu.memory_space<vmem>>, %arg4: memref<3x128x128xf32, #tpu.memory_space<vmem>>, %arg5: memref<2x3x64x64xf32, #tpu.memory_space<vmem>>, %arg6: memref<2x3x64x64xf32, #tpu.memory_space<vmem>>, %arg7: memref<2x3x32x32xf32, #tpu.memory_space<vmem>>, %arg8: memref<2x3x32x32xf32, #tpu.memory_space<vmem>>, %arg9: memref<2x3x22x28xf32, #tpu.memory_space<vmem>>, %arg10: memref<2x3x22x28xf32, #tpu.memory_space<vmem>>, %arg11: memref<2x3x22x28xf32, #tpu.memory_space<vmem>>, %arg12: memref<2x3x22x28xf32, #tpu.memory_space<vmem>>, %arg13: memref<2x3x66x46xf32, #tpu.memory_space<vmem>>, %arg14: memref<2x3x66x46xf32, #tpu.memory_space<vmem>>, %arg15: memref<2x3x25x54xf32, #tpu.memory_space<vmem>>, %arg16: memref<2x3x25x54xf32, #tpu.memory_space<vmem>>, %arg17: memref<2x512xf32, #tpu.memory_space<vmem>>, %arg18: memref<2x1xi32, #tpu.memory_space<vmem>>, %arg19: memref<14xf32, #tpu.memory_space<smem>>, %arg20: memref<4x128x128xbf16, #tpu.memory_space<vmem>>) attributes {dimension_semantics = [], scalar_prefetch = 0 : i64, scratch_operands = 0 : i64, tpu.core_type = #tpu.core_type<tc>} {
    %c0 = arith.constant 0 : index
    %c0_0 = arith.constant 0 : index
    %c0_1 = arith.constant 0 : index
    %c0_2 = arith.constant 0 : index
    %0 = vector.load %arg2[%c0, %c0_0, %c0_1, %c0_2] : memref<2x3x128x128xf32, #tpu.memory_space<vmem>>, vector<2x3x128x128xf32>
    %c0_3 = arith.constant 0 : index
    %c0_4 = arith.constant 0 : index
    %c0_5 = arith.constant 0 : index
    %c0_6 = arith.constant 0 : index
    %1 = vector.load %arg3[%c0_3, %c0_4, %c0_5, %c0_6] : memref<2x3x128x128xf32, #tpu.memory_space<vmem>>, vector<2x3x128x128xf32>
    %2 = arith.subf %0, %1 : vector<2x3x128x128xf32>
    %3 = math.absf %2 : vector<2x3x128x128xf32>
    %4 = vector.shape_cast %3 : vector<2x3x128x128xf32> to vector<1x2x3x128x128xf32>
    %cst = arith.constant dense<0.000000e+00> : vector<1xf32>
    %5 = vector.multi_reduction <add>, %4, %cst [1, 2, 3, 4] : vector<1x2x3x128x128xf32> to vector<1xf32>
    %6 = vector.shape_cast %5 : vector<1xf32> to vector<1x1x1x1x1xf32>
    %7 = vector.extract %6[0, 0, 0, 0, 0] : f32 from vector<1x1x1x1x1xf32>
    %cst_7 = arith.constant 9.830400e+04 : f32
    %8 = arith.divf %7, %cst_7 : f32
    %c0_8 = arith.constant 0 : index
    %9 = memref.load %arg19[%c0_8] : memref<14xf32, #tpu.memory_space<smem>>
    memref.store %8, %arg19[%c0_8] : memref<14xf32, #tpu.memory_space<smem>>
    %10 = vector.shape_cast %0 : vector<2x3x128x128xf32> to vector<768x128xf32>
    %11 = tpu.iota {dimensions = array<i32: 0>} : vector<128x128xi32>
    %12 = tpu.iota {dimensions = array<i32: 1>} : vector<128x128xi32>
    %13 = arith.addi %11, %12 : vector<128x128xi32>
    %c127_i32 = arith.constant 127 : i32
    %14 = vector.broadcast %c127_i32 : i32 to vector<128x128xi32>
    %15 = arith.cmpi eq, %13, %14 : vector<128x128xi32>
    %16 = arith.extui %15 : vector<128x128xi1> to vector<128x128xi32>
    %17 = arith.sitofp %16 : vector<128x128xi32> to vector<128x128xf32>
    %cst_9 = arith.constant dense<0.000000e+00> : vector<768x128xf32>
    %18 = tpu.matmul %10, %17, %cst_9 {dimension_numbers = #tpu.dot_dimension_numbers<[1], [0], [0], [1], [0, 0, 1, 1], [], []>} : vector<768x128xf32>, vector<128x128xf32>, vector<768x128xf32> -> vector<768x128xf32>
    %19 = arith.subf %10, %18 : vector<768x128xf32>
    %20 = math.absf %19 : vector<768x128xf32>
    %21 = vector.shape_cast %20 : vector<768x128xf32> to vector<1x768x128xf32>
    %cst_10 = arith.constant dense<0.000000e+00> : vector<1xf32>
    %22 = vector.multi_reduction <add>, %21, %cst_10 [1, 2] : vector<1x768x128xf32> to vector<1xf32>
    %23 = vector.shape_cast %22 : vector<1xf32> to vector<1x1x1xf32>
    %24 = vector.extract %23[0, 0, 0] : f32 from vector<1x1x1xf32>
    %cst_11 = arith.constant 9.830400e+04 : f32
    %25 = arith.divf %24, %cst_11 : f32
    %c1 = arith.constant 1 : index
    %26 = memref.load %arg19[%c1] : memref<14xf32, #tpu.memory_space<smem>>
    memref.store %25, %arg19[%c1] : memref<14xf32, #tpu.memory_space<smem>>
    %c127_i32_12 = arith.constant 127 : i32
    %27 = vector.broadcast %c127_i32_12 : i32 to vector<128x128xi32>
    %28 = arith.cmpi slt, %12, %27 : vector<128x128xi32>
    %c1_i32 = arith.constant 1 : i32
    %29 = vector.broadcast %c1_i32 : i32 to vector<128x128xi32>
    %30 = arith.addi %12, %29 : vector<128x128xi32>
    %31 = arith.cmpi eq, %11, %30 : vector<128x128xi32>
    %32 = arith.extui %31 : vector<128x128xi1> to vector<128x128xi32>
    %33 = arith.sitofp %32 : vector<128x128xi32> to vector<128x128xf32>
    %34 = arith.cmpi eq, %11, %12 : vector<128x128xi32>
    %35 = arith.extui %34 : vector<128x128xi1> to vector<128x128xi32>
    %36 = arith.sitofp %35 : vector<128x128xi32> to vector<128x128xf32>
    %37 = arith.subf %33, %36 : vector<128x128xf32>
    %cst_13 = arith.constant 0.000000e+00 : f32
    %38 = vector.broadcast %cst_13 : f32 to vector<128x128xf32>
    %39 = arith.select %28, %37, %38 : vector<128x128xi1>, vector<128x128xf32>
    %cst_14 = arith.constant dense<0.000000e+00> : vector<768x128xf32>
    %40 = tpu.matmul %10, %39, %cst_14 {dimension_numbers = #tpu.dot_dimension_numbers<[1], [0], [0], [1], [0, 0, 1, 1], [], []>} : vector<768x128xf32>, vector<128x128xf32>, vector<768x128xf32> -> vector<768x128xf32>
    %41 = vector.extract_strided_slice %0 {offsets = [0, 0, 1, 0], sizes = [2, 3, 127, 128], strides = [1, 1, 1, 1]} : vector<2x3x128x128xf32> to vector<2x3x127x128xf32>
    %42 = vector.extract_strided_slice %0 {offsets = [0, 0, 0, 0], sizes = [2, 3, 127, 128], strides = [1, 1, 1, 1]} : vector<2x3x128x128xf32> to vector<2x3x127x128xf32>
    %43 = arith.subf %41, %42 : vector<2x3x127x128xf32>
    %44 = math.absf %43 : vector<2x3x127x128xf32>
    %45 = vector.shape_cast %44 : vector<2x3x127x128xf32> to vector<1x2x3x127x128xf32>
    %cst_15 = arith.constant dense<0.000000e+00> : vector<1xf32>
    %46 = vector.multi_reduction <add>, %45, %cst_15 [1, 2, 3, 4] : vector<1x2x3x127x128xf32> to vector<1xf32>
    %47 = vector.shape_cast %46 : vector<1xf32> to vector<1x1x1x1x1xf32>
    %48 = vector.extract %47[0, 0, 0, 0, 0] : f32 from vector<1x1x1x1x1xf32>
    %cst_16 = arith.constant 9.753600e+04 : f32
    %49 = arith.divf %48, %cst_16 : f32
    %50 = math.absf %40 : vector<768x128xf32>
    %51 = vector.shape_cast %50 : vector<768x128xf32> to vector<1x768x128xf32>
    %cst_17 = arith.constant dense<0.000000e+00> : vector<1xf32>
    %52 = vector.multi_reduction <add>, %51, %cst_17 [1, 2] : vector<1x768x128xf32> to vector<1xf32>
    %53 = vector.shape_cast %52 : vector<1xf32> to vector<1x1x1xf32>
    %54 = vector.extract %53[0, 0, 0] : f32 from vector<1x1x1xf32>
    %cst_18 = arith.constant 9.753600e+04 : f32
    %55 = arith.divf %54, %cst_18 : f32
    %56 = arith.addf %49, %55 : f32
    %c2 = arith.constant 2 : index
    %57 = memref.load %arg19[%c2] : memref<14xf32, #tpu.memory_space<smem>>
    memref.store %56, %arg19[%c2] : memref<14xf32, #tpu.memory_space<smem>>
    %c0_19 = arith.constant 0 : index
    %c0_20 = arith.constant 0 : index
    %c0_21 = arith.constant 0 : index
    %58 = vector.load %arg4[%c0_19, %c0_20, %c0_21] : memref<3x128x128xf32, #tpu.memory_space<vmem>>, vector<3x128x128xf32>
    %59 = vector.shape_cast %58 : vector<3x128x128xf32> to vector<1x3x128x128xf32>
    %60 = vector.broadcast %59 : vector<1x3x128x128xf32> to vector<2x3x128x128xf32>
    %61 = arith.mulf %0, %60 : vector<2x3x128x128xf32>
    %62 = vector.shape_cast %61 : vector<2x3x128x128xf32> to vector<1x2x3x128x128xf32>
    %cst_22 = arith.constant dense<0.000000e+00> : vector<1xf32>
    %63 = vector.multi_reduction <add>, %62, %cst_22 [1, 2, 3, 4] : vector<1x2x3x128x128xf32> to vector<1xf32>
    %64 = vector.shape_cast %63 : vector<1xf32> to vector<1x1x1x1x1xf32>
    %65 = vector.extract %64[0, 0, 0, 0, 0] : f32 from vector<1x1x1x1x1xf32>
    %cst_23 = arith.constant 0.000000e+00 : f32
    %66 = arith.subf %cst_23, %65 : f32
    %cst_24 = arith.constant 2.000000e+00 : f32
    %67 = arith.divf %66, %cst_24 : f32
    %c3 = arith.constant 3 : index
    %68 = memref.load %arg19[%c3] : memref<14xf32, #tpu.memory_space<smem>>
    memref.store %67, %arg19[%c3] : memref<14xf32, #tpu.memory_space<smem>>
    %69 = tpu.iota {dimensions = array<i32: 0>} : vector<128x128xi32>
    %70 = tpu.iota {dimensions = array<i32: 1>} : vector<128x128xi32>
    %c0_25 = arith.constant 0 : index
    %c0_26 = arith.constant 0 : index
    %71 = memref.load %arg0[%c0_25, %c0_26] : memref<2x4xi32, #tpu.memory_space<smem>>
    %c0_27 = arith.constant 0 : index
    %c0_28 = arith.constant 0 : index
    %72 = memref.load %arg1[%c0_27, %c0_28] : memref<2x4xi32, #tpu.memory_space<smem>>
    %73 = vector.broadcast %71 : i32 to vector<128x128xi32>
    %74 = arith.cmpi sge, %69, %73 : vector<128x128xi32>
    %c22_i32 = arith.constant 22 : i32
    %75 = arith.addi %71, %c22_i32 : i32
    %76 = vector.broadcast %75 : i32 to vector<128x128xi32>
    %77 = arith.cmpi slt, %69, %76 : vector<128x128xi32>
    %78 = arith.andi %74, %77 : vector<128x128xi1>
    %79 = vector.broadcast %72 : i32 to vector<128x128xi32>
    %80 = arith.cmpi sge, %70, %79 : vector<128x128xi32>
    %81 = arith.andi %78, %80 : vector<128x128xi1>
    %c28_i32 = arith.constant 28 : i32
    %82 = arith.addi %72, %c28_i32 : i32
    %83 = vector.broadcast %82 : i32 to vector<128x128xi32>
    %84 = arith.cmpi slt, %70, %83 : vector<128x128xi32>
    %85 = arith.andi %81, %84 : vector<128x128xi1>
    %86 = vector.shape_cast %85 : vector<128x128xi1> to vector<1x128x128xi1>
    %87 = vector.extract_strided_slice %3 {offsets = [0, 0, 0, 0], sizes = [1, 3, 128, 128], strides = [1, 1, 1, 1]} : vector<2x3x128x128xf32> to vector<1x3x128x128xf32>
    %88 = vector.shape_cast %87 : vector<1x3x128x128xf32> to vector<3x128x128xf32>
    %cst_29 = arith.constant 0.000000e+00 : f32
    %89 = vector.shape_cast %86 : vector<1x128x128xi1> to vector<1x128x128xi1>
    %90 = vector.broadcast %89 : vector<1x128x128xi1> to vector<3x128x128xi1>
    %91 = vector.broadcast %cst_29 : f32 to vector<3x128x128xf32>
    %92 = arith.select %90, %88, %91 : vector<3x128x128xi1>, vector<3x128x128xf32>
    %93 = vector.shape_cast %92 : vector<3x128x128xf32> to vector<1x3x128x128xf32>
    %cst_30 = arith.constant dense<0.000000e+00> : vector<1xf32>
    %94 = vector.multi_reduction <add>, %93, %cst_30 [1, 2, 3] : vector<1x3x128x128xf32> to vector<1xf32>
    %95 = vector.shape_cast %94 : vector<1xf32> to vector<1x1x1x1xf32>
    %96 = vector.extract %95[0, 0, 0, 0] : f32 from vector<1x1x1x1xf32>
    %cst_31 = arith.constant 0.000000e+00 : f32
    %97 = arith.addf %cst_31, %96 : f32
    %c1_32 = arith.constant 1 : index
    %c0_33 = arith.constant 0 : index
    %98 = memref.load %arg0[%c1_32, %c0_33] : memref<2x4xi32, #tpu.memory_space<smem>>
    %c1_34 = arith.constant 1 : index
    %c0_35 = arith.constant 0 : index
    %99 = memref.load %arg1[%c1_34, %c0_35] : memref<2x4xi32, #tpu.memory_space<smem>>
    %100 = vector.broadcast %98 : i32 to vector<128x128xi32>
    %101 = arith.cmpi sge, %69, %100 : vector<128x128xi32>
    %c22_i32_36 = arith.constant 22 : i32
    %102 = arith.addi %98, %c22_i32_36 : i32
    %103 = vector.broadcast %102 : i32 to vector<128x128xi32>
    %104 = arith.cmpi slt, %69, %103 : vector<128x128xi32>
    %105 = arith.andi %101, %104 : vector<128x128xi1>
    %106 = vector.broadcast %99 : i32 to vector<128x128xi32>
    %107 = arith.cmpi sge, %70, %106 : vector<128x128xi32>
    %108 = arith.andi %105, %107 : vector<128x128xi1>
    %c28_i32_37 = arith.constant 28 : i32
    %109 = arith.addi %99, %c28_i32_37 : i32
    %110 = vector.broadcast %109 : i32 to vector<128x128xi32>
    %111 = arith.cmpi slt, %70, %110 : vector<128x128xi32>
    %112 = arith.andi %108, %111 : vector<128x128xi1>
    %113 = vector.shape_cast %112 : vector<128x128xi1> to vector<1x128x128xi1>
    %114 = vector.extract_strided_slice %3 {offsets = [1, 0, 0, 0], sizes = [1, 3, 128, 128], strides = [1, 1, 1, 1]} : vector<2x3x128x128xf32> to vector<1x3x128x128xf32>
    %115 = vector.shape_cast %114 : vector<1x3x128x128xf32> to vector<3x128x128xf32>
    %cst_38 = arith.constant 0.000000e+00 : f32
    %116 = vector.shape_cast %113 : vector<1x128x128xi1> to vector<1x128x128xi1>
    %117 = vector.broadcast %116 : vector<1x128x128xi1> to vector<3x128x128xi1>
    %118 = vector.broadcast %cst_38 : f32 to vector<3x128x128xf32>
    %119 = arith.select %117, %115, %118 : vector<3x128x128xi1>, vector<3x128x128xf32>
    %120 = vector.shape_cast %119 : vector<3x128x128xf32> to vector<1x3x128x128xf32>
    %cst_39 = arith.constant dense<0.000000e+00> : vector<1xf32>
    %121 = vector.multi_reduction <add>, %120, %cst_39 [1, 2, 3] : vector<1x3x128x128xf32> to vector<1xf32>
    %122 = vector.shape_cast %121 : vector<1xf32> to vector<1x1x1x1xf32>
    %123 = vector.extract %122[0, 0, 0, 0] : f32 from vector<1x1x1x1xf32>
    %124 = arith.addf %97, %123 : f32
    %cst_40 = arith.constant 3.696000e+03 : f32
    %125 = arith.divf %124, %cst_40 : f32
    %c4 = arith.constant 4 : index
    %126 = memref.load %arg19[%c4] : memref<14xf32, #tpu.memory_space<smem>>
    memref.store %125, %arg19[%c4] : memref<14xf32, #tpu.memory_space<smem>>
    %c0_41 = arith.constant 0 : index
    %c1_42 = arith.constant 1 : index
    %127 = memref.load %arg0[%c0_41, %c1_42] : memref<2x4xi32, #tpu.memory_space<smem>>
    %c0_43 = arith.constant 0 : index
    %c1_44 = arith.constant 1 : index
    %128 = memref.load %arg1[%c0_43, %c1_44] : memref<2x4xi32, #tpu.memory_space<smem>>
    %129 = vector.broadcast %127 : i32 to vector<128x128xi32>
    %130 = arith.cmpi sge, %69, %129 : vector<128x128xi32>
    %c22_i32_45 = arith.constant 22 : i32
    %131 = arith.addi %127, %c22_i32_45 : i32
    %132 = vector.broadcast %131 : i32 to vector<128x128xi32>
    %133 = arith.cmpi slt, %69, %132 : vector<128x128xi32>
    %134 = arith.andi %130, %133 : vector<128x128xi1>
    %135 = vector.broadcast %128 : i32 to vector<128x128xi32>
    %136 = arith.cmpi sge, %70, %135 : vector<128x128xi32>
    %137 = arith.andi %134, %136 : vector<128x128xi1>
    %c28_i32_46 = arith.constant 28 : i32
    %138 = arith.addi %128, %c28_i32_46 : i32
    %139 = vector.broadcast %138 : i32 to vector<128x128xi32>
    %140 = arith.cmpi slt, %70, %139 : vector<128x128xi32>
    %141 = arith.andi %137, %140 : vector<128x128xi1>
    %142 = vector.shape_cast %141 : vector<128x128xi1> to vector<1x128x128xi1>
    %143 = vector.extract_strided_slice %3 {offsets = [0, 0, 0, 0], sizes = [1, 3, 128, 128], strides = [1, 1, 1, 1]} : vector<2x3x128x128xf32> to vector<1x3x128x128xf32>
    %144 = vector.shape_cast %143 : vector<1x3x128x128xf32> to vector<3x128x128xf32>
    %cst_47 = arith.constant 0.000000e+00 : f32
    %145 = vector.shape_cast %142 : vector<1x128x128xi1> to vector<1x128x128xi1>
    %146 = vector.broadcast %145 : vector<1x128x128xi1> to vector<3x128x128xi1>
    %147 = vector.broadcast %cst_47 : f32 to vector<3x128x128xf32>
    %148 = arith.select %146, %144, %147 : vector<3x128x128xi1>, vector<3x128x128xf32>
    %149 = vector.shape_cast %148 : vector<3x128x128xf32> to vector<1x3x128x128xf32>
    %cst_48 = arith.constant dense<0.000000e+00> : vector<1xf32>
    %150 = vector.multi_reduction <add>, %149, %cst_48 [1, 2, 3] : vector<1x3x128x128xf32> to vector<1xf32>
    %151 = vector.shape_cast %150 : vector<1xf32> to vector<1x1x1x1xf32>
    %152 = vector.extract %151[0, 0, 0, 0] : f32 from vector<1x1x1x1xf32>
    %cst_49 = arith.constant 0.000000e+00 : f32
    %153 = arith.addf %cst_49, %152 : f32
    %c1_50 = arith.constant 1 : index
    %c1_51 = arith.constant 1 : index
    %154 = memref.load %arg0[%c1_50, %c1_51] : memref<2x4xi32, #tpu.memory_space<smem>>
    %c1_52 = arith.constant 1 : index
    %c1_53 = arith.constant 1 : index
    %155 = memref.load %arg1[%c1_52, %c1_53] : memref<2x4xi32, #tpu.memory_space<smem>>
    %156 = vector.broadcast %154 : i32 to vector<128x128xi32>
    %157 = arith.cmpi sge, %69, %156 : vector<128x128xi32>
    %c22_i32_54 = arith.constant 22 : i32
    %158 = arith.addi %154, %c22_i32_54 : i32
    %159 = vector.broadcast %158 : i32 to vector<128x128xi32>
    %160 = arith.cmpi slt, %69, %159 : vector<128x128xi32>
    %161 = arith.andi %157, %160 : vector<128x128xi1>
    %162 = vector.broadcast %155 : i32 to vector<128x128xi32>
    %163 = arith.cmpi sge, %70, %162 : vector<128x128xi32>
    %164 = arith.andi %161, %163 : vector<128x128xi1>
    %c28_i32_55 = arith.constant 28 : i32
    %165 = arith.addi %155, %c28_i32_55 : i32
    %166 = vector.broadcast %165 : i32 to vector<128x128xi32>
    %167 = arith.cmpi slt, %70, %166 : vector<128x128xi32>
    %168 = arith.andi %164, %167 : vector<128x128xi1>
    %169 = vector.shape_cast %168 : vector<128x128xi1> to vector<1x128x128xi1>
    %170 = vector.extract_strided_slice %3 {offsets = [1, 0, 0, 0], sizes = [1, 3, 128, 128], strides = [1, 1, 1, 1]} : vector<2x3x128x128xf32> to vector<1x3x128x128xf32>
    %171 = vector.shape_cast %170 : vector<1x3x128x128xf32> to vector<3x128x128xf32>
    %cst_56 = arith.constant 0.000000e+00 : f32
    %172 = vector.shape_cast %169 : vector<1x128x128xi1> to vector<1x128x128xi1>
    %173 = vector.broadcast %172 : vector<1x128x128xi1> to vector<3x128x128xi1>
    %174 = vector.broadcast %cst_56 : f32 to vector<3x128x128xf32>
    %175 = arith.select %173, %171, %174 : vector<3x128x128xi1>, vector<3x128x128xf32>
    %176 = vector.shape_cast %175 : vector<3x128x128xf32> to vector<1x3x128x128xf32>
    %cst_57 = arith.constant dense<0.000000e+00> : vector<1xf32>
    %177 = vector.multi_reduction <add>, %176, %cst_57 [1, 2, 3] : vector<1x3x128x128xf32> to vector<1xf32>
    %178 = vector.shape_cast %177 : vector<1xf32> to vector<1x1x1x1xf32>
    %179 = vector.extract %178[0, 0, 0, 0] : f32 from vector<1x1x1x1xf32>
    %180 = arith.addf %153, %179 : f32
    %cst_58 = arith.constant 3.696000e+03 : f32
    %181 = arith.divf %180, %cst_58 : f32
    %c5 = arith.constant 5 : index
    %182 = memref.load %arg19[%c5] : memref<14xf32, #tpu.memory_space<smem>>
    memref.store %181, %arg19[%c5] : memref<14xf32, #tpu.memory_space<smem>>
    %c0_59 = arith.constant 0 : index
    %c2_60 = arith.constant 2 : index
    %183 = memref.load %arg0[%c0_59, %c2_60] : memref<2x4xi32, #tpu.memory_space<smem>>
    %c0_61 = arith.constant 0 : index
    %c2_62 = arith.constant 2 : index
    %184 = memref.load %arg1[%c0_61, %c2_62] : memref<2x4xi32, #tpu.memory_space<smem>>
    %185 = vector.broadcast %183 : i32 to vector<128x128xi32>
    %186 = arith.cmpi sge, %69, %185 : vector<128x128xi32>
    %c66_i32 = arith.constant 66 : i32
    %187 = arith.addi %183, %c66_i32 : i32
    %188 = vector.broadcast %187 : i32 to vector<128x128xi32>
    %189 = arith.cmpi slt, %69, %188 : vector<128x128xi32>
    %190 = arith.andi %186, %189 : vector<128x128xi1>
    %191 = vector.broadcast %184 : i32 to vector<128x128xi32>
    %192 = arith.cmpi sge, %70, %191 : vector<128x128xi32>
    %193 = arith.andi %190, %192 : vector<128x128xi1>
    %c46_i32 = arith.constant 46 : i32
    %194 = arith.addi %184, %c46_i32 : i32
    %195 = vector.broadcast %194 : i32 to vector<128x128xi32>
    %196 = arith.cmpi slt, %70, %195 : vector<128x128xi32>
    %197 = arith.andi %193, %196 : vector<128x128xi1>
    %198 = vector.shape_cast %197 : vector<128x128xi1> to vector<1x128x128xi1>
    %199 = vector.extract_strided_slice %3 {offsets = [0, 0, 0, 0], sizes = [1, 3, 128, 128], strides = [1, 1, 1, 1]} : vector<2x3x128x128xf32> to vector<1x3x128x128xf32>
    %200 = vector.shape_cast %199 : vector<1x3x128x128xf32> to vector<3x128x128xf32>
    %cst_63 = arith.constant 0.000000e+00 : f32
    %201 = vector.shape_cast %198 : vector<1x128x128xi1> to vector<1x128x128xi1>
    %202 = vector.broadcast %201 : vector<1x128x128xi1> to vector<3x128x128xi1>
    %203 = vector.broadcast %cst_63 : f32 to vector<3x128x128xf32>
    %204 = arith.select %202, %200, %203 : vector<3x128x128xi1>, vector<3x128x128xf32>
    %205 = vector.shape_cast %204 : vector<3x128x128xf32> to vector<1x3x128x128xf32>
    %cst_64 = arith.constant dense<0.000000e+00> : vector<1xf32>
    %206 = vector.multi_reduction <add>, %205, %cst_64 [1, 2, 3] : vector<1x3x128x128xf32> to vector<1xf32>
    %207 = vector.shape_cast %206 : vector<1xf32> to vector<1x1x1x1xf32>
    %208 = vector.extract %207[0, 0, 0, 0] : f32 from vector<1x1x1x1xf32>
    %cst_65 = arith.constant 0.000000e+00 : f32
    %209 = arith.addf %cst_65, %208 : f32
    %c1_66 = arith.constant 1 : index
    %c2_67 = arith.constant 2 : index
    %210 = memref.load %arg0[%c1_66, %c2_67] : memref<2x4xi32, #tpu.memory_space<smem>>
    %c1_68 = arith.constant 1 : index
    %c2_69 = arith.constant 2 : index
    %211 = memref.load %arg1[%c1_68, %c2_69] : memref<2x4xi32, #tpu.memory_space<smem>>
    %212 = vector.broadcast %210 : i32 to vector<128x128xi32>
    %213 = arith.cmpi sge, %69, %212 : vector<128x128xi32>
    %c66_i32_70 = arith.constant 66 : i32
    %214 = arith.addi %210, %c66_i32_70 : i32
    %215 = vector.broadcast %214 : i32 to vector<128x128xi32>
    %216 = arith.cmpi slt, %69, %215 : vector<128x128xi32>
    %217 = arith.andi %213, %216 : vector<128x128xi1>
    %218 = vector.broadcast %211 : i32 to vector<128x128xi32>
    %219 = arith.cmpi sge, %70, %218 : vector<128x128xi32>
    %220 = arith.andi %217, %219 : vector<128x128xi1>
    %c46_i32_71 = arith.constant 46 : i32
    %221 = arith.addi %211, %c46_i32_71 : i32
    %222 = vector.broadcast %221 : i32 to vector<128x128xi32>
    %223 = arith.cmpi slt, %70, %222 : vector<128x128xi32>
    %224 = arith.andi %220, %223 : vector<128x128xi1>
    %225 = vector.shape_cast %224 : vector<128x128xi1> to vector<1x128x128xi1>
    %226 = vector.extract_strided_slice %3 {offsets = [1, 0, 0, 0], sizes = [1, 3, 128, 128], strides = [1, 1, 1, 1]} : vector<2x3x128x128xf32> to vector<1x3x128x128xf32>
    %227 = vector.shape_cast %226 : vector<1x3x128x128xf32> to vector<3x128x128xf32>
    %cst_72 = arith.constant 0.000000e+00 : f32
    %228 = vector.shape_cast %225 : vector<1x128x128xi1> to vector<1x128x128xi1>
    %229 = vector.broadcast %228 : vector<1x128x128xi1> to vector<3x128x128xi1>
    %230 = vector.broadcast %cst_72 : f32 to vector<3x128x128xf32>
    %231 = arith.select %229, %227, %230 : vector<3x128x128xi1>, vector<3x128x128xf32>
    %232 = vector.shape_cast %231 : vector<3x128x128xf32> to vector<1x3x128x128xf32>
    %cst_73 = arith.constant dense<0.000000e+00> : vector<1xf32>
    %233 = vector.multi_reduction <add>, %232, %cst_73 [1, 2, 3] : vector<1x3x128x128xf32> to vector<1xf32>
    %234 = vector.shape_cast %233 : vector<1xf32> to vector<1x1x1x1xf32>
    %235 = vector.extract %234[0, 0, 0, 0] : f32 from vector<1x1x1x1xf32>
    %236 = arith.addf %209, %235 : f32
    %cst_74 = arith.constant 1.821600e+04 : f32
    %237 = arith.divf %236, %cst_74 : f32
    %c6 = arith.constant 6 : index
    %238 = memref.load %arg19[%c6] : memref<14xf32, #tpu.memory_space<smem>>
    memref.store %237, %arg19[%c6] : memref<14xf32, #tpu.memory_space<smem>>
    %c0_75 = arith.constant 0 : index
    %c3_76 = arith.constant 3 : index
    %239 = memref.load %arg0[%c0_75, %c3_76] : memref<2x4xi32, #tpu.memory_space<smem>>
    %c0_77 = arith.constant 0 : index
    %c3_78 = arith.constant 3 : index
    %240 = memref.load %arg1[%c0_77, %c3_78] : memref<2x4xi32, #tpu.memory_space<smem>>
    %241 = vector.broadcast %239 : i32 to vector<128x128xi32>
    %242 = arith.cmpi sge, %69, %241 : vector<128x128xi32>
    %c25_i32 = arith.constant 25 : i32
    %243 = arith.addi %239, %c25_i32 : i32
    %244 = vector.broadcast %243 : i32 to vector<128x128xi32>
    %245 = arith.cmpi slt, %69, %244 : vector<128x128xi32>
    %246 = arith.andi %242, %245 : vector<128x128xi1>
    %247 = vector.broadcast %240 : i32 to vector<128x128xi32>
    %248 = arith.cmpi sge, %70, %247 : vector<128x128xi32>
    %249 = arith.andi %246, %248 : vector<128x128xi1>
    %c54_i32 = arith.constant 54 : i32
    %250 = arith.addi %240, %c54_i32 : i32
    %251 = vector.broadcast %250 : i32 to vector<128x128xi32>
    %252 = arith.cmpi slt, %70, %251 : vector<128x128xi32>
    %253 = arith.andi %249, %252 : vector<128x128xi1>
    %254 = vector.shape_cast %253 : vector<128x128xi1> to vector<1x128x128xi1>
    %255 = vector.extract_strided_slice %3 {offsets = [0, 0, 0, 0], sizes = [1, 3, 128, 128], strides = [1, 1, 1, 1]} : vector<2x3x128x128xf32> to vector<1x3x128x128xf32>
    %256 = vector.shape_cast %255 : vector<1x3x128x128xf32> to vector<3x128x128xf32>
    %cst_79 = arith.constant 0.000000e+00 : f32
    %257 = vector.shape_cast %254 : vector<1x128x128xi1> to vector<1x128x128xi1>
    %258 = vector.broadcast %257 : vector<1x128x128xi1> to vector<3x128x128xi1>
    %259 = vector.broadcast %cst_79 : f32 to vector<3x128x128xf32>
    %260 = arith.select %258, %256, %259 : vector<3x128x128xi1>, vector<3x128x128xf32>
    %261 = vector.shape_cast %260 : vector<3x128x128xf32> to vector<1x3x128x128xf32>
    %cst_80 = arith.constant dense<0.000000e+00> : vector<1xf32>
    %262 = vector.multi_reduction <add>, %261, %cst_80 [1, 2, 3] : vector<1x3x128x128xf32> to vector<1xf32>
    %263 = vector.shape_cast %262 : vector<1xf32> to vector<1x1x1x1xf32>
    %264 = vector.extract %263[0, 0, 0, 0] : f32 from vector<1x1x1x1xf32>
    %cst_81 = arith.constant 0.000000e+00 : f32
    %265 = arith.addf %cst_81, %264 : f32
    %c1_82 = arith.constant 1 : index
    %c3_83 = arith.constant 3 : index
    %266 = memref.load %arg0[%c1_82, %c3_83] : memref<2x4xi32, #tpu.memory_space<smem>>
    %c1_84 = arith.constant 1 : index
    %c3_85 = arith.constant 3 : index
    %267 = memref.load %arg1[%c1_84, %c3_85] : memref<2x4xi32, #tpu.memory_space<smem>>
    %268 = vector.broadcast %266 : i32 to vector<128x128xi32>
    %269 = arith.cmpi sge, %69, %268 : vector<128x128xi32>
    %c25_i32_86 = arith.constant 25 : i32
    %270 = arith.addi %266, %c25_i32_86 : i32
    %271 = vector.broadcast %270 : i32 to vector<128x128xi32>
    %272 = arith.cmpi slt, %69, %271 : vector<128x128xi32>
    %273 = arith.andi %269, %272 : vector<128x128xi1>
    %274 = vector.broadcast %267 : i32 to vector<128x128xi32>
    %275 = arith.cmpi sge, %70, %274 : vector<128x128xi32>
    %276 = arith.andi %273, %275 : vector<128x128xi1>
    %c54_i32_87 = arith.constant 54 : i32
    %277 = arith.addi %267, %c54_i32_87 : i32
    %278 = vector.broadcast %277 : i32 to vector<128x128xi32>
    %279 = arith.cmpi slt, %70, %278 : vector<128x128xi32>
    %280 = arith.andi %276, %279 : vector<128x128xi1>
    %281 = vector.shape_cast %280 : vector<128x128xi1> to vector<1x128x128xi1>
    %282 = vector.extract_strided_slice %3 {offsets = [1, 0, 0, 0], sizes = [1, 3, 128, 128], strides = [1, 1, 1, 1]} : vector<2x3x128x128xf32> to vector<1x3x128x128xf32>
    %283 = vector.shape_cast %282 : vector<1x3x128x128xf32> to vector<3x128x128xf32>
    %cst_88 = arith.constant 0.000000e+00 : f32
    %284 = vector.shape_cast %281 : vector<1x128x128xi1> to vector<1x128x128xi1>
    %285 = vector.broadcast %284 : vector<1x128x128xi1> to vector<3x128x128xi1>
    %286 = vector.broadcast %cst_88 : f32 to vector<3x128x128xf32>
    %287 = arith.select %285, %283, %286 : vector<3x128x128xi1>, vector<3x128x128xf32>
    %288 = vector.shape_cast %287 : vector<3x128x128xf32> to vector<1x3x128x128xf32>
    %cst_89 = arith.constant dense<0.000000e+00> : vector<1xf32>
    %289 = vector.multi_reduction <add>, %288, %cst_89 [1, 2, 3] : vector<1x3x128x128xf32> to vector<1xf32>
    %290 = vector.shape_cast %289 : vector<1xf32> to vector<1x1x1x1xf32>
    %291 = vector.extract %290[0, 0, 0, 0] : f32 from vector<1x1x1x1xf32>
    %292 = arith.addf %265, %291 : f32
    %cst_90 = arith.constant 8.100000e+03 : f32
    %293 = arith.divf %292, %cst_90 : f32
    %c7 = arith.constant 7 : index
    %294 = memref.load %arg19[%c7] : memref<14xf32, #tpu.memory_space<smem>>
    memref.store %293, %arg19[%c7] : memref<14xf32, #tpu.memory_space<smem>>
    %c0_91 = arith.constant 0 : index
    %c0_92 = arith.constant 0 : index
    %c0_93 = arith.constant 0 : index
    %c0_94 = arith.constant 0 : index
    %295 = vector.load %arg5[%c0_91, %c0_92, %c0_93, %c0_94] : memref<2x3x64x64xf32, #tpu.memory_space<vmem>>, vector<2x3x64x64xf32>
    %c0_95 = arith.constant 0 : index
    %c0_96 = arith.constant 0 : index
    %c0_97 = arith.constant 0 : index
    %c0_98 = arith.constant 0 : index
    %296 = vector.load %arg7[%c0_95, %c0_96, %c0_97, %c0_98] : memref<2x3x32x32xf32, #tpu.memory_space<vmem>>, vector<2x3x32x32xf32>
    %c0_99 = arith.constant 0 : index
    %c0_100 = arith.constant 0 : index
    %c0_101 = arith.constant 0 : index
    %c0_102 = arith.constant 0 : index
    %297 = vector.load %arg6[%c0_99, %c0_100, %c0_101, %c0_102] : memref<2x3x64x64xf32, #tpu.memory_space<vmem>>, vector<2x3x64x64xf32>
    %298 = arith.subf %295, %297 : vector<2x3x64x64xf32>
    %299 = math.absf %298 : vector<2x3x64x64xf32>
    %300 = vector.shape_cast %299 : vector<2x3x64x64xf32> to vector<1x2x3x64x64xf32>
    %cst_103 = arith.constant dense<0.000000e+00> : vector<1xf32>
    %301 = vector.multi_reduction <add>, %300, %cst_103 [1, 2, 3, 4] : vector<1x2x3x64x64xf32> to vector<1xf32>
    %302 = vector.shape_cast %301 : vector<1xf32> to vector<1x1x1x1x1xf32>
    %303 = vector.extract %302[0, 0, 0, 0, 0] : f32 from vector<1x1x1x1x1xf32>
    %cst_104 = arith.constant 2.457600e+04 : f32
    %304 = arith.divf %303, %cst_104 : f32
    %c8 = arith.constant 8 : index
    %305 = memref.load %arg19[%c8] : memref<14xf32, #tpu.memory_space<smem>>
    memref.store %304, %arg19[%c8] : memref<14xf32, #tpu.memory_space<smem>>
    %306 = vector.shape_cast %295 : vector<2x3x64x64xf32> to vector<384x64xf32>
    %307 = tpu.iota {dimensions = array<i32: 0>} : vector<64x64xi32>
    %308 = tpu.iota {dimensions = array<i32: 1>} : vector<64x64xi32>
    %309 = arith.addi %307, %308 : vector<64x64xi32>
    %c63_i32 = arith.constant 63 : i32
    %310 = vector.broadcast %c63_i32 : i32 to vector<64x64xi32>
    %311 = arith.cmpi eq, %309, %310 : vector<64x64xi32>
    %312 = arith.extui %311 : vector<64x64xi1> to vector<64x64xi32>
    %313 = arith.sitofp %312 : vector<64x64xi32> to vector<64x64xf32>
    %cst_105 = arith.constant dense<0.000000e+00> : vector<384x64xf32>
    %314 = tpu.matmul %306, %313, %cst_105 {dimension_numbers = #tpu.dot_dimension_numbers<[1], [0], [0], [1], [0, 0, 1, 1], [], []>} : vector<384x64xf32>, vector<64x64xf32>, vector<384x64xf32> -> vector<384x64xf32>
    %315 = arith.subf %306, %314 : vector<384x64xf32>
    %316 = math.absf %315 : vector<384x64xf32>
    %317 = vector.shape_cast %316 : vector<384x64xf32> to vector<1x384x64xf32>
    %cst_106 = arith.constant dense<0.000000e+00> : vector<1xf32>
    %318 = vector.multi_reduction <add>, %317, %cst_106 [1, 2] : vector<1x384x64xf32> to vector<1xf32>
    %319 = vector.shape_cast %318 : vector<1xf32> to vector<1x1x1xf32>
    %320 = vector.extract %319[0, 0, 0] : f32 from vector<1x1x1xf32>
    %cst_107 = arith.constant 2.457600e+04 : f32
    %321 = arith.divf %320, %cst_107 : f32
    %c9 = arith.constant 9 : index
    %322 = memref.load %arg19[%c9] : memref<14xf32, #tpu.memory_space<smem>>
    memref.store %321, %arg19[%c9] : memref<14xf32, #tpu.memory_space<smem>>
    %c0_108 = arith.constant 0 : index
    %c0_109 = arith.constant 0 : index
    %c0_110 = arith.constant 0 : index
    %c0_111 = arith.constant 0 : index
    %323 = vector.load %arg8[%c0_108, %c0_109, %c0_110, %c0_111] : memref<2x3x32x32xf32, #tpu.memory_space<vmem>>, vector<2x3x32x32xf32>
    %324 = arith.subf %296, %323 : vector<2x3x32x32xf32>
    %325 = math.absf %324 : vector<2x3x32x32xf32>
    %326 = vector.shape_cast %325 : vector<2x3x32x32xf32> to vector<1x2x3x32x32xf32>
    %cst_112 = arith.constant dense<0.000000e+00> : vector<1xf32>
    %327 = vector.multi_reduction <add>, %326, %cst_112 [1, 2, 3, 4] : vector<1x2x3x32x32xf32> to vector<1xf32>
    %328 = vector.shape_cast %327 : vector<1xf32> to vector<1x1x1x1x1xf32>
    %329 = vector.extract %328[0, 0, 0, 0, 0] : f32 from vector<1x1x1x1x1xf32>
    %cst_113 = arith.constant 6.144000e+03 : f32
    %330 = arith.divf %329, %cst_113 : f32
    %c10 = arith.constant 10 : index
    %331 = memref.load %arg19[%c10] : memref<14xf32, #tpu.memory_space<smem>>
    memref.store %330, %arg19[%c10] : memref<14xf32, #tpu.memory_space<smem>>
    %332 = vector.shape_cast %296 : vector<2x3x32x32xf32> to vector<192x32xf32>
    %333 = tpu.iota {dimensions = array<i32: 0>} : vector<32x32xi32>
    %334 = tpu.iota {dimensions = array<i32: 1>} : vector<32x32xi32>
    %335 = arith.addi %333, %334 : vector<32x32xi32>
    %c31_i32 = arith.constant 31 : i32
    %336 = vector.broadcast %c31_i32 : i32 to vector<32x32xi32>
    %337 = arith.cmpi eq, %335, %336 : vector<32x32xi32>
    %338 = arith.extui %337 : vector<32x32xi1> to vector<32x32xi32>
    %339 = arith.sitofp %338 : vector<32x32xi32> to vector<32x32xf32>
    %cst_114 = arith.constant dense<0.000000e+00> : vector<192x32xf32>
    %340 = tpu.matmul %332, %339, %cst_114 {dimension_numbers = #tpu.dot_dimension_numbers<[1], [0], [0], [1], [0, 0, 1, 1], [], []>} : vector<192x32xf32>, vector<32x32xf32>, vector<192x32xf32> -> vector<192x32xf32>
    %341 = arith.subf %332, %340 : vector<192x32xf32>
    %342 = math.absf %341 : vector<192x32xf32>
    %343 = vector.shape_cast %342 : vector<192x32xf32> to vector<1x192x32xf32>
    %cst_115 = arith.constant dense<0.000000e+00> : vector<1xf32>
    %344 = vector.multi_reduction <add>, %343, %cst_115 [1, 2] : vector<1x192x32xf32> to vector<1xf32>
    %345 = vector.shape_cast %344 : vector<1xf32> to vector<1x1x1xf32>
    %346 = vector.extract %345[0, 0, 0] : f32 from vector<1x1x1xf32>
    %cst_116 = arith.constant 6.144000e+03 : f32
    %347 = arith.divf %346, %cst_116 : f32
    %c11 = arith.constant 11 : index
    %348 = memref.load %arg19[%c11] : memref<14xf32, #tpu.memory_space<smem>>
    memref.store %347, %arg19[%c11] : memref<14xf32, #tpu.memory_space<smem>>
    %c0_117 = arith.constant 0 : index
    %c0_118 = arith.constant 0 : index
    %c0_119 = arith.constant 0 : index
    %c0_120 = arith.constant 0 : index
    %349 = vector.load %arg9[%c0_117, %c0_118, %c0_119, %c0_120] : memref<2x3x22x28xf32, #tpu.memory_space<vmem>>, vector<2x3x22x28xf32>
    %c0_121 = arith.constant 0 : index
    %c0_122 = arith.constant 0 : index
    %c0_123 = arith.constant 0 : index
    %c0_124 = arith.constant 0 : index
    %350 = vector.load %arg10[%c0_121, %c0_122, %c0_123, %c0_124] : memref<2x3x22x28xf32, #tpu.memory_space<vmem>>, vector<2x3x22x28xf32>
    %351 = arith.subf %349, %350 : vector<2x3x22x28xf32>
    %352 = math.absf %351 : vector<2x3x22x28xf32>
    %353 = vector.shape_cast %352 : vector<2x3x22x28xf32> to vector<1x2x3x22x28xf32>
    %cst_125 = arith.constant dense<0.000000e+00> : vector<1xf32>
    %354 = vector.multi_reduction <add>, %353, %cst_125 [1, 2, 3, 4] : vector<1x2x3x22x28xf32> to vector<1xf32>
    %355 = vector.shape_cast %354 : vector<1xf32> to vector<1x1x1x1x1xf32>
    %356 = vector.extract %355[0, 0, 0, 0, 0] : f32 from vector<1x1x1x1x1xf32>
    %cst_126 = arith.constant 3.696000e+03 : f32
    %357 = arith.divf %356, %cst_126 : f32
    %c0_127 = arith.constant 0 : index
    %c0_128 = arith.constant 0 : index
    %c0_129 = arith.constant 0 : index
    %c0_130 = arith.constant 0 : index
    %358 = vector.load %arg11[%c0_127, %c0_128, %c0_129, %c0_130] : memref<2x3x22x28xf32, #tpu.memory_space<vmem>>, vector<2x3x22x28xf32>
    %c0_131 = arith.constant 0 : index
    %c0_132 = arith.constant 0 : index
    %c0_133 = arith.constant 0 : index
    %c0_134 = arith.constant 0 : index
    %359 = vector.load %arg12[%c0_131, %c0_132, %c0_133, %c0_134] : memref<2x3x22x28xf32, #tpu.memory_space<vmem>>, vector<2x3x22x28xf32>
    %360 = arith.subf %358, %359 : vector<2x3x22x28xf32>
    %361 = math.absf %360 : vector<2x3x22x28xf32>
    %362 = vector.shape_cast %361 : vector<2x3x22x28xf32> to vector<1x2x3x22x28xf32>
    %cst_135 = arith.constant dense<0.000000e+00> : vector<1xf32>
    %363 = vector.multi_reduction <add>, %362, %cst_135 [1, 2, 3, 4] : vector<1x2x3x22x28xf32> to vector<1xf32>
    %364 = vector.shape_cast %363 : vector<1xf32> to vector<1x1x1x1x1xf32>
    %365 = vector.extract %364[0, 0, 0, 0, 0] : f32 from vector<1x1x1x1x1xf32>
    %cst_136 = arith.constant 3.696000e+03 : f32
    %366 = arith.divf %365, %cst_136 : f32
    %367 = arith.addf %357, %366 : f32
    %c0_137 = arith.constant 0 : index
    %c0_138 = arith.constant 0 : index
    %c0_139 = arith.constant 0 : index
    %c0_140 = arith.constant 0 : index
    %368 = vector.load %arg13[%c0_137, %c0_138, %c0_139, %c0_140] : memref<2x3x66x46xf32, #tpu.memory_space<vmem>>, vector<2x3x66x46xf32>
    %c0_141 = arith.constant 0 : index
    %c0_142 = arith.constant 0 : index
    %c0_143 = arith.constant 0 : index
    %c0_144 = arith.constant 0 : index
    %369 = vector.load %arg14[%c0_141, %c0_142, %c0_143, %c0_144] : memref<2x3x66x46xf32, #tpu.memory_space<vmem>>, vector<2x3x66x46xf32>
    %370 = arith.subf %368, %369 : vector<2x3x66x46xf32>
    %371 = math.absf %370 : vector<2x3x66x46xf32>
    %372 = vector.shape_cast %371 : vector<2x3x66x46xf32> to vector<1x2x3x66x46xf32>
    %cst_145 = arith.constant dense<0.000000e+00> : vector<1xf32>
    %373 = vector.multi_reduction <add>, %372, %cst_145 [1, 2, 3, 4] : vector<1x2x3x66x46xf32> to vector<1xf32>
    %374 = vector.shape_cast %373 : vector<1xf32> to vector<1x1x1x1x1xf32>
    %375 = vector.extract %374[0, 0, 0, 0, 0] : f32 from vector<1x1x1x1x1xf32>
    %cst_146 = arith.constant 1.821600e+04 : f32
    %376 = arith.divf %375, %cst_146 : f32
    %377 = arith.addf %367, %376 : f32
    %c0_147 = arith.constant 0 : index
    %c0_148 = arith.constant 0 : index
    %c0_149 = arith.constant 0 : index
    %c0_150 = arith.constant 0 : index
    %378 = vector.load %arg15[%c0_147, %c0_148, %c0_149, %c0_150] : memref<2x3x25x54xf32, #tpu.memory_space<vmem>>, vector<2x3x25x54xf32>
    %c0_151 = arith.constant 0 : index
    %c0_152 = arith.constant 0 : index
    %c0_153 = arith.constant 0 : index
    %c0_154 = arith.constant 0 : index
    %379 = vector.load %arg16[%c0_151, %c0_152, %c0_153, %c0_154] : memref<2x3x25x54xf32, #tpu.memory_space<vmem>>, vector<2x3x25x54xf32>
    %380 = arith.subf %378, %379 : vector<2x3x25x54xf32>
    %381 = math.absf %380 : vector<2x3x25x54xf32>
    %382 = vector.shape_cast %381 : vector<2x3x25x54xf32> to vector<1x2x3x25x54xf32>
    %cst_155 = arith.constant dense<0.000000e+00> : vector<1xf32>
    %383 = vector.multi_reduction <add>, %382, %cst_155 [1, 2, 3, 4] : vector<1x2x3x25x54xf32> to vector<1xf32>
    %384 = vector.shape_cast %383 : vector<1xf32> to vector<1x1x1x1x1xf32>
    %385 = vector.extract %384[0, 0, 0, 0, 0] : f32 from vector<1x1x1x1x1xf32>
    %cst_156 = arith.constant 8.100000e+03 : f32
    %386 = arith.divf %385, %cst_156 : f32
    %387 = arith.addf %377, %386 : f32
    %c12 = arith.constant 12 : index
    %388 = memref.load %arg19[%c12] : memref<14xf32, #tpu.memory_space<smem>>
    memref.store %387, %arg19[%c12] : memref<14xf32, #tpu.memory_space<smem>>
    %c0_157 = arith.constant 0 : index
    %c0_158 = arith.constant 0 : index
    %389 = vector.load %arg17[%c0_157, %c0_158] : memref<2x512xf32, #tpu.memory_space<vmem>>, vector<2x512xf32>
    %c0_159 = arith.constant 0 : index
    %c0_160 = arith.constant 0 : index
    %390 = vector.load %arg18[%c0_159, %c0_160] : memref<2x1xi32, #tpu.memory_space<vmem>>, vector<2x1xi32>
    %cst_161 = arith.constant dense<0xFF800000> : vector<2xf32>
    %391 = vector.multi_reduction <maximumf>, %389, %cst_161 [1] : vector<2x512xf32> to vector<2xf32>
    %392 = vector.shape_cast %391 : vector<2xf32> to vector<2x1xf32>
    %393 = vector.broadcast %392 : vector<2x1xf32> to vector<2x512xf32>
    %394 = arith.subf %389, %393 : vector<2x512xf32>
    %395 = math.exp %394 : vector<2x512xf32>
    %cst_162 = arith.constant dense<0.000000e+00> : vector<2xf32>
    %396 = vector.multi_reduction <add>, %395, %cst_162 [1] : vector<2x512xf32> to vector<2xf32>
    %397 = vector.shape_cast %396 : vector<2xf32> to vector<2x1xf32>
    %398 = math.log %397 : vector<2x1xf32>
    %399 = arith.addf %392, %398 : vector<2x1xf32>
    %400 = tpu.iota {dimensions = array<i32: 1>} : vector<2x512xi32>
    %401 = vector.broadcast %390 : vector<2x1xi32> to vector<2x512xi32>
    %402 = arith.cmpi eq, %400, %401 : vector<2x512xi32>
    %cst_163 = arith.constant 0.000000e+00 : f32
    %403 = vector.broadcast %cst_163 : f32 to vector<2x512xf32>
    %404 = arith.select %402, %389, %403 : vector<2x512xi1>, vector<2x512xf32>
    %cst_164 = arith.constant dense<0.000000e+00> : vector<2xf32>
    %405 = vector.multi_reduction <add>, %404, %cst_164 [1] : vector<2x512xf32> to vector<2xf32>
    %406 = vector.shape_cast %405 : vector<2xf32> to vector<2x1xf32>
    %407 = arith.subf %399, %406 : vector<2x1xf32>
    %408 = vector.shape_cast %407 : vector<2x1xf32> to vector<1x2x1xf32>
    %cst_165 = arith.constant dense<0.000000e+00> : vector<1xf32>
    %409 = vector.multi_reduction <add>, %408, %cst_165 [1, 2] : vector<1x2x1xf32> to vector<1xf32>
    %410 = vector.shape_cast %409 : vector<1xf32> to vector<1x1x1xf32>
    %411 = vector.extract %410[0, 0, 0] : f32 from vector<1x1x1xf32>
    %cst_166 = arith.constant 2.000000e+00 : f32
    %412 = arith.divf %411, %cst_166 : f32
    %c13 = arith.constant 13 : index
    %413 = memref.load %arg19[%c13] : memref<14xf32, #tpu.memory_space<smem>>
    memref.store %412, %arg19[%c13] : memref<14xf32, #tpu.memory_space<smem>>
    %414 = vector.extract_strided_slice %0 {offsets = [0, 0, 0, 0], sizes = [2, 1, 128, 128], strides = [1, 1, 1, 1]} : vector<2x3x128x128xf32> to vector<2x1x128x128xf32>
    %415 = vector.shape_cast %414 : vector<2x1x128x128xf32> to vector<2x128x128xf32>
    %cst_167 = arith.constant 2.126000e-01 : f32
    %416 = vector.broadcast %cst_167 : f32 to vector<2x128x128xf32>
    %417 = arith.mulf %415, %416 : vector<2x128x128xf32>
    %418 = vector.extract_strided_slice %0 {offsets = [0, 0, 0, 0], sizes = [2, 1, 128, 128], strides = [1, 1, 1, 1]} : vector<2x3x128x128xf32> to vector<2x1x128x128xf32>
    %419 = vector.shape_cast %418 : vector<2x1x128x128xf32> to vector<2x128x128xf32>
    %cst_168 = arith.constant 7.152000e-01 : f32
    %420 = vector.broadcast %cst_168 : f32 to vector<2x128x128xf32>
    %421 = arith.mulf %419, %420 : vector<2x128x128xf32>
    %422 = arith.addf %417, %421 : vector<2x128x128xf32>
    %423 = vector.extract_strided_slice %0 {offsets = [0, 0, 0, 0], sizes = [2, 1, 128, 128], strides = [1, 1, 1, 1]} : vector<2x3x128x128xf32> to vector<2x1x128x128xf32>
    %424 = vector.shape_cast %423 : vector<2x1x128x128xf32> to vector<2x128x128xf32>
    %cst_169 = arith.constant 7.220000e-02 : f32
    %425 = vector.broadcast %cst_169 : f32 to vector<2x128x128xf32>
    %426 = arith.mulf %424, %425 : vector<2x128x128xf32>
    %427 = arith.addf %422, %426 : vector<2x128x128xf32>
    %428 = vector.extract_strided_slice %1 {offsets = [0, 0, 0, 0], sizes = [2, 1, 128, 128], strides = [1, 1, 1, 1]} : vector<2x3x128x128xf32> to vector<2x1x128x128xf32>
    %429 = vector.shape_cast %428 : vector<2x1x128x128xf32> to vector<2x128x128xf32>
    %cst_170 = arith.constant 2.126000e-01 : f32
    %430 = vector.broadcast %cst_170 : f32 to vector<2x128x128xf32>
    %431 = arith.mulf %429, %430 : vector<2x128x128xf32>
    %432 = vector.extract_strided_slice %1 {offsets = [0, 0, 0, 0], sizes = [2, 1, 128, 128], strides = [1, 1, 1, 1]} : vector<2x3x128x128xf32> to vector<2x1x128x128xf32>
    %433 = vector.shape_cast %432 : vector<2x1x128x128xf32> to vector<2x128x128xf32>
    %cst_171 = arith.constant 7.152000e-01 : f32
    %434 = vector.broadcast %cst_171 : f32 to vector<2x128x128xf32>
    %435 = arith.mulf %433, %434 : vector<2x128x128xf32>
    %436 = arith.addf %431, %435 : vector<2x128x128xf32>
    %437 = vector.extract_strided_slice %1 {offsets = [0, 0, 0, 0], sizes = [2, 1, 128, 128], strides = [1, 1, 1, 1]} : vector<2x3x128x128xf32> to vector<2x1x128x128xf32>
    %438 = vector.shape_cast %437 : vector<2x1x128x128xf32> to vector<2x128x128xf32>
    %cst_172 = arith.constant 7.220000e-02 : f32
    %439 = vector.broadcast %cst_172 : f32 to vector<2x128x128xf32>
    %440 = arith.mulf %438, %439 : vector<2x128x128xf32>
    %441 = arith.addf %436, %440 : vector<2x128x128xf32>
    %442 = arith.truncf %427 : vector<2x128x128xf32> to vector<2x128x128xbf16>
    %c0_173 = arith.constant 0 : index
    %c0_174 = arith.constant 0 : index
    %c0_175 = arith.constant 0 : index
    %443 = vector.load %arg20[%c0_173, %c0_174, %c0_175] : memref<4x128x128xbf16, #tpu.memory_space<vmem>>, vector<2x128x128xbf16>
    tpu.vector_store %arg20[%c0_173, %c0_174, %c0_175], %442 {strides = array<i32>} : memref<4x128x128xbf16, #tpu.memory_space<vmem>>, vector<2x128x128xbf16>,
    %444 = arith.truncf %441 : vector<2x128x128xf32> to vector<2x128x128xbf16>
    %c2_176 = arith.constant 2 : index
    %c0_177 = arith.constant 0 : index
    %c0_178 = arith.constant 0 : index
    %445 = vector.load %arg20[%c2_176, %c0_177, %c0_178] : memref<4x128x128xbf16, #tpu.memory_space<vmem>>, vector<2x128x128xbf16>
    tpu.vector_store %arg20[%c2_176, %c0_177, %c0_178], %444 {strides = array<i32>} : memref<4x128x128xbf16, #tpu.memory_space<vmem>>, vector<2x128x128xbf16>,
    return
  }
}

module attributes {stable_mosaic.version = 11 : i64} {
  func.func @_feat_matmul_kernel(%arg0: i32, %arg1: i32, %arg2: memref<4x4096xbf16, #tpu.memory_space<vmem>>, %arg3: memref<4096x128xf32, #tpu.memory_space<vmem>>, %arg4: memref<2x128xf32, #tpu.memory_space<vmem>>, %arg5: memref<4x128xf32, #tpu.memory_space<vmem>>) attributes {dimension_semantics = [#tpu.dimension_semantics<parallel>, #tpu.dimension_semantics<arbitrary>], iteration_bounds = array<i64: 2, 4>, scalar_prefetch = 0 : i64, scratch_operands = 1 : i64, tpu.core_type = #tpu.core_type<tc>, window_params = [{transform_indices = @transform_0, window_bounds = array<i64: 4, 4096>}, {transform_indices = @transform_1, window_bounds = array<i64: 4096, 128>}, {transform_indices = @transform_2, window_bounds = array<i64: 2, 128>}]} {
    %c0_i32 = arith.constant 0 : i32
    %0 = arith.cmpi eq, %arg1, %c0_i32 : i32
    %1 = arith.extui %0 : i1 to i32
    %c0_i32_0 = arith.constant 0 : i32
    %2 = arith.cmpi ne, %1, %c0_i32_0 : i32
    scf.if %2 {
      %cst_9 = arith.constant 0.000000e+00 : f32
      %13 = vector.broadcast %cst_9 : f32 to vector<4x128xf32>
      %c0_10 = arith.constant 0 : index
      %c0_11 = arith.constant 0 : index
      %14 = vector.load %arg5[%c0_10, %c0_11] : memref<4x128xf32, #tpu.memory_space<vmem>>, vector<4x128xf32>
      tpu.vector_store %arg5[%c0_10, %c0_11], %13 {strides = array<i32>} : memref<4x128xf32, #tpu.memory_space<vmem>>, vector<4x128xf32>,
    } else {
    }
    %c0 = arith.constant 0 : index
    %c0_1 = arith.constant 0 : index
    %3 = vector.load %arg5[%c0, %c0_1] : memref<4x128xf32, #tpu.memory_space<vmem>>, vector<4x128xf32>
    %c0_2 = arith.constant 0 : index
    %c0_3 = arith.constant 0 : index
    %4 = vector.load %arg2[%c0_2, %c0_3] : memref<4x4096xbf16, #tpu.memory_space<vmem>>, vector<4x4096xbf16>
    %c0_4 = arith.constant 0 : index
    %c0_5 = arith.constant 0 : index
    %5 = vector.load %arg3[%c0_4, %c0_5] : memref<4096x128xf32, #tpu.memory_space<vmem>>, vector<4096x128xf32>
    %6 = arith.truncf %5 : vector<4096x128xf32> to vector<4096x128xbf16>
    %cst = arith.constant dense<0.000000e+00> : vector<4x128xf32>
    %7 = tpu.matmul %4, %6, %cst {dimension_numbers = #tpu.dot_dimension_numbers<[1], [0], [0], [1], [0, 0, 1, 1], [], []>} : vector<4x4096xbf16>, vector<4096x128xbf16>, vector<4x128xf32> -> vector<4x128xf32>
    %8 = arith.addf %3, %7 : vector<4x128xf32>
    %c0_6 = arith.constant 0 : index
    %c0_7 = arith.constant 0 : index
    %9 = vector.load %arg5[%c0_6, %c0_7] : memref<4x128xf32, #tpu.memory_space<vmem>>, vector<4x128xf32>
    tpu.vector_store %arg5[%c0_6, %c0_7], %8 {strides = array<i32>} : memref<4x128xf32, #tpu.memory_space<vmem>>, vector<4x128xf32>,
    %c3_i32 = arith.constant 3 : i32
    %10 = arith.cmpi eq, %arg1, %c3_i32 : i32
    %11 = arith.extui %10 : i1 to i32
    %c0_i32_8 = arith.constant 0 : i32
    %12 = arith.cmpi ne, %11, %c0_i32_8 : i32
    scf.if %12 {
      %c0_9 = arith.constant 0 : index
      %c0_10 = arith.constant 0 : index
      %13 = vector.load %arg5[%c0_9, %c0_10] : memref<4x128xf32, #tpu.memory_space<vmem>>, vector<2x128xf32>
      %c2 = arith.constant 2 : index
      %c0_11 = arith.constant 0 : index
      %14 = vector.load %arg5[%c2, %c0_11] : memref<4x128xf32, #tpu.memory_space<vmem>>, vector<2x128xf32>
      %15 = arith.subf %13, %14 : vector<2x128xf32>
      %16 = math.absf %15 : vector<2x128xf32>
      %c0_12 = arith.constant 0 : index
      %c0_13 = arith.constant 0 : index
      %17 = vector.load %arg4[%c0_12, %c0_13] : memref<2x128xf32, #tpu.memory_space<vmem>>, vector<2x128xf32>
      tpu.vector_store %arg4[%c0_12, %c0_13], %16 {strides = array<i32>} : memref<2x128xf32, #tpu.memory_space<vmem>>, vector<2x128xf32>,
    } else {
    }
    return
  }
  func.func @transform_0(%arg0: i32, %arg1: i32) -> (i32, i32) {
    %c0_i32 = arith.constant 0 : i32
    %c0_i32_0 = arith.constant 0 : i32
    return %c0_i32, %arg1 : i32, i32
  }
  func.func @transform_1(%arg0: i32, %arg1: i32) -> (i32, i32) {
    %c0_i32 = arith.constant 0 : i32
    return %arg1, %arg0 : i32, i32
  }
  func.func @transform_2(%arg0: i32, %arg1: i32) -> (i32, i32) {
    %c0_i32 = arith.constant 0 : i32
    %c0_i32_0 = arith.constant 0 : i32
    return %c0_i32, %arg0 : i32, i32
  }
}

</mosaic_0001>

<llo_original>
// kernel: loss_generator_forward.3
$region0: #{loss_generator_forward.3}
  #allocation0 [shape = 'u32[]', space=smem, size = 0x4, offset = 0x4, fixed_abs, tag = 'smem constant byte address 0x4 - core index']
  #allocation1 [shape = 'u32[144,128]{1,0:T(1,128)}', space=vmem, size = 0x12000, scoped, tag = 'internal scratch']
  #allocation2 [shape = 'f32[4,128]{1,0:T(4,128)}', space=vmem, size = 0x800, scoped, tag = 'scratch operand']
  %s0 = inlined_call_operand.vmem [shape: bf16[4,16384], index: 0, kind: input, shape index: {}]
  %s1 = inlined_call_operand.hbm [shape: f32[16384,256], index: 1, kind: input, shape index: {}]
  %s2 = inlined_call_operand.vmem [shape: f32[2,256], index: 2, kind: output, shape index: {}]
  %s3 = sld [smem:[#allocation0]]
  $region53: #{loss_generator_forward.3} parent=0
    _
  %s5 = ssub.s32 1, %s3
  %s6 = scalar_select 0, %s5, %s3
  $region1: #{loss_generator_forward.3} parent=0
    #allocation3 [shape = 'u8[4194304]{0}', space=vmem, size = 0x400000, scoped, tag = 'input window, operand 1']
    #allocation4 [shape = 's32[2]{0}', space=sflag, size = 0x8, scoped, tag = 'scoped memory for loss_generator_forward.3']
    %7 = vsyncpa [#allocation4], 0
    %s8 = scalar_lea.sflag [#allocation4], 1
    %9 = vsyncpa %s8, 0
    loop: start=0, step=1, limit=10
    $region2: #{loss_generator_forward.3} parent=1 // loop_pre_header
      _
    $region3: #{loss_generator_forward.3} parent=1 // loop_header
      %s11 = sphi 0, %s15
      %p12 = scmp.ge.s32.totalorder %s11, 10
      %s18 = sphi 0, %s30
      %s19 = sphi 0, %s26
      %s20 = sphi 0, %s18
      %s21 = sphi 0, %s19
      %s22 = sphi 0, %s20
      %s23 = sphi 0, %s21
      %s33 = sphi 0, %s35
      %s36 = sphi 0, %s33
      %s37 = sphi 0, %s36
      %s53 = sphi 0, %s37
      %s61 = sphi 0, %s63
      %s64 = sphi 0, %s61
      %s65 = sphi 0, %s64
      %s81 = sphi 0, %s65
      %s87 = sphi 0, %s89
      %s90 = sphi 0, %s87
      %s91 = sphi 0, %s90
      %s107 = sphi 0, %s91
    $region4: #{loss_generator_forward.3} parent=1 // loop_header_branch
      %14 = sbr.rel (%p12) target = $region8
    $region5: #{loss_generator_forward.3} parent=1 // loop_body
      %s16 = ssub.s32 %s11, 1
      %s17 = ssub.s32 %s11, 2
      %s24 = sadd.s32 1, %s19
      %p25 = scmp.ge.s32.totalorder %s24, 4
      %s26 = scalar_select %p25, 0, %s24
      %s27 = sadd.s32 1, %s18
      %s28 = scalar_select %p25, %s27, %s18
      %p29 = scmp.ge.s32.totalorder %s28, 2
      %s30 = scalar_select %p29, 0, %s28
      %s31 = ssub.s32 %s19, %s26
      %p32 = scmp.eq.s32.totalorder %s31, 0
      %s34 = sadd.s32 %s33, 1
      %s35 = scalar_select %p32, %s33, %s34
      %p38 = pneg %p32
      %p39 = scmp.eq.s32.totalorder %s11, 7
      %p40 = por %p38, %p39
      %p41 = scmp.ne.s32.totalorder %s33, %s36
      %p42 = scmp.eq.s32.totalorder %s11, 0
      %p43 = por %p41, %p42
      %p44 = scmp.ne.s32.totalorder %s33, %s36
      %p45 = scmp.eq.s32.totalorder %s16, 7
      %p46 = por %p44, %p45
      %p47 = scmp.ne.s32.totalorder %s36, %s37
      %p48 = scmp.eq.s32.totalorder %s16, 0
      %p49 = por %p47, %p48
      %p50 = scmp.ne.s32.totalorder %s36, %s37
      %p51 = scmp.eq.s32.totalorder %s17, 7
      %p52 = por %p50, %p51
      %p54 = scmp.ne.s32.totalorder %s37, %s53
      %p55 = scmp.eq.s32.totalorder %s17, 0
      %p56 = por %p54, %p55
      %s57 = ssub.s32 %s19, %s26
      %s58 = ssub.s32 %s18, %s30
      %s59 = sor.u32 %s57, %s58
      %p60 = scmp.eq.s32.totalorder %s59, 0
      %s62 = sadd.s32 %s61, 1
      %s63 = scalar_select %p60, %s61, %s62
      %p66 = pneg %p60
      %p67 = scmp.eq.s32.totalorder %s11, 7
      %p68 = por %p66, %p67
      %p69 = scmp.ne.s32.totalorder %s61, %s64
      %p70 = scmp.eq.s32.totalorder %s11, 0
      %p71 = por %p69, %p70
      %p72 = scmp.ne.s32.totalorder %s61, %s64
      %p73 = scmp.eq.s32.totalorder %s16, 7
      %p74 = por %p72, %p73
      %p75 = scmp.ne.s32.totalorder %s64, %s65
      %p76 = scmp.eq.s32.totalorder %s16, 0
      %p77 = por %p75, %p76
      %p78 = scmp.ne.s32.totalorder %s64, %s65
      %p79 = scmp.eq.s32.totalorder %s17, 7
      %p80 = por %p78, %p79
      %p82 = scmp.ne.s32.totalorder %s65, %s81
      %p83 = scmp.eq.s32.totalorder %s17, 0
      %p84 = por %p82, %p83
      %s85 = ssub.s32 %s18, %s30
      %p86 = scmp.eq.s32.totalorder %s85, 0
      %s88 = sadd.s32 %s87, 1
      %s89 = scalar_select %p86, %s87, %s88
      %p92 = pneg %p86
      %p93 = scmp.eq.s32.totalorder %s11, 7
      %p94 = por %p92, %p93
      %p95 = scmp.ne.s32.totalorder %s87, %s90
      %p96 = scmp.eq.s32.totalorder %s11, 0
      %p97 = por %p95, %p96
      %p98 = scmp.ne.s32.totalorder %s87, %s90
      %p99 = scmp.eq.s32.totalorder %s16, 7
      %p100 = por %p98, %p99
      %p101 = scmp.ne.s32.totalorder %s90, %s91
      %p102 = scmp.eq.s32.totalorder %s16, 0
      %p103 = por %p101, %p102
      %p104 = scmp.ne.s32.totalorder %s90, %s91
      %p105 = scmp.eq.s32.totalorder %s17, 7
      %p106 = por %p104, %p105
      %p108 = scmp.ne.s32.totalorder %s91, %s107
      %p109 = scmp.eq.s32.totalorder %s17, 0
      %p110 = por %p108, %p109
      %p111 = scmp.le.s32.totalorder 1, %s11
      %p112 = scmp.lt.s32.totalorder %s11, 9
      %p113 = pnand %p111, %p112
      %p114 = pneg %p113
      // Predicated region
      $region9: #{loss_generator_forward.3} parent=5 // pred_check
        _
      $region10: #{loss_generator_forward.3} parent=5 // pred_check_branch
        %116 = sbr.rel (%p113) target = $region12
      $region11: #{loss_generator_forward.3} parent=5 // pred_region
        %s117 = ssub.s32 %s11, 1
      $region12: #{loss_generator_forward.3} parent=5 // pred_fallthru
        _
      %p118 = scmp.lt.s32.totalorder %s11, 8
      // Predicated region
      $region13: #{loss_generator_forward.3} parent=5 // pred_check
        %p119 = pneg %p118
      $region14: #{loss_generator_forward.3} parent=5 // pred_check_branch
        %121 = sbr.rel (%p119) target = $region16
      $region15: #{loss_generator_forward.3} parent=5 // pred_region
        // Predicated region
        $region17: #{loss_generator_forward.3} parent=15 // pred_check
          %p122 = pneg %p43
        $region18: #{loss_generator_forward.3} parent=15 // pred_check_branch
          %124 = sbr.rel (%p122) target = $region20
        $region19: #{loss_generator_forward.3} parent=15 // pred_region
          %s125 = smul.u32 32, %s19
          %p126 = scmp.lt.s32.totalorder %s125, 127
          %s127 = scalar_select %p126, %s125, 127
          %s128 = smul.addr %s127, 2
          %s129 = scalar_lea.vmem %s0, %s128
          %s130 = smul.u32 32, %s19
        $region20: #{loss_generator_forward.3} parent=15 // pred_fallthru
          _
        // Predicated region
        $region21: #{loss_generator_forward.3} parent=15 // pred_check
          %p131 = pneg %p71
        $region22: #{loss_generator_forward.3} parent=15 // pred_check_branch
          %133 = sbr.rel (%p131) target = $region24
        $region23: #{loss_generator_forward.3} parent=15 // pred_region
          %s134 = sand.u32 %s61, 1
          %s135 = scalar_lea.sflag [#allocation4], %s134
          %s136 = sand.u32 %s61, 1
          %s137 = smul.addr %s136, 4096
          %s138 = scalar_lea.vmem [#allocation3], %s137
          %s139 = smul.u32 512, %s19
          %s141 = ssub.s32 65536, 65536
          %142 = vsyncadd %s135, %s141
          %s143 = smul.addr %s139, 2
          %s144 = sadd.s32 %s18, %s143
          %s145 = smul.addr %s144, 128
          %s146 = scalar_lea.hbm %s1, %s145
          %s147 = sshll.u32 %s138, 4
          %s148 = int_to_ptr.vmem [resolvable:$true] %s147
          %153 = dma.hbm_to_vmem [thread:$0]  %s146, 65536, %s148, %s135, 256, 128, 8
        $region24: #{loss_generator_forward.3} parent=15 // pred_fallthru
          _
      $region16: #{loss_generator_forward.3} parent=5 // pred_fallthru
        _
      %p154 = scmp.le.s32.totalorder 1, %s11
      %p155 = scmp.lt.s32.totalorder %s11, 9
      %p156 = pnand %p154, %p155
      %p157 = pneg %p156
      // Predicated region
      $region25: #{loss_generator_forward.3} parent=5 // pred_check
        _
      $region26: #{loss_generator_forward.3} parent=5 // pred_check_branch
        %159 = sbr.rel (%p156) target = $region28
      $region27: #{loss_generator_forward.3} parent=5 // pred_region
        %s160 = ssub.s32 %s11, 1
        %s161 = sand.u32 %s64, 1
        %s162 = scalar_lea.sflag [#allocation4], %s161
        %s163 = sand.u32 %s64, 1
        %s164 = smul.addr %s163, 4096
        %s165 = scalar_lea.vmem [#allocation3], %s164
        // Predicated region
        $region29: #{loss_generator_forward.3} parent=27 // pred_check
          %p166 = pneg %p77
        $region30: #{loss_generator_forward.3} parent=27 // pred_check_branch
          %168 = sbr.rel (%p166) target = $region32
        $region31: #{loss_generator_forward.3} parent=27 // pred_region
          %169 = dma.done %s162, 65536
        $region32: #{loss_generator_forward.3} parent=27 // pred_fallthru
          _
        %s170 = smul.u32 32, %s21
        %p171 = scmp.lt.s32.totalorder %s170, 127
        %s172 = scalar_select %p171, %s170, 127
        %s173 = smul.addr %s172, 2
        %s174 = scalar_lea.vmem %s0, %s173
        %p175 = pneg %p49
        %p176 = pneg %p46
        %s177 = sand.u32 %s64, 1
        %s178 = scalar_lea.sflag [#allocation4], %s177
        %s179 = sand.u32 %s64, 1
        %s180 = smul.addr %s179, 4096
        %s181 = scalar_lea.vmem [#allocation3], %s180
        %p182 = pneg %p77
        %p183 = pneg %p74
        %p184 = pneg %p103
        %p185 = pneg %p100
        %p186 = scmp.lt.s32.totalorder %s20, 1
        %s187 = scalar_select %p186, %s20, 1
        %s188 = smul.addr %s187, 2
        %s189 = scalar_lea.vmem %s2, %s188
        %s190 = smul.u32 32, %s21
        %p191 = scmp.lt.s32.totalorder %s190, 127
        %s192 = scalar_select %p191, %s190, 127
        %s193 = smul.addr %s192, 2
        %s194 = scalar_lea.vmem %s0, %s193
        %s195 = smul.u32 32, %s21
        %s196 = smul.u32 512, %s21
        %p197 = scmp.lt.s32.totalorder %s20, 1
        %s198 = scalar_select %p197, %s20, 1
        %s199 = smul.addr %s198, 2
        %s200 = scalar_lea.vmem %s2, %s199
        %p202 = scmp.eq.s32.totalorder %s21, 0
        // Predicated region
        $region33: #{loss_generator_forward.3} parent=27 // pred_check
          %p203 = pneg %p202
        $region34: #{loss_generator_forward.3} parent=27 // pred_check_branch
          %205 = sbr.rel (%p203) target = $region36
        $region35: #{loss_generator_forward.3} parent=27 // pred_region
          %206 = vst [vmem:[#allocation2] sm:$0xf] 0.0
        $region36: #{loss_generator_forward.3} parent=27 // pred_fallthru
          _
        %v207 = vld [vmem:[#allocation2] sm:$0xf]
        %v208 = vld [vmem:[%s194] sm:$0xff]
        %v209 = vld [vmem:[%s194 + $0x8] sm:$0xff]
        %v210 = vld [vmem:[%s194 + $0x10] sm:$0xff]
        %v211 = vld [vmem:[%s194 + $0x18] sm:$0xff]
        %v212 = vld [vmem:[%s194 + $0x20] sm:$0xff]
        %v213 = vld [vmem:[%s194 + $0x28] sm:$0xff]
        %v214 = vld [vmem:[%s194 + $0x30] sm:$0xff]
        %v215 = vld [vmem:[%s194 + $0x38] sm:$0xff]
        %v216 = vld [vmem:[%s165] sm:$0xff]
        %v217 = vld [vmem:[%s165 + $0x8] sm:$0xff]
        %v218 = vld [vmem:[%s165 + $0x10] sm:$0xff]
        %v219 = vld [vmem:[%s165 + $0x18] sm:$0xff]
        %v220 = vld [vmem:[%s165 + $0x20] sm:$0xff]
        %v221 = vld [vmem:[%s165 + $0x28] sm:$0xff]
        %v222 = vld [vmem:[%s165 + $0x30] sm:$0xff]
        %v223 = vld [vmem:[%s165 + $0x38] sm:$0xff]
        %v224 = vld [vmem:[%s165 + $0x40] sm:$0xff]
        %v225 = vld [vmem:[%s165 + $0x48] sm:$0xff]
        %v226 = vld [vmem:[%s165 + $0x50] sm:$0xff]
        %v227 = vld [vmem:[%s165 + $0x58] sm:$0xff]
        %v228 = vld [vmem:[%s165 + $0x60] sm:$0xff]
        %v229 = vld [vmem:[%s165 + $0x68] sm:$0xff]
        %v230 = vld [vmem:[%s165 + $0x70] sm:$0xff]
        %v231 = vld [vmem:[%s165 + $0x78] sm:$0xff]
        %v232 = vld [vmem:[%s165 + $0x80] sm:$0xff]
        %v233 = vld [vmem:[%s165 + $0x88] sm:$0xff]
        %v234 = vld [vmem:[%s165 + $0x90] sm:$0xff]
        %v235 = vld [vmem:[%s165 + $0x98] sm:$0xff]
        %v236 = vld [vmem:[%s165 + $0xa0] sm:$0xff]
        %v237 = vld [vmem:[%s165 + $0xa8] sm:$0xff]
        %v238 = vld [vmem:[%s165 + $0xb0] sm:$0xff]
        %v239 = vld [vmem:[%s165 + $0xb8] sm:$0xff]
        %v240 = vld [vmem:[%s165 + $0xc0] sm:$0xff]
        %v241 = vld [vmem:[%s165 + $0xc8] sm:$0xff]
        %v242 = vld [vmem:[%s165 + $0xd0] sm:$0xff]
        %v243 = vld [vmem:[%s165 + $0xd8] sm:$0xff]
        %v244 = vld [vmem:[%s165 + $0xe0] sm:$0xff]
        %v245 = vld [vmem:[%s165 + $0xe8] sm:$0xff]
        %v246 = vld [vmem:[%s165 + $0xf0] sm:$0xff]
        %v247 = vld [vmem:[%s165 + $0xf8] sm:$0xff]
        %v248 = vld [vmem:[%s165 + $0x100] sm:$0xff]
        %v249 = vld [vmem:[%s165 + $0x108] sm:$0xff]
        %v250 = vld [vmem:[%s165 + $0x110] sm:$0xff]
        %v251 = vld [vmem:[%s165 + $0x118] sm:$0xff]
        %v252 = vld [vmem:[%s165 + $0x120] sm:$0xff]
        %v253 = vld [vmem:[%s165 + $0x128] sm:$0xff]
        %v254 = vld [vmem:[%s165 + $0x130] sm:$0xff]
        %v255 = vld [vmem:[%s165 + $0x138] sm:$0xff]
        %v256 = vld [vmem:[%s165 + $0x140] sm:$0xff]
        %v257 = vld [vmem:[%s165 + $0x148] sm:$0xff]
        %v258 = vld [vmem:[%s165 + $0x150] sm:$0xff]
        %v259 = vld [vmem:[%s165 + $0x158] sm:$0xff]
        %v260 = vld [vmem:[%s165 + $0x160] sm:$0xff]
        %v261 = vld [vmem:[%s165 + $0x168] sm:$0xff]
        %v262 = vld [vmem:[%s165 + $0x170] sm:$0xff]
        %v263 = vld [vmem:[%s165 + $0x178] sm:$0xff]
        %v264 = vld [vmem:[%s165 + $0x180] sm:$0xff]
        %v265 = vld [vmem:[%s165 + $0x188] sm:$0xff]
        %v266 = vld [vmem:[%s165 + $0x190] sm:$0xff]
        %v267 = vld [vmem:[%s165 + $0x198] sm:$0xff]
        %v268 = vld [vmem:[%s165 + $0x1a0] sm:$0xff]
        %v269 = vld [vmem:[%s165 + $0x1a8] sm:$0xff]
        %v270 = vld [vmem:[%s165 + $0x1b0] sm:$0xff]
        %v271 = vld [vmem:[%s165 + $0x1b8] sm:$0xff]
        %v272 = vld [vmem:[%s165 + $0x1c0] sm:$0xff]
        %v273 = vld [vmem:[%s165 + $0x1c8] sm:$0xff]
        %v274 = vld [vmem:[%s165 + $0x1d0] sm:$0xff]
        %v275 = vld [vmem:[%s165 + $0x1d8] sm:$0xff]
        %v276 = vld [vmem:[%s165 + $0x1e0] sm:$0xff]
        %v277 = vld [vmem:[%s165 + $0x1e8] sm:$0xff]
        %v278 = vld [vmem:[%s165 + $0x1f0] sm:$0xff]
        %v279 = vld [vmem:[%s165 + $0x1f8] sm:$0xff]
        %v280 = vld [vmem:[%s165 + $0x200] sm:$0xff]
        %v281 = vld [vmem:[%s165 + $0x208] sm:$0xff]
        %v282 = vld [vmem:[%s165 + $0x210] sm:$0xff]
        %v283 = vld [vmem:[%s165 + $0x218] sm:$0xff]
        %v284 = vld [vmem:[%s165 + $0x220] sm:$0xff]
        %v285 = vld [vmem:[%s165 + $0x228] sm:$0xff]
        %v286 = vld [vmem:[%s165 + $0x230] sm:$0xff]
        %v287 = vld [vmem:[%s165 + $0x238] sm:$0xff]
        %v288 = vld [vmem:[%s165 + $0x240] sm:$0xff]
        %v289 = vld [vmem:[%s165 + $0x248] sm:$0xff]
        %v290 = vld [vmem:[%s165 + $0x250] sm:$0xff]
        %v291 = vld [vmem:[%s165 + $0x258] sm:$0xff]
        %v292 = vld [vmem:[%s165 + $0x260] sm:$0xff]
        %v293 = vld [vmem:[%s165 + $0x268] sm:$0xff]
        %v294 = vld [vmem:[%s165 + $0x270] sm:$0xff]
        %v295 = vld [vmem:[%s165 + $0x278] sm:$0xff]
        %v296 = vld [vmem:[%s165 + $0x280] sm:$0xff]
        %v297 = vld [vmem:[%s165 + $0x288] sm:$0xff]
        %v298 = vld [vmem:[%s165 + $0x290] sm:$0xff]
        %v299 = vld [vmem:[%s165 + $0x298] sm:$0xff]
        %v300 = vld [vmem:[%s165 + $0x2a0] sm:$0xff]
        %v301 = vld [vmem:[%s165 + $0x2a8] sm:$0xff]
        %v302 = vld [vmem:[%s165 + $0x2b0] sm:$0xff]
        %v303 = vld [vmem:[%s165 + $0x2b8] sm:$0xff]
        %v304 = vld [vmem:[%s165 + $0x2c0] sm:$0xff]
        %v305 = vld [vmem:[%s165 + $0x2c8] sm:$0xff]
        %v306 = vld [vmem:[%s165 + $0x2d0] sm:$0xff]
        %v307 = vld [vmem:[%s165 + $0x2d8] sm:$0xff]
        %v308 = vld [vmem:[%s165 + $0x2e0] sm:$0xff]
        %v309 = vld [vmem:[%s165 + $0x2e8] sm:$0xff]
        %v310 = vld [vmem:[%s165 + $0x2f0] sm:$0xff]
        %v311 = vld [vmem:[%s165 + $0x2f8] sm:$0xff]
        %v312 = vld [vmem:[%s165 + $0x300] sm:$0xff]
        %v313 = vld [vmem:[%s165 + $0x308] sm:$0xff]
        %v314 = vld [vmem:[%s165 + $0x310] sm:$0xff]
        %v315 = vld [vmem:[%s165 + $0x318] sm:$0xff]
        %v316 = vld [vmem:[%s165 + $0x320] sm:$0xff]
        %v317 = vld [vmem:[%s165 + $0x328] sm:$0xff]
        %v318 = vld [vmem:[%s165 + $0x330] sm:$0xff]
        %v319 = vld [vmem:[%s165 + $0x338] sm:$0xff]
        %v320 = vld [vmem:[%s165 + $0x340] sm:$0xff]
        %v321 = vld [vmem:[%s165 + $0x348] sm:$0xff]
        %v322 = vld [vmem:[%s165 + $0x350] sm:$0xff]
        %v323 = vld [vmem:[%s165 + $0x358] sm:$0xff]
        %v324 = vld [vmem:[%s165 + $0x360] sm:$0xff]
        %v325 = vld [vmem:[%s165 + $0x368] sm:$0xff]
        %v326 = vld [vmem:[%s165 + $0x370] sm:$0xff]
        %v327 = vld [vmem:[%s165 + $0x378] sm:$0xff]
        %v328 = vld [vmem:[%s165 + $0x380] sm:$0xff]
        %v329 = vld [vmem:[%s165 + $0x388] sm:$0xff]
        %v330 = vld [vmem:[%s165 + $0x390] sm:$0xff]
        %v331 = vld [vmem:[%s165 + $0x398] sm:$0xff]
        %v332 = vld [vmem:[%s165 + $0x3a0] sm:$0xff]
        %v333 = vld [vmem:[%s165 + $0x3a8] sm:$0xff]
        %v334 = vld [vmem:[%s165 + $0x3b0] sm:$0xff]
        %v335 = vld [vmem:[%s165 + $0x3b8] sm:$0xff]
        %v336 = vld [vmem:[%s165 + $0x3c0] sm:$0xff]
        %v337 = vld [vmem:[%s165 + $0x3c8] sm:$0xff]
        %v338 = vld [vmem:[%s165 + $0x3d0] sm:$0xff]
        %v339 = vld [vmem:[%s165 + $0x3d8] sm:$0xff]
        %v340 = vld [vmem:[%s165 + $0x3e0] sm:$0xff]
        %v341 = vld [vmem:[%s165 + $0x3e8] sm:$0xff]
        %v342 = vld [vmem:[%s165 + $0x3f0] sm:$0xff]
        %v343 = vld [vmem:[%s165 + $0x3f8] sm:$0xff]
        %v344 = vld [vmem:[%s165 + $0x400] sm:$0xff]
        %v345 = vld [vmem:[%s165 + $0x408] sm:$0xff]
        %v346 = vld [vmem:[%s165 + $0x410] sm:$0xff]
        %v347 = vld [vmem:[%s165 + $0x418] sm:$0xff]
        %v348 = vld [vmem:[%s165 + $0x420] sm:$0xff]
        %v349 = vld [vmem:[%s165 + $0x428] sm:$0xff]
        %v350 = vld [vmem:[%s165 + $0x430] sm:$0xff]
        %v351 = vld [vmem:[%s165 + $0x438] sm:$0xff]
        %v352 = vld [vmem:[%s165 + $0x440] sm:$0xff]
        %v353 = vld [vmem:[%s165 + $0x448] sm:$0xff]
        %v354 = vld [vmem:[%s165 + $0x450] sm:$0xff]
        %v355 = vld [vmem:[%s165 + $0x458] sm:$0xff]
        %v356 = vld [vmem:[%s165 + $0x460] sm:$0xff]
        %v357 = vld [vmem:[%s165 + $0x468] sm:$0xff]
        %v358 = vld [vmem:[%s165 + $0x470] sm:$0xff]
        %v359 = vld [vmem:[%s165 + $0x478] sm:$0xff]
        %v360 = vld [vmem:[%s165 + $0x480] sm:$0xff]
        %v361 = vld [vmem:[%s165 + $0x488] sm:$0xff]
        %v362 = vld [vmem:[%s165 + $0x490] sm:$0xff]
        %v363 = vld [vmem:[%s165 + $0x498] sm:$0xff]
        %v364 = vld [vmem:[%s165 + $0x4a0] sm:$0xff]
        %v365 = vld [vmem:[%s165 + $0x4a8] sm:$0xff]
        %v366 = vld [vmem:[%s165 + $0x4b0] sm:$0xff]
        %v367 = vld [vmem:[%s165 + $0x4b8] sm:$0xff]
        %v368 = vld [vmem:[%s165 + $0x4c0] sm:$0xff]
        %v369 = vld [vmem:[%s165 + $0x4c8] sm:$0xff]
        %v370 = vld [vmem:[%s165 + $0x4d0] sm:$0xff]
        %v371 = vld [vmem:[%s165 + $0x4d8] sm:$0xff]
        %v372 = vld [vmem:[%s165 + $0x4e0] sm:$0xff]
        %v373 = vld [vmem:[%s165 + $0x4e8] sm:$0xff]
        %v374 = vld [vmem:[%s165 + $0x4f0] sm:$0xff]
        %v375 = vld [vmem:[%s165 + $0x4f8] sm:$0xff]
        %v376 = vld [vmem:[%s165 + $0x500] sm:$0xff]
        %v377 = vld [vmem:[%s165 + $0x508] sm:$0xff]
        %v378 = vld [vmem:[%s165 + $0x510] sm:$0xff]
        %v379 = vld [vmem:[%s165 + $0x518] sm:$0xff]
        %v380 = vld [vmem:[%s165 + $0x520] sm:$0xff]
        %v381 = vld [vmem:[%s165 + $0x528] sm:$0xff]
        %v382 = vld [vmem:[%s165 + $0x530] sm:$0xff]
        %v383 = vld [vmem:[%s165 + $0x538] sm:$0xff]
        %v384 = vld [vmem:[%s165 + $0x540] sm:$0xff]
        %v385 = vld [vmem:[%s165 + $0x548] sm:$0xff]
        %v386 = vld [vmem:[%s165 + $0x550] sm:$0xff]
        %v387 = vld [vmem:[%s165 + $0x558] sm:$0xff]
        %v388 = vld [vmem:[%s165 + $0x560] sm:$0xff]
        %v389 = vld [vmem:[%s165 + $0x568] sm:$0xff]
        %v390 = vld [vmem:[%s165 + $0x570] sm:$0xff]
        %v391 = vld [vmem:[%s165 + $0x578] sm:$0xff]
        %v392 = vld [vmem:[%s165 + $0x580] sm:$0xff]
        %v393 = vld [vmem:[%s165 + $0x588] sm:$0xff]
        %v394 = vld [vmem:[%s165 + $0x590] sm:$0xff]
        %v395 = vld [vmem:[%s165 + $0x598] sm:$0xff]
        %v396 = vld [vmem:[%s165 + $0x5a0] sm:$0xff]
        %v397 = vld [vmem:[%s165 + $0x5a8] sm:$0xff]
        %v398 = vld [vmem:[%s165 + $0x5b0] sm:$0xff]
        %v399 = vld [vmem:[%s165 + $0x5b8] sm:$0xff]
        %v400 = vld [vmem:[%s165 + $0x5c0] sm:$0xff]
        %v401 = vld [vmem:[%s165 + $0x5c8] sm:$0xff]
        %v402 = vld [vmem:[%s165 + $0x5d0] sm:$0xff]
        %v403 = vld [vmem:[%s165 + $0x5d8] sm:$0xff]
        %v404 = vld [vmem:[%s165 + $0x5e0] sm:$0xff]
        %v405 = vld [vmem:[%s165 + $0x5e8] sm:$0xff]
        %v406 = vld [vmem:[%s165 + $0x5f0] sm:$0xff]
        %v407 = vld [vmem:[%s165 + $0x5f8] sm:$0xff]
        %v408 = vld [vmem:[%s165 + $0x600] sm:$0xff]
        %v409 = vld [vmem:[%s165 + $0x608] sm:$0xff]
        %v410 = vld [vmem:[%s165 + $0x610] sm:$0xff]
        %v411 = vld [vmem:[%s165 + $0x618] sm:$0xff]
        %v412 = vld [vmem:[%s165 + $0x620] sm:$0xff]
        %v413 = vld [vmem:[%s165 + $0x628] sm:$0xff]
        %v414 = vld [vmem:[%s165 + $0x630] sm:$0xff]
        %v415 = vld [vmem:[%s165 + $0x638] sm:$0xff]
        %v416 = vld [vmem:[%s165 + $0x640] sm:$0xff]
        %v417 = vld [vmem:[%s165 + $0x648] sm:$0xff]
        %v418 = vld [vmem:[%s165 + $0x650] sm:$0xff]
        %v419 = vld [vmem:[%s165 + $0x658] sm:$0xff]
        %v420 = vld [vmem:[%s165 + $0x660] sm:$0xff]
        %v421 = vld [vmem:[%s165 + $0x668] sm:$0xff]
        %v422 = vld [vmem:[%s165 + $0x670] sm:$0xff]
        %v423 = vld [vmem:[%s165 + $0x678] sm:$0xff]
        %v424 = vld [vmem:[%s165 + $0x680] sm:$0xff]
        %v425 = vld [vmem:[%s165 + $0x688] sm:$0xff]
        %v426 = vld [vmem:[%s165 + $0x690] sm:$0xff]
        %v427 = vld [vmem:[%s165 + $0x698] sm:$0xff]
        %v428 = vld [vmem:[%s165 + $0x6a0] sm:$0xff]
        %v429 = vld [vmem:[%s165 + $0x6a8] sm:$0xff]
        %v430 = vld [vmem:[%s165 + $0x6b0] sm:$0xff]
        %v431 = vld [vmem:[%s165 + $0x6b8] sm:$0xff]
        %v432 = vld [vmem:[%s165 + $0x6c0] sm:$0xff]
        %v433 = vld [vmem:[%s165 + $0x6c8] sm:$0xff]
        %v434 = vld [vmem:[%s165 + $0x6d0] sm:$0xff]
        %v435 = vld [vmem:[%s165 + $0x6d8] sm:$0xff]
        %v436 = vld [vmem:[%s165 + $0x6e0] sm:$0xff]
        %v437 = vld [vmem:[%s165 + $0x6e8] sm:$0xff]
        %v438 = vld [vmem:[%s165 + $0x6f0] sm:$0xff]
        %v439 = vld [vmem:[%s165 + $0x6f8] sm:$0xff]
        %v440 = vld [vmem:[%s165 + $0x700] sm:$0xff]
        %v441 = vld [vmem:[%s165 + $0x708] sm:$0xff]
        %v442 = vld [vmem:[%s165 + $0x710] sm:$0xff]
        %v443 = vld [vmem:[%s165 + $0x718] sm:$0xff]
        %v444 = vld [vmem:[%s165 + $0x720] sm:$0xff]
        %v445 = vld [vmem:[%s165 + $0x728] sm:$0xff]
        %v446 = vld [vmem:[%s165 + $0x730] sm:$0xff]
        %v447 = vld [vmem:[%s165 + $0x738] sm:$0xff]
        %v448 = vld [vmem:[%s165 + $0x740] sm:$0xff]
        %v449 = vld [vmem:[%s165 + $0x748] sm:$0xff]
        %v450 = vld [vmem:[%s165 + $0x750] sm:$0xff]
        %v451 = vld [vmem:[%s165 + $0x758] sm:$0xff]
        %v452 = vld [vmem:[%s165 + $0x760] sm:$0xff]
        %v453 = vld [vmem:[%s165 + $0x768] sm:$0xff]
        %v454 = vld [vmem:[%s165 + $0x770] sm:$0xff]
        %v455 = vld [vmem:[%s165 + $0x778] sm:$0xff]
        %v456 = vld [vmem:[%s165 + $0x780] sm:$0xff]
        %v457 = vld [vmem:[%s165 + $0x788] sm:$0xff]
        %v458 = vld [vmem:[%s165 + $0x790] sm:$0xff]
        %v459 = vld [vmem:[%s165 + $0x798] sm:$0xff]
        %v460 = vld [vmem:[%s165 + $0x7a0] sm:$0xff]
        %v461 = vld [vmem:[%s165 + $0x7a8] sm:$0xff]
        %v462 = vld [vmem:[%s165 + $0x7b0] sm:$0xff]
        %v463 = vld [vmem:[%s165 + $0x7b8] sm:$0xff]
        %v464 = vld [vmem:[%s165 + $0x7c0] sm:$0xff]
        %v465 = vld [vmem:[%s165 + $0x7c8] sm:$0xff]
        %v466 = vld [vmem:[%s165 + $0x7d0] sm:$0xff]
        %v467 = vld [vmem:[%s165 + $0x7d8] sm:$0xff]
        %v468 = vld [vmem:[%s165 + $0x7e0] sm:$0xff]
        %v469 = vld [vmem:[%s165 + $0x7e8] sm:$0xff]
        %v470 = vld [vmem:[%s165 + $0x7f0] sm:$0xff]
        %v471 = vld [vmem:[%s165 + $0x7f8] sm:$0xff]
        %v472 = vld [vmem:[%s165 + $0x800] sm:$0xff]
        %v473 = vld [vmem:[%s165 + $0x808] sm:$0xff]
        %v474 = vld [vmem:[%s165 + $0x810] sm:$0xff]
        %v475 = vld [vmem:[%s165 + $0x818] sm:$0xff]
        %v476 = vld [vmem:[%s165 + $0x820] sm:$0xff]
        %v477 = vld [vmem:[%s165 + $0x828] sm:$0xff]
        %v478 = vld [vmem:[%s165 + $0x830] sm:$0xff]
        %v479 = vld [vmem:[%s165 + $0x838] sm:$0xff]
        %v480 = vld [vmem:[%s165 + $0x840] sm:$0xff]
        %v481 = vld [vmem:[%s165 + $0x848] sm:$0xff]
        %v482 = vld [vmem:[%s165 + $0x850] sm:$0xff]
        %v483 = vld [vmem:[%s165 + $0x858] sm:$0xff]
        %v484 = vld [vmem:[%s165 + $0x860] sm:$0xff]
        %v485 = vld [vmem:[%s165 + $0x868] sm:$0xff]
        %v486 = vld [vmem:[%s165 + $0x870] sm:$0xff]
        %v487 = vld [vmem:[%s165 + $0x878] sm:$0xff]
        %v488 = vld [vmem:[%s165 + $0x880] sm:$0xff]
        %v489 = vld [vmem:[%s165 + $0x888] sm:$0xff]
        %v490 = vld [vmem:[%s165 + $0x890] sm:$0xff]
        %v491 = vld [vmem:[%s165 + $0x898] sm:$0xff]
        %v492 = vld [vmem:[%s165 + $0x8a0] sm:$0xff]
        %v493 = vld [vmem:[%s165 + $0x8a8] sm:$0xff]
        %v494 = vld [vmem:[%s165 + $0x8b0] sm:$0xff]
        %v495 = vld [vmem:[%s165 + $0x8b8] sm:$0xff]
        %v496 = vld [vmem:[%s165 + $0x8c0] sm:$0xff]
        %v497 = vld [vmem:[%s165 + $0x8c8] sm:$0xff]
        %v498 = vld [vmem:[%s165 + $0x8d0] sm:$0xff]
        %v499 = vld [vmem:[%s165 + $0x8d8] sm:$0xff]
        %v500 = vld [vmem:[%s165 + $0x8e0] sm:$0xff]
        %v501 = vld [vmem:[%s165 + $0x8e8] sm:$0xff]
        %v502 = vld [vmem:[%s165 + $0x8f0] sm:$0xff]
        %v503 = vld [vmem:[%s165 + $0x8f8] sm:$0xff]
        %v504 = vld [vmem:[%s165 + $0x900] sm:$0xff]
        %v505 = vld [vmem:[%s165 + $0x908] sm:$0xff]
        %v506 = vld [vmem:[%s165 + $0x910] sm:$0xff]
        %v507 = vld [vmem:[%s165 + $0x918] sm:$0xff]
        %v508 = vld [vmem:[%s165 + $0x920] sm:$0xff]
        %v509 = vld [vmem:[%s165 + $0x928] sm:$0xff]
        %v510 = vld [vmem:[%s165 + $0x930] sm:$0xff]
        %v511 = vld [vmem:[%s165 + $0x938] sm:$0xff]
        %v512 = vld [vmem:[%s165 + $0x940] sm:$0xff]
        %v513 = vld [vmem:[%s165 + $0x948] sm:$0xff]
        %v514 = vld [vmem:[%s165 + $0x950] sm:$0xff]
        %v515 = vld [vmem:[%s165 + $0x958] sm:$0xff]
        %v516 = vld [vmem:[%s165 + $0x960] sm:$0xff]
        %v517 = vld [vmem:[%s165 + $0x968] sm:$0xff]
        %v518 = vld [vmem:[%s165 + $0x970] sm:$0xff]
        %v519 = vld [vmem:[%s165 + $0x978] sm:$0xff]
        %v520 = vld [vmem:[%s165 + $0x980] sm:$0xff]
        %v521 = vld [vmem:[%s165 + $0x988] sm:$0xff]
        %v522 = vld [vmem:[%s165 + $0x990] sm:$0xff]
        %v523 = vld [vmem:[%s165 + $0x998] sm:$0xff]
        %v524 = vld [vmem:[%s165 + $0x9a0] sm:$0xff]
        %v525 = vld [vmem:[%s165 + $0x9a8] sm:$0xff]
        %v526 = vld [vmem:[%s165 + $0x9b0] sm:$0xff]
        %v527 = vld [vmem:[%s165 + $0x9b8] sm:$0xff]
        %v528 = vld [vmem:[%s165 + $0x9c0] sm:$0xff]
        %v529 = vld [vmem:[%s165 + $0x9c8] sm:$0xff]
        %v530 = vld [vmem:[%s165 + $0x9d0] sm:$0xff]
        %v531 = vld [vmem:[%s165 + $0x9d8] sm:$0xff]
        %v532 = vld [vmem:[%s165 + $0x9e0] sm:$0xff]
        %v533 = vld [vmem:[%s165 + $0x9e8] sm:$0xff]
        %v534 = vld [vmem:[%s165 + $0x9f0] sm:$0xff]
        %v535 = vld [vmem:[%s165 + $0x9f8] sm:$0xff]
        %v536 = vld [vmem:[%s165 + $0xa00] sm:$0xff]
        %v537 = vld [vmem:[%s165 + $0xa08] sm:$0xff]
        %v538 = vld [vmem:[%s165 + $0xa10] sm:$0xff]
        %v539 = vld [vmem:[%s165 + $0xa18] sm:$0xff]
        %v540 = vld [vmem:[%s165 + $0xa20] sm:$0xff]
        %v541 = vld [vmem:[%s165 + $0xa28] sm:$0xff]
        %v542 = vld [vmem:[%s165 + $0xa30] sm:$0xff]
        %v543 = vld [vmem:[%s165 + $0xa38] sm:$0xff]
        %v544 = vld [vmem:[%s165 + $0xa40] sm:$0xff]
        %v545 = vld [vmem:[%s165 + $0xa48] sm:$0xff]
        %v546 = vld [vmem:[%s165 + $0xa50] sm:$0xff]
        %v547 = vld [vmem:[%s165 + $0xa58] sm:$0xff]
        %v548 = vld [vmem:[%s165 + $0xa60] sm:$0xff]
        %v549 = vld [vmem:[%s165 + $0xa68] sm:$0xff]
        %v550 = vld [vmem:[%s165 + $0xa70] sm:$0xff]
        %v551 = vld [vmem:[%s165 + $0xa78] sm:$0xff]
        %v552 = vld [vmem:[%s165 + $0xa80] sm:$0xff]
        %v553 = vld [vmem:[%s165 + $0xa88] sm:$0xff]
        %v554 = vld [vmem:[%s165 + $0xa90] sm:$0xff]
        %v555 = vld [vmem:[%s165 + $0xa98] sm:$0xff]
        %v556 = vld [vmem:[%s165 + $0xaa0] sm:$0xff]
        %v557 = vld [vmem:[%s165 + $0xaa8] sm:$0xff]
        %v558 = vld [vmem:[%s165 + $0xab0] sm:$0xff]
        %v559 = vld [vmem:[%s165 + $0xab8] sm:$0xff]
        %v560 = vld [vmem:[%s165 + $0xac0] sm:$0xff]
        %v561 = vld [vmem:[%s165 + $0xac8] sm:$0xff]
        %v562 = vld [vmem:[%s165 + $0xad0] sm:$0xff]
        %v563 = vld [vmem:[%s165 + $0xad8] sm:$0xff]
        %v564 = vld [vmem:[%s165 + $0xae0] sm:$0xff]
        %v565 = vld [vmem:[%s165 + $0xae8] sm:$0xff]
        %v566 = vld [vmem:[%s165 + $0xaf0] sm:$0xff]
        %v567 = vld [vmem:[%s165 + $0xaf8] sm:$0xff]
        %v568 = vld [vmem:[%s165 + $0xb00] sm:$0xff]
        %v569 = vld [vmem:[%s165 + $0xb08] sm:$0xff]
        %v570 = vld [vmem:[%s165 + $0xb10] sm:$0xff]
        %v571 = vld [vmem:[%s165 + $0xb18] sm:$0xff]
        %v572 = vld [vmem:[%s165 + $0xb20] sm:$0xff]
        %v573 = vld [vmem:[%s165 + $0xb28] sm:$0xff]
        %v574 = vld [vmem:[%s165 + $0xb30] sm:$0xff]
        %v575 = vld [vmem:[%s165 + $0xb38] sm:$0xff]
        %v576 = vld [vmem:[%s165 + $0xb40] sm:$0xff]
        %v577 = vld [vmem:[%s165 + $0xb48] sm:$0xff]
        %v578 = vld [vmem:[%s165 + $0xb50] sm:$0xff]
        %v579 = vld [vmem:[%s165 + $0xb58] sm:$0xff]
        %v580 = vld [vmem:[%s165 + $0xb60] sm:$0xff]
        %v581 = vld [vmem:[%s165 + $0xb68] sm:$0xff]
        %v582 = vld [vmem:[%s165 + $0xb70] sm:$0xff]
        %v583 = vld [vmem:[%s165 + $0xb78] sm:$0xff]
        %v584 = vld [vmem:[%s165 + $0xb80] sm:$0xff]
        %v585 = vld [vmem:[%s165 + $0xb88] sm:$0xff]
        %v586 = vld [vmem:[%s165 + $0xb90] sm:$0xff]
        %v587 = vld [vmem:[%s165 + $0xb98] sm:$0xff]
        %v588 = vld [vmem:[%s165 + $0xba0] sm:$0xff]
        %v589 = vld [vmem:[%s165 + $0xba8] sm:$0xff]
        %v590 = vld [vmem:[%s165 + $0xbb0] sm:$0xff]
        %v591 = vld [vmem:[%s165 + $0xbb8] sm:$0xff]
        %v592 = vld [vmem:[%s165 + $0xbc0] sm:$0xff]
        %v593 = vld [vmem:[%s165 + $0xbc8] sm:$0xff]
        %v594 = vld [vmem:[%s165 + $0xbd0] sm:$0xff]
        %v595 = vld [vmem:[%s165 + $0xbd8] sm:$0xff]
        %v596 = vld [vmem:[%s165 + $0xbe0] sm:$0xff]
        %v597 = vld [vmem:[%s165 + $0xbe8] sm:$0xff]
        %v598 = vld [vmem:[%s165 + $0xbf0] sm:$0xff]
        %v599 = vld [vmem:[%s165 + $0xbf8] sm:$0xff]
        %v600 = vld [vmem:[%s165 + $0xc00] sm:$0xff]
        %v601 = vld [vmem:[%s165 + $0xc08] sm:$0xff]
        %v602 = vld [vmem:[%s165 + $0xc10] sm:$0xff]
        %v603 = vld [vmem:[%s165 + $0xc18] sm:$0xff]
        %v604 = vld [vmem:[%s165 + $0xc20] sm:$0xff]
        %v605 = vld [vmem:[%s165 + $0xc28] sm:$0xff]
        %v606 = vld [vmem:[%s165 + $0xc30] sm:$0xff]
        %v607 = vld [vmem:[%s165 + $0xc38] sm:$0xff]
        %v608 = vld [vmem:[%s165 + $0xc40] sm:$0xff]
        %v609 = vld [vmem:[%s165 + $0xc48] sm:$0xff]
        %v610 = vld [vmem:[%s165 + $0xc50] sm:$0xff]
        %v611 = vld [vmem:[%s165 + $0xc58] sm:$0xff]
        %v612 = vld [vmem:[%s165 + $0xc60] sm:$0xff]
        %v613 = vld [vmem:[%s165 + $0xc68] sm:$0xff]
        %v614 = vld [vmem:[%s165 + $0xc70] sm:$0xff]
        %v615 = vld [vmem:[%s165 + $0xc78] sm:$0xff]
        %v616 = vld [vmem:[%s165 + $0xc80] sm:$0xff]
        %v617 = vld [vmem:[%s165 + $0xc88] sm:$0xff]
        %v618 = vld [vmem:[%s165 + $0xc90] sm:$0xff]
        %v619 = vld [vmem:[%s165 + $0xc98] sm:$0xff]
        %v620 = vld [vmem:[%s165 + $0xca0] sm:$0xff]
        %v621 = vld [vmem:[%s165 + $0xca8] sm:$0xff]
        %v622 = vld [vmem:[%s165 + $0xcb0] sm:$0xff]
        %v623 = vld [vmem:[%s165 + $0xcb8] sm:$0xff]
        %v624 = vld [vmem:[%s165 + $0xcc0] sm:$0xff]
        %v625 = vld [vmem:[%s165 + $0xcc8] sm:$0xff]
        %v626 = vld [vmem:[%s165 + $0xcd0] sm:$0xff]
        %v627 = vld [vmem:[%s165 + $0xcd8] sm:$0xff]
        %v628 = vld [vmem:[%s165 + $0xce0] sm:$0xff]
        %v629 = vld [vmem:[%s165 + $0xce8] sm:$0xff]
        %v630 = vld [vmem:[%s165 + $0xcf0] sm:$0xff]
        %v631 = vld [vmem:[%s165 + $0xcf8] sm:$0xff]
        %v632 = vld [vmem:[%s165 + $0xd00] sm:$0xff]
        %v633 = vld [vmem:[%s165 + $0xd08] sm:$0xff]
        %v634 = vld [vmem:[%s165 + $0xd10] sm:$0xff]
        %v635 = vld [vmem:[%s165 + $0xd18] sm:$0xff]
        %v636 = vld [vmem:[%s165 + $0xd20] sm:$0xff]
        %v637 = vld [vmem:[%s165 + $0xd28] sm:$0xff]
        %v638 = vld [vmem:[%s165 + $0xd30] sm:$0xff]
        %v639 = vld [vmem:[%s165 + $0xd38] sm:$0xff]
        %v640 = vld [vmem:[%s165 + $0xd40] sm:$0xff]
        %v641 = vld [vmem:[%s165 + $0xd48] sm:$0xff]
        %v642 = vld [vmem:[%s165 + $0xd50] sm:$0xff]
        %v643 = vld [vmem:[%s165 + $0xd58] sm:$0xff]
        %v644 = vld [vmem:[%s165 + $0xd60] sm:$0xff]
        %v645 = vld [vmem:[%s165 + $0xd68] sm:$0xff]
        %v646 = vld [vmem:[%s165 + $0xd70] sm:$0xff]
        %v647 = vld [vmem:[%s165 + $0xd78] sm:$0xff]
        %v648 = vld [vmem:[%s165 + $0xd80] sm:$0xff]
        %v649 = vld [vmem:[%s165 + $0xd88] sm:$0xff]
        %v650 = vld [vmem:[%s165 + $0xd90] sm:$0xff]
        %v651 = vld [vmem:[%s165 + $0xd98] sm:$0xff]
        %v652 = vld [vmem:[%s165 + $0xda0] sm:$0xff]
        %v653 = vld [vmem:[%s165 + $0xda8] sm:$0xff]
        %v654 = vld [vmem:[%s165 + $0xdb0] sm:$0xff]
        %v655 = vld [vmem:[%s165 + $0xdb8] sm:$0xff]
        %v656 = vld [vmem:[%s165 + $0xdc0] sm:$0xff]
        %v657 = vld [vmem:[%s165 + $0xdc8] sm:$0xff]
        %v658 = vld [vmem:[%s165 + $0xdd0] sm:$0xff]
        %v659 = vld [vmem:[%s165 + $0xdd8] sm:$0xff]
        %v660 = vld [vmem:[%s165 + $0xde0] sm:$0xff]
        %v661 = vld [vmem:[%s165 + $0xde8] sm:$0xff]
        %v662 = vld [vmem:[%s165 + $0xdf0] sm:$0xff]
        %v663 = vld [vmem:[%s165 + $0xdf8] sm:$0xff]
        %v664 = vld [vmem:[%s165 + $0xe00] sm:$0xff]
        %v665 = vld [vmem:[%s165 + $0xe08] sm:$0xff]
        %v666 = vld [vmem:[%s165 + $0xe10] sm:$0xff]
        %v667 = vld [vmem:[%s165 + $0xe18] sm:$0xff]
        %v668 = vld [vmem:[%s165 + $0xe20] sm:$0xff]
        %v669 = vld [vmem:[%s165 + $0xe28] sm:$0xff]
        %v670 = vld [vmem:[%s165 + $0xe30] sm:$0xff]
        %v671 = vld [vmem:[%s165 + $0xe38] sm:$0xff]
        %v672 = vld [vmem:[%s165 + $0xe40] sm:$0xff]
        %v673 = vld [vmem:[%s165 + $0xe48] sm:$0xff]
        %v674 = vld [vmem:[%s165 + $0xe50] sm:$0xff]
        %v675 = vld [vmem:[%s165 + $0xe58] sm:$0xff]
        %v676 = vld [vmem:[%s165 + $0xe60] sm:$0xff]
        %v677 = vld [vmem:[%s165 + $0xe68] sm:$0xff]
        %v678 = vld [vmem:[%s165 + $0xe70] sm:$0xff]
        %v679 = vld [vmem:[%s165 + $0xe78] sm:$0xff]
        %v680 = vld [vmem:[%s165 + $0xe80] sm:$0xff]
        %v681 = vld [vmem:[%s165 + $0xe88] sm:$0xff]
        %v682 = vld [vmem:[%s165 + $0xe90] sm:$0xff]
        %v683 = vld [vmem:[%s165 + $0xe98] sm:$0xff]
        %v684 = vld [vmem:[%s165 + $0xea0] sm:$0xff]
        %v685 = vld [vmem:[%s165 + $0xea8] sm:$0xff]
        %v686 = vld [vmem:[%s165 + $0xeb0] sm:$0xff]
        %v687 = vld [vmem:[%s165 + $0xeb8] sm:$0xff]
        %v688 = vld [vmem:[%s165 + $0xec0] sm:$0xff]
        %v689 = vld [vmem:[%s165 + $0xec8] sm:$0xff]
        %v690 = vld [vmem:[%s165 + $0xed0] sm:$0xff]
        %v691 = vld [vmem:[%s165 + $0xed8] sm:$0xff]
        %v692 = vld [vmem:[%s165 + $0xee0] sm:$0xff]
        %v693 = vld [vmem:[%s165 + $0xee8] sm:$0xff]
        %v694 = vld [vmem:[%s165 + $0xef0] sm:$0xff]
        %v695 = vld [vmem:[%s165 + $0xef8] sm:$0xff]
        %v696 = vld [vmem:[%s165 + $0xf00] sm:$0xff]
        %v697 = vld [vmem:[%s165 + $0xf08] sm:$0xff]
        %v698 = vld [vmem:[%s165 + $0xf10] sm:$0xff]
        %v699 = vld [vmem:[%s165 + $0xf18] sm:$0xff]
        %v700 = vld [vmem:[%s165 + $0xf20] sm:$0xff]
        %v701 = vld [vmem:[%s165 + $0xf28] sm:$0xff]
        %v702 = vld [vmem:[%s165 + $0xf30] sm:$0xff]
        %v703 = vld [vmem:[%s165 + $0xf38] sm:$0xff]
        %v704 = vld [vmem:[%s165 + $0xf40] sm:$0xff]
        %v705 = vld [vmem:[%s165 + $0xf48] sm:$0xff]
        %v706 = vld [vmem:[%s165 + $0xf50] sm:$0xff]
        %v707 = vld [vmem:[%s165 + $0xf58] sm:$0xff]
        %v708 = vld [vmem:[%s165 + $0xf60] sm:$0xff]
        %v709 = vld [vmem:[%s165 + $0xf68] sm:$0xff]
        %v710 = vld [vmem:[%s165 + $0xf70] sm:$0xff]
        %v711 = vld [vmem:[%s165 + $0xf78] sm:$0xff]
        %v712 = vld [vmem:[%s165 + $0xf80] sm:$0xff]
        %v713 = vld [vmem:[%s165 + $0xf88] sm:$0xff]
        %v714 = vld [vmem:[%s165 + $0xf90] sm:$0xff]
        %v715 = vld [vmem:[%s165 + $0xf98] sm:$0xff]
        %v716 = vld [vmem:[%s165 + $0xfa0] sm:$0xff]
        %v717 = vld [vmem:[%s165 + $0xfa8] sm:$0xff]
        %v718 = vld [vmem:[%s165 + $0xfb0] sm:$0xff]
        %v719 = vld [vmem:[%s165 + $0xfb8] sm:$0xff]
        %v720 = vld [vmem:[%s165 + $0xfc0] sm:$0xff]
        %v721 = vld [vmem:[%s165 + $0xfc8] sm:$0xff]
        %v722 = vld [vmem:[%s165 + $0xfd0] sm:$0xff]
        %v723 = vld [vmem:[%s165 + $0xfd8] sm:$0xff]
        %v724 = vld [vmem:[%s165 + $0xfe0] sm:$0xff]
        %v725 = vld [vmem:[%s165 + $0xfe8] sm:$0xff]
        %v726 = vld [vmem:[%s165 + $0xff0] sm:$0xff]
        %v727 = vld [vmem:[%s165 + $0xff8] sm:$0xff]
        %v728 = vpack.c.bf16 %v217, %v216
        %v729 = vpack.c.bf16 %v219, %v218
        %v730 = vpack.c.bf16 %v221, %v220
        %v731 = vpack.c.bf16 %v223, %v222
        %v732 = vpack.c.bf16 %v225, %v224
        %v733 = vpack.c.bf16 %v227, %v226
        %v734 = vpack.c.bf16 %v229, %v228
        %v735 = vpack.c.bf16 %v231, %v230
        %v736 = vpack.c.bf16 %v233, %v232
        %v737 = vpack.c.bf16 %v235, %v234
        %v738 = vpack.c.bf16 %v237, %v236
        %v739 = vpack.c.bf16 %v239, %v238
        %v740 = vpack.c.bf16 %v241, %v240
        %v741 = vpack.c.bf16 %v243, %v242
        %v742 = vpack.c.bf16 %v245, %v244
        %v743 = vpack.c.bf16 %v247, %v246
        %v744 = vpack.c.bf16 %v249, %v248
        %v745 = vpack.c.bf16 %v251, %v250
        %v746 = vpack.c.bf16 %v253, %v252
        %v747 = vpack.c.bf16 %v255, %v254
        %v748 = vpack.c.bf16 %v257, %v256
        %v749 = vpack.c.bf16 %v259, %v258
        %v750 = vpack.c.bf16 %v261, %v260
        %v751 = vpack.c.bf16 %v263, %v262
        %v752 = vpack.c.bf16 %v265, %v264
        %v753 = vpack.c.bf16 %v267, %v266
        %v754 = vpack.c.bf16 %v269, %v268
        %v755 = vpack.c.bf16 %v271, %v270
        %v756 = vpack.c.bf16 %v273, %v272
        %v757 = vpack.c.bf16 %v275, %v274
        %v758 = vpack.c.bf16 %v277, %v276
        %v759 = vpack.c.bf16 %v279, %v278
        %v760 = vpack.c.bf16 %v281, %v280
        %v761 = vpack.c.bf16 %v283, %v282
        %v762 = vpack.c.bf16 %v285, %v284
        %v763 = vpack.c.bf16 %v287, %v286
        %v764 = vpack.c.bf16 %v289, %v288
        %v765 = vpack.c.bf16 %v291, %v290
        %v766 = vpack.c.bf16 %v293, %v292
        %v767 = vpack.c.bf16 %v295, %v294
        %v768 = vpack.c.bf16 %v297, %v296
        %v769 = vpack.c.bf16 %v299, %v298
        %v770 = vpack.c.bf16 %v301, %v300
        %v771 = vpack.c.bf16 %v303, %v302
        %v772 = vpack.c.bf16 %v305, %v304
        %v773 = vpack.c.bf16 %v307, %v306
        %v774 = vpack.c.bf16 %v309, %v308
        %v775 = vpack.c.bf16 %v311, %v310
        %v776 = vpack.c.bf16 %v313, %v312
        %v777 = vpack.c.bf16 %v315, %v314
        %v778 = vpack.c.bf16 %v317, %v316
        %v779 = vpack.c.bf16 %v319, %v318
        %v780 = vpack.c.bf16 %v321, %v320
        %v781 = vpack.c.bf16 %v323, %v322
        %v782 = vpack.c.bf16 %v325, %v324
        %v783 = vpack.c.bf16 %v327, %v326
        %v784 = vpack.c.bf16 %v329, %v328
        %v785 = vpack.c.bf16 %v331, %v330
        %v786 = vpack.c.bf16 %v333, %v332
        %v787 = vpack.c.bf16 %v335, %v334
        %v788 = vpack.c.bf16 %v337, %v336
        %v789 = vpack.c.bf16 %v339, %v338
        %v790 = vpack.c.bf16 %v341, %v340
        %v791 = vpack.c.bf16 %v343, %v342
        %v792 = vpack.c.bf16 %v345, %v344
        %v793 = vpack.c.bf16 %v347, %v346
        %v794 = vpack.c.bf16 %v349, %v348
        %v795 = vpack.c.bf16 %v351, %v350
        %v796 = vpack.c.bf16 %v353, %v352
        %v797 = vpack.c.bf16 %v355, %v354
        %v798 = vpack.c.bf16 %v357, %v356
        %v799 = vpack.c.bf16 %v359, %v358
        %v800 = vpack.c.bf16 %v361, %v360
        %v801 = vpack.c.bf16 %v363, %v362
        %v802 = vpack.c.bf16 %v365, %v364
        %v803 = vpack.c.bf16 %v367, %v366
        %v804 = vpack.c.bf16 %v369, %v368
        %v805 = vpack.c.bf16 %v371, %v370
        %v806 = vpack.c.bf16 %v373, %v372
        %v807 = vpack.c.bf16 %v375, %v374
        %v808 = vpack.c.bf16 %v377, %v376
        %v809 = vpack.c.bf16 %v379, %v378
        %v810 = vpack.c.bf16 %v381, %v380
        %v811 = vpack.c.bf16 %v383, %v382
        %v812 = vpack.c.bf16 %v385, %v384
        %v813 = vpack.c.bf16 %v387, %v386
        %v814 = vpack.c.bf16 %v389, %v388
        %v815 = vpack.c.bf16 %v391, %v390
        %v816 = vpack.c.bf16 %v393, %v392
        %v817 = vpack.c.bf16 %v395, %v394
        %v818 = vpack.c.bf16 %v397, %v396
        %v819 = vpack.c.bf16 %v399, %v398
        %v820 = vpack.c.bf16 %v401, %v400
        %v821 = vpack.c.bf16 %v403, %v402
        %v822 = vpack.c.bf16 %v405, %v404
        %v823 = vpack.c.bf16 %v407, %v406
        %v824 = vpack.c.bf16 %v409, %v408
        %v825 = vpack.c.bf16 %v411, %v410
        %v826 = vpack.c.bf16 %v413, %v412
        %v827 = vpack.c.bf16 %v415, %v414
        %v828 = vpack.c.bf16 %v417, %v416
        %v829 = vpack.c.bf16 %v419, %v418
        %v830 = vpack.c.bf16 %v421, %v420
        %v831 = vpack.c.bf16 %v423, %v422
        %v832 = vpack.c.bf16 %v425, %v424
        %v833 = vpack.c.bf16 %v427, %v426
        %v834 = vpack.c.bf16 %v429, %v428
        %v835 = vpack.c.bf16 %v431, %v430
        %v836 = vpack.c.bf16 %v433, %v432
        %v837 = vpack.c.bf16 %v435, %v434
        %v838 = vpack.c.bf16 %v437, %v436
        %v839 = vpack.c.bf16 %v439, %v438
        %v840 = vpack.c.bf16 %v441, %v440
        %v841 = vpack.c.bf16 %v443, %v442
        %v842 = vpack.c.bf16 %v445, %v444
        %v843 = vpack.c.bf16 %v447, %v446
        %v844 = vpack.c.bf16 %v449, %v448
        %v845 = vpack.c.bf16 %v451, %v450
        %v846 = vpack.c.bf16 %v453, %v452
        %v847 = vpack.c.bf16 %v455, %v454
        %v848 = vpack.c.bf16 %v457, %v456
        %v849 = vpack.c.bf16 %v459, %v458
        %v850 = vpack.c.bf16 %v461, %v460
        %v851 = vpack.c.bf16 %v463, %v462
        %v852 = vpack.c.bf16 %v465, %v464
        %v853 = vpack.c.bf16 %v467, %v466
        %v854 = vpack.c.bf16 %v469, %v468
        %v855 = vpack.c.bf16 %v471, %v470
        %v856 = vpack.c.bf16 %v473, %v472
        %v857 = vpack.c.bf16 %v475, %v474
        %v858 = vpack.c.bf16 %v477, %v476
        %v859 = vpack.c.bf16 %v479, %v478
        %v860 = vpack.c.bf16 %v481, %v480
        %v861 = vpack.c.bf16 %v483, %v482
        %v862 = vpack.c.bf16 %v485, %v484
        %v863 = vpack.c.bf16 %v487, %v486
        %v864 = vpack.c.bf16 %v489, %v488
        %v865 = vpack.c.bf16 %v491, %v490
        %v866 = vpack.c.bf16 %v493, %v492
        %v867 = vpack.c.bf16 %v495, %v494
        %v868 = vpack.c.bf16 %v497, %v496
        %v869 = vpack.c.bf16 %v499, %v498
        %v870 = vpack.c.bf16 %v501, %v500
        %v871 = vpack.c.bf16 %v503, %v502
        %v872 = vpack.c.bf16 %v505, %v504
        %v873 = vpack.c.bf16 %v507, %v506
        %v874 = vpack.c.bf16 %v509, %v508
        %v875 = vpack.c.bf16 %v511, %v510
        %v876 = vpack.c.bf16 %v513, %v512
        %v877 = vpack.c.bf16 %v515, %v514
        %v878 = vpack.c.bf16 %v517, %v516
        %v879 = vpack.c.bf16 %v519, %v518
        %v880 = vpack.c.bf16 %v521, %v520
        %v881 = vpack.c.bf16 %v523, %v522
        %v882 = vpack.c.bf16 %v525, %v524
        %v883 = vpack.c.bf16 %v527, %v526
        %v884 = vpack.c.bf16 %v529, %v528
        %v885 = vpack.c.bf16 %v531, %v530
        %v886 = vpack.c.bf16 %v533, %v532
        %v887 = vpack.c.bf16 %v535, %v534
        %v888 = vpack.c.bf16 %v537, %v536
        %v889 = vpack.c.bf16 %v539, %v538
        %v890 = vpack.c.bf16 %v541, %v540
        %v891 = vpack.c.bf16 %v543, %v542
        %v892 = vpack.c.bf16 %v545, %v544
        %v893 = vpack.c.bf16 %v547, %v546
        %v894 = vpack.c.bf16 %v549, %v548
        %v895 = vpack.c.bf16 %v551, %v550
        %v896 = vpack.c.bf16 %v553, %v552
        %v897 = vpack.c.bf16 %v555, %v554
        %v898 = vpack.c.bf16 %v557, %v556
        %v899 = vpack.c.bf16 %v559, %v558
        %v900 = vpack.c.bf16 %v561, %v560
        %v901 = vpack.c.bf16 %v563, %v562
        %v902 = vpack.c.bf16 %v565, %v564
        %v903 = vpack.c.bf16 %v567, %v566
        %v904 = vpack.c.bf16 %v569, %v568
        %v905 = vpack.c.bf16 %v571, %v570
        %v906 = vpack.c.bf16 %v573, %v572
        %v907 = vpack.c.bf16 %v575, %v574
        %v908 = vpack.c.bf16 %v577, %v576
        %v909 = vpack.c.bf16 %v579, %v578
        %v910 = vpack.c.bf16 %v581, %v580
        %v911 = vpack.c.bf16 %v583, %v582
        %v912 = vpack.c.bf16 %v585, %v584
        %v913 = vpack.c.bf16 %v587, %v586
        %v914 = vpack.c.bf16 %v589, %v588
        %v915 = vpack.c.bf16 %v591, %v590
        %v916 = vpack.c.bf16 %v593, %v592
        %v917 = vpack.c.bf16 %v595, %v594
        %v918 = vpack.c.bf16 %v597, %v596
        %v919 = vpack.c.bf16 %v599, %v598
        %v920 = vpack.c.bf16 %v601, %v600
        %v921 = vpack.c.bf16 %v603, %v602
        %v922 = vpack.c.bf16 %v605, %v604
        %v923 = vpack.c.bf16 %v607, %v606
        %v924 = vpack.c.bf16 %v609, %v608
        %v925 = vpack.c.bf16 %v611, %v610
        %v926 = vpack.c.bf16 %v613, %v612
        %v927 = vpack.c.bf16 %v615, %v614
        %v928 = vpack.c.bf16 %v617, %v616
        %v929 = vpack.c.bf16 %v619, %v618
        %v930 = vpack.c.bf16 %v621, %v620
        %v931 = vpack.c.bf16 %v623, %v622
        %v932 = vpack.c.bf16 %v625, %v624
        %v933 = vpack.c.bf16 %v627, %v626
        %v934 = vpack.c.bf16 %v629, %v628
        %v935 = vpack.c.bf16 %v631, %v630
        %v936 = vpack.c.bf16 %v633, %v632
        %v937 = vpack.c.bf16 %v635, %v634
        %v938 = vpack.c.bf16 %v637, %v636
        %v939 = vpack.c.bf16 %v639, %v638
        %v940 = vpack.c.bf16 %v641, %v640
        %v941 = vpack.c.bf16 %v643, %v642
        %v942 = vpack.c.bf16 %v645, %v644
        %v943 = vpack.c.bf16 %v647, %v646
        %v944 = vpack.c.bf16 %v649, %v648
        %v945 = vpack.c.bf16 %v651, %v650
        %v946 = vpack.c.bf16 %v653, %v652
        %v947 = vpack.c.bf16 %v655, %v654
        %v948 = vpack.c.bf16 %v657, %v656
        %v949 = vpack.c.bf16 %v659, %v658
        %v950 = vpack.c.bf16 %v661, %v660
        %v951 = vpack.c.bf16 %v663, %v662
        %v952 = vpack.c.bf16 %v665, %v664
        %v953 = vpack.c.bf16 %v667, %v666
        %v954 = vpack.c.bf16 %v669, %v668
        %v955 = vpack.c.bf16 %v671, %v670
        %v956 = vpack.c.bf16 %v673, %v672
        %v957 = vpack.c.bf16 %v675, %v674
        %v958 = vpack.c.bf16 %v677, %v676
        %v959 = vpack.c.bf16 %v679, %v678
        %v960 = vpack.c.bf16 %v681, %v680
        %v961 = vpack.c.bf16 %v683, %v682
        %v962 = vpack.c.bf16 %v685, %v684
        %v963 = vpack.c.bf16 %v687, %v686
        %v964 = vpack.c.bf16 %v689, %v688
        %v965 = vpack.c.bf16 %v691, %v690
        %v966 = vpack.c.bf16 %v693, %v692
        %v967 = vpack.c.bf16 %v695, %v694
        %v968 = vpack.c.bf16 %v697, %v696
        %v969 = vpack.c.bf16 %v699, %v698
        %v970 = vpack.c.bf16 %v701, %v700
        %v971 = vpack.c.bf16 %v703, %v702
        %v972 = vpack.c.bf16 %v705, %v704
        %v973 = vpack.c.bf16 %v707, %v706
        %v974 = vpack.c.bf16 %v709, %v708
        %v975 = vpack.c.bf16 %v711, %v710
        %v976 = vpack.c.bf16 %v713, %v712
        %v977 = vpack.c.bf16 %v715, %v714
        %v978 = vpack.c.bf16 %v717, %v716
        %v979 = vpack.c.bf16 %v719, %v718
        %v980 = vpack.c.bf16 %v721, %v720
        %v981 = vpack.c.bf16 %v723, %v722
        %v982 = vpack.c.bf16 %v725, %v724
        %v983 = vpack.c.bf16 %v727, %v726
        %v992 = vcombine.high %v208, %v208
        %v994 = vunpack.c.l.s4 1983009808
        %v995 = vunpack.c.0.s8 %v994
        %v996 = vlaneseq
        %v997 = vshrl.u32 %v996, 7
        %v998 = vsub.s32 %v995, %v997
        %v999 = vrot.slane %v208, %v998
        %v1001 = vunpack.c.l.s4 1983009808
        %v1002 = vunpack.c.0.s8 %v1001
        %v1003 = vlaneseq
        %v1004 = vshrl.u32 %v1003, 7
        %v1005 = vsub.s32 %v1002, %v1004
        %v1006 = vrot.slane %v992, %v1005
        %v1007 = vcombine.high %v999, %v999
        %v1008 = vcombine.high %v1006, %v1006
        %v1009 = vcombine.high %v209, %v209
        %v1011 = vunpack.c.l.s4 1983009808
        %v1012 = vunpack.c.0.s8 %v1011
        %v1013 = vlaneseq
        %v1014 = vshrl.u32 %v1013, 7
        %v1015 = vsub.s32 %v1012, %v1014
        %v1016 = vrot.slane %v209, %v1015
        %v1018 = vunpack.c.l.s4 1983009808
        %v1019 = vunpack.c.0.s8 %v1018
        %v1020 = vlaneseq
        %v1021 = vshrl.u32 %v1020, 7
        %v1022 = vsub.s32 %v1019, %v1021
        %v1023 = vrot.slane %v1009, %v1022
        %v1024 = vcombine.high %v1016, %v1016
        %v1025 = vcombine.high %v1023, %v1023
        %v1026 = vcombine.high %v210, %v210
        %v1028 = vunpack.c.l.s4 1983009808
        %v1029 = vunpack.c.0.s8 %v1028
        %v1030 = vlaneseq
        %v1031 = vshrl.u32 %v1030, 7
        %v1032 = vsub.s32 %v1029, %v1031
        %v1033 = vrot.slane %v210, %v1032
        %v1035 = vunpack.c.l.s4 1983009808
        %v1036 = vunpack.c.0.s8 %v1035
        %v1037 = vlaneseq
        %v1038 = vshrl.u32 %v1037, 7
        %v1039 = vsub.s32 %v1036, %v1038
        %v1040 = vrot.slane %v1026, %v1039
        %v1041 = vcombine.high %v1033, %v1033
        %v1042 = vcombine.high %v1040, %v1040
        %v1043 = vcombine.high %v211, %v211
        %v1045 = vunpack.c.l.s4 1983009808
        %v1046 = vunpack.c.0.s8 %v1045
        %v1047 = vlaneseq
        %v1048 = vshrl.u32 %v1047, 7
        %v1049 = vsub.s32 %v1046, %v1048
        %v1050 = vrot.slane %v211, %v1049
        %v1052 = vunpack.c.l.s4 1983009808
        %v1053 = vunpack.c.0.s8 %v1052
        %v1054 = vlaneseq
        %v1055 = vshrl.u32 %v1054, 7
        %v1056 = vsub.s32 %v1053, %v1055
        %v1057 = vrot.slane %v1043, %v1056
        %v1058 = vcombine.high %v1050, %v1050
        %v1059 = vcombine.high %v1057, %v1057
        %v1060 = vcombine.high %v212, %v212
        %v1062 = vunpack.c.l.s4 1983009808
        %v1063 = vunpack.c.0.s8 %v1062
        %v1064 = vlaneseq
        %v1065 = vshrl.u32 %v1064, 7
        %v1066 = vsub.s32 %v1063, %v1065
        %v1067 = vrot.slane %v212, %v1066
        %v1069 = vunpack.c.l.s4 1983009808
        %v1070 = vunpack.c.0.s8 %v1069
        %v1071 = vlaneseq
        %v1072 = vshrl.u32 %v1071, 7
        %v1073 = vsub.s32 %v1070, %v1072
        %v1074 = vrot.slane %v1060, %v1073
        %v1075 = vcombine.high %v1067, %v1067
        %v1076 = vcombine.high %v1074, %v1074
        %v1077 = vcombine.high %v213, %v213
        %v1079 = vunpack.c.l.s4 1983009808
        %v1080 = vunpack.c.0.s8 %v1079
        %v1081 = vlaneseq
        %v1082 = vshrl.u32 %v1081, 7
        %v1083 = vsub.s32 %v1080, %v1082
        %v1084 = vrot.slane %v213, %v1083
        %v1086 = vunpack.c.l.s4 1983009808
        %v1087 = vunpack.c.0.s8 %v1086
        %v1088 = vlaneseq
        %v1089 = vshrl.u32 %v1088, 7
        %v1090 = vsub.s32 %v1087, %v1089
        %v1091 = vrot.slane %v1077, %v1090
        %v1092 = vcombine.high %v1084, %v1084
        %v1093 = vcombine.high %v1091, %v1091
        %v1094 = vcombine.high %v214, %v214
        %v1096 = vunpack.c.l.s4 1983009808
        %v1097 = vunpack.c.0.s8 %v1096
        %v1098 = vlaneseq
        %v1099 = vshrl.u32 %v1098, 7
        %v1100 = vsub.s32 %v1097, %v1099
        %v1101 = vrot.slane %v214, %v1100
        %v1103 = vunpack.c.l.s4 1983009808
        %v1104 = vunpack.c.0.s8 %v1103
        %v1105 = vlaneseq
        %v1106 = vshrl.u32 %v1105, 7
        %v1107 = vsub.s32 %v1104, %v1106
        %v1108 = vrot.slane %v1094, %v1107
        %v1109 = vcombine.high %v1101, %v1101
        %v1110 = vcombine.high %v1108, %v1108
        %v1111 = vcombine.high %v215, %v215
        %v1113 = vunpack.c.l.s4 1983009808
        %v1114 = vunpack.c.0.s8 %v1113
        %v1115 = vlaneseq
        %v1116 = vshrl.u32 %v1115, 7
        %v1117 = vsub.s32 %v1114, %v1116
        %v1118 = vrot.slane %v215, %v1117
        %v1120 = vunpack.c.l.s4 1983009808
        %v1121 = vunpack.c.0.s8 %v1120
        %v1122 = vlaneseq
        %v1123 = vshrl.u32 %v1122, 7
        %v1124 = vsub.s32 %v1121, %v1123
        %v1125 = vrot.slane %v1111, %v1124
        %v1126 = vcombine.high %v1118, %v1118
        %v1127 = vcombine.high %v1125, %v1125
        %1160 = vmatprep.subr.bf16.mxu0 0
        %1161 = vmatpush1.bf16.msra.mxu0 %v735
        %1162 = vmatprep.subr.bf16.mxu0 0
        %1163 = vmatpush1.bf16.msra.mxu0 %v734
        %1164 = vmatprep.subr.bf16.mxu0 0
        %1165 = vmatpush1.bf16.msra.mxu0 %v733
        %1166 = vmatprep.subr.bf16.mxu0 0
        %1167 = vmatpush1.bf16.msra.mxu0 %v732
        %1168 = vmatprep.subr.bf16.mxu0 0
        %1169 = vmatpush1.bf16.msra.mxu0 %v731
        %1170 = vmatprep.subr.bf16.mxu0 0
        %1171 = vmatpush1.bf16.msra.mxu0 %v730
        %1172 = vmatprep.subr.bf16.mxu0 0
        %1173 = vmatpush1.bf16.msra.mxu0 %v729
        %1174 = vmatprep.subr.bf16.mxu0 0
        %1175 = vmatpush1.bf16.msra.mxu0 %v728
        %1176 = vmatprep.subr.bf16.mxu0 0
        %1177 = vmatpush2.bf16.msra.mxu0 %v743
        %1178 = vmatprep.subr.bf16.mxu0 0
        %1179 = vmatpush2.bf16.msra.mxu0 %v742
        %1180 = vmatprep.subr.bf16.mxu0 0
        %1181 = vmatpush2.bf16.msra.mxu0 %v741
        %1182 = vmatprep.subr.bf16.mxu0 0
        %1183 = vmatpush2.bf16.msra.mxu0 %v740
        %1184 = vmatprep.subr.bf16.mxu0 0
        %1185 = vmatpush2.bf16.msra.mxu0 %v739
        %1186 = vmatprep.subr.bf16.mxu0 0
        %1187 = vmatpush2.bf16.msra.mxu0 %v738
        %1188 = vmatprep.subr.bf16.mxu0 0
        %1189 = vmatpush2.bf16.msra.mxu0 %v737
        %1190 = vmatprep.subr.bf16.mxu0 0
        %1191 = vmatpush2.bf16.msra.mxu0 %v736
        %1192 = vmatprep.mubr.bf16.mxu0 %v1007
        %1193 = vmatmul.mubr.bf16.gmra.mxu0 %v999
        %v1194 = vpop.f32.mrf.mxu0
        %v1195 = vadd.f32 0.0, %v1194
        %v1196 = vpop.f32.mrf.mxu0
        %v1197 = vpop.f32.mrf.mxu0
        %v1198 = vpop.f32.mrf.mxu0
        %1199 = vdwg.mxu0
        %1200 = vmatprep.subr.bf16.mxu0 0
        %1201 = vmatpush1.bf16.msra.mxu0 %v751
        %1202 = vmatprep.subr.bf16.mxu0 0
        %1203 = vmatpush1.bf16.msra.mxu0 %v750
        %1204 = vmatprep.subr.bf16.mxu0 0
        %1205 = vmatpush1.bf16.msra.mxu0 %v749
        %1206 = vmatprep.subr.bf16.mxu0 0
        %1207 = vmatpush1.bf16.msra.mxu0 %v748
        %1208 = vmatprep.subr.bf16.mxu0 0
        %1209 = vmatpush1.bf16.msra.mxu0 %v747
        %1210 = vmatprep.subr.bf16.mxu0 0
        %1211 = vmatpush1.bf16.msra.mxu0 %v746
        %1212 = vmatprep.subr.bf16.mxu0 0
        %1213 = vmatpush1.bf16.msra.mxu0 %v745
        %1214 = vmatprep.subr.bf16.mxu0 0
        %1215 = vmatpush1.bf16.msra.mxu0 %v744
        %1216 = vmatprep.subr.bf16.mxu0 0
        %1217 = vmatpush2.bf16.msra.mxu0 %v759
        %1218 = vmatprep.subr.bf16.mxu0 0
        %1219 = vmatpush2.bf16.msra.mxu0 %v758
        %1220 = vmatprep.subr.bf16.mxu0 0
        %1221 = vmatpush2.bf16.msra.mxu0 %v757
        %1222 = vmatprep.subr.bf16.mxu0 0
        %1223 = vmatpush2.bf16.msra.mxu0 %v756
        %1224 = vmatprep.subr.bf16.mxu0 0
        %1225 = vmatpush2.bf16.msra.mxu0 %v755
        %1226 = vmatprep.subr.bf16.mxu0 0
        %1227 = vmatpush2.bf16.msra.mxu0 %v754
        %1228 = vmatprep.subr.bf16.mxu0 0
        %1229 = vmatpush2.bf16.msra.mxu0 %v753
        %1230 = vmatprep.subr.bf16.mxu0 0
        %1231 = vmatpush2.bf16.msra.mxu0 %v752
        %1232 = vmatprep.mubr.bf16.mxu0 %v1008
        %1233 = vmatmul.mubr.bf16.gmra.mxu0 %v1006
        %v1234 = vpop.f32.mrf.mxu0
        %v1235 = vadd.f32 %v1195, %v1234
        %v1236 = vpop.f32.mrf.mxu0
        %v1237 = vpop.f32.mrf.mxu0
        %v1238 = vpop.f32.mrf.mxu0
        %1239 = vdwg.mxu0
        %1240 = vmatprep.subr.bf16.mxu0 0
        %1241 = vmatpush1.bf16.msra.mxu0 %v767
        %1242 = vmatprep.subr.bf16.mxu0 0
        %1243 = vmatpush1.bf16.msra.mxu0 %v766
        %1244 = vmatprep.subr.bf16.mxu0 0
        %1245 = vmatpush1.bf16.msra.mxu0 %v765
        %1246 = vmatprep.subr.bf16.mxu0 0
        %1247 = vmatpush1.bf16.msra.mxu0 %v764
        %1248 = vmatprep.subr.bf16.mxu0 0
        %1249 = vmatpush1.bf16.msra.mxu0 %v763
        %1250 = vmatprep.subr.bf16.mxu0 0
        %1251 = vmatpush1.bf16.msra.mxu0 %v762
        %1252 = vmatprep.subr.bf16.mxu0 0
        %1253 = vmatpush1.bf16.msra.mxu0 %v761
        %1254 = vmatprep.subr.bf16.mxu0 0
        %1255 = vmatpush1.bf16.msra.mxu0 %v760
        %1256 = vmatprep.subr.bf16.mxu0 0
        %1257 = vmatpush2.bf16.msra.mxu0 %v775
        %1258 = vmatprep.subr.bf16.mxu0 0
        %1259 = vmatpush2.bf16.msra.mxu0 %v774
        %1260 = vmatprep.subr.bf16.mxu0 0
        %1261 = vmatpush2.bf16.msra.mxu0 %v773
        %1262 = vmatprep.subr.bf16.mxu0 0
        %1263 = vmatpush2.bf16.msra.mxu0 %v772
        %1264 = vmatprep.subr.bf16.mxu0 0
        %1265 = vmatpush2.bf16.msra.mxu0 %v771
        %1266 = vmatprep.subr.bf16.mxu0 0
        %1267 = vmatpush2.bf16.msra.mxu0 %v770
        %1268 = vmatprep.subr.bf16.mxu0 0
        %1269 = vmatpush2.bf16.msra.mxu0 %v769
        %1270 = vmatprep.subr.bf16.mxu0 0
        %1271 = vmatpush2.bf16.msra.mxu0 %v768
        %1272 = vmatprep.mubr.bf16.mxu0 %v1024
        %1273 = vmatmul.mubr.bf16.gmra.mxu0 %v1016
        %v1274 = vpop.f32.mrf.mxu0
        %v1275 = vadd.f32 %v1235, %v1274
        %v1276 = vpop.f32.mrf.mxu0
        %v1277 = vpop.f32.mrf.mxu0
        %v1278 = vpop.f32.mrf.mxu0
        %1279 = vdwg.mxu0
        %1280 = vmatprep.subr.bf16.mxu0 0
        %1281 = vmatpush1.bf16.msra.mxu0 %v783
        %1282 = vmatprep.subr.bf16.mxu0 0
        %1283 = vmatpush1.bf16.msra.mxu0 %v782
        %1284 = vmatprep.subr.bf16.mxu0 0
        %1285 = vmatpush1.bf16.msra.mxu0 %v781
        %1286 = vmatprep.subr.bf16.mxu0 0
        %1287 = vmatpush1.bf16.msra.mxu0 %v780
        %1288 = vmatprep.subr.bf16.mxu0 0
        %1289 = vmatpush1.bf16.msra.mxu0 %v779
        %1290 = vmatprep.subr.bf16.mxu0 0
        %1291 = vmatpush1.bf16.msra.mxu0 %v778
        %1292 = vmatprep.subr.bf16.mxu0 0
        %1293 = vmatpush1.bf16.msra.mxu0 %v777
        %1294 = vmatprep.subr.bf16.mxu0 0
        %1295 = vmatpush1.bf16.msra.mxu0 %v776
        %1296 = vmatprep.subr.bf16.mxu0 0
        %1297 = vmatpush2.bf16.msra.mxu0 %v791
        %1298 = vmatprep.subr.bf16.mxu0 0
        %1299 = vmatpush2.bf16.msra.mxu0 %v790
        %1300 = vmatprep.subr.bf16.mxu0 0
        %1301 = vmatpush2.bf16.msra.mxu0 %v789
        %1302 = vmatprep.subr.bf16.mxu0 0
        %1303 = vmatpush2.bf16.msra.mxu0 %v788
        %1304 = vmatprep.subr.bf16.mxu0 0
        %1305 = vmatpush2.bf16.msra.mxu0 %v787
        %1306 = vmatprep.subr.bf16.mxu0 0
        %1307 = vmatpush2.bf16.msra.mxu0 %v786
        %1308 = vmatprep.subr.bf16.mxu0 0
        %1309 = vmatpush2.bf16.msra.mxu0 %v785
        %1310 = vmatprep.subr.bf16.mxu0 0
        %1311 = vmatpush2.bf16.msra.mxu0 %v784
        %1312 = vmatprep.mubr.bf16.mxu0 %v1025
        %1313 = vmatmul.mubr.bf16.gmra.mxu0 %v1023
        %v1314 = vpop.f32.mrf.mxu0
        %v1315 = vadd.f32 %v1275, %v1314
        %v1316 = vpop.f32.mrf.mxu0
        %v1317 = vpop.f32.mrf.mxu0
        %v1318 = vpop.f32.mrf.mxu0
        %1319 = vdwg.mxu0
        %1320 = vmatprep.subr.bf16.mxu0 0
        %1321 = vmatpush1.bf16.msra.mxu0 %v799
        %1322 = vmatprep.subr.bf16.mxu0 0
        %1323 = vmatpush1.bf16.msra.mxu0 %v798
        %1324 = vmatprep.subr.bf16.mxu0 0
        %1325 = vmatpush1.bf16.msra.mxu0 %v797
        %1326 = vmatprep.subr.bf16.mxu0 0
        %1327 = vmatpush1.bf16.msra.mxu0 %v796
        %1328 = vmatprep.subr.bf16.mxu0 0
        %1329 = vmatpush1.bf16.msra.mxu0 %v795
        %1330 = vmatprep.subr.bf16.mxu0 0
        %1331 = vmatpush1.bf16.msra.mxu0 %v794
        %1332 = vmatprep.subr.bf16.mxu0 0
        %1333 = vmatpush1.bf16.msra.mxu0 %v793
        %1334 = vmatprep.subr.bf16.mxu0 0
        %1335 = vmatpush1.bf16.msra.mxu0 %v792
        %1336 = vmatprep.subr.bf16.mxu0 0
        %1337 = vmatpush2.bf16.msra.mxu0 %v807
        %1338 = vmatprep.subr.bf16.mxu0 0
        %1339 = vmatpush2.bf16.msra.mxu0 %v806
        %1340 = vmatprep.subr.bf16.mxu0 0
        %1341 = vmatpush2.bf16.msra.mxu0 %v805
        %1342 = vmatprep.subr.bf16.mxu0 0
        %1343 = vmatpush2.bf16.msra.mxu0 %v804
        %1344 = vmatprep.subr.bf16.mxu0 0
        %1345 = vmatpush2.bf16.msra.mxu0 %v803
        %1346 = vmatprep.subr.bf16.mxu0 0
        %1347 = vmatpush2.bf16.msra.mxu0 %v802
        %1348 = vmatprep.subr.bf16.mxu0 0
        %1349 = vmatpush2.bf16.msra.mxu0 %v801
        %1350 = vmatprep.subr.bf16.mxu0 0
        %1351 = vmatpush2.bf16.msra.mxu0 %v800
        %1352 = vmatprep.mubr.bf16.mxu0 %v1041
        %1353 = vmatmul.mubr.bf16.gmra.mxu0 %v1033
        %v1354 = vpop.f32.mrf.mxu0
        %v1355 = vadd.f32 %v1315, %v1354
        %v1356 = vpop.f32.mrf.mxu0
        %v1357 = vpop.f32.mrf.mxu0
        %v1358 = vpop.f32.mrf.mxu0
        %1359 = vdwg.mxu0
        %1360 = vmatprep.subr.bf16.mxu0 0
        %1361 = vmatpush1.bf16.msra.mxu0 %v815
        %1362 = vmatprep.subr.bf16.mxu0 0
        %1363 = vmatpush1.bf16.msra.mxu0 %v814
        %1364 = vmatprep.subr.bf16.mxu0 0
        %1365 = vmatpush1.bf16.msra.mxu0 %v813
        %1366 = vmatprep.subr.bf16.mxu0 0
        %1367 = vmatpush1.bf16.msra.mxu0 %v812
        %1368 = vmatprep.subr.bf16.mxu0 0
        %1369 = vmatpush1.bf16.msra.mxu0 %v811
        %1370 = vmatprep.subr.bf16.mxu0 0
        %1371 = vmatpush1.bf16.msra.mxu0 %v810
        %1372 = vmatprep.subr.bf16.mxu0 0
        %1373 = vmatpush1.bf16.msra.mxu0 %v809
        %1374 = vmatprep.subr.bf16.mxu0 0
        %1375 = vmatpush1.bf16.msra.mxu0 %v808
        %1376 = vmatprep.subr.bf16.mxu0 0
        %1377 = vmatpush2.bf16.msra.mxu0 %v823
        %1378 = vmatprep.subr.bf16.mxu0 0
        %1379 = vmatpush2.bf16.msra.mxu0 %v822
        %1380 = vmatprep.subr.bf16.mxu0 0
        %1381 = vmatpush2.bf16.msra.mxu0 %v821
        %1382 = vmatprep.subr.bf16.mxu0 0
        %1383 = vmatpush2.bf16.msra.mxu0 %v820
        %1384 = vmatprep.subr.bf16.mxu0 0
        %1385 = vmatpush2.bf16.msra.mxu0 %v819
        %1386 = vmatprep.subr.bf16.mxu0 0
        %1387 = vmatpush2.bf16.msra.mxu0 %v818
        %1388 = vmatprep.subr.bf16.mxu0 0
        %1389 = vmatpush2.bf16.msra.mxu0 %v817
        %1390 = vmatprep.subr.bf16.mxu0 0
        %1391 = vmatpush2.bf16.msra.mxu0 %v816
        %1392 = vmatprep.mubr.bf16.mxu0 %v1042
        %1393 = vmatmul.mubr.bf16.gmra.mxu0 %v1040
        %v1394 = vpop.f32.mrf.mxu0
        %v1395 = vadd.f32 %v1355, %v1394
        %v1396 = vpop.f32.mrf.mxu0
        %v1397 = vpop.f32.mrf.mxu0
        %v1398 = vpop.f32.mrf.mxu0
        %1399 = vdwg.mxu0
        %1400 = vmatprep.subr.bf16.mxu0 0
        %1401 = vmatpush1.bf16.msra.mxu0 %v831
        %1402 = vmatprep.subr.bf16.mxu0 0
        %1403 = vmatpush1.bf16.msra.mxu0 %v830
        %1404 = vmatprep.subr.bf16.mxu0 0
        %1405 = vmatpush1.bf16.msra.mxu0 %v829
        %1406 = vmatprep.subr.bf16.mxu0 0
        %1407 = vmatpush1.bf16.msra.mxu0 %v828
        %1408 = vmatprep.subr.bf16.mxu0 0
        %1409 = vmatpush1.bf16.msra.mxu0 %v827
        %1410 = vmatprep.subr.bf16.mxu0 0
        %1411 = vmatpush1.bf16.msra.mxu0 %v826
        %1412 = vmatprep.subr.bf16.mxu0 0
        %1413 = vmatpush1.bf16.msra.mxu0 %v825
        %1414 = vmatprep.subr.bf16.mxu0 0
        %1415 = vmatpush1.bf16.msra.mxu0 %v824
        %1416 = vmatprep.subr.bf16.mxu0 0
        %1417 = vmatpush2.bf16.msra.mxu0 %v839
        %1418 = vmatprep.subr.bf16.mxu0 0
        %1419 = vmatpush2.bf16.msra.mxu0 %v838
        %1420 = vmatprep.subr.bf16.mxu0 0
        %1421 = vmatpush2.bf16.msra.mxu0 %v837
        %1422 = vmatprep.subr.bf16.mxu0 0
        %1423 = vmatpush2.bf16.msra.mxu0 %v836
        %1424 = vmatprep.subr.bf16.mxu0 0
        %1425 = vmatpush2.bf16.msra.mxu0 %v835
        %1426 = vmatprep.subr.bf16.mxu0 0
        %1427 = vmatpush2.bf16.msra.mxu0 %v834
        %1428 = vmatprep.subr.bf16.mxu0 0
        %1429 = vmatpush2.bf16.msra.mxu0 %v833
        %1430 = vmatprep.subr.bf16.mxu0 0
        %1431 = vmatpush2.bf16.msra.mxu0 %v832
        %1432 = vmatprep.mubr.bf16.mxu0 %v1058
        %1433 = vmatmul.mubr.bf16.gmra.mxu0 %v1050
        %v1434 = vpop.f32.mrf.mxu0
        %v1435 = vadd.f32 %v1395, %v1434
        %v1436 = vpop.f32.mrf.mxu0
        %v1437 = vpop.f32.mrf.mxu0
        %v1438 = vpop.f32.mrf.mxu0
        %1439 = vdwg.mxu0
        %1440 = vmatprep.subr.bf16.mxu0 0
        %1441 = vmatpush1.bf16.msra.mxu0 %v847
        %1442 = vmatprep.subr.bf16.mxu0 0
        %1443 = vmatpush1.bf16.msra.mxu0 %v846
        %1444 = vmatprep.subr.bf16.mxu0 0
        %1445 = vmatpush1.bf16.msra.mxu0 %v845
        %1446 = vmatprep.subr.bf16.mxu0 0
        %1447 = vmatpush1.bf16.msra.mxu0 %v844
        %1448 = vmatprep.subr.bf16.mxu0 0
        %1449 = vmatpush1.bf16.msra.mxu0 %v843
        %1450 = vmatprep.subr.bf16.mxu0 0
        %1451 = vmatpush1.bf16.msra.mxu0 %v842
        %1452 = vmatprep.subr.bf16.mxu0 0
        %1453 = vmatpush1.bf16.msra.mxu0 %v841
        %1454 = vmatprep.subr.bf16.mxu0 0
        %1455 = vmatpush1.bf16.msra.mxu0 %v840
        %1456 = vmatprep.subr.bf16.mxu0 0
        %1457 = vmatpush2.bf16.msra.mxu0 %v855
        %1458 = vmatprep.subr.bf16.mxu0 0
        %1459 = vmatpush2.bf16.msra.mxu0 %v854
        %1460 = vmatprep.subr.bf16.mxu0 0
        %1461 = vmatpush2.bf16.msra.mxu0 %v853
        %1462 = vmatprep.subr.bf16.mxu0 0
        %1463 = vmatpush2.bf16.msra.mxu0 %v852
        %1464 = vmatprep.subr.bf16.mxu0 0
        %1465 = vmatpush2.bf16.msra.mxu0 %v851
        %1466 = vmatprep.subr.bf16.mxu0 0
        %1467 = vmatpush2.bf16.msra.mxu0 %v850
        %1468 = vmatprep.subr.bf16.mxu0 0
        %1469 = vmatpush2.bf16.msra.mxu0 %v849
        %1470 = vmatprep.subr.bf16.mxu0 0
        %1471 = vmatpush2.bf16.msra.mxu0 %v848
        %1472 = vmatprep.mubr.bf16.mxu0 %v1059
        %1473 = vmatmul.mubr.bf16.gmra.mxu0 %v1057
        %v1474 = vpop.f32.mrf.mxu0
        %v1475 = vadd.f32 %v1435, %v1474
        %v1476 = vpop.f32.mrf.mxu0
        %v1477 = vpop.f32.mrf.mxu0
        %v1478 = vpop.f32.mrf.mxu0
        %1479 = vdwg.mxu0
        %1480 = vmatprep.subr.bf16.mxu0 0
        %1481 = vmatpush1.bf16.msra.mxu0 %v863
        %1482 = vmatprep.subr.bf16.mxu0 0
        %1483 = vmatpush1.bf16.msra.mxu0 %v862
        %1484 = vmatprep.subr.bf16.mxu0 0
        %1485 = vmatpush1.bf16.msra.mxu0 %v861
        %1486 = vmatprep.subr.bf16.mxu0 0
        %1487 = vmatpush1.bf16.msra.mxu0 %v860
        %1488 = vmatprep.subr.bf16.mxu0 0
        %1489 = vmatpush1.bf16.msra.mxu0 %v859
        %1490 = vmatprep.subr.bf16.mxu0 0
        %1491 = vmatpush1.bf16.msra.mxu0 %v858
        %1492 = vmatprep.subr.bf16.mxu0 0
        %1493 = vmatpush1.bf16.msra.mxu0 %v857
        %1494 = vmatprep.subr.bf16.mxu0 0
        %1495 = vmatpush1.bf16.msra.mxu0 %v856
        %1496 = vmatprep.subr.bf16.mxu0 0
        %1497 = vmatpush2.bf16.msra.mxu0 %v871
        %1498 = vmatprep.subr.bf16.mxu0 0
        %1499 = vmatpush2.bf16.msra.mxu0 %v870
        %1500 = vmatprep.subr.bf16.mxu0 0
        %1501 = vmatpush2.bf16.msra.mxu0 %v869
        %1502 = vmatprep.subr.bf16.mxu0 0
        %1503 = vmatpush2.bf16.msra.mxu0 %v868
        %1504 = vmatprep.subr.bf16.mxu0 0
        %1505 = vmatpush2.bf16.msra.mxu0 %v867
        %1506 = vmatprep.subr.bf16.mxu0 0
        %1507 = vmatpush2.bf16.msra.mxu0 %v866
        %1508 = vmatprep.subr.bf16.mxu0 0
        %1509 = vmatpush2.bf16.msra.mxu0 %v865
        %1510 = vmatprep.subr.bf16.mxu0 0
        %1511 = vmatpush2.bf16.msra.mxu0 %v864
        %1512 = vmatprep.mubr.bf16.mxu0 %v1075
        %1513 = vmatmul.mubr.bf16.gmra.mxu0 %v1067
        %v1514 = vpop.f32.mrf.mxu0
        %v1515 = vadd.f32 %v1475, %v1514
        %v1516 = vpop.f32.mrf.mxu0
        %v1517 = vpop.f32.mrf.mxu0
        %v1518 = vpop.f32.mrf.mxu0
        %1519 = vdwg.mxu0
        %1520 = vmatprep.subr.bf16.mxu0 0
        %1521 = vmatpush1.bf16.msra.mxu0 %v879
        %1522 = vmatprep.subr.bf16.mxu0 0
        %1523 = vmatpush1.bf16.msra.mxu0 %v878
        %1524 = vmatprep.subr.bf16.mxu0 0
        %1525 = vmatpush1.bf16.msra.mxu0 %v877
        %1526 = vmatprep.subr.bf16.mxu0 0
        %1527 = vmatpush1.bf16.msra.mxu0 %v876
        %1528 = vmatprep.subr.bf16.mxu0 0
        %1529 = vmatpush1.bf16.msra.mxu0 %v875
        %1530 = vmatprep.subr.bf16.mxu0 0
        %1531 = vmatpush1.bf16.msra.mxu0 %v874
        %1532 = vmatprep.subr.bf16.mxu0 0
        %1533 = vmatpush1.bf16.msra.mxu0 %v873
        %1534 = vmatprep.subr.bf16.mxu0 0
        %1535 = vmatpush1.bf16.msra.mxu0 %v872
        %1536 = vmatprep.subr.bf16.mxu0 0
        %1537 = vmatpush2.bf16.msra.mxu0 %v887
        %1538 = vmatprep.subr.bf16.mxu0 0
        %1539 = vmatpush2.bf16.msra.mxu0 %v886
        %1540 = vmatprep.subr.bf16.mxu0 0
        %1541 = vmatpush2.bf16.msra.mxu0 %v885
        %1542 = vmatprep.subr.bf16.mxu0 0
        %1543 = vmatpush2.bf16.msra.mxu0 %v884
        %1544 = vmatprep.subr.bf16.mxu0 0
        %1545 = vmatpush2.bf16.msra.mxu0 %v883
        %1546 = vmatprep.subr.bf16.mxu0 0
        %1547 = vmatpush2.bf16.msra.mxu0 %v882
        %1548 = vmatprep.subr.bf16.mxu0 0
        %1549 = vmatpush2.bf16.msra.mxu0 %v881
        %1550 = vmatprep.subr.bf16.mxu0 0
        %1551 = vmatpush2.bf16.msra.mxu0 %v880
        %1552 = vmatprep.mubr.bf16.mxu0 %v1076
        %1553 = vmatmul.mubr.bf16.gmra.mxu0 %v1074
        %v1554 = vpop.f32.mrf.mxu0
        %v1555 = vadd.f32 %v1515, %v1554
        %v1556 = vpop.f32.mrf.mxu0
        %v1557 = vpop.f32.mrf.mxu0
        %v1558 = vpop.f32.mrf.mxu0
        %1559 = vdwg.mxu0
        %1560 = vmatprep.subr.bf16.mxu0 0
        %1561 = vmatpush1.bf16.msra.mxu0 %v895
        %1562 = vmatprep.subr.bf16.mxu0 0
        %1563 = vmatpush1.bf16.msra.mxu0 %v894
        %1564 = vmatprep.subr.bf16.mxu0 0
        %1565 = vmatpush1.bf16.msra.mxu0 %v893
        %1566 = vmatprep.subr.bf16.mxu0 0
        %1567 = vmatpush1.bf16.msra.mxu0 %v892
        %1568 = vmatprep.subr.bf16.mxu0 0
        %1569 = vmatpush1.bf16.msra.mxu0 %v891
        %1570 = vmatprep.subr.bf16.mxu0 0
        %1571 = vmatpush1.bf16.msra.mxu0 %v890
        %1572 = vmatprep.subr.bf16.mxu0 0
        %1573 = vmatpush1.bf16.msra.mxu0 %v889
        %1574 = vmatprep.subr.bf16.mxu0 0
        %1575 = vmatpush1.bf16.msra.mxu0 %v888
        %1576 = vmatprep.subr.bf16.mxu0 0
        %1577 = vmatpush2.bf16.msra.mxu0 %v903
        %1578 = vmatprep.subr.bf16.mxu0 0
        %1579 = vmatpush2.bf16.msra.mxu0 %v902
        %1580 = vmatprep.subr.bf16.mxu0 0
        %1581 = vmatpush2.bf16.msra.mxu0 %v901
        %1582 = vmatprep.subr.bf16.mxu0 0
        %1583 = vmatpush2.bf16.msra.mxu0 %v900
        %1584 = vmatprep.subr.bf16.mxu0 0
        %1585 = vmatpush2.bf16.msra.mxu0 %v899
        %1586 = vmatprep.subr.bf16.mxu0 0
        %1587 = vmatpush2.bf16.msra.mxu0 %v898
        %1588 = vmatprep.subr.bf16.mxu0 0
        %1589 = vmatpush2.bf16.msra.mxu0 %v897
        %1590 = vmatprep.subr.bf16.mxu0 0
        %1591 = vmatpush2.bf16.msra.mxu0 %v896
        %1592 = vmatprep.mubr.bf16.mxu0 %v1092
        %1593 = vmatmul.mubr.bf16.gmra.mxu0 %v1084
        %v1594 = vpop.f32.mrf.mxu0
        %v1595 = vadd.f32 %v1555, %v1594
        %v1596 = vpop.f32.mrf.mxu0
        %v1597 = vpop.f32.mrf.mxu0
        %v1598 = vpop.f32.mrf.mxu0
        %1599 = vdwg.mxu0
        %1600 = vmatprep.subr.bf16.mxu0 0
        %1601 = vmatpush1.bf16.msra.mxu0 %v911
        %1602 = vmatprep.subr.bf16.mxu0 0
        %1603 = vmatpush1.bf16.msra.mxu0 %v910
        %1604 = vmatprep.subr.bf16.mxu0 0
        %1605 = vmatpush1.bf16.msra.mxu0 %v909
        %1606 = vmatprep.subr.bf16.mxu0 0
        %1607 = vmatpush1.bf16.msra.mxu0 %v908
        %1608 = vmatprep.subr.bf16.mxu0 0
        %1609 = vmatpush1.bf16.msra.mxu0 %v907
        %1610 = vmatprep.subr.bf16.mxu0 0
        %1611 = vmatpush1.bf16.msra.mxu0 %v906
        %1612 = vmatprep.subr.bf16.mxu0 0
        %1613 = vmatpush1.bf16.msra.mxu0 %v905
        %1614 = vmatprep.subr.bf16.mxu0 0
        %1615 = vmatpush1.bf16.msra.mxu0 %v904
        %1616 = vmatprep.subr.bf16.mxu0 0
        %1617 = vmatpush2.bf16.msra.mxu0 %v919
        %1618 = vmatprep.subr.bf16.mxu0 0
        %1619 = vmatpush2.bf16.msra.mxu0 %v918
        %1620 = vmatprep.subr.bf16.mxu0 0
        %1621 = vmatpush2.bf16.msra.mxu0 %v917
        %1622 = vmatprep.subr.bf16.mxu0 0
        %1623 = vmatpush2.bf16.msra.mxu0 %v916
        %1624 = vmatprep.subr.bf16.mxu0 0
        %1625 = vmatpush2.bf16.msra.mxu0 %v915
        %1626 = vmatprep.subr.bf16.mxu0 0
        %1627 = vmatpush2.bf16.msra.mxu0 %v914
        %1628 = vmatprep.subr.bf16.mxu0 0
        %1629 = vmatpush2.bf16.msra.mxu0 %v913
        %1630 = vmatprep.subr.bf16.mxu0 0
        %1631 = vmatpush2.bf16.msra.mxu0 %v912
        %1632 = vmatprep.mubr.bf16.mxu0 %v1093
        %1633 = vmatmul.mubr.bf16.gmra.mxu0 %v1091
        %v1634 = vpop.f32.mrf.mxu0
        %v1635 = vadd.f32 %v1595, %v1634
        %v1636 = vpop.f32.mrf.mxu0
        %v1637 = vpop.f32.mrf.mxu0
        %v1638 = vpop.f32.mrf.mxu0
        %1639 = vdwg.mxu0
        %1640 = vmatprep.subr.bf16.mxu0 0
        %1641 = vmatpush1.bf16.msra.mxu0 %v927
        %1642 = vmatprep.subr.bf16.mxu0 0
        %1643 = vmatpush1.bf16.msra.mxu0 %v926
        %1644 = vmatprep.subr.bf16.mxu0 0
        %1645 = vmatpush1.bf16.msra.mxu0 %v925
        %1646 = vmatprep.subr.bf16.mxu0 0
        %1647 = vmatpush1.bf16.msra.mxu0 %v924
        %1648 = vmatprep.subr.bf16.mxu0 0
        %1649 = vmatpush1.bf16.msra.mxu0 %v923
        %1650 = vmatprep.subr.bf16.mxu0 0
        %1651 = vmatpush1.bf16.msra.mxu0 %v922
        %1652 = vmatprep.subr.bf16.mxu0 0
        %1653 = vmatpush1.bf16.msra.mxu0 %v921
        %1654 = vmatprep.subr.bf16.mxu0 0
        %1655 = vmatpush1.bf16.msra.mxu0 %v920
        %1656 = vmatprep.subr.bf16.mxu0 0
        %1657 = vmatpush2.bf16.msra.mxu0 %v935
        %1658 = vmatprep.subr.bf16.mxu0 0
        %1659 = vmatpush2.bf16.msra.mxu0 %v934
        %1660 = vmatprep.subr.bf16.mxu0 0
        %1661 = vmatpush2.bf16.msra.mxu0 %v933
        %1662 = vmatprep.subr.bf16.mxu0 0
        %1663 = vmatpush2.bf16.msra.mxu0 %v932
        %1664 = vmatprep.subr.bf16.mxu0 0
        %1665 = vmatpush2.bf16.msra.mxu0 %v931
        %1666 = vmatprep.subr.bf16.mxu0 0
        %1667 = vmatpush2.bf16.msra.mxu0 %v930
        %1668 = vmatprep.subr.bf16.mxu0 0
        %1669 = vmatpush2.bf16.msra.mxu0 %v929
        %1670 = vmatprep.subr.bf16.mxu0 0
        %1671 = vmatpush2.bf16.msra.mxu0 %v928
        %1672 = vmatprep.mubr.bf16.mxu0 %v1109
        %1673 = vmatmul.mubr.bf16.gmra.mxu0 %v1101
        %v1674 = vpop.f32.mrf.mxu0
        %v1675 = vadd.f32 %v1635, %v1674
        %v1676 = vpop.f32.mrf.mxu0
        %v1677 = vpop.f32.mrf.mxu0
        %v1678 = vpop.f32.mrf.mxu0
        %1679 = vdwg.mxu0
        %1680 = vmatprep.subr.bf16.mxu0 0
        %1681 = vmatpush1.bf16.msra.mxu0 %v943
        %1682 = vmatprep.subr.bf16.mxu0 0
        %1683 = vmatpush1.bf16.msra.mxu0 %v942
        %1684 = vmatprep.subr.bf16.mxu0 0
        %1685 = vmatpush1.bf16.msra.mxu0 %v941
        %1686 = vmatprep.subr.bf16.mxu0 0
        %1687 = vmatpush1.bf16.msra.mxu0 %v940
        %1688 = vmatprep.subr.bf16.mxu0 0
        %1689 = vmatpush1.bf16.msra.mxu0 %v939
        %1690 = vmatprep.subr.bf16.mxu0 0
        %1691 = vmatpush1.bf16.msra.mxu0 %v938
        %1692 = vmatprep.subr.bf16.mxu0 0
        %1693 = vmatpush1.bf16.msra.mxu0 %v937
        %1694 = vmatprep.subr.bf16.mxu0 0
        %1695 = vmatpush1.bf16.msra.mxu0 %v936
        %1696 = vmatprep.subr.bf16.mxu0 0
        %1697 = vmatpush2.bf16.msra.mxu0 %v951
        %1698 = vmatprep.subr.bf16.mxu0 0
        %1699 = vmatpush2.bf16.msra.mxu0 %v950
        %1700 = vmatprep.subr.bf16.mxu0 0
        %1701 = vmatpush2.bf16.msra.mxu0 %v949
        %1702 = vmatprep.subr.bf16.mxu0 0
        %1703 = vmatpush2.bf16.msra.mxu0 %v948
        %1704 = vmatprep.subr.bf16.mxu0 0
        %1705 = vmatpush2.bf16.msra.mxu0 %v947
        %1706 = vmatprep.subr.bf16.mxu0 0
        %1707 = vmatpush2.bf16.msra.mxu0 %v946
        %1708 = vmatprep.subr.bf16.mxu0 0
        %1709 = vmatpush2.bf16.msra.mxu0 %v945
        %1710 = vmatprep.subr.bf16.mxu0 0
        %1711 = vmatpush2.bf16.msra.mxu0 %v944
        %1712 = vmatprep.mubr.bf16.mxu0 %v1110
        %1713 = vmatmul.mubr.bf16.gmra.mxu0 %v1108
        %v1714 = vpop.f32.mrf.mxu0
        %v1715 = vadd.f32 %v1675, %v1714
        %v1716 = vpop.f32.mrf.mxu0
        %v1717 = vpop.f32.mrf.mxu0
        %v1718 = vpop.f32.mrf.mxu0
        %1719 = vdwg.mxu0
        %1720 = vmatprep.subr.bf16.mxu0 0
        %1721 = vmatpush1.bf16.msra.mxu0 %v959
        %1722 = vmatprep.subr.bf16.mxu0 0
        %1723 = vmatpush1.bf16.msra.mxu0 %v958
        %1724 = vmatprep.subr.bf16.mxu0 0
        %1725 = vmatpush1.bf16.msra.mxu0 %v957
        %1726 = vmatprep.subr.bf16.mxu0 0
        %1727 = vmatpush1.bf16.msra.mxu0 %v956
        %1728 = vmatprep.subr.bf16.mxu0 0
        %1729 = vmatpush1.bf16.msra.mxu0 %v955
        %1730 = vmatprep.subr.bf16.mxu0 0
        %1731 = vmatpush1.bf16.msra.mxu0 %v954
        %1732 = vmatprep.subr.bf16.mxu0 0
        %1733 = vmatpush1.bf16.msra.mxu0 %v953
        %1734 = vmatprep.subr.bf16.mxu0 0
        %1735 = vmatpush1.bf16.msra.mxu0 %v952
        %1736 = vmatprep.subr.bf16.mxu0 0
        %1737 = vmatpush2.bf16.msra.mxu0 %v967
        %1738 = vmatprep.subr.bf16.mxu0 0
        %1739 = vmatpush2.bf16.msra.mxu0 %v966
        %1740 = vmatprep.subr.bf16.mxu0 0
        %1741 = vmatpush2.bf16.msra.mxu0 %v965
        %1742 = vmatprep.subr.bf16.mxu0 0
        %1743 = vmatpush2.bf16.msra.mxu0 %v964
        %1744 = vmatprep.subr.bf16.mxu0 0
        %1745 = vmatpush2.bf16.msra.mxu0 %v963
        %1746 = vmatprep.subr.bf16.mxu0 0
        %1747 = vmatpush2.bf16.msra.mxu0 %v962
        %1748 = vmatprep.subr.bf16.mxu0 0
        %1749 = vmatpush2.bf16.msra.mxu0 %v961
        %1750 = vmatprep.subr.bf16.mxu0 0
        %1751 = vmatpush2.bf16.msra.mxu0 %v960
        %1752 = vmatprep.mubr.bf16.mxu0 %v1126
        %1753 = vmatmul.mubr.bf16.gmra.mxu0 %v1118
        %v1754 = vpop.f32.mrf.mxu0
        %v1755 = vadd.f32 %v1715, %v1754
        %v1756 = vpop.f32.mrf.mxu0
        %v1757 = vpop.f32.mrf.mxu0
        %v1758 = vpop.f32.mrf.mxu0
        %1759 = vdwg.mxu0
        %1760 = vmatprep.subr.bf16.mxu0 0
        %1761 = vmatpush1.bf16.msra.mxu0 %v975
        %1762 = vmatprep.subr.bf16.mxu0 0
        %1763 = vmatpush1.bf16.msra.mxu0 %v974
        %1764 = vmatprep.subr.bf16.mxu0 0
        %1765 = vmatpush1.bf16.msra.mxu0 %v973
        %1766 = vmatprep.subr.bf16.mxu0 0
        %1767 = vmatpush1.bf16.msra.mxu0 %v972
        %1768 = vmatprep.subr.bf16.mxu0 0
        %1769 = vmatpush1.bf16.msra.mxu0 %v971
        %1770 = vmatprep.subr.bf16.mxu0 0
        %1771 = vmatpush1.bf16.msra.mxu0 %v970
        %1772 = vmatprep.subr.bf16.mxu0 0
        %1773 = vmatpush1.bf16.msra.mxu0 %v969
        %1774 = vmatprep.subr.bf16.mxu0 0
        %1775 = vmatpush1.bf16.msra.mxu0 %v968
        %1776 = vmatprep.subr.bf16.mxu0 0
        %1777 = vmatpush2.bf16.msra.mxu0 %v983
        %1778 = vmatprep.subr.bf16.mxu0 0
        %1779 = vmatpush2.bf16.msra.mxu0 %v982
        %1780 = vmatprep.subr.bf16.mxu0 0
        %1781 = vmatpush2.bf16.msra.mxu0 %v981
        %1782 = vmatprep.subr.bf16.mxu0 0
        %1783 = vmatpush2.bf16.msra.mxu0 %v980
        %1784 = vmatprep.subr.bf16.mxu0 0
        %1785 = vmatpush2.bf16.msra.mxu0 %v979
        %1786 = vmatprep.subr.bf16.mxu0 0
        %1787 = vmatpush2.bf16.msra.mxu0 %v978
        %1788 = vmatprep.subr.bf16.mxu0 0
        %1789 = vmatpush2.bf16.msra.mxu0 %v977
        %1790 = vmatprep.subr.bf16.mxu0 0
        %1791 = vmatpush2.bf16.msra.mxu0 %v976
        %1792 = vmatprep.mubr.bf16.mxu0 %v1127
        %1793 = vmatmul.mubr.bf16.gmra.mxu0 %v1125
        %v1794 = vpop.f32.mrf.mxu0
        %v1795 = vadd.f32 %v1755, %v1794
        %v1796 = vpop.f32.mrf.mxu0
        %v1797 = vpop.f32.mrf.mxu0
        %v1798 = vpop.f32.mrf.mxu0
        %1799 = vdwg.mxu0
        %v1800 = vadd.f32 %v207, %v1795
        %1801 = vst [vmem:[#allocation2] sm:$0xf] %v1800
        %p1802 = scmp.eq.s32.totalorder %s21, 3
        // Predicated region
        $region37: #{loss_generator_forward.3} parent=27 // pred_check
          %p1803 = pneg %p1802
        $region38: #{loss_generator_forward.3} parent=27 // pred_check_branch
          %1805 = sbr.rel (%p1803) target = $region40
        $region39: #{loss_generator_forward.3} parent=27 // pred_region
          %v1806 = vld [vmem:[#allocation2] sm:$0x3]
          %v1807 = vld [vmem:[#allocation2 + $0x2] sm:$0x3]
          %v1808 = vsub.f32 %v1806, %v1807
          %v1809 = vand.u32 2147483647, %v1808
          %1810 = vst [vmem:[%s200] sm:$0x3] %v1809
        $region40: #{loss_generator_forward.3} parent=27 // pred_fallthru
          _
        %p1811 = scmp.lt.s32.totalorder %s20, 1
        %s1812 = scalar_select %p1811, %s20, 1
        %s1813 = smul.addr %s1812, 2
        %s1814 = scalar_lea.vmem %s2, %s1813
        // Predicated region
        $region41: #{loss_generator_forward.3} parent=27 // pred_check
          %p1815 = pneg %p100
        $region42: #{loss_generator_forward.3} parent=27 // pred_check_branch
          %1817 = sbr.rel (%p1815) target = $region44
        $region43: #{loss_generator_forward.3} parent=27 // pred_region
          _
        $region44: #{loss_generator_forward.3} parent=27 // pred_fallthru
          _
      $region28: #{loss_generator_forward.3} parent=5 // pred_fallthru
        _
      %p1818 = scmp.le.s32.totalorder 2, %s11
      // Predicated region
      $region45: #{loss_generator_forward.3} parent=5 // pred_check
        %p1819 = pneg %p1818
      $region46: #{loss_generator_forward.3} parent=5 // pred_check_branch
        %1821 = sbr.rel (%p1819) target = $region48
      $region47: #{loss_generator_forward.3} parent=5 // pred_region
        %s1822 = ssub.s32 %s11, 2
        // Predicated region
        $region49: #{loss_generator_forward.3} parent=47 // pred_check
          %p1823 = pneg %p106
        $region50: #{loss_generator_forward.3} parent=47 // pred_check_branch
          %1825 = sbr.rel (%p1823) target = $region52
        $region51: #{loss_generator_forward.3} parent=47 // pred_region
          %p1826 = scmp.lt.s32.totalorder %s22, 1
          %s1827 = scalar_select %p1826, %s22, 1
          %s1828 = smul.addr %s1827, 2
          %s1829 = scalar_lea.vmem %s2, %s1828
        $region52: #{loss_generator_forward.3} parent=47 // pred_fallthru
          _
      $region48: #{loss_generator_forward.3} parent=5 // pred_fallthru
        _
    $region6: #{loss_generator_forward.3} parent=1 // loop_footer
      %s15 = sadd.s32 1, %s11
    $region7: #{loss_generator_forward.3} parent=1 // loop_footer_branch
      %10 = sbr.rel target = $region3
    $region8: #{loss_generator_forward.3} parent=1 // loop_exit
      _
    %1830 = vsyncpa [#allocation4], 1
    %s1831 = scalar_lea.sflag [#allocation4], 1
    %1832 = vsyncpa %s1831, 1

// kernel: loss_generator_forward.2
$region0: #{loss_generator_forward.2}
  #allocation0 [shape = 'u32[]', space=smem, size = 0x4, offset = 0x4, fixed_abs, tag = 'smem constant byte address 0x4 - core index']
  #allocation1 [shape = 'u32[144,128]{1,0:T(1,128)}', space=vmem, size = 0x12000, scoped, tag = 'internal scratch']
  %s0 = inlined_call_operand.vmem [shape: s32[2,4], index: 0, kind: input, shape index: {}]
  %s1 = inlined_call_operand.vmem [shape: s32[2,4], index: 1, kind: input, shape index: {}]
  %s2 = inlined_call_operand.hbm [shape: f32[2,3,128,128], index: 2, kind: input, shape index: {}]
  %s3 = inlined_call_operand.hbm [shape: f32[2,3,128,128], index: 3, kind: input, shape index: {}]
  %s4 = inlined_call_operand.hbm [shape: f32[3,128,128], index: 4, kind: input, shape index: {}]
  %s5 = inlined_call_operand.hbm [shape: f32[2,3,64,64], index: 5, kind: input, shape index: {}]
  %s6 = inlined_call_operand.hbm [shape: f32[2,3,64,64], index: 6, kind: input, shape index: {}]
  %s7 = inlined_call_operand.hbm [shape: f32[2,3,32,32], index: 7, kind: input, shape index: {}]
  %s8 = inlined_call_operand.hbm [shape: f32[2,3,32,32], index: 8, kind: input, shape index: {}]
  %s9 = inlined_call_operand.vmem [shape: f32[2,3,22,28], index: 9, kind: input, shape index: {}]
  %s10 = inlined_call_operand.vmem [shape: f32[2,3,22,28], index: 10, kind: input, shape index: {}]
  %s11 = inlined_call_operand.vmem [shape: f32[2,3,22,28], index: 11, kind: input, shape index: {}]
  %s12 = inlined_call_operand.vmem [shape: f32[2,3,22,28], index: 12, kind: input, shape index: {}]
  %s13 = inlined_call_operand.vmem [shape: f32[2,3,66,46], index: 13, kind: input, shape index: {}]
  %s14 = inlined_call_operand.vmem [shape: f32[2,3,66,46], index: 14, kind: input, shape index: {}]
  %s15 = inlined_call_operand.vmem [shape: f32[2,3,25,54], index: 15, kind: input, shape index: {}]
  %s16 = inlined_call_operand.vmem [shape: f32[2,3,25,54], index: 16, kind: input, shape index: {}]
  %s17 = inlined_call_operand.hbm [shape: f32[2,512], index: 17, kind: input, shape index: {}]
  %s18 = inlined_call_operand.vmem [shape: s32[2,1], index: 18, kind: input, shape index: {}]
  %s19 = inlined_call_operand.vmem [shape: f32[14], index: 19, kind: output, shape index: {0}]
  %s20 = inlined_call_operand.vmem [shape: bf16[4,128,128], index: 20, kind: output, shape index: {1}]
  %21 = xla_tuple %s19, %s20
  %s22 = sld [smem:[#allocation0]]
  $region134: #{loss_generator_forward.2} parent=0
    _
  %s24 = ssub.s32 1, %s22
  %s25 = scalar_select 0, %s24, %s22
  $region1: #{loss_generator_forward.2} parent=0
    #allocation2 [shape = 'u8[1024]{0}', space=smem, size = 0x400, scoped, tag = 'input window, operand 0, single buffered']
    #allocation3 [shape = 's32[1]{0}', space=sflag, size = 0x4, scoped, tag = 'scoped memory for loss_generator_forward.2']
    #allocation4 [shape = 's32[1]{0}', space=sflag, size = 0x4, scoped, tag = 'scoped memory for loss_generator_forward.2']
    #allocation5 [shape = 's32[1]{0}', space=sflag, size = 0x4, scoped, tag = 'scoped memory for loss_generator_forward.2']
    #allocation6 [shape = 'u8[1024]{0}', space=smem, size = 0x400, scoped, tag = 'input window, operand 1, single buffered']
    #allocation7 [shape = 's32[1]{0}', space=sflag, size = 0x4, scoped, tag = 'scoped memory for loss_generator_forward.2']
    #allocation8 [shape = 'u8[393216]{0}', space=vmem, size = 0x60000, scoped, tag = 'input window, operand 2, single buffered']
    #allocation9 [shape = 'u8[393216]{0}', space=vmem, size = 0x60000, scoped, tag = 'input window, operand 3, single buffered']
    #allocation10 [shape = 's32[1]{0}', space=sflag, size = 0x4, scoped, tag = 'scoped memory for loss_generator_forward.2']
    #allocation11 [shape = 'u8[196608]{0}', space=vmem, size = 0x30000, scoped, tag = 'input window, operand 4, single buffered']
    #allocation12 [shape = 'u8[196608]{0}', space=vmem, size = 0x30000, scoped, tag = 'input window, operand 5, single buffered']
    #allocation13 [shape = 's32[1]{0}', space=sflag, size = 0x4, scoped, tag = 'scoped memory for loss_generator_forward.2']
    #allocation14 [shape = 'u8[196608]{0}', space=vmem, size = 0x30000, scoped, tag = 'input window, operand 6, single buffered']
    #allocation15 [shape = 'u8[98304]{0}', space=vmem, size = 0x18000, scoped, tag = 'input window, operand 7, single buffered']
    #allocation16 [shape = 's32[1]{0}', space=sflag, size = 0x4, scoped, tag = 'scoped memory for loss_generator_forward.2']
    #allocation17 [shape = 'u8[98304]{0}', space=vmem, size = 0x18000, scoped, tag = 'input window, operand 8, single buffered']
    #allocation18 [shape = 'u8[4096]{0}', space=vmem, size = 0x1000, scoped, tag = 'input window, operand 17, single buffered']
    #allocation19 [shape = 's32[1]{0}', space=sflag, size = 0x4, scoped, tag = 'scoped memory for loss_generator_forward.2']
    #allocation20 [shape = 'u8[512]{0}', space=smem, size = 0x200, scoped, tag = 'output window, operand 0, single buffered']
    %26 = vsyncpa [#allocation4], 0
    %27 = vsyncpa [#allocation7], 0
    %28 = vsyncpa [#allocation3], 0
    %29 = vsyncpa [#allocation10], 0
    %30 = vsyncpa [#allocation13], 0
    %31 = vsyncpa [#allocation16], 0
    %32 = vsyncpa [#allocation19], 0
    %33 = vsyncpa [#allocation5], 0
    // Predicated region
    $region2: #{loss_generator_forward.2} parent=1 // pred_check
      _
    $region3: #{loss_generator_forward.2} parent=1 // pred_check_branch
      %35 = sbr.rel (0) target = $region5
    $region4: #{loss_generator_forward.2} parent=1 // pred_region
      %s37 = ssub.s32 32, 32
      %38 = vsyncadd [#allocation4], %s37
      %s40 = sshll.u32 %s0, 4
      %s41 = int_to_ptr.vmem [resolvable:$true] %s40
      %43 = dma.vmem_to_smem %s41, 32, [#allocation2], [#allocation4]
    $region5: #{loss_generator_forward.2} parent=1 // pred_fallthru
      _
    // Predicated region
    $region6: #{loss_generator_forward.2} parent=1 // pred_check
      _
    $region7: #{loss_generator_forward.2} parent=1 // pred_check_branch
      %45 = sbr.rel (0) target = $region9
    $region8: #{loss_generator_forward.2} parent=1 // pred_region
      %s47 = ssub.s32 32, 32
      %48 = vsyncadd [#allocation7], %s47
      %s50 = sshll.u32 %s1, 4
      %s51 = int_to_ptr.vmem [resolvable:$true] %s50
      %53 = dma.vmem_to_smem %s51, 32, [#allocation6], [#allocation7]
    $region9: #{loss_generator_forward.2} parent=1 // pred_fallthru
      _
    // Predicated region
    $region10: #{loss_generator_forward.2} parent=1 // pred_check
      _
    $region11: #{loss_generator_forward.2} parent=1 // pred_check_branch
      %55 = sbr.rel (0) target = $region13
    $region12: #{loss_generator_forward.2} parent=1 // pred_region
      %s57 = ssub.s32 12288, 12288
      %58 = vsyncadd [#allocation3], %s57
      %s59 = sshll.u32 [#allocation8], 4
      %s60 = int_to_ptr.vmem [resolvable:$true] %s59
      %65 = dma.hbm_to_vmem [thread:$0]  %s2, 12288, %s60, [#allocation3], 128, 128, 8
    $region13: #{loss_generator_forward.2} parent=1 // pred_fallthru
      _
    // Predicated region
    $region14: #{loss_generator_forward.2} parent=1 // pred_check
      _
    $region15: #{loss_generator_forward.2} parent=1 // pred_check_branch
      %67 = sbr.rel (0) target = $region17
    $region16: #{loss_generator_forward.2} parent=1 // pred_region
      %s69 = ssub.s32 12288, 12288
      %70 = vsyncadd [#allocation10], %s69
      %s71 = sshll.u32 [#allocation9], 4
      %s72 = int_to_ptr.vmem [resolvable:$true] %s71
      %77 = dma.hbm_to_vmem [thread:$0]  %s3, 12288, %s72, [#allocation10], 128, 128, 8
    $region17: #{loss_generator_forward.2} parent=1 // pred_fallthru
      _
    // Predicated region
    $region18: #{loss_generator_forward.2} parent=1 // pred_check
      _
    $region19: #{loss_generator_forward.2} parent=1 // pred_check_branch
      %79 = sbr.rel (0) target = $region21
    $region20: #{loss_generator_forward.2} parent=1 // pred_region
      %s81 = ssub.s32 6144, 6144
      %82 = vsyncadd [#allocation10], %s81
      %s83 = sshll.u32 [#allocation11], 4
      %s84 = int_to_ptr.vmem [resolvable:$true] %s83
      %89 = dma.hbm_to_vmem [thread:$0]  %s4, 6144, %s84, [#allocation10], 128, 128, 8
    $region21: #{loss_generator_forward.2} parent=1 // pred_fallthru
      _
    // Predicated region
    $region22: #{loss_generator_forward.2} parent=1 // pred_check
      _
    $region23: #{loss_generator_forward.2} parent=1 // pred_check_branch
      %91 = sbr.rel (0) target = $region25
    $region24: #{loss_generator_forward.2} parent=1 // pred_region
      %s93 = ssub.s32 6144, 6144
      %94 = vsyncadd [#allocation13], %s93
      %s95 = sshll.u32 [#allocation12], 4
      %s96 = int_to_ptr.vmem [resolvable:$true] %s95
      %101 = dma.hbm_to_vmem [thread:$0]  %s5, 6144, %s96, [#allocation13], 128, 128, 8
    $region25: #{loss_generator_forward.2} parent=1 // pred_fallthru
      _
    // Predicated region
    $region26: #{loss_generator_forward.2} parent=1 // pred_check
      _
    $region27: #{loss_generator_forward.2} parent=1 // pred_check_branch
      %103 = sbr.rel (0) target = $region29
    $region28: #{loss_generator_forward.2} parent=1 // pred_region
      %s105 = ssub.s32 6144, 6144
      %106 = vsyncadd [#allocation13], %s105
      %s107 = sshll.u32 [#allocation14], 4
      %s108 = int_to_ptr.vmem [resolvable:$true] %s107
      %113 = dma.hbm_to_vmem [thread:$0]  %s6, 6144, %s108, [#allocation13], 128, 128, 8
    $region29: #{loss_generator_forward.2} parent=1 // pred_fallthru
      _
    // Predicated region
    $region30: #{loss_generator_forward.2} parent=1 // pred_check
      _
    $region31: #{loss_generator_forward.2} parent=1 // pred_check_branch
      %115 = sbr.rel (0) target = $region33
    $region32: #{loss_generator_forward.2} parent=1 // pred_region
      %s117 = ssub.s32 3072, 3072
      %118 = vsyncadd [#allocation16], %s117
      %s119 = sshll.u32 [#allocation15], 4
      %s120 = int_to_ptr.vmem [resolvable:$true] %s119
      %125 = dma.hbm_to_vmem [thread:$0]  %s7, 3072, %s120, [#allocation16], 128, 128, 8
    $region33: #{loss_generator_forward.2} parent=1 // pred_fallthru
      _
    // Predicated region
    $region34: #{loss_generator_forward.2} parent=1 // pred_check
      _
    $region35: #{loss_generator_forward.2} parent=1 // pred_check_branch
      %127 = sbr.rel (0) target = $region37
    $region36: #{loss_generator_forward.2} parent=1 // pred_region
      %s129 = ssub.s32 3072, 3072
      %130 = vsyncadd [#allocation16], %s129
      %s131 = sshll.u32 [#allocation17], 4
      %s132 = int_to_ptr.vmem [resolvable:$true] %s131
      %137 = dma.hbm_to_vmem [thread:$0]  %s8, 3072, %s132, [#allocation16], 128, 128, 8
    $region37: #{loss_generator_forward.2} parent=1 // pred_fallthru
      _
    // Predicated region
    $region38: #{loss_generator_forward.2} parent=1 // pred_check
      _
    $region39: #{loss_generator_forward.2} parent=1 // pred_check_branch
      %139 = sbr.rel (0) target = $region41
    $region40: #{loss_generator_forward.2} parent=1 // pred_region
      _
    $region41: #{loss_generator_forward.2} parent=1 // pred_fallthru
      _
    // Predicated region
    $region42: #{loss_generator_forward.2} parent=1 // pred_check
      _
    $region43: #{loss_generator_forward.2} parent=1 // pred_check_branch
      %141 = sbr.rel (0) target = $region45
    $region44: #{loss_generator_forward.2} parent=1 // pred_region
      _
    $region45: #{loss_generator_forward.2} parent=1 // pred_fallthru
      _
    // Predicated region
    $region46: #{loss_generator_forward.2} parent=1 // pred_check
      _
    $region47: #{loss_generator_forward.2} parent=1 // pred_check_branch
      %143 = sbr.rel (0) target = $region49
    $region48: #{loss_generator_forward.2} parent=1 // pred_region
      _
    $region49: #{loss_generator_forward.2} parent=1 // pred_fallthru
      _
    // Predicated region
    $region50: #{loss_generator_forward.2} parent=1 // pred_check
      _
    $region51: #{loss_generator_forward.2} parent=1 // pred_check_branch
      %145 = sbr.rel (0) target = $region53
    $region52: #{loss_generator_forward.2} parent=1 // pred_region
      _
    $region53: #{loss_generator_forward.2} parent=1 // pred_fallthru
      _
    // Predicated region
    $region54: #{loss_generator_forward.2} parent=1 // pred_check
      _
    $region55: #{loss_generator_forward.2} parent=1 // pred_check_branch
      %147 = sbr.rel (0) target = $region57
    $region56: #{loss_generator_forward.2} parent=1 // pred_region
      _
    $region57: #{loss_generator_forward.2} parent=1 // pred_fallthru
      _
    // Predicated region
    $region58: #{loss_generator_forward.2} parent=1 // pred_check
      _
    $region59: #{loss_generator_forward.2} parent=1 // pred_check_branch
      %149 = sbr.rel (0) target = $region61
    $region60: #{loss_generator_forward.2} parent=1 // pred_region
      _
    $region61: #{loss_generator_forward.2} parent=1 // pred_fallthru
      _
    // Predicated region
    $region62: #{loss_generator_forward.2} parent=1 // pred_check
      _
    $region63: #{loss_generator_forward.2} parent=1 // pred_check_branch
      %151 = sbr.rel (0) target = $region65
    $region64: #{loss_generator_forward.2} parent=1 // pred_region
      _
    $region65: #{loss_generator_forward.2} parent=1 // pred_fallthru
      _
    // Predicated region
    $region66: #{loss_generator_forward.2} parent=1 // pred_check
      _
    $region67: #{loss_generator_forward.2} parent=1 // pred_check_branch
      %153 = sbr.rel (0) target = $region69
    $region68: #{loss_generator_forward.2} parent=1 // pred_region
      _
    $region69: #{loss_generator_forward.2} parent=1 // pred_fallthru
      _
    // Predicated region
    $region70: #{loss_generator_forward.2} parent=1 // pred_check
      _
    $region71: #{loss_generator_forward.2} parent=1 // pred_check_branch
      %155 = sbr.rel (0) target = $region73
    $region72: #{loss_generator_forward.2} parent=1 // pred_region
      %s157 = ssub.s32 128, 128
      %158 = vsyncadd [#allocation19], %s157
      %s160 = sshll.u32 [#allocation18], 4
      %s161 = int_to_ptr.vmem [resolvable:$true] %s160
      %163 = dma.hbm_to_vmem [thread:$0]  %s17, 128, %s161, [#allocation19]
    $region73: #{loss_generator_forward.2} parent=1 // pred_fallthru
      _
    // Predicated region
    $region74: #{loss_generator_forward.2} parent=1 // pred_check
      _
    $region75: #{loss_generator_forward.2} parent=1 // pred_check_branch
      %165 = sbr.rel (0) target = $region77
    $region76: #{loss_generator_forward.2} parent=1 // pred_region
      _
    $region77: #{loss_generator_forward.2} parent=1 // pred_fallthru
      _
    // Predicated region
    $region78: #{loss_generator_forward.2} parent=1 // pred_check
      _
    $region79: #{loss_generator_forward.2} parent=1 // pred_check_branch
      %167 = sbr.rel (0) target = $region81
    $region80: #{loss_generator_forward.2} parent=1 // pred_region
      %168 = dma.done [#allocation4], 32
    $region81: #{loss_generator_forward.2} parent=1 // pred_fallthru
      _
    // Predicated region
    $region82: #{loss_generator_forward.2} parent=1 // pred_check
      _
    $region83: #{loss_generator_forward.2} parent=1 // pred_check_branch
      %170 = sbr.rel (0) target = $region85
    $region84: #{loss_generator_forward.2} parent=1 // pred_region
      %171 = dma.done [#allocation7], 32
    $region85: #{loss_generator_forward.2} parent=1 // pred_fallthru
      _
    // Predicated region
    $region86: #{loss_generator_forward.2} parent=1 // pred_check
      _
    $region87: #{loss_generator_forward.2} parent=1 // pred_check_branch
      %173 = sbr.rel (0) target = $region89
    $region88: #{loss_generator_forward.2} parent=1 // pred_region
      %174 = dma.done [#allocation3], 12288
    $region89: #{loss_generator_forward.2} parent=1 // pred_fallthru
      _
    // Predicated region
    $region90: #{loss_generator_forward.2} parent=1 // pred_check
      _
    $region91: #{loss_generator_forward.2} parent=1 // pred_check_branch
      %176 = sbr.rel (0) target = $region93
    $region92: #{loss_generator_forward.2} parent=1 // pred_region
      %177 = dma.done [#allocation10], 12288
    $region93: #{loss_generator_forward.2} parent=1 // pred_fallthru
      _
    // Predicated region
    $region94: #{loss_generator_forward.2} parent=1 // pred_check
      _
    $region95: #{loss_generator_forward.2} parent=1 // pred_check_branch
      %179 = sbr.rel (0) target = $region97
    $region96: #{loss_generator_forward.2} parent=1 // pred_region
      %180 = dma.done [#allocation10], 6144
    $region97: #{loss_generator_forward.2} parent=1 // pred_fallthru
      _
    // Predicated region
    $region98: #{loss_generator_forward.2} parent=1 // pred_check
      _
    $region99: #{loss_generator_forward.2} parent=1 // pred_check_branch
      %182 = sbr.rel (0) target = $region101
    $region100: #{loss_generator_forward.2} parent=1 // pred_region
      %183 = dma.done [#allocation13], 6144
    $region101: #{loss_generator_forward.2} parent=1 // pred_fallthru
      _
    // Predicated region
    $region102: #{loss_generator_forward.2} parent=1 // pred_check
      _
    $region103: #{loss_generator_forward.2} parent=1 // pred_check_branch
      %185 = sbr.rel (0) target = $region105
    $region104: #{loss_generator_forward.2} parent=1 // pred_region
      %186 = dma.done [#allocation13], 6144
    $region105: #{loss_generator_forward.2} parent=1 // pred_fallthru
      _
    // Predicated region
    $region106: #{loss_generator_forward.2} parent=1 // pred_check
      _
    $region107: #{loss_generator_forward.2} parent=1 // pred_check_branch
      %188 = sbr.rel (0) target = $region109
    $region108: #{loss_generator_forward.2} parent=1 // pred_region
      %189 = dma.done [#allocation16], 3072
    $region109: #{loss_generator_forward.2} parent=1 // pred_fallthru
      _
    // Predicated region
    $region110: #{loss_generator_forward.2} parent=1 // pred_check
      _
    $region111: #{loss_generator_forward.2} parent=1 // pred_check_branch
      %191 = sbr.rel (0) target = $region113
    $region112: #{loss_generator_forward.2} parent=1 // pred_region
      %192 = dma.done [#allocation16], 3072
    $region113: #{loss_generator_forward.2} parent=1 // pred_fallthru
      _
    // Predicated region
    $region114: #{loss_generator_forward.2} parent=1 // pred_check
      _
    $region115: #{loss_generator_forward.2} parent=1 // pred_check_branch
      %194 = sbr.rel (0) target = $region117
    $region116: #{loss_generator_forward.2} parent=1 // pred_region
      %195 = dma.done [#allocation19], 128
    $region117: #{loss_generator_forward.2} parent=1 // pred_fallthru
      _
    %196 = sfence
    %v197 = vld [vmem:[#allocation8] sm:$0xff]
    %v198 = vld [vmem:[#allocation8 + $0x8] sm:$0xff]
    %v199 = vld [vmem:[#allocation8 + $0x10] sm:$0xff]
    %v200 = vld [vmem:[#allocation8 + $0x18] sm:$0xff]
    %v201 = vld [vmem:[#allocation8 + $0x20] sm:$0xff]
    %v202 = vld [vmem:[#allocation8 + $0x28] sm:$0xff]
    %v203 = vld [vmem:[#allocation8 + $0x30] sm:$0xff]
    %v204 = vld [vmem:[#allocation8 + $0x38] sm:$0xff]
    %v205 = vld [vmem:[#allocation8 + $0x40] sm:$0xff]
    %v206 = vld [vmem:[#allocation8 + $0x48] sm:$0xff]
    %v207 = vld [vmem:[#allocation8 + $0x50] sm:$0xff]
    %v208 = vld [vmem:[#allocation8 + $0x58] sm:$0xff]
    %v209 = vld [vmem:[#allocation8 + $0x60] sm:$0xff]
    %v210 = vld [vmem:[#allocation8 + $0x68] sm:$0xff]
    %v211 = vld [vmem:[#allocation8 + $0x70] sm:$0xff]
    %v212 = vld [vmem:[#allocation8 + $0x78] sm:$0xff]
    %v213 = vld [vmem:[#allocation8 + $0x80] sm:$0xff]
    %v214 = vld [vmem:[#allocation8 + $0x88] sm:$0xff]
    %v215 = vld [vmem:[#allocation8 + $0x90] sm:$0xff]
    %v216 = vld [vmem:[#allocation8 + $0x98] sm:$0xff]
    %v217 = vld [vmem:[#allocation8 + $0xa0] sm:$0xff]
    %v218 = vld [vmem:[#allocation8 + $0xa8] sm:$0xff]
    %v219 = vld [vmem:[#allocation8 + $0xb0] sm:$0xff]
    %v220 = vld [vmem:[#allocation8 + $0xb8] sm:$0xff]
    %v221 = vld [vmem:[#allocation8 + $0xc0] sm:$0xff]
    %v222 = vld [vmem:[#allocation8 + $0xc8] sm:$0xff]
    %v223 = vld [vmem:[#allocation8 + $0xd0] sm:$0xff]
    %v224 = vld [vmem:[#allocation8 + $0xd8] sm:$0xff]
    %v225 = vld [vmem:[#allocation8 + $0xe0] sm:$0xff]
    %v226 = vld [vmem:[#allocation8 + $0xe8] sm:$0xff]
    %v227 = vld [vmem:[#allocation8 + $0xf0] sm:$0xff]
    %v228 = vld [vmem:[#allocation8 + $0xf8] sm:$0xff]
    %v229 = vld [vmem:[#allocation8 + $0x100] sm:$0xff]
    %v230 = vld [vmem:[#allocation8 + $0x108] sm:$0xff]
    %v231 = vld [vmem:[#allocation8 + $0x110] sm:$0xff]
    %v232 = vld [vmem:[#allocation8 + $0x118] sm:$0xff]
    %v233 = vld [vmem:[#allocation8 + $0x120] sm:$0xff]
    %v234 = vld [vmem:[#allocation8 + $0x128] sm:$0xff]
    %v235 = vld [vmem:[#allocation8 + $0x130] sm:$0xff]
    %v236 = vld [vmem:[#allocation8 + $0x138] sm:$0xff]
    %v237 = vld [vmem:[#allocation8 + $0x140] sm:$0xff]
    %v238 = vld [vmem:[#allocation8 + $0x148] sm:$0xff]
    %v239 = vld [vmem:[#allocation8 + $0x150] sm:$0xff]
    %v240 = vld [vmem:[#allocation8 + $0x158] sm:$0xff]
    %v241 = vld [vmem:[#allocation8 + $0x160] sm:$0xff]
    %v242 = vld [vmem:[#allocation8 + $0x168] sm:$0xff]
    %v243 = vld [vmem:[#allocation8 + $0x170] sm:$0xff]
    %v244 = vld [vmem:[#allocation8 + $0x178] sm:$0xff]
    %v245 = vld [vmem:[#allocation8 + $0x180] sm:$0xff]
    %v246 = vld [vmem:[#allocation8 + $0x188] sm:$0xff]
    %v247 = vld [vmem:[#allocation8 + $0x190] sm:$0xff]
    %v248 = vld [vmem:[#allocation8 + $0x198] sm:$0xff]
    %v249 = vld [vmem:[#allocation8 + $0x1a0] sm:$0xff]
    %v250 = vld [vmem:[#allocation8 + $0x1a8] sm:$0xff]
    %v251 = vld [vmem:[#allocation8 + $0x1b0] sm:$0xff]
    %v252 = vld [vmem:[#allocation8 + $0x1b8] sm:$0xff]
    %v253 = vld [vmem:[#allocation8 + $0x1c0] sm:$0xff]
    %v254 = vld [vmem:[#allocation8 + $0x1c8] sm:$0xff]
    %v255 = vld [vmem:[#allocation8 + $0x1d0] sm:$0xff]
    %v256 = vld [vmem:[#allocation8 + $0x1d8] sm:$0xff]
    %v257 = vld [vmem:[#allocation8 + $0x1e0] sm:$0xff]
    %v258 = vld [vmem:[#allocation8 + $0x1e8] sm:$0xff]
    %v259 = vld [vmem:[#allocation8 + $0x1f0] sm:$0xff]
    %v260 = vld [vmem:[#allocation8 + $0x1f8] sm:$0xff]
    %v261 = vld [vmem:[#allocation8 + $0x200] sm:$0xff]
    %v262 = vld [vmem:[#allocation8 + $0x208] sm:$0xff]
    %v263 = vld [vmem:[#allocation8 + $0x210] sm:$0xff]
    %v264 = vld [vmem:[#allocation8 + $0x218] sm:$0xff]
    %v265 = vld [vmem:[#allocation8 + $0x220] sm:$0xff]
    %v266 = vld [vmem:[#allocation8 + $0x228] sm:$0xff]
    %v267 = vld [vmem:[#allocation8 + $0x230] sm:$0xff]
    %v268 = vld [vmem:[#allocation8 + $0x238] sm:$0xff]
    %v269 = vld [vmem:[#allocation8 + $0x240] sm:$0xff]
    %v270 = vld [vmem:[#allocation8 + $0x248] sm:$0xff]
    %v271 = vld [vmem:[#allocation8 + $0x250] sm:$0xff]
    %v272 = vld [vmem:[#allocation8 + $0x258] sm:$0xff]
    %v273 = vld [vmem:[#allocation8 + $0x260] sm:$0xff]
    %v274 = vld [vmem:[#allocation8 + $0x268] sm:$0xff]
    %v275 = vld [vmem:[#allocation8 + $0x270] sm:$0xff]
    %v276 = vld [vmem:[#allocation8 + $0x278] sm:$0xff]
    %v277 = vld [vmem:[#allocation8 + $0x280] sm:$0xff]
    %v278 = vld [vmem:[#allocation8 + $0x288] sm:$0xff]
    %v279 = vld [vmem:[#allocation8 + $0x290] sm:$0xff]
    %v280 = vld [vmem:[#allocation8 + $0x298] sm:$0xff]
    %v281 = vld [vmem:[#allocation8 + $0x2a0] sm:$0xff]
    %v282 = vld [vmem:[#allocation8 + $0x2a8] sm:$0xff]
    %v283 = vld [vmem:[#allocation8 + $0x2b0] sm:$0xff]
    %v284 = vld [vmem:[#allocation8 + $0x2b8] sm:$0xff]
    %v285 = vld [vmem:[#allocation8 + $0x2c0] sm:$0xff]
    %v286 = vld [vmem:[#allocation8 + $0x2c8] sm:$0xff]
    %v287 = vld [vmem:[#allocation8 + $0x2d0] sm:$0xff]
    %v288 = vld [vmem:[#allocation8 + $0x2d8] sm:$0xff]
    %v289 = vld [vmem:[#allocation8 + $0x2e0] sm:$0xff]
    %v290 = vld [vmem:[#allocation8 + $0x2e8] sm:$0xff]
    %v291 = vld [vmem:[#allocation8 + $0x2f0] sm:$0xff]
    %v292 = vld [vmem:[#allocation8 + $0x2f8] sm:$0xff]
    %v293 = vld [vmem:[#allocation9] sm:$0xff]
    %v294 = vld [vmem:[#allocation9 + $0x8] sm:$0xff]
    %v295 = vld [vmem:[#allocation9 + $0x10] sm:$0xff]
    %v296 = vld [vmem:[#allocation9 + $0x18] sm:$0xff]
    %v297 = vld [vmem:[#allocation9 + $0x20] sm:$0xff]
    %v298 = vld [vmem:[#allocation9 + $0x28] sm:$0xff]
    %v299 = vld [vmem:[#allocation9 + $0x30] sm:$0xff]
    %v300 = vld [vmem:[#allocation9 + $0x38] sm:$0xff]
    %v301 = vld [vmem:[#allocation9 + $0x40] sm:$0xff]
    %v302 = vld [vmem:[#allocation9 + $0x48] sm:$0xff]
    %v303 = vld [vmem:[#allocation9 + $0x50] sm:$0xff]
    %v304 = vld [vmem:[#allocation9 + $0x58] sm:$0xff]
    %v305 = vld [vmem:[#allocation9 + $0x60] sm:$0xff]
    %v306 = vld [vmem:[#allocation9 + $0x68] sm:$0xff]
    %v307 = vld [vmem:[#allocation9 + $0x70] sm:$0xff]
    %v308 = vld [vmem:[#allocation9 + $0x78] sm:$0xff]
    %v309 = vld [vmem:[#allocation9 + $0x80] sm:$0xff]
    %v310 = vld [vmem:[#allocation9 + $0x88] sm:$0xff]
    %v311 = vld [vmem:[#allocation9 + $0x90] sm:$0xff]
    %v312 = vld [vmem:[#allocation9 + $0x98] sm:$0xff]
    %v313 = vld [vmem:[#allocation9 + $0xa0] sm:$0xff]
    %v314 = vld [vmem:[#allocation9 + $0xa8] sm:$0xff]
    %v315 = vld [vmem:[#allocation9 + $0xb0] sm:$0xff]
    %v316 = vld [vmem:[#allocation9 + $0xb8] sm:$0xff]
    %v317 = vld [vmem:[#allocation9 + $0xc0] sm:$0xff]
    %v318 = vld [vmem:[#allocation9 + $0xc8] sm:$0xff]
    %v319 = vld [vmem:[#allocation9 + $0xd0] sm:$0xff]
    %v320 = vld [vmem:[#allocation9 + $0xd8] sm:$0xff]
    %v321 = vld [vmem:[#allocation9 + $0xe0] sm:$0xff]
    %v322 = vld [vmem:[#allocation9 + $0xe8] sm:$0xff]
    %v323 = vld [vmem:[#allocation9 + $0xf0] sm:$0xff]
    %v324 = vld [vmem:[#allocation9 + $0xf8] sm:$0xff]
    %v325 = vld [vmem:[#allocation9 + $0x100] sm:$0xff]
    %v326 = vld [vmem:[#allocation9 + $0x108] sm:$0xff]
    %v327 = vld [vmem:[#allocation9 + $0x110] sm:$0xff]
    %v328 = vld [vmem:[#allocation9 + $0x118] sm:$0xff]
    %v329 = vld [vmem:[#allocation9 + $0x120] sm:$0xff]
    %v330 = vld [vmem:[#allocation9 + $0x128] sm:$0xff]
    %v331 = vld [vmem:[#allocation9 + $0x130] sm:$0xff]
    %v332 = vld [vmem:[#allocation9 + $0x138] sm:$0xff]
    %v333 = vld [vmem:[#allocation9 + $0x140] sm:$0xff]
    %v334 = vld [vmem:[#allocation9 + $0x148] sm:$0xff]
    %v335 = vld [vmem:[#allocation9 + $0x150] sm:$0xff]
    %v336 = vld [vmem:[#allocation9 + $0x158] sm:$0xff]
    %v337 = vld [vmem:[#allocation9 + $0x160] sm:$0xff]
    %v338 = vld [vmem:[#allocation9 + $0x168] sm:$0xff]
    %v339 = vld [vmem:[#allocation9 + $0x170] sm:$0xff]
    %v340 = vld [vmem:[#allocation9 + $0x178] sm:$0xff]
    %v341 = vld [vmem:[#allocation9 + $0x180] sm:$0xff]
    %v342 = vld [vmem:[#allocation9 + $0x188] sm:$0xff]
    %v343 = vld [vmem:[#allocation9 + $0x190] sm:$0xff]
    %v344 = vld [vmem:[#allocation9 + $0x198] sm:$0xff]
    %v345 = vld [vmem:[#allocation9 + $0x1a0] sm:$0xff]
    %v346 = vld [vmem:[#allocation9 + $0x1a8] sm:$0xff]
    %v347 = vld [vmem:[#allocation9 + $0x1b0] sm:$0xff]
    %v348 = vld [vmem:[#allocation9 + $0x1b8] sm:$0xff]
    %v349 = vld [vmem:[#allocation9 + $0x1c0] sm:$0xff]
    %v350 = vld [vmem:[#allocation9 + $0x1c8] sm:$0xff]
    %v351 = vld [vmem:[#allocation9 + $0x1d0] sm:$0xff]
    %v352 = vld [vmem:[#allocation9 + $0x1d8] sm:$0xff]
    %v353 = vld [vmem:[#allocation9 + $0x1e0] sm:$0xff]
    %v354 = vld [vmem:[#allocation9 + $0x1e8] sm:$0xff]
    %v355 = vld [vmem:[#allocation9 + $0x1f0] sm:$0xff]
    %v356 = vld [vmem:[#allocation9 + $0x1f8] sm:$0xff]
    %v357 = vld [vmem:[#allocation9 + $0x200] sm:$0xff]
    %v358 = vld [vmem:[#allocation9 + $0x208] sm:$0xff]
    %v359 = vld [vmem:[#allocation9 + $0x210] sm:$0xff]
    %v360 = vld [vmem:[#allocation9 + $0x218] sm:$0xff]
    %v361 = vld [vmem:[#allocation9 + $0x220] sm:$0xff]
    %v362 = vld [vmem:[#allocation9 + $0x228] sm:$0xff]
    %v363 = vld [vmem:[#allocation9 + $0x230] sm:$0xff]
    %v364 = vld [vmem:[#allocation9 + $0x238] sm:$0xff]
    %v365 = vld [vmem:[#allocation9 + $0x240] sm:$0xff]
    %v366 = vld [vmem:[#allocation9 + $0x248] sm:$0xff]
    %v367 = vld [vmem:[#allocation9 + $0x250] sm:$0xff]
    %v368 = vld [vmem:[#allocation9 + $0x258] sm:$0xff]
    %v369 = vld [vmem:[#allocation9 + $0x260] sm:$0xff]
    %v370 = vld [vmem:[#allocation9 + $0x268] sm:$0xff]
    %v371 = vld [vmem:[#allocation9 + $0x270] sm:$0xff]
    %v372 = vld [vmem:[#allocation9 + $0x278] sm:$0xff]
    %v373 = vld [vmem:[#allocation9 + $0x280] sm:$0xff]
    %v374 = vld [vmem:[#allocation9 + $0x288] sm:$0xff]
    %v375 = vld [vmem:[#allocation9 + $0x290] sm:$0xff]
    %v376 = vld [vmem:[#allocation9 + $0x298] sm:$0xff]
    %v377 = vld [vmem:[#allocation9 + $0x2a0] sm:$0xff]
    %v378 = vld [vmem:[#allocation9 + $0x2a8] sm:$0xff]
    %v379 = vld [vmem:[#allocation9 + $0x2b0] sm:$0xff]
    %v380 = vld [vmem:[#allocation9 + $0x2b8] sm:$0xff]
    %v381 = vld [vmem:[#allocation9 + $0x2c0] sm:$0xff]
    %v382 = vld [vmem:[#allocation9 + $0x2c8] sm:$0xff]
    %v383 = vld [vmem:[#allocation9 + $0x2d0] sm:$0xff]
    %v384 = vld [vmem:[#allocation9 + $0x2d8] sm:$0xff]
    %v385 = vld [vmem:[#allocation9 + $0x2e0] sm:$0xff]
    %v386 = vld [vmem:[#allocation9 + $0x2e8] sm:$0xff]
    %v387 = vld [vmem:[#allocation9 + $0x2f0] sm:$0xff]
    %v388 = vld [vmem:[#allocation9 + $0x2f8] sm:$0xff]
    %v389 = vsub.f32 %v197, %v293
    %v390 = vsub.f32 %v198, %v294
    %v391 = vsub.f32 %v199, %v295
    %v392 = vsub.f32 %v200, %v296
    %v393 = vsub.f32 %v201, %v297
    %v394 = vsub.f32 %v202, %v298
    %v395 = vsub.f32 %v203, %v299
    %v396 = vsub.f32 %v204, %v300
    %v397 = vsub.f32 %v205, %v301
    %v398 = vsub.f32 %v206, %v302
    %v399 = vsub.f32 %v207, %v303
    %v400 = vsub.f32 %v208, %v304
    %v401 = vsub.f32 %v209, %v305
    %v402 = vsub.f32 %v210, %v306
    %v403 = vsub.f32 %v211, %v307
    %v404 = vsub.f32 %v212, %v308
    %v405 = vsub.f32 %v213, %v309
    %v406 = vsub.f32 %v214, %v310
    %v407 = vsub.f32 %v215, %v311
    %v408 = vsub.f32 %v216, %v312
    %v409 = vsub.f32 %v217, %v313
    %v410 = vsub.f32 %v218, %v314
    %v411 = vsub.f32 %v219, %v315
    %v412 = vsub.f32 %v220, %v316
    %v413 = vsub.f32 %v221, %v317
    %v414 = vsub.f32 %v222, %v318
    %v415 = vsub.f32 %v223, %v319
    %v416 = vsub.f32 %v224, %v320
    %v417 = vsub.f32 %v225, %v321
    %v418 = vsub.f32 %v226, %v322
    %v419 = vsub.f32 %v227, %v323
    %v420 = vsub.f32 %v228, %v324
    %v421 = vsub.f32 %v229, %v325
    %v422 = vsub.f32 %v230, %v326
    %v423 = vsub.f32 %v231, %v327
    %v424 = vsub.f32 %v232, %v328
    %v425 = vsub.f32 %v233, %v329
    %v426 = vsub.f32 %v234, %v330
    %v427 = vsub.f32 %v235, %v331
    %v428 = vsub.f32 %v236, %v332
    %v429 = vsub.f32 %v237, %v333
    %v430 = vsub.f32 %v238, %v334
    %v431 = vsub.f32 %v239, %v335
    %v432 = vsub.f32 %v240, %v336
    %v433 = vsub.f32 %v241, %v337
    %v434 = vsub.f32 %v242, %v338
    %v435 = vsub.f32 %v243, %v339
    %v436 = vsub.f32 %v244, %v340
    %v437 = vsub.f32 %v245, %v341
    %v438 = vsub.f32 %v246, %v342
    %v439 = vsub.f32 %v247, %v343
    %v440 = vsub.f32 %v248, %v344
    %v441 = vsub.f32 %v249, %v345
    %v442 = vsub.f32 %v250, %v346
    %v443 = vsub.f32 %v251, %v347
    %v444 = vsub.f32 %v252, %v348
    %v445 = vsub.f32 %v253, %v349
    %v446 = vsub.f32 %v254, %v350
    %v447 = vsub.f32 %v255, %v351
    %v448 = vsub.f32 %v256, %v352
    %v449 = vsub.f32 %v257, %v353
    %v450 = vsub.f32 %v258, %v354
    %v451 = vsub.f32 %v259, %v355
    %v452 = vsub.f32 %v260, %v356
    %v453 = vsub.f32 %v261, %v357
    %v454 = vsub.f32 %v262, %v358
    %v455 = vsub.f32 %v263, %v359
    %v456 = vsub.f32 %v264, %v360
    %v457 = vsub.f32 %v265, %v361
    %v458 = vsub.f32 %v266, %v362
    %v459 = vsub.f32 %v267, %v363
    %v460 = vsub.f32 %v268, %v364
    %v461 = vsub.f32 %v269, %v365
    %v462 = vsub.f32 %v270, %v366
    %v463 = vsub.f32 %v271, %v367
    %v464 = vsub.f32 %v272, %v368
    %v465 = vsub.f32 %v273, %v369
    %v466 = vsub.f32 %v274, %v370
    %v467 = vsub.f32 %v275, %v371
    %v468 = vsub.f32 %v276, %v372
    %v469 = vsub.f32 %v277, %v373
    %v470 = vsub.f32 %v278, %v374
    %v471 = vsub.f32 %v279, %v375
    %v472 = vsub.f32 %v280, %v376
    %v473 = vsub.f32 %v281, %v377
    %v474 = vsub.f32 %v282, %v378
    %v475 = vsub.f32 %v283, %v379
    %v476 = vsub.f32 %v284, %v380
    %v477 = vsub.f32 %v285, %v381
    %v478 = vsub.f32 %v286, %v382
    %v479 = vsub.f32 %v287, %v383
    %v480 = vsub.f32 %v288, %v384
    %v481 = vsub.f32 %v289, %v385
    %v482 = vsub.f32 %v290, %v386
    %v483 = vsub.f32 %v291, %v387
    %v484 = vsub.f32 %v292, %v388
    %v485 = vand.u32 2147483647, %v389
    %v486 = vand.u32 2147483647, %v390
    %v487 = vand.u32 2147483647, %v391
    %v488 = vand.u32 2147483647, %v392
    %v489 = vand.u32 2147483647, %v393
    %v490 = vand.u32 2147483647, %v394
    %v491 = vand.u32 2147483647, %v395
    %v492 = vand.u32 2147483647, %v396
    %v493 = vand.u32 2147483647, %v397
    %v494 = vand.u32 2147483647, %v398
    %v495 = vand.u32 2147483647, %v399
    %v496 = vand.u32 2147483647, %v400
    %v497 = vand.u32 2147483647, %v401
    %v498 = vand.u32 2147483647, %v402
    %v499 = vand.u32 2147483647, %v403
    %v500 = vand.u32 2147483647, %v404
    %v501 = vand.u32 2147483647, %v405
    %v502 = vand.u32 2147483647, %v406
    %v503 = vand.u32 2147483647, %v407
    %v504 = vand.u32 2147483647, %v408
    %v505 = vand.u32 2147483647, %v409
    %v506 = vand.u32 2147483647, %v410
    %v507 = vand.u32 2147483647, %v411
    %v508 = vand.u32 2147483647, %v412
    %v509 = vand.u32 2147483647, %v413
    %v510 = vand.u32 2147483647, %v414
    %v511 = vand.u32 2147483647, %v415
    %v512 = vand.u32 2147483647, %v416
    %v513 = vand.u32 2147483647, %v417
    %v514 = vand.u32 2147483647, %v418
    %v515 = vand.u32 2147483647, %v419
    %v516 = vand.u32 2147483647, %v420
    %v517 = vand.u32 2147483647, %v421
    %v518 = vand.u32 2147483647, %v422
    %v519 = vand.u32 2147483647, %v423
    %v520 = vand.u32 2147483647, %v424
    %v521 = vand.u32 2147483647, %v425
    %v522 = vand.u32 2147483647, %v426
    %v523 = vand.u32 2147483647, %v427
    %v524 = vand.u32 2147483647, %v428
    %v525 = vand.u32 2147483647, %v429
    %v526 = vand.u32 2147483647, %v430
    %v527 = vand.u32 2147483647, %v431
    %v528 = vand.u32 2147483647, %v432
    %v529 = vand.u32 2147483647, %v433
    %v530 = vand.u32 2147483647, %v434
    %v531 = vand.u32 2147483647, %v435
    %v532 = vand.u32 2147483647, %v436
    %v533 = vand.u32 2147483647, %v437
    %v534 = vand.u32 2147483647, %v438
    %v535 = vand.u32 2147483647, %v439
    %v536 = vand.u32 2147483647, %v440
    %v537 = vand.u32 2147483647, %v441
    %v538 = vand.u32 2147483647, %v442
    %v539 = vand.u32 2147483647, %v443
    %v540 = vand.u32 2147483647, %v444
    %v541 = vand.u32 2147483647, %v445
    %v542 = vand.u32 2147483647, %v446
    %v543 = vand.u32 2147483647, %v447
    %v544 = vand.u32 2147483647, %v448
    %v545 = vand.u32 2147483647, %v449
    %v546 = vand.u32 2147483647, %v450
    %v547 = vand.u32 2147483647, %v451
    %v548 = vand.u32 2147483647, %v452
    %v549 = vand.u32 2147483647, %v453
    %v550 = vand.u32 2147483647, %v454
    %v551 = vand.u32 2147483647, %v455
    %v552 = vand.u32 2147483647, %v456
    %v553 = vand.u32 2147483647, %v457
    %v554 = vand.u32 2147483647, %v458
    %v555 = vand.u32 2147483647, %v459
    %v556 = vand.u32 2147483647, %v460
    %v557 = vand.u32 2147483647, %v461
    %v558 = vand.u32 2147483647, %v462
    %v559 = vand.u32 2147483647, %v463
    %v560 = vand.u32 2147483647, %v464
    %v561 = vand.u32 2147483647, %v465
    %v562 = vand.u32 2147483647, %v466
    %v563 = vand.u32 2147483647, %v467
    %v564 = vand.u32 2147483647, %v468
    %v565 = vand.u32 2147483647, %v469
    %v566 = vand.u32 2147483647, %v470
    %v567 = vand.u32 2147483647, %v471
    %v568 = vand.u32 2147483647, %v472
    %v569 = vand.u32 2147483647, %v473
    %v570 = vand.u32 2147483647, %v474
    %v571 = vand.u32 2147483647, %v475
    %v572 = vand.u32 2147483647, %v476
    %v573 = vand.u32 2147483647, %v477
    %v574 = vand.u32 2147483647, %v478
    %v575 = vand.u32 2147483647, %v479
    %v576 = vand.u32 2147483647, %v480
    %v577 = vand.u32 2147483647, %v481
    %v578 = vand.u32 2147483647, %v482
    %v579 = vand.u32 2147483647, %v483
    %v580 = vand.u32 2147483647, %v484
    %v581 = vadd.f32 %v485, %v486
    %v582 = vadd.f32 %v581, %v487
    %v583 = vadd.f32 %v582, %v488
    %v584 = vadd.f32 %v583, %v489
    %v585 = vadd.f32 %v584, %v490
    %v586 = vadd.f32 %v585, %v491
    %v587 = vadd.f32 %v586, %v492
    %v588 = vadd.f32 %v587, %v493
    %v589 = vadd.f32 %v588, %v494
    %v590 = vadd.f32 %v589, %v495
    %v591 = vadd.f32 %v590, %v496
    %v592 = vadd.f32 %v591, %v497
    %v593 = vadd.f32 %v592, %v498
    %v594 = vadd.f32 %v593, %v499
    %v595 = vadd.f32 %v594, %v500
    %v596 = vadd.f32 %v595, %v501
    %v597 = vadd.f32 %v596, %v502
    %v598 = vadd.f32 %v597, %v503
    %v599 = vadd.f32 %v598, %v504
    %v600 = vadd.f32 %v599, %v505
    %v601 = vadd.f32 %v600, %v506
    %v602 = vadd.f32 %v601, %v507
    %v603 = vadd.f32 %v602, %v508
    %v604 = vadd.f32 %v603, %v509
    %v605 = vadd.f32 %v604, %v510
    %v606 = vadd.f32 %v605, %v511
    %v607 = vadd.f32 %v606, %v512
    %v608 = vadd.f32 %v607, %v513
    %v609 = vadd.f32 %v608, %v514
    %v610 = vadd.f32 %v609, %v515
    %v611 = vadd.f32 %v610, %v516
    %v612 = vadd.f32 %v611, %v517
    %v613 = vadd.f32 %v612, %v518
    %v614 = vadd.f32 %v613, %v519
    %v615 = vadd.f32 %v614, %v520
    %v616 = vadd.f32 %v615, %v521
    %v617 = vadd.f32 %v616, %v522
    %v618 = vadd.f32 %v617, %v523
    %v619 = vadd.f32 %v618, %v524
    %v620 = vadd.f32 %v619, %v525
    %v621 = vadd.f32 %v620, %v526
    %v622 = vadd.f32 %v621, %v527
    %v623 = vadd.f32 %v622, %v528
    %v624 = vadd.f32 %v623, %v529
    %v625 = vadd.f32 %v624, %v530
    %v626 = vadd.f32 %v625, %v531
    %v627 = vadd.f32 %v626, %v532
    %v628 = vadd.f32 %v627, %v533
    %v629 = vadd.f32 %v628, %v534
    %v630 = vadd.f32 %v629, %v535
    %v631 = vadd.f32 %v630, %v536
    %v632 = vadd.f32 %v631, %v537
    %v633 = vadd.f32 %v632, %v538
    %v634 = vadd.f32 %v633, %v539
    %v635 = vadd.f32 %v634, %v540
    %v636 = vadd.f32 %v635, %v541
    %v637 = vadd.f32 %v636, %v542
    %v638 = vadd.f32 %v637, %v543
    %v639 = vadd.f32 %v638, %v544
    %v640 = vadd.f32 %v639, %v545
    %v641 = vadd.f32 %v640, %v546
    %v642 = vadd.f32 %v641, %v547
    %v643 = vadd.f32 %v642, %v548
    %v644 = vadd.f32 %v643, %v549
    %v645 = vadd.f32 %v644, %v550
    %v646 = vadd.f32 %v645, %v551
    %v647 = vadd.f32 %v646, %v552
    %v648 = vadd.f32 %v647, %v553
    %v649 = vadd.f32 %v648, %v554
    %v650 = vadd.f32 %v649, %v555
    %v651 = vadd.f32 %v650, %v556
    %v652 = vadd.f32 %v651, %v557
    %v653 = vadd.f32 %v652, %v558
    %v654 = vadd.f32 %v653, %v559
    %v655 = vadd.f32 %v654, %v560
    %v656 = vadd.f32 %v655, %v561
    %v657 = vadd.f32 %v656, %v562
    %v658 = vadd.f32 %v657, %v563
    %v659 = vadd.f32 %v658, %v564
    %v660 = vadd.f32 %v659, %v565
    %v661 = vadd.f32 %v660, %v566
    %v662 = vadd.f32 %v661, %v567
    %v663 = vadd.f32 %v662, %v568
    %v664 = vadd.f32 %v663, %v569
    %v665 = vadd.f32 %v664, %v570
    %v666 = vadd.f32 %v665, %v571
    %v667 = vadd.f32 %v666, %v572
    %v668 = vadd.f32 %v667, %v573
    %v669 = vadd.f32 %v668, %v574
    %v670 = vadd.f32 %v669, %v575
    %v671 = vadd.f32 %v670, %v576
    %v672 = vadd.f32 %v671, %v577
    %v673 = vadd.f32 %v672, %v578
    %v674 = vadd.f32 %v673, %v579
    %v675 = vadd.f32 %v674, %v580
    %676 = vadd.xlane.f32.xlu0 %v675
    %v677 = vpop.xlane.xlu0 %676
    %v678 = vrot.slane %v677, 4
    %v679 = vadd.f32 %v677, %v678
    %v680 = vrot.slane %v679, 2
    %v681 = vadd.f32 %v679, %v680
    %v682 = vrot.slane %v681, 1
    %v683 = vadd.f32 %v681, %v682
    %s684 = vtos %v683
    %v685 = vrcp.pop 98304.0
    %s686 = vtos %v685
    %s687 = smul.f32 %s684, %s686
    %s688 = scalar_lea.smem [#allocation20], 0
    %689 = sst [smem:[%s688]] %s687
    %v690 = vlaneseq
    %v691 = vshrl.u32 %v690, 7
    %v692 = vadd.s32 %v691, 8
    %v693 = vadd.s32 %v691, 16
    %v694 = vadd.s32 %v691, 24
    %v695 = vadd.s32 %v691, 32
    %v696 = vadd.s32 %v691, 40
    %v697 = vadd.s32 %v691, 48
    %v698 = vadd.s32 %v691, 56
    %v699 = vadd.s32 %v691, 64
    %v700 = vadd.s32 %v691, 72
    %v701 = vadd.s32 %v691, 80
    %v702 = vadd.s32 %v691, 88
    %v703 = vadd.s32 %v691, 96
    %v704 = vadd.s32 %v691, 104
    %v705 = vadd.s32 %v691, 112
    %v706 = vadd.s32 %v691, 120
    %v707 = vlaneseq
    %v708 = vand.u32 %v707, 127
    %v709 = vadd.s32 %v691, %v708
    %v710 = vadd.s32 %v692, %v708
    %v711 = vadd.s32 %v693, %v708
    %v712 = vadd.s32 %v694, %v708
    %v713 = vadd.s32 %v695, %v708
    %v714 = vadd.s32 %v696, %v708
    %v715 = vadd.s32 %v697, %v708
    %v716 = vadd.s32 %v698, %v708
    %v717 = vadd.s32 %v699, %v708
    %v718 = vadd.s32 %v700, %v708
    %v719 = vadd.s32 %v701, %v708
    %v720 = vadd.s32 %v702, %v708
    %v721 = vadd.s32 %v703, %v708
    %v722 = vadd.s32 %v704, %v708
    %v723 = vadd.s32 %v705, %v708
    %v724 = vadd.s32 %v706, %v708
    %vm725 = vcmp.eq.s32.totalorder %v709, 127
    %vm726 = vcmp.eq.s32.totalorder %v710, 127
    %vm727 = vcmp.eq.s32.totalorder %v711, 127
    %vm728 = vcmp.eq.s32.totalorder %v712, 127
    %vm729 = vcmp.eq.s32.totalorder %v713, 127
    %vm730 = vcmp.eq.s32.totalorder %v714, 127
    %vm731 = vcmp.eq.s32.totalorder %v715, 127
    %vm732 = vcmp.eq.s32.totalorder %v716, 127
    %vm733 = vcmp.eq.s32.totalorder %v717, 127
    %vm734 = vcmp.eq.s32.totalorder %v718, 127
    %vm735 = vcmp.eq.s32.totalorder %v719, 127
    %vm736 = vcmp.eq.s32.totalorder %v720, 127
    %vm737 = vcmp.eq.s32.totalorder %v721, 127
    %vm738 = vcmp.eq.s32.totalorder %v722, 127
    %vm739 = vcmp.eq.s32.totalorder %v723, 127
    %vm740 = vcmp.eq.s32.totalorder %v724, 127
    %v741 = vsel %vm725, 1, 0
    %v742 = vsel %vm726, 1, 0
    %v743 = vsel %vm727, 1, 0
    %v744 = vsel %vm728, 1, 0
    %v745 = vsel %vm729, 1, 0
    %v746 = vsel %vm730, 1, 0
    %v747 = vsel %vm731, 1, 0
    %v748 = vsel %vm732, 1, 0
    %v749 = vsel %vm733, 1, 0
    %v750 = vsel %vm734, 1, 0
    %v751 = vsel %vm735, 1, 0
    %v752 = vsel %vm736, 1, 0
    %v753 = vsel %vm737, 1, 0
    %v754 = vsel %vm738, 1, 0
    %v755 = vsel %vm739, 1, 0
    %v756 = vsel %vm740, 1, 0
    %v757 = vcvt.s32.f32 %v741
    %v758 = vcvt.s32.f32 %v742
    %v759 = vcvt.s32.f32 %v743
    %v760 = vcvt.s32.f32 %v744
    %v761 = vcvt.s32.f32 %v745
    %v762 = vcvt.s32.f32 %v746
    %v763 = vcvt.s32.f32 %v747
    %v764 = vcvt.s32.f32 %v748
    %v765 = vcvt.s32.f32 %v749
    %v766 = vcvt.s32.f32 %v750
    %v767 = vcvt.s32.f32 %v751
    %v768 = vcvt.s32.f32 %v752
    %v769 = vcvt.s32.f32 %v753
    %v770 = vcvt.s32.f32 %v754
    %v771 = vcvt.s32.f32 %v755
    %v772 = vcvt.s32.f32 %v756
    %773 = vmatprep.subr.mxu0 0.0
    %774 = vmatpush1.msra.mxu0 %v772
    %775 = vmatprep.subr.mxu0 0.0
    %776 = vmatpush1.msra.mxu0 %v771
    %777 = vmatprep.subr.mxu0 0.0
    %778 = vmatpush1.msra.mxu0 %v770
    %779 = vmatprep.subr.mxu0 0.0
    %780 = vmatpush1.msra.mxu0 %v769
    %781 = vmatprep.subr.mxu0 0.0
    %782 = vmatpush1.msra.mxu0 %v768
    %783 = vmatprep.subr.mxu0 0.0
    %784 = vmatpush1.msra.mxu0 %v767
    %785 = vmatprep.subr.mxu0 0.0
    %786 = vmatpush1.msra.mxu0 %v766
    %787 = vmatprep.subr.mxu0 0.0
    %788 = vmatpush1.msra.mxu0 %v765
    %789 = vmatprep.subr.mxu0 0.0
    %790 = vmatpush1.msra.mxu0 %v764
    %791 = vmatprep.subr.mxu0 0.0
    %792 = vmatpush1.msra.mxu0 %v763
    %793 = vmatprep.subr.mxu0 0.0
    %794 = vmatpush1.msra.mxu0 %v762
    %795 = vmatprep.subr.mxu0 0.0
    %796 = vmatpush1.msra.mxu0 %v761
    %797 = vmatprep.subr.mxu0 0.0
    %798 = vmatpush1.msra.mxu0 %v760
    %799 = vmatprep.subr.mxu0 0.0
    %800 = vmatpush1.msra.mxu0 %v759
    %801 = vmatprep.subr.mxu0 0.0
    %802 = vmatpush1.msra.mxu0 %v758
    %803 = vmatprep.subr.mxu0 0.0
    %804 = vmatpush1.msra.mxu0 %v757
    %805 = vmatprep.subr.mxu0 0.0
    %806 = vmatpush2.msra.mxu0 0.0
    %807 = vmatprep.subr.mxu0 0.0
    %808 = vmatpush2.msra.mxu0 0.0
    %809 = vmatprep.subr.mxu0 0.0
    %810 = vmatpush2.msra.mxu0 0.0
    %811 = vmatprep.subr.mxu0 0.0
    %812 = vmatpush2.msra.mxu0 0.0
    %813 = vmatprep.subr.mxu0 0.0
    %814 = vmatpush2.msra.mxu0 0.0
    %815 = vmatprep.subr.mxu0 0.0
    %816 = vmatpush2.msra.mxu0 0.0
    %817 = vmatprep.subr.mxu0 0.0
    %818 = vmatpush2.msra.mxu0 0.0
    %819 = vmatprep.subr.mxu0 0.0
    %820 = vmatpush2.msra.mxu0 0.0
    %821 = vmatprep.subr.mxu0 0.0
    %822 = vmatpush2.msra.mxu0 0.0
    %823 = vmatprep.subr.mxu0 0.0
    %824 = vmatpush2.msra.mxu0 0.0
    %825 = vmatprep.subr.mxu0 0.0
    %826 = vmatpush2.msra.mxu0 0.0
    %827 = vmatprep.subr.mxu0 0.0
    %828 = vmatpush2.msra.mxu0 0.0
    %829 = vmatprep.subr.mxu0 0.0
    %830 = vmatpush2.msra.mxu0 0.0
    %831 = vmatprep.subr.mxu0 0.0
    %832 = vmatpush2.msra.mxu0 0.0
    %833 = vmatprep.subr.mxu0 0.0
    %834 = vmatpush2.msra.mxu0 0.0
    %835 = vmatprep.subr.mxu0 0.0
    %836 = vmatpush2.msra.mxu0 0.0
    %837 = vmatprep.mubr.f32.mxu0 0.0
    %838 = vmatmul.mubr.f32.gmra.mxu0 %v197
    %v839 = vpop.f32.mrf.mxu0
    %v840 = vadd.f32 0.0, %v839
    %v841 = vpop.f32.mrf.mxu0
    %842 = vmatprep.mubr.f32.mxu0 0.0
    %843 = vmatmul.mubr.f32.gmra.mxu0 %v198
    %v844 = vpop.f32.mrf.mxu0
    %v845 = vadd.f32 0.0, %v844
    %v846 = vpop.f32.mrf.mxu0
    %847 = vmatprep.mubr.f32.mxu0 0.0
    %848 = vmatmul.mubr.f32.gmra.mxu0 %v199
    %v849 = vpop.f32.mrf.mxu0
    %v850 = vadd.f32 0.0, %v849
    %v851 = vpop.f32.mrf.mxu0
    %852 = vmatprep.mubr.f32.mxu0 0.0
    %853 = vmatmul.mubr.f32.gmra.mxu0 %v200
    %v854 = vpop.f32.mrf.mxu0
    %v855 = vadd.f32 0.0, %v854
    %v856 = vpop.f32.mrf.mxu0
    %857 = vmatprep.mubr.f32.mxu0 0.0
    %858 = vmatmul.mubr.f32.gmra.mxu0 %v201
    %v859 = vpop.f32.mrf.mxu0
    %v860 = vadd.f32 0.0, %v859
    %v861 = vpop.f32.mrf.mxu0
    %862 = vmatprep.mubr.f32.mxu0 0.0
    %863 = vmatmul.mubr.f32.gmra.mxu0 %v202
    %v864 = vpop.f32.mrf.mxu0
    %v865 = vadd.f32 0.0, %v864
    %v866 = vpop.f32.mrf.mxu0
    %867 = vmatprep.mubr.f32.mxu0 0.0
    %868 = vmatmul.mubr.f32.gmra.mxu0 %v203
    %v869 = vpop.f32.mrf.mxu0
    %v870 = vadd.f32 0.0, %v869
    %v871 = vpop.f32.mrf.mxu0
    %872 = vmatprep.mubr.f32.mxu0 0.0
    %873 = vmatmul.mubr.f32.gmra.mxu0 %v204
    %v874 = vpop.f32.mrf.mxu0
    %v875 = vadd.f32 0.0, %v874
    %v876 = vpop.f32.mrf.mxu0
    %877 = vmatprep.mubr.f32.mxu0 0.0
    %878 = vmatmul.mubr.f32.gmra.mxu0 %v205
    %v879 = vpop.f32.mrf.mxu0
    %v880 = vadd.f32 0.0, %v879
    %v881 = vpop.f32.mrf.mxu0
    %882 = vmatprep.mubr.f32.mxu0 0.0
    %883 = vmatmul.mubr.f32.gmra.mxu0 %v206
    %v884 = vpop.f32.mrf.mxu0
    %v885 = vadd.f32 0.0, %v884
    %v886 = vpop.f32.mrf.mxu0
    %887 = vmatprep.mubr.f32.mxu0 0.0
    %888 = vmatmul.mubr.f32.gmra.mxu0 %v207
    %v889 = vpop.f32.mrf.mxu0
    %v890 = vadd.f32 0.0, %v889
    %v891 = vpop.f32.mrf.mxu0
    %892 = vmatprep.mubr.f32.mxu0 0.0
    %893 = vmatmul.mubr.f32.gmra.mxu0 %v208
    %v894 = vpop.f32.mrf.mxu0
    %v895 = vadd.f32 0.0, %v894
    %v896 = vpop.f32.mrf.mxu0
    %897 = vmatprep.mubr.f32.mxu0 0.0
    %898 = vmatmul.mubr.f32.gmra.mxu0 %v209
    %v899 = vpop.f32.mrf.mxu0
    %v900 = vadd.f32 0.0, %v899
    %v901 = vpop.f32.mrf.mxu0
    %902 = vmatprep.mubr.f32.mxu0 0.0
    %903 = vmatmul.mubr.f32.gmra.mxu0 %v210
    %v904 = vpop.f32.mrf.mxu0
    %v905 = vadd.f32 0.0, %v904
    %v906 = vpop.f32.mrf.mxu0
    %907 = vmatprep.mubr.f32.mxu0 0.0
    %908 = vmatmul.mubr.f32.gmra.mxu0 %v211
    %v909 = vpop.f32.mrf.mxu0
    %v910 = vadd.f32 0.0, %v909
    %v911 = vpop.f32.mrf.mxu0
    %912 = vmatprep.mubr.f32.mxu0 0.0
    %913 = vmatmul.mubr.f32.gmra.mxu0 %v212
    %v914 = vpop.f32.mrf.mxu0
    %v915 = vadd.f32 0.0, %v914
    %v916 = vpop.f32.mrf.mxu0
    %917 = vmatprep.mubr.f32.mxu0 0.0
    %918 = vmatmul.mubr.f32.gmra.mxu0 %v213
    %v919 = vpop.f32.mrf.mxu0
    %v920 = vadd.f32 0.0, %v919
    %v921 = vpop.f32.mrf.mxu0
    %922 = vmatprep.mubr.f32.mxu0 0.0
    %923 = vmatmul.mubr.f32.gmra.mxu0 %v214
    %v924 = vpop.f32.mrf.mxu0
    %v925 = vadd.f32 0.0, %v924
    %v926 = vpop.f32.mrf.mxu0
    %927 = vmatprep.mubr.f32.mxu0 0.0
    %928 = vmatmul.mubr.f32.gmra.mxu0 %v215
    %v929 = vpop.f32.mrf.mxu0
    %v930 = vadd.f32 0.0, %v929
    %v931 = vpop.f32.mrf.mxu0
    %932 = vmatprep.mubr.f32.mxu0 0.0
    %933 = vmatmul.mubr.f32.gmra.mxu0 %v216
    %v934 = vpop.f32.mrf.mxu0
    %v935 = vadd.f32 0.0, %v934
    %v936 = vpop.f32.mrf.mxu0
    %937 = vmatprep.mubr.f32.mxu0 0.0
    %938 = vmatmul.mubr.f32.gmra.mxu0 %v217
    %v939 = vpop.f32.mrf.mxu0
    %v940 = vadd.f32 0.0, %v939
    %v941 = vpop.f32.mrf.mxu0
    %942 = vmatprep.mubr.f32.mxu0 0.0
    %943 = vmatmul.mubr.f32.gmra.mxu0 %v218
    %v944 = vpop.f32.mrf.mxu0
    %v945 = vadd.f32 0.0, %v944
    %v946 = vpop.f32.mrf.mxu0
    %947 = vmatprep.mubr.f32.mxu0 0.0
    %948 = vmatmul.mubr.f32.gmra.mxu0 %v219
    %v949 = vpop.f32.mrf.mxu0
    %v950 = vadd.f32 0.0, %v949
    %v951 = vpop.f32.mrf.mxu0
    %952 = vmatprep.mubr.f32.mxu0 0.0
    %953 = vmatmul.mubr.f32.gmra.mxu0 %v220
    %v954 = vpop.f32.mrf.mxu0
    %v955 = vadd.f32 0.0, %v954
    %v956 = vpop.f32.mrf.mxu0
    %957 = vmatprep.mubr.f32.mxu0 0.0
    %958 = vmatmul.mubr.f32.gmra.mxu0 %v221
    %v959 = vpop.f32.mrf.mxu0
    %v960 = vadd.f32 0.0, %v959
    %v961 = vpop.f32.mrf.mxu0
    %962 = vmatprep.mubr.f32.mxu0 0.0
    %963 = vmatmul.mubr.f32.gmra.mxu0 %v222
    %v964 = vpop.f32.mrf.mxu0
    %v965 = vadd.f32 0.0, %v964
    %v966 = vpop.f32.mrf.mxu0
    %967 = vmatprep.mubr.f32.mxu0 0.0
    %968 = vmatmul.mubr.f32.gmra.mxu0 %v223
    %v969 = vpop.f32.mrf.mxu0
    %v970 = vadd.f32 0.0, %v969
    %v971 = vpop.f32.mrf.mxu0
    %972 = vmatprep.mubr.f32.mxu0 0.0
    %973 = vmatmul.mubr.f32.gmra.mxu0 %v224
    %v974 = vpop.f32.mrf.mxu0
    %v975 = vadd.f32 0.0, %v974
    %v976 = vpop.f32.mrf.mxu0
    %977 = vmatprep.mubr.f32.mxu0 0.0
    %978 = vmatmul.mubr.f32.gmra.mxu0 %v225
    %v979 = vpop.f32.mrf.mxu0
    %v980 = vadd.f32 0.0, %v979
    %v981 = vpop.f32.mrf.mxu0
    %982 = vmatprep.mubr.f32.mxu0 0.0
    %983 = vmatmul.mubr.f32.gmra.mxu0 %v226
    %v984 = vpop.f32.mrf.mxu0
    %v985 = vadd.f32 0.0, %v984
    %v986 = vpop.f32.mrf.mxu0
    %987 = vmatprep.mubr.f32.mxu0 0.0
    %988 = vmatmul.mubr.f32.gmra.mxu0 %v227
    %v989 = vpop.f32.mrf.mxu0
    %v990 = vadd.f32 0.0, %v989
    %v991 = vpop.f32.mrf.mxu0
    %992 = vmatprep.mubr.f32.mxu0 0.0
    %993 = vmatmul.mubr.f32.gmra.mxu0 %v228
    %v994 = vpop.f32.mrf.mxu0
    %v995 = vadd.f32 0.0, %v994
    %v996 = vpop.f32.mrf.mxu0
    %997 = vmatprep.mubr.f32.mxu0 0.0
    %998 = vmatmul.mubr.f32.gmra.mxu0 %v229
    %v999 = vpop.f32.mrf.mxu0
    %v1000 = vadd.f32 0.0, %v999
    %v1001 = vpop.f32.mrf.mxu0
    %1002 = vmatprep.mubr.f32.mxu0 0.0
    %1003 = vmatmul.mubr.f32.gmra.mxu0 %v230
    %v1004 = vpop.f32.mrf.mxu0
    %v1005 = vadd.f32 0.0, %v1004
    %v1006 = vpop.f32.mrf.mxu0
    %1007 = vmatprep.mubr.f32.mxu0 0.0
    %1008 = vmatmul.mubr.f32.gmra.mxu0 %v231
    %v1009 = vpop.f32.mrf.mxu0
    %v1010 = vadd.f32 0.0, %v1009
    %v1011 = vpop.f32.mrf.mxu0
    %1012 = vmatprep.mubr.f32.mxu0 0.0
    %1013 = vmatmul.mubr.f32.gmra.mxu0 %v232
    %v1014 = vpop.f32.mrf.mxu0
    %v1015 = vadd.f32 0.0, %v1014
    %v1016 = vpop.f32.mrf.mxu0
    %1017 = vmatprep.mubr.f32.mxu0 0.0
    %1018 = vmatmul.mubr.f32.gmra.mxu0 %v233
    %v1019 = vpop.f32.mrf.mxu0
    %v1020 = vadd.f32 0.0, %v1019
    %v1021 = vpop.f32.mrf.mxu0
    %1022 = vmatprep.mubr.f32.mxu0 0.0
    %1023 = vmatmul.mubr.f32.gmra.mxu0 %v234
    %v1024 = vpop.f32.mrf.mxu0
    %v1025 = vadd.f32 0.0, %v1024
    %v1026 = vpop.f32.mrf.mxu0
    %1027 = vmatprep.mubr.f32.mxu0 0.0
    %1028 = vmatmul.mubr.f32.gmra.mxu0 %v235
    %v1029 = vpop.f32.mrf.mxu0
    %v1030 = vadd.f32 0.0, %v1029
    %v1031 = vpop.f32.mrf.mxu0
    %1032 = vmatprep.mubr.f32.mxu0 0.0
    %1033 = vmatmul.mubr.f32.gmra.mxu0 %v236
    %v1034 = vpop.f32.mrf.mxu0
    %v1035 = vadd.f32 0.0, %v1034
    %v1036 = vpop.f32.mrf.mxu0
    %1037 = vmatprep.mubr.f32.mxu0 0.0
    %1038 = vmatmul.mubr.f32.gmra.mxu0 %v237
    %v1039 = vpop.f32.mrf.mxu0
    %v1040 = vadd.f32 0.0, %v1039
    %v1041 = vpop.f32.mrf.mxu0
    %1042 = vmatprep.mubr.f32.mxu0 0.0
    %1043 = vmatmul.mubr.f32.gmra.mxu0 %v238
    %v1044 = vpop.f32.mrf.mxu0
    %v1045 = vadd.f32 0.0, %v1044
    %v1046 = vpop.f32.mrf.mxu0
    %1047 = vmatprep.mubr.f32.mxu0 0.0
    %1048 = vmatmul.mubr.f32.gmra.mxu0 %v239
    %v1049 = vpop.f32.mrf.mxu0
    %v1050 = vadd.f32 0.0, %v1049
    %v1051 = vpop.f32.mrf.mxu0
    %1052 = vmatprep.mubr.f32.mxu0 0.0
    %1053 = vmatmul.mubr.f32.gmra.mxu0 %v240
    %v1054 = vpop.f32.mrf.mxu0
    %v1055 = vadd.f32 0.0, %v1054
    %v1056 = vpop.f32.mrf.mxu0
    %1057 = vmatprep.mubr.f32.mxu0 0.0
    %1058 = vmatmul.mubr.f32.gmra.mxu0 %v241
    %v1059 = vpop.f32.mrf.mxu0
    %v1060 = vadd.f32 0.0, %v1059
    %v1061 = vpop.f32.mrf.mxu0
    %1062 = vmatprep.mubr.f32.mxu0 0.0
    %1063 = vmatmul.mubr.f32.gmra.mxu0 %v242
    %v1064 = vpop.f32.mrf.mxu0
    %v1065 = vadd.f32 0.0, %v1064
    %v1066 = vpop.f32.mrf.mxu0
    %1067 = vmatprep.mubr.f32.mxu0 0.0
    %1068 = vmatmul.mubr.f32.gmra.mxu0 %v243
    %v1069 = vpop.f32.mrf.mxu0
    %v1070 = vadd.f32 0.0, %v1069
    %v1071 = vpop.f32.mrf.mxu0
    %1072 = vmatprep.mubr.f32.mxu0 0.0
    %1073 = vmatmul.mubr.f32.gmra.mxu0 %v244
    %v1074 = vpop.f32.mrf.mxu0
    %v1075 = vadd.f32 0.0, %v1074
    %v1076 = vpop.f32.mrf.mxu0
    %1077 = vmatprep.mubr.f32.mxu0 0.0
    %1078 = vmatmul.mubr.f32.gmra.mxu0 %v245
    %v1079 = vpop.f32.mrf.mxu0
    %v1080 = vadd.f32 0.0, %v1079
    %v1081 = vpop.f32.mrf.mxu0
    %1082 = vmatprep.mubr.f32.mxu0 0.0
    %1083 = vmatmul.mubr.f32.gmra.mxu0 %v246
    %v1084 = vpop.f32.mrf.mxu0
    %v1085 = vadd.f32 0.0, %v1084
    %v1086 = vpop.f32.mrf.mxu0
    %1087 = vmatprep.mubr.f32.mxu0 0.0
    %1088 = vmatmul.mubr.f32.gmra.mxu0 %v247
    %v1089 = vpop.f32.mrf.mxu0
    %v1090 = vadd.f32 0.0, %v1089
    %v1091 = vpop.f32.mrf.mxu0
    %1092 = vmatprep.mubr.f32.mxu0 0.0
    %1093 = vmatmul.mubr.f32.gmra.mxu0 %v248
    %v1094 = vpop.f32.mrf.mxu0
    %v1095 = vadd.f32 0.0, %v1094
    %v1096 = vpop.f32.mrf.mxu0
    %1097 = vmatprep.mubr.f32.mxu0 0.0
    %1098 = vmatmul.mubr.f32.gmra.mxu0 %v249
    %v1099 = vpop.f32.mrf.mxu0
    %v1100 = vadd.f32 0.0, %v1099
    %v1101 = vpop.f32.mrf.mxu0
    %1102 = vmatprep.mubr.f32.mxu0 0.0
    %1103 = vmatmul.mubr.f32.gmra.mxu0 %v250
    %v1104 = vpop.f32.mrf.mxu0
    %v1105 = vadd.f32 0.0, %v1104
    %v1106 = vpop.f32.mrf.mxu0
    %1107 = vmatprep.mubr.f32.mxu0 0.0
    %1108 = vmatmul.mubr.f32.gmra.mxu0 %v251
    %v1109 = vpop.f32.mrf.mxu0
    %v1110 = vadd.f32 0.0, %v1109
    %v1111 = vpop.f32.mrf.mxu0
    %1112 = vmatprep.mubr.f32.mxu0 0.0
    %1113 = vmatmul.mubr.f32.gmra.mxu0 %v252
    %v1114 = vpop.f32.mrf.mxu0
    %v1115 = vadd.f32 0.0, %v1114
    %v1116 = vpop.f32.mrf.mxu0
    %1117 = vmatprep.mubr.f32.mxu0 0.0
    %1118 = vmatmul.mubr.f32.gmra.mxu0 %v253
    %v1119 = vpop.f32.mrf.mxu0
    %v1120 = vadd.f32 0.0, %v1119
    %v1121 = vpop.f32.mrf.mxu0
    %1122 = vmatprep.mubr.f32.mxu0 0.0
    %1123 = vmatmul.mubr.f32.gmra.mxu0 %v254
    %v1124 = vpop.f32.mrf.mxu0
    %v1125 = vadd.f32 0.0, %v1124
    %v1126 = vpop.f32.mrf.mxu0
    %1127 = vmatprep.mubr.f32.mxu0 0.0
    %1128 = vmatmul.mubr.f32.gmra.mxu0 %v255
    %v1129 = vpop.f32.mrf.mxu0
    %v1130 = vadd.f32 0.0, %v1129
    %v1131 = vpop.f32.mrf.mxu0
    %1132 = vmatprep.mubr.f32.mxu0 0.0
    %1133 = vmatmul.mubr.f32.gmra.mxu0 %v256
    %v1134 = vpop.f32.mrf.mxu0
    %v1135 = vadd.f32 0.0, %v1134
    %v1136 = vpop.f32.mrf.mxu0
    %1137 = vmatprep.mubr.f32.mxu0 0.0
    %1138 = vmatmul.mubr.f32.gmra.mxu0 %v257
    %v1139 = vpop.f32.mrf.mxu0
    %v1140 = vadd.f32 0.0, %v1139
    %v1141 = vpop.f32.mrf.mxu0
    %1142 = vmatprep.mubr.f32.mxu0 0.0
    %1143 = vmatmul.mubr.f32.gmra.mxu0 %v258
    %v1144 = vpop.f32.mrf.mxu0
    %v1145 = vadd.f32 0.0, %v1144
    %v1146 = vpop.f32.mrf.mxu0
    %1147 = vmatprep.mubr.f32.mxu0 0.0
    %1148 = vmatmul.mubr.f32.gmra.mxu0 %v259
    %v1149 = vpop.f32.mrf.mxu0
    %v1150 = vadd.f32 0.0, %v1149
    %v1151 = vpop.f32.mrf.mxu0
    %1152 = vmatprep.mubr.f32.mxu0 0.0
    %1153 = vmatmul.mubr.f32.gmra.mxu0 %v260
    %v1154 = vpop.f32.mrf.mxu0
    %v1155 = vadd.f32 0.0, %v1154
    %v1156 = vpop.f32.mrf.mxu0
    %1157 = vmatprep.mubr.f32.mxu0 0.0
    %1158 = vmatmul.mubr.f32.gmra.mxu0 %v261
    %v1159 = vpop.f32.mrf.mxu0
    %v1160 = vadd.f32 0.0, %v1159
    %v1161 = vpop.f32.mrf.mxu0
    %1162 = vmatprep.mubr.f32.mxu0 0.0
    %1163 = vmatmul.mubr.f32.gmra.mxu0 %v262
    %v1164 = vpop.f32.mrf.mxu0
    %v1165 = vadd.f32 0.0, %v1164
    %v1166 = vpop.f32.mrf.mxu0
    %1167 = vmatprep.mubr.f32.mxu0 0.0
    %1168 = vmatmul.mubr.f32.gmra.mxu0 %v263
    %v1169 = vpop.f32.mrf.mxu0
    %v1170 = vadd.f32 0.0, %v1169
    %v1171 = vpop.f32.mrf.mxu0
    %1172 = vmatprep.mubr.f32.mxu0 0.0
    %1173 = vmatmul.mubr.f32.gmra.mxu0 %v264
    %v1174 = vpop.f32.mrf.mxu0
    %v1175 = vadd.f32 0.0, %v1174
    %v1176 = vpop.f32.mrf.mxu0
    %1177 = vmatprep.mubr.f32.mxu0 0.0
    %1178 = vmatmul.mubr.f32.gmra.mxu0 %v265
    %v1179 = vpop.f32.mrf.mxu0
    %v1180 = vadd.f32 0.0, %v1179
    %v1181 = vpop.f32.mrf.mxu0
    %1182 = vmatprep.mubr.f32.mxu0 0.0
    %1183 = vmatmul.mubr.f32.gmra.mxu0 %v266
    %v1184 = vpop.f32.mrf.mxu0
    %v1185 = vadd.f32 0.0, %v1184
    %v1186 = vpop.f32.mrf.mxu0
    %1187 = vmatprep.mubr.f32.mxu0 0.0
    %1188 = vmatmul.mubr.f32.gmra.mxu0 %v267
    %v1189 = vpop.f32.mrf.mxu0
    %v1190 = vadd.f32 0.0, %v1189
    %v1191 = vpop.f32.mrf.mxu0
    %1192 = vmatprep.mubr.f32.mxu0 0.0
    %1193 = vmatmul.mubr.f32.gmra.mxu0 %v268
    %v1194 = vpop.f32.mrf.mxu0
    %v1195 = vadd.f32 0.0, %v1194
    %v1196 = vpop.f32.mrf.mxu0
    %1197 = vmatprep.mubr.f32.mxu0 0.0
    %1198 = vmatmul.mubr.f32.gmra.mxu0 %v269
    %v1199 = vpop.f32.mrf.mxu0
    %v1200 = vadd.f32 0.0, %v1199
    %v1201 = vpop.f32.mrf.mxu0
    %1202 = vmatprep.mubr.f32.mxu0 0.0
    %1203 = vmatmul.mubr.f32.gmra.mxu0 %v270
    %v1204 = vpop.f32.mrf.mxu0
    %v1205 = vadd.f32 0.0, %v1204
    %v1206 = vpop.f32.mrf.mxu0
    %1207 = vmatprep.mubr.f32.mxu0 0.0
    %1208 = vmatmul.mubr.f32.gmra.mxu0 %v271
    %v1209 = vpop.f32.mrf.mxu0
    %v1210 = vadd.f32 0.0, %v1209
    %v1211 = vpop.f32.mrf.mxu0
    %1212 = vmatprep.mubr.f32.mxu0 0.0
    %1213 = vmatmul.mubr.f32.gmra.mxu0 %v272
    %v1214 = vpop.f32.mrf.mxu0
    %v1215 = vadd.f32 0.0, %v1214
    %v1216 = vpop.f32.mrf.mxu0
    %1217 = vmatprep.mubr.f32.mxu0 0.0
    %1218 = vmatmul.mubr.f32.gmra.mxu0 %v273
    %v1219 = vpop.f32.mrf.mxu0
    %v1220 = vadd.f32 0.0, %v1219
    %v1221 = vpop.f32.mrf.mxu0
    %1222 = vmatprep.mubr.f32.mxu0 0.0
    %1223 = vmatmul.mubr.f32.gmra.mxu0 %v274
    %v1224 = vpop.f32.mrf.mxu0
    %v1225 = vadd.f32 0.0, %v1224
    %v1226 = vpop.f32.mrf.mxu0
    %1227 = vmatprep.mubr.f32.mxu0 0.0
    %1228 = vmatmul.mubr.f32.gmra.mxu0 %v275
    %v1229 = vpop.f32.mrf.mxu0
    %v1230 = vadd.f32 0.0, %v1229
    %v1231 = vpop.f32.mrf.mxu0
    %1232 = vmatprep.mubr.f32.mxu0 0.0
    %1233 = vmatmul.mubr.f32.gmra.mxu0 %v276
    %v1234 = vpop.f32.mrf.mxu0
    %v1235 = vadd.f32 0.0, %v1234
    %v1236 = vpop.f32.mrf.mxu0
    %1237 = vmatprep.mubr.f32.mxu0 0.0
    %1238 = vmatmul.mubr.f32.gmra.mxu0 %v277
    %v1239 = vpop.f32.mrf.mxu0
    %v1240 = vadd.f32 0.0, %v1239
    %v1241 = vpop.f32.mrf.mxu0
    %1242 = vmatprep.mubr.f32.mxu0 0.0
    %1243 = vmatmul.mubr.f32.gmra.mxu0 %v278
    %v1244 = vpop.f32.mrf.mxu0
    %v1245 = vadd.f32 0.0, %v1244
    %v1246 = vpop.f32.mrf.mxu0
    %1247 = vmatprep.mubr.f32.mxu0 0.0
    %1248 = vmatmul.mubr.f32.gmra.mxu0 %v279
    %v1249 = vpop.f32.mrf.mxu0
    %v1250 = vadd.f32 0.0, %v1249
    %v1251 = vpop.f32.mrf.mxu0
    %1252 = vmatprep.mubr.f32.mxu0 0.0
    %1253 = vmatmul.mubr.f32.gmra.mxu0 %v280
    %v1254 = vpop.f32.mrf.mxu0
    %v1255 = vadd.f32 0.0, %v1254
    %v1256 = vpop.f32.mrf.mxu0
    %1257 = vmatprep.mubr.f32.mxu0 0.0
    %1258 = vmatmul.mubr.f32.gmra.mxu0 %v281
    %v1259 = vpop.f32.mrf.mxu0
    %v1260 = vadd.f32 0.0, %v1259
    %v1261 = vpop.f32.mrf.mxu0
    %1262 = vmatprep.mubr.f32.mxu0 0.0
    %1263 = vmatmul.mubr.f32.gmra.mxu0 %v282
    %v1264 = vpop.f32.mrf.mxu0
    %v1265 = vadd.f32 0.0, %v1264
    %v1266 = vpop.f32.mrf.mxu0
    %1267 = vmatprep.mubr.f32.mxu0 0.0
    %1268 = vmatmul.mubr.f32.gmra.mxu0 %v283
    %v1269 = vpop.f32.mrf.mxu0
    %v1270 = vadd.f32 0.0, %v1269
    %v1271 = vpop.f32.mrf.mxu0
    %1272 = vmatprep.mubr.f32.mxu0 0.0
    %1273 = vmatmul.mubr.f32.gmra.mxu0 %v284
    %v1274 = vpop.f32.mrf.mxu0
    %v1275 = vadd.f32 0.0, %v1274
    %v1276 = vpop.f32.mrf.mxu0
    %1277 = vmatprep.mubr.f32.mxu0 0.0
    %1278 = vmatmul.mubr.f32.gmra.mxu0 %v285
    %v1279 = vpop.f32.mrf.mxu0
    %v1280 = vadd.f32 0.0, %v1279
    %v1281 = vpop.f32.mrf.mxu0
    %1282 = vmatprep.mubr.f32.mxu0 0.0
    %1283 = vmatmul.mubr.f32.gmra.mxu0 %v286
    %v1284 = vpop.f32.mrf.mxu0
    %v1285 = vadd.f32 0.0, %v1284
    %v1286 = vpop.f32.mrf.mxu0
    %1287 = vmatprep.mubr.f32.mxu0 0.0
    %1288 = vmatmul.mubr.f32.gmra.mxu0 %v287
    %v1289 = vpop.f32.mrf.mxu0
    %v1290 = vadd.f32 0.0, %v1289
    %v1291 = vpop.f32.mrf.mxu0
    %1292 = vmatprep.mubr.f32.mxu0 0.0
    %1293 = vmatmul.mubr.f32.gmra.mxu0 %v288
    %v1294 = vpop.f32.mrf.mxu0
    %v1295 = vadd.f32 0.0, %v1294
    %v1296 = vpop.f32.mrf.mxu0
    %1297 = vmatprep.mubr.f32.mxu0 0.0
    %1298 = vmatmul.mubr.f32.gmra.mxu0 %v289
    %v1299 = vpop.f32.mrf.mxu0
    %v1300 = vadd.f32 0.0, %v1299
    %v1301 = vpop.f32.mrf.mxu0
    %1302 = vmatprep.mubr.f32.mxu0 0.0
    %1303 = vmatmul.mubr.f32.gmra.mxu0 %v290
    %v1304 = vpop.f32.mrf.mxu0
    %v1305 = vadd.f32 0.0, %v1304
    %v1306 = vpop.f32.mrf.mxu0
    %1307 = vmatprep.mubr.f32.mxu0 0.0
    %1308 = vmatmul.mubr.f32.gmra.mxu0 %v291
    %v1309 = vpop.f32.mrf.mxu0
    %v1310 = vadd.f32 0.0, %v1309
    %v1311 = vpop.f32.mrf.mxu0
    %1312 = vmatprep.mubr.f32.mxu0 0.0
    %1313 = vmatmul.mubr.f32.gmra.mxu0 %v292
    %v1314 = vpop.f32.mrf.mxu0
    %v1315 = vadd.f32 0.0, %v1314
    %v1316 = vpop.f32.mrf.mxu0
    %1317 = vdwg.mxu0
    %v1318 = vsub.f32 %v197, %v840
    %v1319 = vsub.f32 %v198, %v845
    %v1320 = vsub.f32 %v199, %v850
    %v1321 = vsub.f32 %v200, %v855
    %v1322 = vsub.f32 %v201, %v860
    %v1323 = vsub.f32 %v202, %v865
    %v1324 = vsub.f32 %v203, %v870
    %v1325 = vsub.f32 %v204, %v875
    %v1326 = vsub.f32 %v205, %v880
    %v1327 = vsub.f32 %v206, %v885
    %v1328 = vsub.f32 %v207, %v890
    %v1329 = vsub.f32 %v208, %v895
    %v1330 = vsub.f32 %v209, %v900
    %v1331 = vsub.f32 %v210, %v905
    %v1332 = vsub.f32 %v211, %v910
    %v1333 = vsub.f32 %v212, %v915
    %v1334 = vsub.f32 %v213, %v920
    %v1335 = vsub.f32 %v214, %v925
    %v1336 = vsub.f32 %v215, %v930
    %v1337 = vsub.f32 %v216, %v935
    %v1338 = vsub.f32 %v217, %v940
    %v1339 = vsub.f32 %v218, %v945
    %v1340 = vsub.f32 %v219, %v950
    %v1341 = vsub.f32 %v220, %v955
    %v1342 = vsub.f32 %v221, %v960
    %v1343 = vsub.f32 %v222, %v965
    %v1344 = vsub.f32 %v223, %v970
    %v1345 = vsub.f32 %v224, %v975
    %v1346 = vsub.f32 %v225, %v980
    %v1347 = vsub.f32 %v226, %v985
    %v1348 = vsub.f32 %v227, %v990
    %v1349 = vsub.f32 %v228, %v995
    %v1350 = vsub.f32 %v229, %v1000
    %v1351 = vsub.f32 %v230, %v1005
    %v1352 = vsub.f32 %v231, %v1010
    %v1353 = vsub.f32 %v232, %v1015
    %v1354 = vsub.f32 %v233, %v1020
    %v1355 = vsub.f32 %v234, %v1025
    %v1356 = vsub.f32 %v235, %v1030
    %v1357 = vsub.f32 %v236, %v1035
    %v1358 = vsub.f32 %v237, %v1040
    %v1359 = vsub.f32 %v238, %v1045
    %v1360 = vsub.f32 %v239, %v1050
    %v1361 = vsub.f32 %v240, %v1055
    %v1362 = vsub.f32 %v241, %v1060
    %v1363 = vsub.f32 %v242, %v1065
    %v1364 = vsub.f32 %v243, %v1070
    %v1365 = vsub.f32 %v244, %v1075
    %v1366 = vsub.f32 %v245, %v1080
    %v1367 = vsub.f32 %v246, %v1085
    %v1368 = vsub.f32 %v247, %v1090
    %v1369 = vsub.f32 %v248, %v1095
    %v1370 = vsub.f32 %v249, %v1100
    %v1371 = vsub.f32 %v250, %v1105
    %v1372 = vsub.f32 %v251, %v1110
    %v1373 = vsub.f32 %v252, %v1115
    %v1374 = vsub.f32 %v253, %v1120
    %v1375 = vsub.f32 %v254, %v1125
    %v1376 = vsub.f32 %v255, %v1130
    %v1377 = vsub.f32 %v256, %v1135
    %v1378 = vsub.f32 %v257, %v1140
    %v1379 = vsub.f32 %v258, %v1145
    %v1380 = vsub.f32 %v259, %v1150
    %v1381 = vsub.f32 %v260, %v1155
    %v1382 = vsub.f32 %v261, %v1160
    %v1383 = vsub.f32 %v262, %v1165
    %v1384 = vsub.f32 %v263, %v1170
    %v1385 = vsub.f32 %v264, %v1175
    %v1386 = vsub.f32 %v265, %v1180
    %v1387 = vsub.f32 %v266, %v1185
    %v1388 = vsub.f32 %v267, %v1190
    %v1389 = vsub.f32 %v268, %v1195
    %v1390 = vsub.f32 %v269, %v1200
    %v1391 = vsub.f32 %v270, %v1205
    %v1392 = vsub.f32 %v271, %v1210
    %v1393 = vsub.f32 %v272, %v1215
    %v1394 = vsub.f32 %v273, %v1220
    %v1395 = vsub.f32 %v274, %v1225
    %v1396 = vsub.f32 %v275, %v1230
    %v1397 = vsub.f32 %v276, %v1235
    %v1398 = vsub.f32 %v277, %v1240
    %v1399 = vsub.f32 %v278, %v1245
    %v1400 = vsub.f32 %v279, %v1250
    %v1401 = vsub.f32 %v280, %v1255
    %v1402 = vsub.f32 %v281, %v1260
    %v1403 = vsub.f32 %v282, %v1265
    %v1404 = vsub.f32 %v283, %v1270
    %v1405 = vsub.f32 %v284, %v1275
    %v1406 = vsub.f32 %v285, %v1280
    %v1407 = vsub.f32 %v286, %v1285
    %v1408 = vsub.f32 %v287, %v1290
    %v1409 = vsub.f32 %v288, %v1295
    %v1410 = vsub.f32 %v289, %v1300
    %v1411 = vsub.f32 %v290, %v1305
    %v1412 = vsub.f32 %v291, %v1310
    %v1413 = vsub.f32 %v292, %v1315
    %v1414 = vand.u32 2147483647, %v1318
    %v1415 = vand.u32 2147483647, %v1319
    %v1416 = vand.u32 2147483647, %v1320
    %v1417 = vand.u32 2147483647, %v1321
    %v1418 = vand.u32 2147483647, %v1322
    %v1419 = vand.u32 2147483647, %v1323
    %v1420 = vand.u32 2147483647, %v1324
    %v1421 = vand.u32 2147483647, %v1325
    %v1422 = vand.u32 2147483647, %v1326
    %v1423 = vand.u32 2147483647, %v1327
    %v1424 = vand.u32 2147483647, %v1328
    %v1425 = vand.u32 2147483647, %v1329
    %v1426 = vand.u32 2147483647, %v1330
    %v1427 = vand.u32 2147483647, %v1331
    %v1428 = vand.u32 2147483647, %v1332
    %v1429 = vand.u32 2147483647, %v1333
    %v1430 = vand.u32 2147483647, %v1334
    %v1431 = vand.u32 2147483647, %v1335
    %v1432 = vand.u32 2147483647, %v1336
    %v1433 = vand.u32 2147483647, %v1337
    %v1434 = vand.u32 2147483647, %v1338
    %v1435 = vand.u32 2147483647, %v1339
    %v1436 = vand.u32 2147483647, %v1340
    %v1437 = vand.u32 2147483647, %v1341
    %v1438 = vand.u32 2147483647, %v1342
    %v1439 = vand.u32 2147483647, %v1343
    %v1440 = vand.u32 2147483647, %v1344
    %v1441 = vand.u32 2147483647, %v1345
    %v1442 = vand.u32 2147483647, %v1346
    %v1443 = vand.u32 2147483647, %v1347
    %v1444 = vand.u32 2147483647, %v1348
    %v1445 = vand.u32 2147483647, %v1349
    %v1446 = vand.u32 2147483647, %v1350
    %v1447 = vand.u32 2147483647, %v1351
    %v1448 = vand.u32 2147483647, %v1352
    %v1449 = vand.u32 2147483647, %v1353
    %v1450 = vand.u32 2147483647, %v1354
    %v1451 = vand.u32 2147483647, %v1355
    %v1452 = vand.u32 2147483647, %v1356
    %v1453 = vand.u32 2147483647, %v1357
    %v1454 = vand.u32 2147483647, %v1358
    %v1455 = vand.u32 2147483647, %v1359
    %v1456 = vand.u32 2147483647, %v1360
    %v1457 = vand.u32 2147483647, %v1361
    %v1458 = vand.u32 2147483647, %v1362
    %v1459 = vand.u32 2147483647, %v1363
    %v1460 = vand.u32 2147483647, %v1364
    %v1461 = vand.u32 2147483647, %v1365
    %v1462 = vand.u32 2147483647, %v1366
    %v1463 = vand.u32 2147483647, %v1367
    %v1464 = vand.u32 2147483647, %v1368
    %v1465 = vand.u32 2147483647, %v1369
    %v1466 = vand.u32 2147483647, %v1370
    %v1467 = vand.u32 2147483647, %v1371
    %v1468 = vand.u32 2147483647, %v1372
    %v1469 = vand.u32 2147483647, %v1373
    %v1470 = vand.u32 2147483647, %v1374
    %v1471 = vand.u32 2147483647, %v1375
    %v1472 = vand.u32 2147483647, %v1376
    %v1473 = vand.u32 2147483647, %v1377
    %v1474 = vand.u32 2147483647, %v1378
    %v1475 = vand.u32 2147483647, %v1379
    %v1476 = vand.u32 2147483647, %v1380
    %v1477 = vand.u32 2147483647, %v1381
    %v1478 = vand.u32 2147483647, %v1382
    %v1479 = vand.u32 2147483647, %v1383
    %v1480 = vand.u32 2147483647, %v1384
    %v1481 = vand.u32 2147483647, %v1385
    %v1482 = vand.u32 2147483647, %v1386
    %v1483 = vand.u32 2147483647, %v1387
    %v1484 = vand.u32 2147483647, %v1388
    %v1485 = vand.u32 2147483647, %v1389
    %v1486 = vand.u32 2147483647, %v1390
    %v1487 = vand.u32 2147483647, %v1391
    %v1488 = vand.u32 2147483647, %v1392
    %v1489 = vand.u32 2147483647, %v1393
    %v1490 = vand.u32 2147483647, %v1394
    %v1491 = vand.u32 2147483647, %v1395
    %v1492 = vand.u32 2147483647, %v1396
    %v1493 = vand.u32 2147483647, %v1397
    %v1494 = vand.u32 2147483647, %v1398
    %v1495 = vand.u32 2147483647, %v1399
    %v1496 = vand.u32 2147483647, %v1400
    %v1497 = vand.u32 2147483647, %v1401
    %v1498 = vand.u32 2147483647, %v1402
    %v1499 = vand.u32 2147483647, %v1403
    %v1500 = vand.u32 2147483647, %v1404
    %v1501 = vand.u32 2147483647, %v1405
    %v1502 = vand.u32 2147483647, %v1406
    %v1503 = vand.u32 2147483647, %v1407
    %v1504 = vand.u32 2147483647, %v1408
    %v1505 = vand.u32 2147483647, %v1409
    %v1506 = vand.u32 2147483647, %v1410
    %v1507 = vand.u32 2147483647, %v1411
    %v1508 = vand.u32 2147483647, %v1412
    %v1509 = vand.u32 2147483647, %v1413
    %v1510 = vadd.f32 %v1414, %v1415
    %v1511 = vadd.f32 %v1510, %v1416
    %v1512 = vadd.f32 %v1511, %v1417
    %v1513 = vadd.f32 %v1512, %v1418
    %v1514 = vadd.f32 %v1513, %v1419
    %v1515 = vadd.f32 %v1514, %v1420
    %v1516 = vadd.f32 %v1515, %v1421
    %v1517 = vadd.f32 %v1516, %v1422
    %v1518 = vadd.f32 %v1517, %v1423
    %v1519 = vadd.f32 %v1518, %v1424
    %v1520 = vadd.f32 %v1519, %v1425
    %v1521 = vadd.f32 %v1520, %v1426
    %v1522 = vadd.f32 %v1521, %v1427
    %v1523 = vadd.f32 %v1522, %v1428
    %v1524 = vadd.f32 %v1523, %v1429
    %v1525 = vadd.f32 %v1524, %v1430
    %v1526 = vadd.f32 %v1525, %v1431
    %v1527 = vadd.f32 %v1526, %v1432
    %v1528 = vadd.f32 %v1527, %v1433
    %v1529 = vadd.f32 %v1528, %v1434
    %v1530 = vadd.f32 %v1529, %v1435
    %v1531 = vadd.f32 %v1530, %v1436
    %v1532 = vadd.f32 %v1531, %v1437
    %v1533 = vadd.f32 %v1532, %v1438
    %v1534 = vadd.f32 %v1533, %v1439
    %v1535 = vadd.f32 %v1534, %v1440
    %v1536 = vadd.f32 %v1535, %v1441
    %v1537 = vadd.f32 %v1536, %v1442
    %v1538 = vadd.f32 %v1537, %v1443
    %v1539 = vadd.f32 %v1538, %v1444
    %v1540 = vadd.f32 %v1539, %v1445
    %v1541 = vadd.f32 %v1540, %v1446
    %v1542 = vadd.f32 %v1541, %v1447
    %v1543 = vadd.f32 %v1542, %v1448
    %v1544 = vadd.f32 %v1543, %v1449
    %v1545 = vadd.f32 %v1544, %v1450
    %v1546 = vadd.f32 %v1545, %v1451
    %v1547 = vadd.f32 %v1546, %v1452
    %v1548 = vadd.f32 %v1547, %v1453
    %v1549 = vadd.f32 %v1548, %v1454
    %v1550 = vadd.f32 %v1549, %v1455
    %v1551 = vadd.f32 %v1550, %v1456
    %v1552 = vadd.f32 %v1551, %v1457
    %v1553 = vadd.f32 %v1552, %v1458
    %v1554 = vadd.f32 %v1553, %v1459
    %v1555 = vadd.f32 %v1554, %v1460
    %v1556 = vadd.f32 %v1555, %v1461
    %v1557 = vadd.f32 %v1556, %v1462
    %v1558 = vadd.f32 %v1557, %v1463
    %v1559 = vadd.f32 %v1558, %v1464
    %v1560 = vadd.f32 %v1559, %v1465
    %v1561 = vadd.f32 %v1560, %v1466
    %v1562 = vadd.f32 %v1561, %v1467
    %v1563 = vadd.f32 %v1562, %v1468
    %v1564 = vadd.f32 %v1563, %v1469
    %v1565 = vadd.f32 %v1564, %v1470
    %v1566 = vadd.f32 %v1565, %v1471
    %v1567 = vadd.f32 %v1566, %v1472
    %v1568 = vadd.f32 %v1567, %v1473
    %v1569 = vadd.f32 %v1568, %v1474
    %v1570 = vadd.f32 %v1569, %v1475
    %v1571 = vadd.f32 %v1570, %v1476
    %v1572 = vadd.f32 %v1571, %v1477
    %v1573 = vadd.f32 %v1572, %v1478
    %v1574 = vadd.f32 %v1573, %v1479
    %v1575 = vadd.f32 %v1574, %v1480
    %v1576 = vadd.f32 %v1575, %v1481
    %v1577 = vadd.f32 %v1576, %v1482
    %v1578 = vadd.f32 %v1577, %v1483
    %v1579 = vadd.f32 %v1578, %v1484
    %v1580 = vadd.f32 %v1579, %v1485
    %v1581 = vadd.f32 %v1580, %v1486
    %v1582 = vadd.f32 %v1581, %v1487
    %v1583 = vadd.f32 %v1582, %v1488
    %v1584 = vadd.f32 %v1583, %v1489
    %v1585 = vadd.f32 %v1584, %v1490
    %v1586 = vadd.f32 %v1585, %v1491
    %v1587 = vadd.f32 %v1586, %v1492
    %v1588 = vadd.f32 %v1587, %v1493
    %v1589 = vadd.f32 %v1588, %v1494
    %v1590 = vadd.f32 %v1589, %v1495
    %v1591 = vadd.f32 %v1590, %v1496
    %v1592 = vadd.f32 %v1591, %v1497
    %v1593 = vadd.f32 %v1592, %v1498
    %v1594 = vadd.f32 %v1593, %v1499
    %v1595 = vadd.f32 %v1594, %v1500
    %v1596 = vadd.f32 %v1595, %v1501
    %v1597 = vadd.f32 %v1596, %v1502
    %v1598 = vadd.f32 %v1597, %v1503
    %v1599 = vadd.f32 %v1598, %v1504
    %v1600 = vadd.f32 %v1599, %v1505
    %v1601 = vadd.f32 %v1600, %v1506
    %v1602 = vadd.f32 %v1601, %v1507
    %v1603 = vadd.f32 %v1602, %v1508
    %v1604 = vadd.f32 %v1603, %v1509
    %1605 = vadd.xlane.f32.xlu0 %v1604
    %v1606 = vpop.xlane.xlu0 %1605
    %v1607 = vrot.slane %v1606, 4
    %v1608 = vadd.f32 %v1606, %v1607
    %v1609 = vrot.slane %v1608, 2
    %v1610 = vadd.f32 %v1608, %v1609
    %v1611 = vrot.slane %v1610, 1
    %v1612 = vadd.f32 %v1610, %v1611
    %s1613 = vtos %v1612
    %v1614 = vrcp.pop 98304.0
    %s1615 = vtos %v1614
    %s1616 = smul.f32 %s1613, %s1615
    %s1617 = scalar_lea.smem [#allocation20], 1
    %1618 = sst [smem:[%s1617]] %s1616
    %vm1619 = vcmp.lt.s32.totalorder %v708, 127
    %v1620 = vadd.s32 %v708, 1
    %vm1621 = vcmp.eq.s32.totalorder %v691, %v1620
    %vm1622 = vcmp.eq.s32.totalorder %v692, %v1620
    %vm1623 = vcmp.eq.s32.totalorder %v693, %v1620
    %vm1624 = vcmp.eq.s32.totalorder %v694, %v1620
    %vm1625 = vcmp.eq.s32.totalorder %v695, %v1620
    %vm1626 = vcmp.eq.s32.totalorder %v696, %v1620
    %vm1627 = vcmp.eq.s32.totalorder %v697, %v1620
    %vm1628 = vcmp.eq.s32.totalorder %v698, %v1620
    %vm1629 = vcmp.eq.s32.totalorder %v699, %v1620
    %vm1630 = vcmp.eq.s32.totalorder %v700, %v1620
    %vm1631 = vcmp.eq.s32.totalorder %v701, %v1620
    %vm1632 = vcmp.eq.s32.totalorder %v702, %v1620
    %vm1633 = vcmp.eq.s32.totalorder %v703, %v1620
    %vm1634 = vcmp.eq.s32.totalorder %v704, %v1620
    %vm1635 = vcmp.eq.s32.totalorder %v705, %v1620
    %vm1636 = vcmp.eq.s32.totalorder %v706, %v1620
    %v1637 = vsel %vm1621, 1, 0
    %v1638 = vsel %vm1622, 1, 0
    %v1639 = vsel %vm1623, 1, 0
    %v1640 = vsel %vm1624, 1, 0
    %v1641 = vsel %vm1625, 1, 0
    %v1642 = vsel %vm1626, 1, 0
    %v1643 = vsel %vm1627, 1, 0
    %v1644 = vsel %vm1628, 1, 0
    %v1645 = vsel %vm1629, 1, 0
    %v1646 = vsel %vm1630, 1, 0
    %v1647 = vsel %vm1631, 1, 0
    %v1648 = vsel %vm1632, 1, 0
    %v1649 = vsel %vm1633, 1, 0
    %v1650 = vsel %vm1634, 1, 0
    %v1651 = vsel %vm1635, 1, 0
    %v1652 = vsel %vm1636, 1, 0
    %v1653 = vcvt.s32.f32 %v1637
    %v1654 = vcvt.s32.f32 %v1638
    %v1655 = vcvt.s32.f32 %v1639
    %v1656 = vcvt.s32.f32 %v1640
    %v1657 = vcvt.s32.f32 %v1641
    %v1658 = vcvt.s32.f32 %v1642
    %v1659 = vcvt.s32.f32 %v1643
    %v1660 = vcvt.s32.f32 %v1644
    %v1661 = vcvt.s32.f32 %v1645
    %v1662 = vcvt.s32.f32 %v1646
    %v1663 = vcvt.s32.f32 %v1647
    %v1664 = vcvt.s32.f32 %v1648
    %v1665 = vcvt.s32.f32 %v1649
    %v1666 = vcvt.s32.f32 %v1650
    %v1667 = vcvt.s32.f32 %v1651
    %v1668 = vcvt.s32.f32 %v1652
    %vm1669 = vcmp.eq.s32.totalorder %v691, %v708
    %vm1670 = vcmp.eq.s32.totalorder %v692, %v708
    %vm1671 = vcmp.eq.s32.totalorder %v693, %v708
    %vm1672 = vcmp.eq.s32.totalorder %v694, %v708
    %vm1673 = vcmp.eq.s32.totalorder %v695, %v708
    %vm1674 = vcmp.eq.s32.totalorder %v696, %v708
    %vm1675 = vcmp.eq.s32.totalorder %v697, %v708
    %vm1676 = vcmp.eq.s32.totalorder %v698, %v708
    %vm1677 = vcmp.eq.s32.totalorder %v699, %v708
    %vm1678 = vcmp.eq.s32.totalorder %v700, %v708
    %vm1679 = vcmp.eq.s32.totalorder %v701, %v708
    %vm1680 = vcmp.eq.s32.totalorder %v702, %v708
    %vm1681 = vcmp.eq.s32.totalorder %v703, %v708
    %vm1682 = vcmp.eq.s32.totalorder %v704, %v708
    %vm1683 = vcmp.eq.s32.totalorder %v705, %v708
    %vm1684 = vcmp.eq.s32.totalorder %v706, %v708
    %v1685 = vsel %vm1669, 1, 0
    %v1686 = vsel %vm1670, 1, 0
    %v1687 = vsel %vm1671, 1, 0
    %v1688 = vsel %vm1672, 1, 0
    %v1689 = vsel %vm1673, 1, 0
    %v1690 = vsel %vm1674, 1, 0
    %v1691 = vsel %vm1675, 1, 0
    %v1692 = vsel %vm1676, 1, 0
    %v1693 = vsel %vm1677, 1, 0
    %v1694 = vsel %vm1678, 1, 0
    %v1695 = vsel %vm1679, 1, 0
    %v1696 = vsel %vm1680, 1, 0
    %v1697 = vsel %vm1681, 1, 0
    %v1698 = vsel %vm1682, 1, 0
    %v1699 = vsel %vm1683, 1, 0
    %v1700 = vsel %vm1684, 1, 0
    %v1701 = vcvt.s32.f32 %v1685
    %v1702 = vcvt.s32.f32 %v1686
    %v1703 = vcvt.s32.f32 %v1687
    %v1704 = vcvt.s32.f32 %v1688
    %v1705 = vcvt.s32.f32 %v1689
    %v1706 = vcvt.s32.f32 %v1690
    %v1707 = vcvt.s32.f32 %v1691
    %v1708 = vcvt.s32.f32 %v1692
    %v1709 = vcvt.s32.f32 %v1693
    %v1710 = vcvt.s32.f32 %v1694
    %v1711 = vcvt.s32.f32 %v1695
    %v1712 = vcvt.s32.f32 %v1696
    %v1713 = vcvt.s32.f32 %v1697
    %v1714 = vcvt.s32.f32 %v1698
    %v1715 = vcvt.s32.f32 %v1699
    %v1716 = vcvt.s32.f32 %v1700
    %v1717 = vsub.f32 %v1653, %v1701
    %v1718 = vsub.f32 %v1654, %v1702
    %v1719 = vsub.f32 %v1655, %v1703
    %v1720 = vsub.f32 %v1656, %v1704
    %v1721 = vsub.f32 %v1657, %v1705
    %v1722 = vsub.f32 %v1658, %v1706
    %v1723 = vsub.f32 %v1659, %v1707
    %v1724 = vsub.f32 %v1660, %v1708
    %v1725 = vsub.f32 %v1661, %v1709
    %v1726 = vsub.f32 %v1662, %v1710
    %v1727 = vsub.f32 %v1663, %v1711
    %v1728 = vsub.f32 %v1664, %v1712
    %v1729 = vsub.f32 %v1665, %v1713
    %v1730 = vsub.f32 %v1666, %v1714
    %v1731 = vsub.f32 %v1667, %v1715
    %v1732 = vsub.f32 %v1668, %v1716
    %v1733 = vsel %vm1619, %v1717, 0.0
    %v1734 = vsel %vm1619, %v1718, 0.0
    %v1735 = vsel %vm1619, %v1719, 0.0
    %v1736 = vsel %vm1619, %v1720, 0.0
    %v1737 = vsel %vm1619, %v1721, 0.0
    %v1738 = vsel %vm1619, %v1722, 0.0
    %v1739 = vsel %vm1619, %v1723, 0.0
    %v1740 = vsel %vm1619, %v1724, 0.0
    %v1741 = vsel %vm1619, %v1725, 0.0
    %v1742 = vsel %vm1619, %v1726, 0.0
    %v1743 = vsel %vm1619, %v1727, 0.0
    %v1744 = vsel %vm1619, %v1728, 0.0
    %v1745 = vsel %vm1619, %v1729, 0.0
    %v1746 = vsel %vm1619, %v1730, 0.0
    %v1747 = vsel %vm1619, %v1731, 0.0
    %v1748 = vsel %vm1619, %v1732, 0.0
    %1749 = vmatprep.subr.mxu0 0.0
    %1750 = vmatpush1.msra.mxu0 %v1748
    %1751 = vmatprep.subr.mxu0 0.0
    %1752 = vmatpush1.msra.mxu0 %v1747
    %1753 = vmatprep.subr.mxu0 0.0
    %1754 = vmatpush1.msra.mxu0 %v1746
    %1755 = vmatprep.subr.mxu0 0.0
    %1756 = vmatpush1.msra.mxu0 %v1745
    %1757 = vmatprep.subr.mxu0 0.0
    %1758 = vmatpush1.msra.mxu0 %v1744
    %1759 = vmatprep.subr.mxu0 0.0
    %1760 = vmatpush1.msra.mxu0 %v1743
    %1761 = vmatprep.subr.mxu0 0.0
    %1762 = vmatpush1.msra.mxu0 %v1742
    %1763 = vmatprep.subr.mxu0 0.0
    %1764 = vmatpush1.msra.mxu0 %v1741
    %1765 = vmatprep.subr.mxu0 0.0
    %1766 = vmatpush1.msra.mxu0 %v1740
    %1767 = vmatprep.subr.mxu0 0.0
    %1768 = vmatpush1.msra.mxu0 %v1739
    %1769 = vmatprep.subr.mxu0 0.0
    %1770 = vmatpush1.msra.mxu0 %v1738
    %1771 = vmatprep.subr.mxu0 0.0
    %1772 = vmatpush1.msra.mxu0 %v1737
    %1773 = vmatprep.subr.mxu0 0.0
    %1774 = vmatpush1.msra.mxu0 %v1736
    %1775 = vmatprep.subr.mxu0 0.0
    %1776 = vmatpush1.msra.mxu0 %v1735
    %1777 = vmatprep.subr.mxu0 0.0
    %1778 = vmatpush1.msra.mxu0 %v1734
    %1779 = vmatprep.subr.mxu0 0.0
    %1780 = vmatpush1.msra.mxu0 %v1733
    %1781 = vmatprep.subr.mxu0 0.0
    %1782 = vmatpush2.msra.mxu0 0.0
    %1783 = vmatprep.subr.mxu0 0.0
    %1784 = vmatpush2.msra.mxu0 0.0
    %1785 = vmatprep.subr.mxu0 0.0
    %1786 = vmatpush2.msra.mxu0 0.0
    %1787 = vmatprep.subr.mxu0 0.0
    %1788 = vmatpush2.msra.mxu0 0.0
    %1789 = vmatprep.subr.mxu0 0.0
    %1790 = vmatpush2.msra.mxu0 0.0
    %1791 = vmatprep.subr.mxu0 0.0
    %1792 = vmatpush2.msra.mxu0 0.0
    %1793 = vmatprep.subr.mxu0 0.0
    %1794 = vmatpush2.msra.mxu0 0.0
    %1795 = vmatprep.subr.mxu0 0.0
    %1796 = vmatpush2.msra.mxu0 0.0
    %1797 = vmatprep.subr.mxu0 0.0
    %1798 = vmatpush2.msra.mxu0 0.0
    %1799 = vmatprep.subr.mxu0 0.0
    %1800 = vmatpush2.msra.mxu0 0.0
    %1801 = vmatprep.subr.mxu0 0.0
    %1802 = vmatpush2.msra.mxu0 0.0
    %1803 = vmatprep.subr.mxu0 0.0
    %1804 = vmatpush2.msra.mxu0 0.0
    %1805 = vmatprep.subr.mxu0 0.0
    %1806 = vmatpush2.msra.mxu0 0.0
    %1807 = vmatprep.subr.mxu0 0.0
    %1808 = vmatpush2.msra.mxu0 0.0
    %1809 = vmatprep.subr.mxu0 0.0
    %1810 = vmatpush2.msra.mxu0 0.0
    %1811 = vmatprep.subr.mxu0 0.0
    %1812 = vmatpush2.msra.mxu0 0.0
    %1813 = vmatprep.mubr.f32.mxu0 0.0
    %1814 = vmatmul.mubr.f32.gmra.mxu0 %v197
    %v1815 = vpop.f32.mrf.mxu0
    %v1816 = vadd.f32 0.0, %v1815
    %v1817 = vpop.f32.mrf.mxu0
    %1818 = vmatprep.mubr.f32.mxu0 0.0
    %1819 = vmatmul.mubr.f32.gmra.mxu0 %v198
    %v1820 = vpop.f32.mrf.mxu0
    %v1821 = vadd.f32 0.0, %v1820
    %v1822 = vpop.f32.mrf.mxu0
    %1823 = vmatprep.mubr.f32.mxu0 0.0
    %1824 = vmatmul.mubr.f32.gmra.mxu0 %v199
    %v1825 = vpop.f32.mrf.mxu0
    %v1826 = vadd.f32 0.0, %v1825
    %v1827 = vpop.f32.mrf.mxu0
    %1828 = vmatprep.mubr.f32.mxu0 0.0
    %1829 = vmatmul.mubr.f32.gmra.mxu0 %v200
    %v1830 = vpop.f32.mrf.mxu0
    %v1831 = vadd.f32 0.0, %v1830
    %v1832 = vpop.f32.mrf.mxu0
    %1833 = vmatprep.mubr.f32.mxu0 0.0
    %1834 = vmatmul.mubr.f32.gmra.mxu0 %v201
    %v1835 = vpop.f32.mrf.mxu0
    %v1836 = vadd.f32 0.0, %v1835
    %v1837 = vpop.f32.mrf.mxu0
    %1838 = vmatprep.mubr.f32.mxu0 0.0
    %1839 = vmatmul.mubr.f32.gmra.mxu0 %v202
    %v1840 = vpop.f32.mrf.mxu0
    %v1841 = vadd.f32 0.0, %v1840
    %v1842 = vpop.f32.mrf.mxu0
    %1843 = vmatprep.mubr.f32.mxu0 0.0
    %1844 = vmatmul.mubr.f32.gmra.mxu0 %v203
    %v1845 = vpop.f32.mrf.mxu0
    %v1846 = vadd.f32 0.0, %v1845
    %v1847 = vpop.f32.mrf.mxu0
    %1848 = vmatprep.mubr.f32.mxu0 0.0
    %1849 = vmatmul.mubr.f32.gmra.mxu0 %v204
    %v1850 = vpop.f32.mrf.mxu0
    %v1851 = vadd.f32 0.0, %v1850
    %v1852 = vpop.f32.mrf.mxu0
    %1853 = vmatprep.mubr.f32.mxu0 0.0
    %1854 = vmatmul.mubr.f32.gmra.mxu0 %v205
    %v1855 = vpop.f32.mrf.mxu0
    %v1856 = vadd.f32 0.0, %v1855
    %v1857 = vpop.f32.mrf.mxu0
    %1858 = vmatprep.mubr.f32.mxu0 0.0
    %1859 = vmatmul.mubr.f32.gmra.mxu0 %v206
    %v1860 = vpop.f32.mrf.mxu0
    %v1861 = vadd.f32 0.0, %v1860
    %v1862 = vpop.f32.mrf.mxu0
    %1863 = vmatprep.mubr.f32.mxu0 0.0
    %1864 = vmatmul.mubr.f32.gmra.mxu0 %v207
    %v1865 = vpop.f32.mrf.mxu0
    %v1866 = vadd.f32 0.0, %v1865
    %v1867 = vpop.f32.mrf.mxu0
    %1868 = vmatprep.mubr.f32.mxu0 0.0
    %1869 = vmatmul.mubr.f32.gmra.mxu0 %v208
    %v1870 = vpop.f32.mrf.mxu0
    %v1871 = vadd.f32 0.0, %v1870
    %v1872 = vpop.f32.mrf.mxu0
    %1873 = vmatprep.mubr.f32.mxu0 0.0
    %1874 = vmatmul.mubr.f32.gmra.mxu0 %v209
    %v1875 = vpop.f32.mrf.mxu0
    %v1876 = vadd.f32 0.0, %v1875
    %v1877 = vpop.f32.mrf.mxu0
    %1878 = vmatprep.mubr.f32.mxu0 0.0
    %1879 = vmatmul.mubr.f32.gmra.mxu0 %v210
    %v1880 = vpop.f32.mrf.mxu0
    %v1881 = vadd.f32 0.0, %v1880
    %v1882 = vpop.f32.mrf.mxu0
    %1883 = vmatprep.mubr.f32.mxu0 0.0
    %1884 = vmatmul.mubr.f32.gmra.mxu0 %v211
    %v1885 = vpop.f32.mrf.mxu0
    %v1886 = vadd.f32 0.0, %v1885
    %v1887 = vpop.f32.mrf.mxu0
    %1888 = vmatprep.mubr.f32.mxu0 0.0
    %1889 = vmatmul.mubr.f32.gmra.mxu0 %v212
    %v1890 = vpop.f32.mrf.mxu0
    %v1891 = vadd.f32 0.0, %v1890
    %v1892 = vpop.f32.mrf.mxu0
    %1893 = vmatprep.mubr.f32.mxu0 0.0
    %1894 = vmatmul.mubr.f32.gmra.mxu0 %v213
    %v1895 = vpop.f32.mrf.mxu0
    %v1896 = vadd.f32 0.0, %v1895
    %v1897 = vpop.f32.mrf.mxu0
    %1898 = vmatprep.mubr.f32.mxu0 0.0
    %1899 = vmatmul.mubr.f32.gmra.mxu0 %v214
    %v1900 = vpop.f32.mrf.mxu0
    %v1901 = vadd.f32 0.0, %v1900
    %v1902 = vpop.f32.mrf.mxu0
    %1903 = vmatprep.mubr.f32.mxu0 0.0
    %1904 = vmatmul.mubr.f32.gmra.mxu0 %v215
    %v1905 = vpop.f32.mrf.mxu0
    %v1906 = vadd.f32 0.0, %v1905
    %v1907 = vpop.f32.mrf.mxu0
    %1908 = vmatprep.mubr.f32.mxu0 0.0
    %1909 = vmatmul.mubr.f32.gmra.mxu0 %v216
    %v1910 = vpop.f32.mrf.mxu0
    %v1911 = vadd.f32 0.0, %v1910
    %v1912 = vpop.f32.mrf.mxu0
    %1913 = vmatprep.mubr.f32.mxu0 0.0
    %1914 = vmatmul.mubr.f32.gmra.mxu0 %v217
    %v1915 = vpop.f32.mrf.mxu0
    %v1916 = vadd.f32 0.0, %v1915
    %v1917 = vpop.f32.mrf.mxu0
    %1918 = vmatprep.mubr.f32.mxu0 0.0
    %1919 = vmatmul.mubr.f32.gmra.mxu0 %v218
    %v1920 = vpop.f32.mrf.mxu0
    %v1921 = vadd.f32 0.0, %v1920
    %v1922 = vpop.f32.mrf.mxu0
    %1923 = vmatprep.mubr.f32.mxu0 0.0
    %1924 = vmatmul.mubr.f32.gmra.mxu0 %v219
    %v1925 = vpop.f32.mrf.mxu0
    %v1926 = vadd.f32 0.0, %v1925
    %v1927 = vpop.f32.mrf.mxu0
    %1928 = vmatprep.mubr.f32.mxu0 0.0
    %1929 = vmatmul.mubr.f32.gmra.mxu0 %v220
    %v1930 = vpop.f32.mrf.mxu0
    %v1931 = vadd.f32 0.0, %v1930
    %v1932 = vpop.f32.mrf.mxu0
    %1933 = vmatprep.mubr.f32.mxu0 0.0
    %1934 = vmatmul.mubr.f32.gmra.mxu0 %v221
    %v1935 = vpop.f32.mrf.mxu0
    %v1936 = vadd.f32 0.0, %v1935
    %v1937 = vpop.f32.mrf.mxu0
    %1938 = vmatprep.mubr.f32.mxu0 0.0
    %1939 = vmatmul.mubr.f32.gmra.mxu0 %v222
    %v1940 = vpop.f32.mrf.mxu0
    %v1941 = vadd.f32 0.0, %v1940
    %v1942 = vpop.f32.mrf.mxu0
    %1943 = vmatprep.mubr.f32.mxu0 0.0
    %1944 = vmatmul.mubr.f32.gmra.mxu0 %v223
    %v1945 = vpop.f32.mrf.mxu0
    %v1946 = vadd.f32 0.0, %v1945
    %v1947 = vpop.f32.mrf.mxu0
    %1948 = vmatprep.mubr.f32.mxu0 0.0
    %1949 = vmatmul.mubr.f32.gmra.mxu0 %v224
    %v1950 = vpop.f32.mrf.mxu0
    %v1951 = vadd.f32 0.0, %v1950
    %v1952 = vpop.f32.mrf.mxu0
    %1953 = vmatprep.mubr.f32.mxu0 0.0
    %1954 = vmatmul.mubr.f32.gmra.mxu0 %v225
    %v1955 = vpop.f32.mrf.mxu0
    %v1956 = vadd.f32 0.0, %v1955
    %v1957 = vpop.f32.mrf.mxu0
    %1958 = vmatprep.mubr.f32.mxu0 0.0
    %1959 = vmatmul.mubr.f32.gmra.mxu0 %v226
    %v1960 = vpop.f32.mrf.mxu0
    %v1961 = vadd.f32 0.0, %v1960
    %v1962 = vpop.f32.mrf.mxu0
    %1963 = vmatprep.mubr.f32.mxu0 0.0
    %1964 = vmatmul.mubr.f32.gmra.mxu0 %v227
    %v1965 = vpop.f32.mrf.mxu0
    %v1966 = vadd.f32 0.0, %v1965
    %v1967 = vpop.f32.mrf.mxu0
    %1968 = vmatprep.mubr.f32.mxu0 0.0
    %1969 = vmatmul.mubr.f32.gmra.mxu0 %v228
    %v1970 = vpop.f32.mrf.mxu0
    %v1971 = vadd.f32 0.0, %v1970
    %v1972 = vpop.f32.mrf.mxu0
    %1973 = vmatprep.mubr.f32.mxu0 0.0
    %1974 = vmatmul.mubr.f32.gmra.mxu0 %v229
    %v1975 = vpop.f32.mrf.mxu0
    %v1976 = vadd.f32 0.0, %v1975
    %v1977 = vpop.f32.mrf.mxu0
    %1978 = vmatprep.mubr.f32.mxu0 0.0
    %1979 = vmatmul.mubr.f32.gmra.mxu0 %v230
    %v1980 = vpop.f32.mrf.mxu0
    %v1981 = vadd.f32 0.0, %v1980
    %v1982 = vpop.f32.mrf.mxu0
    %1983 = vmatprep.mubr.f32.mxu0 0.0
    %1984 = vmatmul.mubr.f32.gmra.mxu0 %v231
    %v1985 = vpop.f32.mrf.mxu0
    %v1986 = vadd.f32 0.0, %v1985
    %v1987 = vpop.f32.mrf.mxu0
    %1988 = vmatprep.mubr.f32.mxu0 0.0
    %1989 = vmatmul.mubr.f32.gmra.mxu0 %v232
    %v1990 = vpop.f32.mrf.mxu0
    %v1991 = vadd.f32 0.0, %v1990
    %v1992 = vpop.f32.mrf.mxu0
    %1993 = vmatprep.mubr.f32.mxu0 0.0
    %1994 = vmatmul.mubr.f32.gmra.mxu0 %v233
    %v1995 = vpop.f32.mrf.mxu0
    %v1996 = vadd.f32 0.0, %v1995
    %v1997 = vpop.f32.mrf.mxu0
    %1998 = vmatprep.mubr.f32.mxu0 0.0
    %1999 = vmatmul.mubr.f32.gmra.mxu0 %v234
    %v2000 = vpop.f32.mrf.mxu0
    %v2001 = vadd.f32 0.0, %v2000
    %v2002 = vpop.f32.mrf.mxu0
    %2003 = vmatprep.mubr.f32.mxu0 0.0
    %2004 = vmatmul.mubr.f32.gmra.mxu0 %v235
    %v2005 = vpop.f32.mrf.mxu0
    %v2006 = vadd.f32 0.0, %v2005
    %v2007 = vpop.f32.mrf.mxu0
    %2008 = vmatprep.mubr.f32.mxu0 0.0
    %2009 = vmatmul.mubr.f32.gmra.mxu0 %v236
    %v2010 = vpop.f32.mrf.mxu0
    %v2011 = vadd.f32 0.0, %v2010
    %v2012 = vpop.f32.mrf.mxu0
    %2013 = vmatprep.mubr.f32.mxu0 0.0
    %2014 = vmatmul.mubr.f32.gmra.mxu0 %v237
    %v2015 = vpop.f32.mrf.mxu0
    %v2016 = vadd.f32 0.0, %v2015
    %v2017 = vpop.f32.mrf.mxu0
    %2018 = vmatprep.mubr.f32.mxu0 0.0
    %2019 = vmatmul.mubr.f32.gmra.mxu0 %v238
    %v2020 = vpop.f32.mrf.mxu0
    %v2021 = vadd.f32 0.0, %v2020
    %v2022 = vpop.f32.mrf.mxu0
    %2023 = vmatprep.mubr.f32.mxu0 0.0
    %2024 = vmatmul.mubr.f32.gmra.mxu0 %v239
    %v2025 = vpop.f32.mrf.mxu0
    %v2026 = vadd.f32 0.0, %v2025
    %v2027 = vpop.f32.mrf.mxu0
    %2028 = vmatprep.mubr.f32.mxu0 0.0
    %2029 = vmatmul.mubr.f32.gmra.mxu0 %v240
    %v2030 = vpop.f32.mrf.mxu0
    %v2031 = vadd.f32 0.0, %v2030
    %v2032 = vpop.f32.mrf.mxu0
    %2033 = vmatprep.mubr.f32.mxu0 0.0
    %2034 = vmatmul.mubr.f32.gmra.mxu0 %v241
    %v2035 = vpop.f32.mrf.mxu0
    %v2036 = vadd.f32 0.0, %v2035
    %v2037 = vpop.f32.mrf.mxu0
    %2038 = vmatprep.mubr.f32.mxu0 0.0
    %2039 = vmatmul.mubr.f32.gmra.mxu0 %v242
    %v2040 = vpop.f32.mrf.mxu0
    %v2041 = vadd.f32 0.0, %v2040
    %v2042 = vpop.f32.mrf.mxu0
    %2043 = vmatprep.mubr.f32.mxu0 0.0
    %2044 = vmatmul.mubr.f32.gmra.mxu0 %v243
    %v2045 = vpop.f32.mrf.mxu0
    %v2046 = vadd.f32 0.0, %v2045
    %v2047 = vpop.f32.mrf.mxu0
    %2048 = vmatprep.mubr.f32.mxu0 0.0
    %2049 = vmatmul.mubr.f32.gmra.mxu0 %v244
    %v2050 = vpop.f32.mrf.mxu0
    %v2051 = vadd.f32 0.0, %v2050
    %v2052 = vpop.f32.mrf.mxu0
    %2053 = vmatprep.mubr.f32.mxu0 0.0
    %2054 = vmatmul.mubr.f32.gmra.mxu0 %v245
    %v2055 = vpop.f32.mrf.mxu0
    %v2056 = vadd.f32 0.0, %v2055
    %v2057 = vpop.f32.mrf.mxu0
    %2058 = vmatprep.mubr.f32.mxu0 0.0
    %2059 = vmatmul.mubr.f32.gmra.mxu0 %v246
    %v2060 = vpop.f32.mrf.mxu0
    %v2061 = vadd.f32 0.0, %v2060
    %v2062 = vpop.f32.mrf.mxu0
    %2063 = vmatprep.mubr.f32.mxu0 0.0
    %2064 = vmatmul.mubr.f32.gmra.mxu0 %v247
    %v2065 = vpop.f32.mrf.mxu0
    %v2066 = vadd.f32 0.0, %v2065
    %v2067 = vpop.f32.mrf.mxu0
    %2068 = vmatprep.mubr.f32.mxu0 0.0
    %2069 = vmatmul.mubr.f32.gmra.mxu0 %v248
    %v2070 = vpop.f32.mrf.mxu0
    %v2071 = vadd.f32 0.0, %v2070
    %v2072 = vpop.f32.mrf.mxu0
    %2073 = vmatprep.mubr.f32.mxu0 0.0
    %2074 = vmatmul.mubr.f32.gmra.mxu0 %v249
    %v2075 = vpop.f32.mrf.mxu0
    %v2076 = vadd.f32 0.0, %v2075
    %v2077 = vpop.f32.mrf.mxu0
    %2078 = vmatprep.mubr.f32.mxu0 0.0
    %2079 = vmatmul.mubr.f32.gmra.mxu0 %v250
    %v2080 = vpop.f32.mrf.mxu0
    %v2081 = vadd.f32 0.0, %v2080
    %v2082 = vpop.f32.mrf.mxu0
    %2083 = vmatprep.mubr.f32.mxu0 0.0
    %2084 = vmatmul.mubr.f32.gmra.mxu0 %v251
    %v2085 = vpop.f32.mrf.mxu0
    %v2086 = vadd.f32 0.0, %v2085
    %v2087 = vpop.f32.mrf.mxu0
    %2088 = vmatprep.mubr.f32.mxu0 0.0
    %2089 = vmatmul.mubr.f32.gmra.mxu0 %v252
    %v2090 = vpop.f32.mrf.mxu0
    %v2091 = vadd.f32 0.0, %v2090
    %v2092 = vpop.f32.mrf.mxu0
    %2093 = vmatprep.mubr.f32.mxu0 0.0
    %2094 = vmatmul.mubr.f32.gmra.mxu0 %v253
    %v2095 = vpop.f32.mrf.mxu0
    %v2096 = vadd.f32 0.0, %v2095
    %v2097 = vpop.f32.mrf.mxu0
    %2098 = vmatprep.mubr.f32.mxu0 0.0
    %2099 = vmatmul.mubr.f32.gmra.mxu0 %v254
    %v2100 = vpop.f32.mrf.mxu0
    %v2101 = vadd.f32 0.0, %v2100
    %v2102 = vpop.f32.mrf.mxu0
    %2103 = vmatprep.mubr.f32.mxu0 0.0
    %2104 = vmatmul.mubr.f32.gmra.mxu0 %v255
    %v2105 = vpop.f32.mrf.mxu0
    %v2106 = vadd.f32 0.0, %v2105
    %v2107 = vpop.f32.mrf.mxu0
    %2108 = vmatprep.mubr.f32.mxu0 0.0
    %2109 = vmatmul.mubr.f32.gmra.mxu0 %v256
    %v2110 = vpop.f32.mrf.mxu0
    %v2111 = vadd.f32 0.0, %v2110
    %v2112 = vpop.f32.mrf.mxu0
    %2113 = vmatprep.mubr.f32.mxu0 0.0
    %2114 = vmatmul.mubr.f32.gmra.mxu0 %v257
    %v2115 = vpop.f32.mrf.mxu0
    %v2116 = vadd.f32 0.0, %v2115
    %v2117 = vpop.f32.mrf.mxu0
    %2118 = vmatprep.mubr.f32.mxu0 0.0
    %2119 = vmatmul.mubr.f32.gmra.mxu0 %v258
    %v2120 = vpop.f32.mrf.mxu0
    %v2121 = vadd.f32 0.0, %v2120
    %v2122 = vpop.f32.mrf.mxu0
    %2123 = vmatprep.mubr.f32.mxu0 0.0
    %2124 = vmatmul.mubr.f32.gmra.mxu0 %v259
    %v2125 = vpop.f32.mrf.mxu0
    %v2126 = vadd.f32 0.0, %v2125
    %v2127 = vpop.f32.mrf.mxu0
    %2128 = vmatprep.mubr.f32.mxu0 0.0
    %2129 = vmatmul.mubr.f32.gmra.mxu0 %v260
    %v2130 = vpop.f32.mrf.mxu0
    %v2131 = vadd.f32 0.0, %v2130
    %v2132 = vpop.f32.mrf.mxu0
    %2133 = vmatprep.mubr.f32.mxu0 0.0
    %2134 = vmatmul.mubr.f32.gmra.mxu0 %v261
    %v2135 = vpop.f32.mrf.mxu0
    %v2136 = vadd.f32 0.0, %v2135
    %v2137 = vpop.f32.mrf.mxu0
    %2138 = vmatprep.mubr.f32.mxu0 0.0
    %2139 = vmatmul.mubr.f32.gmra.mxu0 %v262
    %v2140 = vpop.f32.mrf.mxu0
    %v2141 = vadd.f32 0.0, %v2140
    %v2142 = vpop.f32.mrf.mxu0
    %2143 = vmatprep.mubr.f32.mxu0 0.0
    %2144 = vmatmul.mubr.f32.gmra.mxu0 %v263
    %v2145 = vpop.f32.mrf.mxu0
    %v2146 = vadd.f32 0.0, %v2145
    %v2147 = vpop.f32.mrf.mxu0
    %2148 = vmatprep.mubr.f32.mxu0 0.0
    %2149 = vmatmul.mubr.f32.gmra.mxu0 %v264
    %v2150 = vpop.f32.mrf.mxu0
    %v2151 = vadd.f32 0.0, %v2150
    %v2152 = vpop.f32.mrf.mxu0
    %2153 = vmatprep.mubr.f32.mxu0 0.0
    %2154 = vmatmul.mubr.f32.gmra.mxu0 %v265
    %v2155 = vpop.f32.mrf.mxu0
    %v2156 = vadd.f32 0.0, %v2155
    %v2157 = vpop.f32.mrf.mxu0
    %2158 = vmatprep.mubr.f32.mxu0 0.0
    %2159 = vmatmul.mubr.f32.gmra.mxu0 %v266
    %v2160 = vpop.f32.mrf.mxu0
    %v2161 = vadd.f32 0.0, %v2160
    %v2162 = vpop.f32.mrf.mxu0
    %2163 = vmatprep.mubr.f32.mxu0 0.0
    %2164 = vmatmul.mubr.f32.gmra.mxu0 %v267
    %v2165 = vpop.f32.mrf.mxu0
    %v2166 = vadd.f32 0.0, %v2165
    %v2167 = vpop.f32.mrf.mxu0
    %2168 = vmatprep.mubr.f32.mxu0 0.0
    %2169 = vmatmul.mubr.f32.gmra.mxu0 %v268
    %v2170 = vpop.f32.mrf.mxu0
    %v2171 = vadd.f32 0.0, %v2170
    %v2172 = vpop.f32.mrf.mxu0
    %2173 = vmatprep.mubr.f32.mxu0 0.0
    %2174 = vmatmul.mubr.f32.gmra.mxu0 %v269
    %v2175 = vpop.f32.mrf.mxu0
    %v2176 = vadd.f32 0.0, %v2175
    %v2177 = vpop.f32.mrf.mxu0
    %2178 = vmatprep.mubr.f32.mxu0 0.0
    %2179 = vmatmul.mubr.f32.gmra.mxu0 %v270
    %v2180 = vpop.f32.mrf.mxu0
    %v2181 = vadd.f32 0.0, %v2180
    %v2182 = vpop.f32.mrf.mxu0
    %2183 = vmatprep.mubr.f32.mxu0 0.0
    %2184 = vmatmul.mubr.f32.gmra.mxu0 %v271
    %v2185 = vpop.f32.mrf.mxu0
    %v2186 = vadd.f32 0.0, %v2185
    %v2187 = vpop.f32.mrf.mxu0
    %2188 = vmatprep.mubr.f32.mxu0 0.0
    %2189 = vmatmul.mubr.f32.gmra.mxu0 %v272
    %v2190 = vpop.f32.mrf.mxu0
    %v2191 = vadd.f32 0.0, %v2190
    %v2192 = vpop.f32.mrf.mxu0
    %2193 = vmatprep.mubr.f32.mxu0 0.0
    %2194 = vmatmul.mubr.f32.gmra.mxu0 %v273
    %v2195 = vpop.f32.mrf.mxu0
    %v2196 = vadd.f32 0.0, %v2195
    %v2197 = vpop.f32.mrf.mxu0
    %2198 = vmatprep.mubr.f32.mxu0 0.0
    %2199 = vmatmul.mubr.f32.gmra.mxu0 %v274
    %v2200 = vpop.f32.mrf.mxu0
    %v2201 = vadd.f32 0.0, %v2200
    %v2202 = vpop.f32.mrf.mxu0
    %2203 = vmatprep.mubr.f32.mxu0 0.0
    %2204 = vmatmul.mubr.f32.gmra.mxu0 %v275
    %v2205 = vpop.f32.mrf.mxu0
    %v2206 = vadd.f32 0.0, %v2205
    %v2207 = vpop.f32.mrf.mxu0
    %2208 = vmatprep.mubr.f32.mxu0 0.0
    %2209 = vmatmul.mubr.f32.gmra.mxu0 %v276
    %v2210 = vpop.f32.mrf.mxu0
    %v2211 = vadd.f32 0.0, %v2210
    %v2212 = vpop.f32.mrf.mxu0
    %2213 = vmatprep.mubr.f32.mxu0 0.0
    %2214 = vmatmul.mubr.f32.gmra.mxu0 %v277
    %v2215 = vpop.f32.mrf.mxu0
    %v2216 = vadd.f32 0.0, %v2215
    %v2217 = vpop.f32.mrf.mxu0
    %2218 = vmatprep.mubr.f32.mxu0 0.0
    %2219 = vmatmul.mubr.f32.gmra.mxu0 %v278
    %v2220 = vpop.f32.mrf.mxu0
    %v2221 = vadd.f32 0.0, %v2220
    %v2222 = vpop.f32.mrf.mxu0
    %2223 = vmatprep.mubr.f32.mxu0 0.0
    %2224 = vmatmul.mubr.f32.gmra.mxu0 %v279
    %v2225 = vpop.f32.mrf.mxu0
    %v2226 = vadd.f32 0.0, %v2225
    %v2227 = vpop.f32.mrf.mxu0
    %2228 = vmatprep.mubr.f32.mxu0 0.0
    %2229 = vmatmul.mubr.f32.gmra.mxu0 %v280
    %v2230 = vpop.f32.mrf.mxu0
    %v2231 = vadd.f32 0.0, %v2230
    %v2232 = vpop.f32.mrf.mxu0
    %2233 = vmatprep.mubr.f32.mxu0 0.0
    %2234 = vmatmul.mubr.f32.gmra.mxu0 %v281
    %v2235 = vpop.f32.mrf.mxu0
    %v2236 = vadd.f32 0.0, %v2235
    %v2237 = vpop.f32.mrf.mxu0
    %2238 = vmatprep.mubr.f32.mxu0 0.0
    %2239 = vmatmul.mubr.f32.gmra.mxu0 %v282
    %v2240 = vpop.f32.mrf.mxu0
    %v2241 = vadd.f32 0.0, %v2240
    %v2242 = vpop.f32.mrf.mxu0
    %2243 = vmatprep.mubr.f32.mxu0 0.0
    %2244 = vmatmul.mubr.f32.gmra.mxu0 %v283
    %v2245 = vpop.f32.mrf.mxu0
    %v2246 = vadd.f32 0.0, %v2245
    %v2247 = vpop.f32.mrf.mxu0
    %2248 = vmatprep.mubr.f32.mxu0 0.0
    %2249 = vmatmul.mubr.f32.gmra.mxu0 %v284
    %v2250 = vpop.f32.mrf.mxu0
    %v2251 = vadd.f32 0.0, %v2250
    %v2252 = vpop.f32.mrf.mxu0
    %2253 = vmatprep.mubr.f32.mxu0 0.0
    %2254 = vmatmul.mubr.f32.gmra.mxu0 %v285
    %v2255 = vpop.f32.mrf.mxu0
    %v2256 = vadd.f32 0.0, %v2255
    %v2257 = vpop.f32.mrf.mxu0
    %2258 = vmatprep.mubr.f32.mxu0 0.0
    %2259 = vmatmul.mubr.f32.gmra.mxu0 %v286
    %v2260 = vpop.f32.mrf.mxu0
    %v2261 = vadd.f32 0.0, %v2260
    %v2262 = vpop.f32.mrf.mxu0
    %2263 = vmatprep.mubr.f32.mxu0 0.0
    %2264 = vmatmul.mubr.f32.gmra.mxu0 %v287
    %v2265 = vpop.f32.mrf.mxu0
    %v2266 = vadd.f32 0.0, %v2265
    %v2267 = vpop.f32.mrf.mxu0
    %2268 = vmatprep.mubr.f32.mxu0 0.0
    %2269 = vmatmul.mubr.f32.gmra.mxu0 %v288
    %v2270 = vpop.f32.mrf.mxu0
    %v2271 = vadd.f32 0.0, %v2270
    %v2272 = vpop.f32.mrf.mxu0
    %2273 = vmatprep.mubr.f32.mxu0 0.0
    %2274 = vmatmul.mubr.f32.gmra.mxu0 %v289
    %v2275 = vpop.f32.mrf.mxu0
    %v2276 = vadd.f32 0.0, %v2275
    %v2277 = vpop.f32.mrf.mxu0
    %2278 = vmatprep.mubr.f32.mxu0 0.0
    %2279 = vmatmul.mubr.f32.gmra.mxu0 %v290
    %v2280 = vpop.f32.mrf.mxu0
    %v2281 = vadd.f32 0.0, %v2280
    %v2282 = vpop.f32.mrf.mxu0
    %2283 = vmatprep.mubr.f32.mxu0 0.0
    %2284 = vmatmul.mubr.f32.gmra.mxu0 %v291
    %v2285 = vpop.f32.mrf.mxu0
    %v2286 = vadd.f32 0.0, %v2285
    %v2287 = vpop.f32.mrf.mxu0
    %2288 = vmatprep.mubr.f32.mxu0 0.0
    %2289 = vmatmul.mubr.f32.gmra.mxu0 %v292
    %v2290 = vpop.f32.mrf.mxu0
    %v2291 = vadd.f32 0.0, %v2290
    %v2292 = vpop.f32.mrf.mxu0
    %2293 = vdwg.mxu0
    %vm2390 = vcmask 1040384
    %v2391 = vrot.slane %v197, 7
    %v2392 = vrot.slane %v198, 7
    %v2393 = vsel %vm2390, %v2391, %v2392
    %v2394 = vrot.slane %v199, 7
    %v2395 = vsel %vm2390, %v2392, %v2394
    %v2396 = vrot.slane %v200, 7
    %v2397 = vsel %vm2390, %v2394, %v2396
    %v2398 = vrot.slane %v201, 7
    %v2399 = vsel %vm2390, %v2396, %v2398
    %v2400 = vrot.slane %v202, 7
    %v2401 = vsel %vm2390, %v2398, %v2400
    %v2402 = vrot.slane %v203, 7
    %v2403 = vsel %vm2390, %v2400, %v2402
    %v2404 = vrot.slane %v204, 7
    %v2405 = vsel %vm2390, %v2402, %v2404
    %v2406 = vrot.slane %v205, 7
    %v2407 = vsel %vm2390, %v2404, %v2406
    %v2408 = vrot.slane %v206, 7
    %v2409 = vsel %vm2390, %v2406, %v2408
    %v2410 = vrot.slane %v207, 7
    %v2411 = vsel %vm2390, %v2408, %v2410
    %v2412 = vrot.slane %v208, 7
    %v2413 = vsel %vm2390, %v2410, %v2412
    %v2414 = vrot.slane %v209, 7
    %v2415 = vsel %vm2390, %v2412, %v2414
    %v2416 = vrot.slane %v210, 7
    %v2417 = vsel %vm2390, %v2414, %v2416
    %v2418 = vrot.slane %v211, 7
    %v2419 = vsel %vm2390, %v2416, %v2418
    %v2420 = vrot.slane %v212, 7
    %v2421 = vsel %vm2390, %v2418, %v2420
    %v2422 = vrot.slane %v213, 7
    %v2423 = vrot.slane %v214, 7
    %v2424 = vsel %vm2390, %v2422, %v2423
    %v2425 = vrot.slane %v215, 7
    %v2426 = vsel %vm2390, %v2423, %v2425
    %v2427 = vrot.slane %v216, 7
    %v2428 = vsel %vm2390, %v2425, %v2427
    %v2429 = vrot.slane %v217, 7
    %v2430 = vsel %vm2390, %v2427, %v2429
    %v2431 = vrot.slane %v218, 7
    %v2432 = vsel %vm2390, %v2429, %v2431
    %v2433 = vrot.slane %v219, 7
    %v2434 = vsel %vm2390, %v2431, %v2433
    %v2435 = vrot.slane %v220, 7
    %v2436 = vsel %vm2390, %v2433, %v2435
    %v2437 = vrot.slane %v221, 7
    %v2438 = vsel %vm2390, %v2435, %v2437
    %v2439 = vrot.slane %v222, 7
    %v2440 = vsel %vm2390, %v2437, %v2439
    %v2441 = vrot.slane %v223, 7
    %v2442 = vsel %vm2390, %v2439, %v2441
    %v2443 = vrot.slane %v224, 7
    %v2444 = vsel %vm2390, %v2441, %v2443
    %v2445 = vrot.slane %v225, 7
    %v2446 = vsel %vm2390, %v2443, %v2445
    %v2447 = vrot.slane %v226, 7
    %v2448 = vsel %vm2390, %v2445, %v2447
    %v2449 = vrot.slane %v227, 7
    %v2450 = vsel %vm2390, %v2447, %v2449
    %v2451 = vrot.slane %v228, 7
    %v2452 = vsel %vm2390, %v2449, %v2451
    %v2453 = vrot.slane %v229, 7
    %v2454 = vrot.slane %v230, 7
    %v2455 = vsel %vm2390, %v2453, %v2454
    %v2456 = vrot.slane %v231, 7
    %v2457 = vsel %vm2390, %v2454, %v2456
    %v2458 = vrot.slane %v232, 7
    %v2459 = vsel %vm2390, %v2456, %v2458
    %v2460 = vrot.slane %v233, 7
    %v2461 = vsel %vm2390, %v2458, %v2460
    %v2462 = vrot.slane %v234, 7
    %v2463 = vsel %vm2390, %v2460, %v2462
    %v2464 = vrot.slane %v235, 7
    %v2465 = vsel %vm2390, %v2462, %v2464
    %v2466 = vrot.slane %v236, 7
    %v2467 = vsel %vm2390, %v2464, %v2466
    %v2468 = vrot.slane %v237, 7
    %v2469 = vsel %vm2390, %v2466, %v2468
    %v2470 = vrot.slane %v238, 7
    %v2471 = vsel %vm2390, %v2468, %v2470
    %v2472 = vrot.slane %v239, 7
    %v2473 = vsel %vm2390, %v2470, %v2472
    %v2474 = vrot.slane %v240, 7
    %v2475 = vsel %vm2390, %v2472, %v2474
    %v2476 = vrot.slane %v241, 7
    %v2477 = vsel %vm2390, %v2474, %v2476
    %v2478 = vrot.slane %v242, 7
    %v2479 = vsel %vm2390, %v2476, %v2478
    %v2480 = vrot.slane %v243, 7
    %v2481 = vsel %vm2390, %v2478, %v2480
    %v2482 = vrot.slane %v244, 7
    %v2483 = vsel %vm2390, %v2480, %v2482
    %v2484 = vrot.slane %v245, 7
    %v2485 = vrot.slane %v246, 7
    %v2486 = vsel %vm2390, %v2484, %v2485
    %v2487 = vrot.slane %v247, 7
    %v2488 = vsel %vm2390, %v2485, %v2487
    %v2489 = vrot.slane %v248, 7
    %v2490 = vsel %vm2390, %v2487, %v2489
    %v2491 = vrot.slane %v249, 7
    %v2492 = vsel %vm2390, %v2489, %v2491
    %v2493 = vrot.slane %v250, 7
    %v2494 = vsel %vm2390, %v2491, %v2493
    %v2495 = vrot.slane %v251, 7
    %v2496 = vsel %vm2390, %v2493, %v2495
    %v2497 = vrot.slane %v252, 7
    %v2498 = vsel %vm2390, %v2495, %v2497
    %v2499 = vrot.slane %v253, 7
    %v2500 = vsel %vm2390, %v2497, %v2499
    %v2501 = vrot.slane %v254, 7
    %v2502 = vsel %vm2390, %v2499, %v2501
    %v2503 = vrot.slane %v255, 7
    %v2504 = vsel %vm2390, %v2501, %v2503
    %v2505 = vrot.slane %v256, 7
    %v2506 = vsel %vm2390, %v2503, %v2505
    %v2507 = vrot.slane %v257, 7
    %v2508 = vsel %vm2390, %v2505, %v2507
    %v2509 = vrot.slane %v258, 7
    %v2510 = vsel %vm2390, %v2507, %v2509
    %v2511 = vrot.slane %v259, 7
    %v2512 = vsel %vm2390, %v2509, %v2511
    %v2513 = vrot.slane %v260, 7
    %v2514 = vsel %vm2390, %v2511, %v2513
    %v2515 = vrot.slane %v261, 7
    %v2516 = vrot.slane %v262, 7
    %v2517 = vsel %vm2390, %v2515, %v2516
    %v2518 = vrot.slane %v263, 7
    %v2519 = vsel %vm2390, %v2516, %v2518
    %v2520 = vrot.slane %v264, 7
    %v2521 = vsel %vm2390, %v2518, %v2520
    %v2522 = vrot.slane %v265, 7
    %v2523 = vsel %vm2390, %v2520, %v2522
    %v2524 = vrot.slane %v266, 7
    %v2525 = vsel %vm2390, %v2522, %v2524
    %v2526 = vrot.slane %v267, 7
    %v2527 = vsel %vm2390, %v2524, %v2526
    %v2528 = vrot.slane %v268, 7
    %v2529 = vsel %vm2390, %v2526, %v2528
    %v2530 = vrot.slane %v269, 7
    %v2531 = vsel %vm2390, %v2528, %v2530
    %v2532 = vrot.slane %v270, 7
    %v2533 = vsel %vm2390, %v2530, %v2532
    %v2534 = vrot.slane %v271, 7
    %v2535 = vsel %vm2390, %v2532, %v2534
    %v2536 = vrot.slane %v272, 7
    %v2537 = vsel %vm2390, %v2534, %v2536
    %v2538 = vrot.slane %v273, 7
    %v2539 = vsel %vm2390, %v2536, %v2538
    %v2540 = vrot.slane %v274, 7
    %v2541 = vsel %vm2390, %v2538, %v2540
    %v2542 = vrot.slane %v275, 7
    %v2543 = vsel %vm2390, %v2540, %v2542
    %v2544 = vrot.slane %v276, 7
    %v2545 = vsel %vm2390, %v2542, %v2544
    %v2546 = vrot.slane %v277, 7
    %v2547 = vrot.slane %v278, 7
    %v2548 = vsel %vm2390, %v2546, %v2547
    %v2549 = vrot.slane %v279, 7
    %v2550 = vsel %vm2390, %v2547, %v2549
    %v2551 = vrot.slane %v280, 7
    %v2552 = vsel %vm2390, %v2549, %v2551
    %v2553 = vrot.slane %v281, 7
    %v2554 = vsel %vm2390, %v2551, %v2553
    %v2555 = vrot.slane %v282, 7
    %v2556 = vsel %vm2390, %v2553, %v2555
    %v2557 = vrot.slane %v283, 7
    %v2558 = vsel %vm2390, %v2555, %v2557
    %v2559 = vrot.slane %v284, 7
    %v2560 = vsel %vm2390, %v2557, %v2559
    %v2561 = vrot.slane %v285, 7
    %v2562 = vsel %vm2390, %v2559, %v2561
    %v2563 = vrot.slane %v286, 7
    %v2564 = vsel %vm2390, %v2561, %v2563
    %v2565 = vrot.slane %v287, 7
    %v2566 = vsel %vm2390, %v2563, %v2565
    %v2567 = vrot.slane %v288, 7
    %v2568 = vsel %vm2390, %v2565, %v2567
    %v2569 = vrot.slane %v289, 7
    %v2570 = vsel %vm2390, %v2567, %v2569
    %v2571 = vrot.slane %v290, 7
    %v2572 = vsel %vm2390, %v2569, %v2571
    %v2573 = vrot.slane %v291, 7
    %v2574 = vsel %vm2390, %v2571, %v2573
    %v2575 = vrot.slane %v292, 7
    %v2576 = vsel %vm2390, %v2573, %v2575
    %v2673 = vsub.f32 %v197, %v2391
    %v2674 = vsub.f32 %v198, %v2393
    %v2675 = vsub.f32 %v199, %v2395
    %v2676 = vsub.f32 %v200, %v2397
    %v2677 = vsub.f32 %v201, %v2399
    %v2678 = vsub.f32 %v202, %v2401
    %v2679 = vsub.f32 %v203, %v2403
    %v2680 = vsub.f32 %v204, %v2405
    %v2681 = vsub.f32 %v205, %v2407
    %v2682 = vsub.f32 %v206, %v2409
    %v2683 = vsub.f32 %v207, %v2411
    %v2684 = vsub.f32 %v208, %v2413
    %v2685 = vsub.f32 %v209, %v2415
    %v2686 = vsub.f32 %v210, %v2417
    %v2687 = vsub.f32 %v211, %v2419
    %v2688 = vsub.f32 %v212, %v2421
    %v2689 = vsub.f32 %v213, %v2422
    %v2690 = vsub.f32 %v214, %v2424
    %v2691 = vsub.f32 %v215, %v2426
    %v2692 = vsub.f32 %v216, %v2428
    %v2693 = vsub.f32 %v217, %v2430
    %v2694 = vsub.f32 %v218, %v2432
    %v2695 = vsub.f32 %v219, %v2434
    %v2696 = vsub.f32 %v220, %v2436
    %v2697 = vsub.f32 %v221, %v2438
    %v2698 = vsub.f32 %v222, %v2440
    %v2699 = vsub.f32 %v223, %v2442
    %v2700 = vsub.f32 %v224, %v2444
    %v2701 = vsub.f32 %v225, %v2446
    %v2702 = vsub.f32 %v226, %v2448
    %v2703 = vsub.f32 %v227, %v2450
    %v2704 = vsub.f32 %v228, %v2452
    %v2705 = vsub.f32 %v229, %v2453
    %v2706 = vsub.f32 %v230, %v2455
    %v2707 = vsub.f32 %v231, %v2457
    %v2708 = vsub.f32 %v232, %v2459
    %v2709 = vsub.f32 %v233, %v2461
    %v2710 = vsub.f32 %v234, %v2463
    %v2711 = vsub.f32 %v235, %v2465
    %v2712 = vsub.f32 %v236, %v2467
    %v2713 = vsub.f32 %v237, %v2469
    %v2714 = vsub.f32 %v238, %v2471
    %v2715 = vsub.f32 %v239, %v2473
    %v2716 = vsub.f32 %v240, %v2475
    %v2717 = vsub.f32 %v241, %v2477
    %v2718 = vsub.f32 %v242, %v2479
    %v2719 = vsub.f32 %v243, %v2481
    %v2720 = vsub.f32 %v244, %v2483
    %v2721 = vsub.f32 %v245, %v2484
    %v2722 = vsub.f32 %v246, %v2486
    %v2723 = vsub.f32 %v247, %v2488
    %v2724 = vsub.f32 %v248, %v2490
    %v2725 = vsub.f32 %v249, %v2492
    %v2726 = vsub.f32 %v250, %v2494
    %v2727 = vsub.f32 %v251, %v2496
    %v2728 = vsub.f32 %v252, %v2498
    %v2729 = vsub.f32 %v253, %v2500
    %v2730 = vsub.f32 %v254, %v2502
    %v2731 = vsub.f32 %v255, %v2504
    %v2732 = vsub.f32 %v256, %v2506
    %v2733 = vsub.f32 %v257, %v2508
    %v2734 = vsub.f32 %v258, %v2510
    %v2735 = vsub.f32 %v259, %v2512
    %v2736 = vsub.f32 %v260, %v2514
    %v2737 = vsub.f32 %v261, %v2515
    %v2738 = vsub.f32 %v262, %v2517
    %v2739 = vsub.f32 %v263, %v2519
    %v2740 = vsub.f32 %v264, %v2521
    %v2741 = vsub.f32 %v265, %v2523
    %v2742 = vsub.f32 %v266, %v2525
    %v2743 = vsub.f32 %v267, %v2527
    %v2744 = vsub.f32 %v268, %v2529
    %v2745 = vsub.f32 %v269, %v2531
    %v2746 = vsub.f32 %v270, %v2533
    %v2747 = vsub.f32 %v271, %v2535
    %v2748 = vsub.f32 %v272, %v2537
    %v2749 = vsub.f32 %v273, %v2539
    %v2750 = vsub.f32 %v274, %v2541
    %v2751 = vsub.f32 %v275, %v2543
    %v2752 = vsub.f32 %v276, %v2545
    %v2753 = vsub.f32 %v277, %v2546
    %v2754 = vsub.f32 %v278, %v2548
    %v2755 = vsub.f32 %v279, %v2550
    %v2756 = vsub.f32 %v280, %v2552
    %v2757 = vsub.f32 %v281, %v2554
    %v2758 = vsub.f32 %v282, %v2556
    %v2759 = vsub.f32 %v283, %v2558
    %v2760 = vsub.f32 %v284, %v2560
    %v2761 = vsub.f32 %v285, %v2562
    %v2762 = vsub.f32 %v286, %v2564
    %v2763 = vsub.f32 %v287, %v2566
    %v2764 = vsub.f32 %v288, %v2568
    %v2765 = vsub.f32 %v289, %v2570
    %v2766 = vsub.f32 %v290, %v2572
    %v2767 = vsub.f32 %v291, %v2574
    %v2768 = vsub.f32 %v292, %v2576
    %v2769 = vand.u32 2147483647, %v2673
    %v2770 = vand.u32 2147483647, %v2674
    %v2771 = vand.u32 2147483647, %v2675
    %v2772 = vand.u32 2147483647, %v2676
    %v2773 = vand.u32 2147483647, %v2677
    %v2774 = vand.u32 2147483647, %v2678
    %v2775 = vand.u32 2147483647, %v2679
    %v2776 = vand.u32 2147483647, %v2680
    %v2777 = vand.u32 2147483647, %v2681
    %v2778 = vand.u32 2147483647, %v2682
    %v2779 = vand.u32 2147483647, %v2683
    %v2780 = vand.u32 2147483647, %v2684
    %v2781 = vand.u32 2147483647, %v2685
    %v2782 = vand.u32 2147483647, %v2686
    %v2783 = vand.u32 2147483647, %v2687
    %v2784 = vand.u32 2147483647, %v2688
    %v2785 = vand.u32 2147483647, %v2689
    %v2786 = vand.u32 2147483647, %v2690
    %v2787 = vand.u32 2147483647, %v2691
    %v2788 = vand.u32 2147483647, %v2692
    %v2789 = vand.u32 2147483647, %v2693
    %v2790 = vand.u32 2147483647, %v2694
    %v2791 = vand.u32 2147483647, %v2695
    %v2792 = vand.u32 2147483647, %v2696
    %v2793 = vand.u32 2147483647, %v2697
    %v2794 = vand.u32 2147483647, %v2698
    %v2795 = vand.u32 2147483647, %v2699
    %v2796 = vand.u32 2147483647, %v2700
    %v2797 = vand.u32 2147483647, %v2701
    %v2798 = vand.u32 2147483647, %v2702
    %v2799 = vand.u32 2147483647, %v2703
    %v2800 = vand.u32 2147483647, %v2704
    %v2801 = vand.u32 2147483647, %v2705
    %v2802 = vand.u32 2147483647, %v2706
    %v2803 = vand.u32 2147483647, %v2707
    %v2804 = vand.u32 2147483647, %v2708
    %v2805 = vand.u32 2147483647, %v2709
    %v2806 = vand.u32 2147483647, %v2710
    %v2807 = vand.u32 2147483647, %v2711
    %v2808 = vand.u32 2147483647, %v2712
    %v2809 = vand.u32 2147483647, %v2713
    %v2810 = vand.u32 2147483647, %v2714
    %v2811 = vand.u32 2147483647, %v2715
    %v2812 = vand.u32 2147483647, %v2716
    %v2813 = vand.u32 2147483647, %v2717
    %v2814 = vand.u32 2147483647, %v2718
    %v2815 = vand.u32 2147483647, %v2719
    %v2816 = vand.u32 2147483647, %v2720
    %v2817 = vand.u32 2147483647, %v2721
    %v2818 = vand.u32 2147483647, %v2722
    %v2819 = vand.u32 2147483647, %v2723
    %v2820 = vand.u32 2147483647, %v2724
    %v2821 = vand.u32 2147483647, %v2725
    %v2822 = vand.u32 2147483647, %v2726
    %v2823 = vand.u32 2147483647, %v2727
    %v2824 = vand.u32 2147483647, %v2728
    %v2825 = vand.u32 2147483647, %v2729
    %v2826 = vand.u32 2147483647, %v2730
    %v2827 = vand.u32 2147483647, %v2731
    %v2828 = vand.u32 2147483647, %v2732
    %v2829 = vand.u32 2147483647, %v2733
    %v2830 = vand.u32 2147483647, %v2734
    %v2831 = vand.u32 2147483647, %v2735
    %v2832 = vand.u32 2147483647, %v2736
    %v2833 = vand.u32 2147483647, %v2737
    %v2834 = vand.u32 2147483647, %v2738
    %v2835 = vand.u32 2147483647, %v2739
    %v2836 = vand.u32 2147483647, %v2740
    %v2837 = vand.u32 2147483647, %v2741
    %v2838 = vand.u32 2147483647, %v2742
    %v2839 = vand.u32 2147483647, %v2743
    %v2840 = vand.u32 2147483647, %v2744
    %v2841 = vand.u32 2147483647, %v2745
    %v2842 = vand.u32 2147483647, %v2746
    %v2843 = vand.u32 2147483647, %v2747
    %v2844 = vand.u32 2147483647, %v2748
    %v2845 = vand.u32 2147483647, %v2749
    %v2846 = vand.u32 2147483647, %v2750
    %v2847 = vand.u32 2147483647, %v2751
    %v2848 = vand.u32 2147483647, %v2752
    %v2849 = vand.u32 2147483647, %v2753
    %v2850 = vand.u32 2147483647, %v2754
    %v2851 = vand.u32 2147483647, %v2755
    %v2852 = vand.u32 2147483647, %v2756
    %v2853 = vand.u32 2147483647, %v2757
    %v2854 = vand.u32 2147483647, %v2758
    %v2855 = vand.u32 2147483647, %v2759
    %v2856 = vand.u32 2147483647, %v2760
    %v2857 = vand.u32 2147483647, %v2761
    %v2858 = vand.u32 2147483647, %v2762
    %v2859 = vand.u32 2147483647, %v2763
    %v2860 = vand.u32 2147483647, %v2764
    %v2861 = vand.u32 2147483647, %v2765
    %v2862 = vand.u32 2147483647, %v2766
    %v2863 = vand.u32 2147483647, %v2767
    %v2864 = vand.u32 2147483647, %v2768
    %vm2961 = vcmask 1046528
    %v2962 = vrot.slane %v2769, 1
    %v2963 = vrot.slane %v2770, 1
    %v2964 = vsel %vm2961, %v2962, %v2963
    %v2965 = vrot.slane %v2771, 1
    %v2966 = vsel %vm2961, %v2963, %v2965
    %v2967 = vrot.slane %v2772, 1
    %v2968 = vsel %vm2961, %v2965, %v2967
    %v2969 = vrot.slane %v2773, 1
    %v2970 = vsel %vm2961, %v2967, %v2969
    %v2971 = vrot.slane %v2774, 1
    %v2972 = vsel %vm2961, %v2969, %v2971
    %v2973 = vrot.slane %v2775, 1
    %v2974 = vsel %vm2961, %v2971, %v2973
    %v2975 = vrot.slane %v2776, 1
    %v2976 = vsel %vm2961, %v2973, %v2975
    %v2977 = vrot.slane %v2777, 1
    %v2978 = vsel %vm2961, %v2975, %v2977
    %v2979 = vrot.slane %v2778, 1
    %v2980 = vsel %vm2961, %v2977, %v2979
    %v2981 = vrot.slane %v2779, 1
    %v2982 = vsel %vm2961, %v2979, %v2981
    %v2983 = vrot.slane %v2780, 1
    %v2984 = vsel %vm2961, %v2981, %v2983
    %v2985 = vrot.slane %v2781, 1
    %v2986 = vsel %vm2961, %v2983, %v2985
    %v2987 = vrot.slane %v2782, 1
    %v2988 = vsel %vm2961, %v2985, %v2987
    %v2989 = vrot.slane %v2783, 1
    %v2990 = vsel %vm2961, %v2987, %v2989
    %v2991 = vrot.slane %v2784, 1
    %v2992 = vsel %vm2961, %v2989, %v2991
    %v2993 = vrot.slane %v2785, 1
    %v2994 = vrot.slane %v2786, 1
    %v2995 = vsel %vm2961, %v2993, %v2994
    %v2996 = vrot.slane %v2787, 1
    %v2997 = vsel %vm2961, %v2994, %v2996
    %v2998 = vrot.slane %v2788, 1
    %v2999 = vsel %vm2961, %v2996, %v2998
    %v3000 = vrot.slane %v2789, 1
    %v3001 = vsel %vm2961, %v2998, %v3000
    %v3002 = vrot.slane %v2790, 1
    %v3003 = vsel %vm2961, %v3000, %v3002
    %v3004 = vrot.slane %v2791, 1
    %v3005 = vsel %vm2961, %v3002, %v3004
    %v3006 = vrot.slane %v2792, 1
    %v3007 = vsel %vm2961, %v3004, %v3006
    %v3008 = vrot.slane %v2793, 1
    %v3009 = vsel %vm2961, %v3006, %v3008
    %v3010 = vrot.slane %v2794, 1
    %v3011 = vsel %vm2961, %v3008, %v3010
    %v3012 = vrot.slane %v2795, 1
    %v3013 = vsel %vm2961, %v3010, %v3012
    %v3014 = vrot.slane %v2796, 1
    %v3015 = vsel %vm2961, %v3012, %v3014
    %v3016 = vrot.slane %v2797, 1
    %v3017 = vsel %vm2961, %v3014, %v3016
    %v3018 = vrot.slane %v2798, 1
    %v3019 = vsel %vm2961, %v3016, %v3018
    %v3020 = vrot.slane %v2799, 1
    %v3021 = vsel %vm2961, %v3018, %v3020
    %v3022 = vrot.slane %v2800, 1
    %v3023 = vsel %vm2961, %v3020, %v3022
    %v3024 = vrot.slane %v2801, 1
    %v3025 = vrot.slane %v2802, 1
    %v3026 = vsel %vm2961, %v3024, %v3025
    %v3027 = vrot.slane %v2803, 1
    %v3028 = vsel %vm2961, %v3025, %v3027
    %v3029 = vrot.slane %v2804, 1
    %v3030 = vsel %vm2961, %v3027, %v3029
    %v3031 = vrot.slane %v2805, 1
    %v3032 = vsel %vm2961, %v3029, %v3031
    %v3033 = vrot.slane %v2806, 1
    %v3034 = vsel %vm2961, %v3031, %v3033
    %v3035 = vrot.slane %v2807, 1
    %v3036 = vsel %vm2961, %v3033, %v3035
    %v3037 = vrot.slane %v2808, 1
    %v3038 = vsel %vm2961, %v3035, %v3037
    %v3039 = vrot.slane %v2809, 1
    %v3040 = vsel %vm2961, %v3037, %v3039
    %v3041 = vrot.slane %v2810, 1
    %v3042 = vsel %vm2961, %v3039, %v3041
    %v3043 = vrot.slane %v2811, 1
    %v3044 = vsel %vm2961, %v3041, %v3043
    %v3045 = vrot.slane %v2812, 1
    %v3046 = vsel %vm2961, %v3043, %v3045
    %v3047 = vrot.slane %v2813, 1
    %v3048 = vsel %vm2961, %v3045, %v3047
    %v3049 = vrot.slane %v2814, 1
    %v3050 = vsel %vm2961, %v3047, %v3049
    %v3051 = vrot.slane %v2815, 1
    %v3052 = vsel %vm2961, %v3049, %v3051
    %v3053 = vrot.slane %v2816, 1
    %v3054 = vsel %vm2961, %v3051, %v3053
    %v3055 = vrot.slane %v2817, 1
    %v3056 = vrot.slane %v2818, 1
    %v3057 = vsel %vm2961, %v3055, %v3056
    %v3058 = vrot.slane %v2819, 1
    %v3059 = vsel %vm2961, %v3056, %v3058
    %v3060 = vrot.slane %v2820, 1
    %v3061 = vsel %vm2961, %v3058, %v3060
    %v3062 = vrot.slane %v2821, 1
    %v3063 = vsel %vm2961, %v3060, %v3062
    %v3064 = vrot.slane %v2822, 1
    %v3065 = vsel %vm2961, %v3062, %v3064
    %v3066 = vrot.slane %v2823, 1
    %v3067 = vsel %vm2961, %v3064, %v3066
    %v3068 = vrot.slane %v2824, 1
    %v3069 = vsel %vm2961, %v3066, %v3068
    %v3070 = vrot.slane %v2825, 1
    %v3071 = vsel %vm2961, %v3068, %v3070
    %v3072 = vrot.slane %v2826, 1
    %v3073 = vsel %vm2961, %v3070, %v3072
    %v3074 = vrot.slane %v2827, 1
    %v3075 = vsel %vm2961, %v3072, %v3074
    %v3076 = vrot.slane %v2828, 1
    %v3077 = vsel %vm2961, %v3074, %v3076
    %v3078 = vrot.slane %v2829, 1
    %v3079 = vsel %vm2961, %v3076, %v3078
    %v3080 = vrot.slane %v2830, 1
    %v3081 = vsel %vm2961, %v3078, %v3080
    %v3082 = vrot.slane %v2831, 1
    %v3083 = vsel %vm2961, %v3080, %v3082
    %v3084 = vrot.slane %v2832, 1
    %v3085 = vsel %vm2961, %v3082, %v3084
    %v3086 = vrot.slane %v2833, 1
    %v3087 = vrot.slane %v2834, 1
    %v3088 = vsel %vm2961, %v3086, %v3087
    %v3089 = vrot.slane %v2835, 1
    %v3090 = vsel %vm2961, %v3087, %v3089
    %v3091 = vrot.slane %v2836, 1
    %v3092 = vsel %vm2961, %v3089, %v3091
    %v3093 = vrot.slane %v2837, 1
    %v3094 = vsel %vm2961, %v3091, %v3093
    %v3095 = vrot.slane %v2838, 1
    %v3096 = vsel %vm2961, %v3093, %v3095
    %v3097 = vrot.slane %v2839, 1
    %v3098 = vsel %vm2961, %v3095, %v3097
    %v3099 = vrot.slane %v2840, 1
    %v3100 = vsel %vm2961, %v3097, %v3099
    %v3101 = vrot.slane %v2841, 1
    %v3102 = vsel %vm2961, %v3099, %v3101
    %v3103 = vrot.slane %v2842, 1
    %v3104 = vsel %vm2961, %v3101, %v3103
    %v3105 = vrot.slane %v2843, 1
    %v3106 = vsel %vm2961, %v3103, %v3105
    %v3107 = vrot.slane %v2844, 1
    %v3108 = vsel %vm2961, %v3105, %v3107
    %v3109 = vrot.slane %v2845, 1
    %v3110 = vsel %vm2961, %v3107, %v3109
    %v3111 = vrot.slane %v2846, 1
    %v3112 = vsel %vm2961, %v3109, %v3111
    %v3113 = vrot.slane %v2847, 1
    %v3114 = vsel %vm2961, %v3111, %v3113
    %v3115 = vrot.slane %v2848, 1
    %v3116 = vsel %vm2961, %v3113, %v3115
    %v3117 = vrot.slane %v2849, 1
    %v3118 = vrot.slane %v2850, 1
    %v3119 = vsel %vm2961, %v3117, %v3118
    %v3120 = vrot.slane %v2851, 1
    %v3121 = vsel %vm2961, %v3118, %v3120
    %v3122 = vrot.slane %v2852, 1
    %v3123 = vsel %vm2961, %v3120, %v3122
    %v3124 = vrot.slane %v2853, 1
    %v3125 = vsel %vm2961, %v3122, %v3124
    %v3126 = vrot.slane %v2854, 1
    %v3127 = vsel %vm2961, %v3124, %v3126
    %v3128 = vrot.slane %v2855, 1
    %v3129 = vsel %vm2961, %v3126, %v3128
    %v3130 = vrot.slane %v2856, 1
    %v3131 = vsel %vm2961, %v3128, %v3130
    %v3132 = vrot.slane %v2857, 1
    %v3133 = vsel %vm2961, %v3130, %v3132
    %v3134 = vrot.slane %v2858, 1
    %v3135 = vsel %vm2961, %v3132, %v3134
    %v3136 = vrot.slane %v2859, 1
    %v3137 = vsel %vm2961, %v3134, %v3136
    %v3138 = vrot.slane %v2860, 1
    %v3139 = vsel %vm2961, %v3136, %v3138
    %v3140 = vrot.slane %v2861, 1
    %v3141 = vsel %vm2961, %v3138, %v3140
    %v3142 = vrot.slane %v2862, 1
    %v3143 = vsel %vm2961, %v3140, %v3142
    %v3144 = vrot.slane %v2863, 1
    %v3145 = vsel %vm2961, %v3142, %v3144
    %v3146 = vrot.slane %v2864, 1
    %v3147 = vsel %vm2961, %v3144, %v3146
    %v3244 = vadd.f32 %v2964, %v2966
    %v3245 = vadd.f32 %v3244, %v2968
    %v3246 = vadd.f32 %v3245, %v2970
    %v3247 = vadd.f32 %v3246, %v2972
    %v3248 = vadd.f32 %v3247, %v2974
    %v3249 = vadd.f32 %v3248, %v2976
    %v3250 = vadd.f32 %v3249, %v2978
    %v3251 = vadd.f32 %v3250, %v2980
    %v3252 = vadd.f32 %v3251, %v2982
    %v3253 = vadd.f32 %v3252, %v2984
    %v3254 = vadd.f32 %v3253, %v2986
    %v3255 = vadd.f32 %v3254, %v2988
    %v3256 = vadd.f32 %v3255, %v2990
    %v3257 = vadd.f32 %v3256, %v2992
    %v3258 = vsel %vm2961, %v2991, 0.0
    %v3259 = vadd.f32 %v3257, %v3258
    %v3260 = vadd.f32 %v3259, %v2995
    %v3261 = vadd.f32 %v3260, %v2997
    %v3262 = vadd.f32 %v3261, %v2999
    %v3263 = vadd.f32 %v3262, %v3001
    %v3264 = vadd.f32 %v3263, %v3003
    %v3265 = vadd.f32 %v3264, %v3005
    %v3266 = vadd.f32 %v3265, %v3007
    %v3267 = vadd.f32 %v3266, %v3009
    %v3268 = vadd.f32 %v3267, %v3011
    %v3269 = vadd.f32 %v3268, %v3013
    %v3270 = vadd.f32 %v3269, %v3015
    %v3271 = vadd.f32 %v3270, %v3017
    %v3272 = vadd.f32 %v3271, %v3019
    %v3273 = vadd.f32 %v3272, %v3021
    %v3274 = vadd.f32 %v3273, %v3023
    %v3275 = vsel %vm2961, %v3022, 0.0
    %v3276 = vadd.f32 %v3274, %v3275
    %v3277 = vadd.f32 %v3276, %v3026
    %v3278 = vadd.f32 %v3277, %v3028
    %v3279 = vadd.f32 %v3278, %v3030
    %v3280 = vadd.f32 %v3279, %v3032
    %v3281 = vadd.f32 %v3280, %v3034
    %v3282 = vadd.f32 %v3281, %v3036
    %v3283 = vadd.f32 %v3282, %v3038
    %v3284 = vadd.f32 %v3283, %v3040
    %v3285 = vadd.f32 %v3284, %v3042
    %v3286 = vadd.f32 %v3285, %v3044
    %v3287 = vadd.f32 %v3286, %v3046
    %v3288 = vadd.f32 %v3287, %v3048
    %v3289 = vadd.f32 %v3288, %v3050
    %v3290 = vadd.f32 %v3289, %v3052
    %v3291 = vadd.f32 %v3290, %v3054
    %v3292 = vsel %vm2961, %v3053, 0.0
    %v3293 = vadd.f32 %v3291, %v3292
    %v3294 = vadd.f32 %v3293, %v3057
    %v3295 = vadd.f32 %v3294, %v3059
    %v3296 = vadd.f32 %v3295, %v3061
    %v3297 = vadd.f32 %v3296, %v3063
    %v3298 = vadd.f32 %v3297, %v3065
    %v3299 = vadd.f32 %v3298, %v3067
    %v3300 = vadd.f32 %v3299, %v3069
    %v3301 = vadd.f32 %v3300, %v3071
    %v3302 = vadd.f32 %v3301, %v3073
    %v3303 = vadd.f32 %v3302, %v3075
    %v3304 = vadd.f32 %v3303, %v3077
    %v3305 = vadd.f32 %v3304, %v3079
    %v3306 = vadd.f32 %v3305, %v3081
    %v3307 = vadd.f32 %v3306, %v3083
    %v3308 = vadd.f32 %v3307, %v3085
    %v3309 = vsel %vm2961, %v3084, 0.0
    %v3310 = vadd.f32 %v3308, %v3309
    %v3311 = vadd.f32 %v3310, %v3088
    %v3312 = vadd.f32 %v3311, %v3090
    %v3313 = vadd.f32 %v3312, %v3092
    %v3314 = vadd.f32 %v3313, %v3094
    %v3315 = vadd.f32 %v3314, %v3096
    %v3316 = vadd.f32 %v3315, %v3098
    %v3317 = vadd.f32 %v3316, %v3100
    %v3318 = vadd.f32 %v3317, %v3102
    %v3319 = vadd.f32 %v3318, %v3104
    %v3320 = vadd.f32 %v3319, %v3106
    %v3321 = vadd.f32 %v3320, %v3108
    %v3322 = vadd.f32 %v3321, %v3110
    %v3323 = vadd.f32 %v3322, %v3112
    %v3324 = vadd.f32 %v3323, %v3114
    %v3325 = vadd.f32 %v3324, %v3116
    %v3326 = vsel %vm2961, %v3115, 0.0
    %v3327 = vadd.f32 %v3325, %v3326
    %v3328 = vadd.f32 %v3327, %v3119
    %v3329 = vadd.f32 %v3328, %v3121
    %v3330 = vadd.f32 %v3329, %v3123
    %v3331 = vadd.f32 %v3330, %v3125
    %v3332 = vadd.f32 %v3331, %v3127
    %v3333 = vadd.f32 %v3332, %v3129
    %v3334 = vadd.f32 %v3333, %v3131
    %v3335 = vadd.f32 %v3334, %v3133
    %v3336 = vadd.f32 %v3335, %v3135
    %v3337 = vadd.f32 %v3336, %v3137
    %v3338 = vadd.f32 %v3337, %v3139
    %v3339 = vadd.f32 %v3338, %v3141
    %v3340 = vadd.f32 %v3339, %v3143
    %v3341 = vadd.f32 %v3340, %v3145
    %v3342 = vadd.f32 %v3341, %v3147
    %v3343 = vsel %vm2961, %v3146, 0.0
    %v3344 = vadd.f32 %v3342, %v3343
    %3345 = vadd.xlane.f32.xlu0 %v3344
    %v3346 = vpop.xlane.xlu0 %3345
    %v3347 = vrot.slane %v3346, 4
    %v3348 = vadd.f32 %v3346, %v3347
    %v3349 = vrot.slane %v3348, 2
    %v3350 = vadd.f32 %v3348, %v3349
    %v3351 = vrot.slane %v3350, 1
    %v3352 = vadd.f32 %v3350, %v3351
    %s3353 = vtos %v3352
    %v3354 = vrcp.pop 97536.0
    %s3355 = vtos %v3354
    %s3356 = smul.f32 %s3353, %s3355
    %v3357 = vand.u32 2147483647, %v1816
    %v3358 = vand.u32 2147483647, %v1821
    %v3359 = vand.u32 2147483647, %v1826
    %v3360 = vand.u32 2147483647, %v1831
    %v3361 = vand.u32 2147483647, %v1836
    %v3362 = vand.u32 2147483647, %v1841
    %v3363 = vand.u32 2147483647, %v1846
    %v3364 = vand.u32 2147483647, %v1851
    %v3365 = vand.u32 2147483647, %v1856
    %v3366 = vand.u32 2147483647, %v1861
    %v3367 = vand.u32 2147483647, %v1866
    %v3368 = vand.u32 2147483647, %v1871
    %v3369 = vand.u32 2147483647, %v1876
    %v3370 = vand.u32 2147483647, %v1881
    %v3371 = vand.u32 2147483647, %v1886
    %v3372 = vand.u32 2147483647, %v1891
    %v3373 = vand.u32 2147483647, %v1896
    %v3374 = vand.u32 2147483647, %v1901
    %v3375 = vand.u32 2147483647, %v1906
    %v3376 = vand.u32 2147483647, %v1911
    %v3377 = vand.u32 2147483647, %v1916
    %v3378 = vand.u32 2147483647, %v1921
    %v3379 = vand.u32 2147483647, %v1926
    %v3380 = vand.u32 2147483647, %v1931
    %v3381 = vand.u32 2147483647, %v1936
    %v3382 = vand.u32 2147483647, %v1941
    %v3383 = vand.u32 2147483647, %v1946
    %v3384 = vand.u32 2147483647, %v1951
    %v3385 = vand.u32 2147483647, %v1956
    %v3386 = vand.u32 2147483647, %v1961
    %v3387 = vand.u32 2147483647, %v1966
    %v3388 = vand.u32 2147483647, %v1971
    %v3389 = vand.u32 2147483647, %v1976
    %v3390 = vand.u32 2147483647, %v1981
    %v3391 = vand.u32 2147483647, %v1986
    %v3392 = vand.u32 2147483647, %v1991
    %v3393 = vand.u32 2147483647, %v1996
    %v3394 = vand.u32 2147483647, %v2001
    %v3395 = vand.u32 2147483647, %v2006
    %v3396 = vand.u32 2147483647, %v2011
    %v3397 = vand.u32 2147483647, %v2016
    %v3398 = vand.u32 2147483647, %v2021
    %v3399 = vand.u32 2147483647, %v2026
    %v3400 = vand.u32 2147483647, %v2031
    %v3401 = vand.u32 2147483647, %v2036
    %v3402 = vand.u32 2147483647, %v2041
    %v3403 = vand.u32 2147483647, %v2046
    %v3404 = vand.u32 2147483647, %v2051
    %v3405 = vand.u32 2147483647, %v2056
    %v3406 = vand.u32 2147483647, %v2061
    %v3407 = vand.u32 2147483647, %v2066
    %v3408 = vand.u32 2147483647, %v2071
    %v3409 = vand.u32 2147483647, %v2076
    %v3410 = vand.u32 2147483647, %v2081
    %v3411 = vand.u32 2147483647, %v2086
    %v3412 = vand.u32 2147483647, %v2091
    %v3413 = vand.u32 2147483647, %v2096
    %v3414 = vand.u32 2147483647, %v2101
    %v3415 = vand.u32 2147483647, %v2106
    %v3416 = vand.u32 2147483647, %v2111
    %v3417 = vand.u32 2147483647, %v2116
    %v3418 = vand.u32 2147483647, %v2121
    %v3419 = vand.u32 2147483647, %v2126
    %v3420 = vand.u32 2147483647, %v2131
    %v3421 = vand.u32 2147483647, %v2136
    %v3422 = vand.u32 2147483647, %v2141
    %v3423 = vand.u32 2147483647, %v2146
    %v3424 = vand.u32 2147483647, %v2151
    %v3425 = vand.u32 2147483647, %v2156
    %v3426 = vand.u32 2147483647, %v2161
    %v3427 = vand.u32 2147483647, %v2166
    %v3428 = vand.u32 2147483647, %v2171
    %v3429 = vand.u32 2147483647, %v2176
    %v3430 = vand.u32 2147483647, %v2181
    %v3431 = vand.u32 2147483647, %v2186
    %v3432 = vand.u32 2147483647, %v2191
    %v3433 = vand.u32 2147483647, %v2196
    %v3434 = vand.u32 2147483647, %v2201
    %v3435 = vand.u32 2147483647, %v2206
    %v3436 = vand.u32 2147483647, %v2211
    %v3437 = vand.u32 2147483647, %v2216
    %v3438 = vand.u32 2147483647, %v2221
    %v3439 = vand.u32 2147483647, %v2226
    %v3440 = vand.u32 2147483647, %v2231
    %v3441 = vand.u32 2147483647, %v2236
    %v3442 = vand.u32 2147483647, %v2241
    %v3443 = vand.u32 2147483647, %v2246
    %v3444 = vand.u32 2147483647, %v2251
    %v3445 = vand.u32 2147483647, %v2256
    %v3446 = vand.u32 2147483647, %v2261
    %v3447 = vand.u32 2147483647, %v2266
    %v3448 = vand.u32 2147483647, %v2271
    %v3449 = vand.u32 2147483647, %v2276
    %v3450 = vand.u32 2147483647, %v2281
    %v3451 = vand.u32 2147483647, %v2286
    %v3452 = vand.u32 2147483647, %v2291
    %v3453 = vadd.f32 %v3357, %v3358
    %v3454 = vadd.f32 %v3453, %v3359
    %v3455 = vadd.f32 %v3454, %v3360
    %v3456 = vadd.f32 %v3455, %v3361
    %v3457 = vadd.f32 %v3456, %v3362
    %v3458 = vadd.f32 %v3457, %v3363
    %v3459 = vadd.f32 %v3458, %v3364
    %v3460 = vadd.f32 %v3459, %v3365
    %v3461 = vadd.f32 %v3460, %v3366
    %v3462 = vadd.f32 %v3461, %v3367
    %v3463 = vadd.f32 %v3462, %v3368
    %v3464 = vadd.f32 %v3463, %v3369
    %v3465 = vadd.f32 %v3464, %v3370
    %v3466 = vadd.f32 %v3465, %v3371
    %v3467 = vadd.f32 %v3466, %v3372
    %v3468 = vadd.f32 %v3467, %v3373
    %v3469 = vadd.f32 %v3468, %v3374
    %v3470 = vadd.f32 %v3469, %v3375
    %v3471 = vadd.f32 %v3470, %v3376
    %v3472 = vadd.f32 %v3471, %v3377
    %v3473 = vadd.f32 %v3472, %v3378
    %v3474 = vadd.f32 %v3473, %v3379
    %v3475 = vadd.f32 %v3474, %v3380
    %v3476 = vadd.f32 %v3475, %v3381
    %v3477 = vadd.f32 %v3476, %v3382
    %v3478 = vadd.f32 %v3477, %v3383
    %v3479 = vadd.f32 %v3478, %v3384
    %v3480 = vadd.f32 %v3479, %v3385
    %v3481 = vadd.f32 %v3480, %v3386
    %v3482 = vadd.f32 %v3481, %v3387
    %v3483 = vadd.f32 %v3482, %v3388
    %v3484 = vadd.f32 %v3483, %v3389
    %v3485 = vadd.f32 %v3484, %v3390
    %v3486 = vadd.f32 %v3485, %v3391
    %v3487 = vadd.f32 %v3486, %v3392
    %v3488 = vadd.f32 %v3487, %v3393
    %v3489 = vadd.f32 %v3488, %v3394
    %v3490 = vadd.f32 %v3489, %v3395
    %v3491 = vadd.f32 %v3490, %v3396
    %v3492 = vadd.f32 %v3491, %v3397
    %v3493 = vadd.f32 %v3492, %v3398
    %v3494 = vadd.f32 %v3493, %v3399
    %v3495 = vadd.f32 %v3494, %v3400
    %v3496 = vadd.f32 %v3495, %v3401
    %v3497 = vadd.f32 %v3496, %v3402
    %v3498 = vadd.f32 %v3497, %v3403
    %v3499 = vadd.f32 %v3498, %v3404
    %v3500 = vadd.f32 %v3499, %v3405
    %v3501 = vadd.f32 %v3500, %v3406
    %v3502 = vadd.f32 %v3501, %v3407
    %v3503 = vadd.f32 %v3502, %v3408
    %v3504 = vadd.f32 %v3503, %v3409
    %v3505 = vadd.f32 %v3504, %v3410
    %v3506 = vadd.f32 %v3505, %v3411
    %v3507 = vadd.f32 %v3506, %v3412
    %v3508 = vadd.f32 %v3507, %v3413
    %v3509 = vadd.f32 %v3508, %v3414
    %v3510 = vadd.f32 %v3509, %v3415
    %v3511 = vadd.f32 %v3510, %v3416
    %v3512 = vadd.f32 %v3511, %v3417
    %v3513 = vadd.f32 %v3512, %v3418
    %v3514 = vadd.f32 %v3513, %v3419
    %v3515 = vadd.f32 %v3514, %v3420
    %v3516 = vadd.f32 %v3515, %v3421
    %v3517 = vadd.f32 %v3516, %v3422
    %v3518 = vadd.f32 %v3517, %v3423
    %v3519 = vadd.f32 %v3518, %v3424
    %v3520 = vadd.f32 %v3519, %v3425
    %v3521 = vadd.f32 %v3520, %v3426
    %v3522 = vadd.f32 %v3521, %v3427
    %v3523 = vadd.f32 %v3522, %v3428
    %v3524 = vadd.f32 %v3523, %v3429
    %v3525 = vadd.f32 %v3524, %v3430
    %v3526 = vadd.f32 %v3525, %v3431
    %v3527 = vadd.f32 %v3526, %v3432
    %v3528 = vadd.f32 %v3527, %v3433
    %v3529 = vadd.f32 %v3528, %v3434
    %v3530 = vadd.f32 %v3529, %v3435
    %v3531 = vadd.f32 %v3530, %v3436
    %v3532 = vadd.f32 %v3531, %v3437
    %v3533 = vadd.f32 %v3532, %v3438
    %v3534 = vadd.f32 %v3533, %v3439
    %v3535 = vadd.f32 %v3534, %v3440
    %v3536 = vadd.f32 %v3535, %v3441
    %v3537 = vadd.f32 %v3536, %v3442
    %v3538 = vadd.f32 %v3537, %v3443
    %v3539 = vadd.f32 %v3538, %v3444
    %v3540 = vadd.f32 %v3539, %v3445
    %v3541 = vadd.f32 %v3540, %v3446
    %v3542 = vadd.f32 %v3541, %v3447
    %v3543 = vadd.f32 %v3542, %v3448
    %v3544 = vadd.f32 %v3543, %v3449
    %v3545 = vadd.f32 %v3544, %v3450
    %v3546 = vadd.f32 %v3545, %v3451
    %v3547 = vadd.f32 %v3546, %v3452
    %3548 = vadd.xlane.f32.xlu0 %v3547
    %v3549 = vpop.xlane.xlu0 %3548
    %v3550 = vrot.slane %v3549, 4
    %v3551 = vadd.f32 %v3549, %v3550
    %v3552 = vrot.slane %v3551, 2
    %v3553 = vadd.f32 %v3551, %v3552
    %v3554 = vrot.slane %v3553, 1
    %v3555 = vadd.f32 %v3553, %v3554
    %s3556 = vtos %v3555
    %v3557 = vrcp.pop 97536.0
    %s3558 = vtos %v3557
    %s3559 = smul.f32 %s3556, %s3558
    %s3560 = sadd.f32 %s3356, %s3559
    %s3561 = scalar_lea.smem [#allocation20], 2
    %3562 = sst [smem:[%s3561]] %s3560
    %v3563 = vld [vmem:[#allocation11] sm:$0xff]
    %v3564 = vld [vmem:[#allocation11 + $0x8] sm:$0xff]
    %v3565 = vld [vmem:[#allocation11 + $0x10] sm:$0xff]
    %v3566 = vld [vmem:[#allocation11 + $0x18] sm:$0xff]
    %v3567 = vld [vmem:[#allocation11 + $0x20] sm:$0xff]
    %v3568 = vld [vmem:[#allocation11 + $0x28] sm:$0xff]
    %v3569 = vld [vmem:[#allocation11 + $0x30] sm:$0xff]
    %v3570 = vld [vmem:[#allocation11 + $0x38] sm:$0xff]
    %v3571 = vld [vmem:[#allocation11 + $0x40] sm:$0xff]
    %v3572 = vld [vmem:[#allocation11 + $0x48] sm:$0xff]
    %v3573 = vld [vmem:[#allocation11 + $0x50] sm:$0xff]
    %v3574 = vld [vmem:[#allocation11 + $0x58] sm:$0xff]
    %v3575 = vld [vmem:[#allocation11 + $0x60] sm:$0xff]
    %v3576 = vld [vmem:[#allocation11 + $0x68] sm:$0xff]
    %v3577 = vld [vmem:[#allocation11 + $0x70] sm:$0xff]
    %v3578 = vld [vmem:[#allocation11 + $0x78] sm:$0xff]
    %v3579 = vld [vmem:[#allocation11 + $0x80] sm:$0xff]
    %v3580 = vld [vmem:[#allocation11 + $0x88] sm:$0xff]
    %v3581 = vld [vmem:[#allocation11 + $0x90] sm:$0xff]
    %v3582 = vld [vmem:[#allocation11 + $0x98] sm:$0xff]
    %v3583 = vld [vmem:[#allocation11 + $0xa0] sm:$0xff]
    %v3584 = vld [vmem:[#allocation11 + $0xa8] sm:$0xff]
    %v3585 = vld [vmem:[#allocation11 + $0xb0] sm:$0xff]
    %v3586 = vld [vmem:[#allocation11 + $0xb8] sm:$0xff]
    %v3587 = vld [vmem:[#allocation11 + $0xc0] sm:$0xff]
    %v3588 = vld [vmem:[#allocation11 + $0xc8] sm:$0xff]
    %v3589 = vld [vmem:[#allocation11 + $0xd0] sm:$0xff]
    %v3590 = vld [vmem:[#allocation11 + $0xd8] sm:$0xff]
    %v3591 = vld [vmem:[#allocation11 + $0xe0] sm:$0xff]
    %v3592 = vld [vmem:[#allocation11 + $0xe8] sm:$0xff]
    %v3593 = vld [vmem:[#allocation11 + $0xf0] sm:$0xff]
    %v3594 = vld [vmem:[#allocation11 + $0xf8] sm:$0xff]
    %v3595 = vld [vmem:[#allocation11 + $0x100] sm:$0xff]
    %v3596 = vld [vmem:[#allocation11 + $0x108] sm:$0xff]
    %v3597 = vld [vmem:[#allocation11 + $0x110] sm:$0xff]
    %v3598 = vld [vmem:[#allocation11 + $0x118] sm:$0xff]
    %v3599 = vld [vmem:[#allocation11 + $0x120] sm:$0xff]
    %v3600 = vld [vmem:[#allocation11 + $0x128] sm:$0xff]
    %v3601 = vld [vmem:[#allocation11 + $0x130] sm:$0xff]
    %v3602 = vld [vmem:[#allocation11 + $0x138] sm:$0xff]
    %v3603 = vld [vmem:[#allocation11 + $0x140] sm:$0xff]
    %v3604 = vld [vmem:[#allocation11 + $0x148] sm:$0xff]
    %v3605 = vld [vmem:[#allocation11 + $0x150] sm:$0xff]
    %v3606 = vld [vmem:[#allocation11 + $0x158] sm:$0xff]
    %v3607 = vld [vmem:[#allocation11 + $0x160] sm:$0xff]
    %v3608 = vld [vmem:[#allocation11 + $0x168] sm:$0xff]
    %v3609 = vld [vmem:[#allocation11 + $0x170] sm:$0xff]
    %v3610 = vld [vmem:[#allocation11 + $0x178] sm:$0xff]
    %v3611 = vmul.f32 %v197, %v3563
    %v3612 = vmul.f32 %v198, %v3564
    %v3613 = vmul.f32 %v199, %v3565
    %v3614 = vmul.f32 %v200, %v3566
    %v3615 = vmul.f32 %v201, %v3567
    %v3616 = vmul.f32 %v202, %v3568
    %v3617 = vmul.f32 %v203, %v3569
    %v3618 = vmul.f32 %v204, %v3570
    %v3619 = vmul.f32 %v205, %v3571
    %v3620 = vmul.f32 %v206, %v3572
    %v3621 = vmul.f32 %v207, %v3573
    %v3622 = vmul.f32 %v208, %v3574
    %v3623 = vmul.f32 %v209, %v3575
    %v3624 = vmul.f32 %v210, %v3576
    %v3625 = vmul.f32 %v211, %v3577
    %v3626 = vmul.f32 %v212, %v3578
    %v3627 = vmul.f32 %v213, %v3579
    %v3628 = vmul.f32 %v214, %v3580
    %v3629 = vmul.f32 %v215, %v3581
    %v3630 = vmul.f32 %v216, %v3582
    %v3631 = vmul.f32 %v217, %v3583
    %v3632 = vmul.f32 %v218, %v3584
    %v3633 = vmul.f32 %v219, %v3585
    %v3634 = vmul.f32 %v220, %v3586
    %v3635 = vmul.f32 %v221, %v3587
    %v3636 = vmul.f32 %v222, %v3588
    %v3637 = vmul.f32 %v223, %v3589
    %v3638 = vmul.f32 %v224, %v3590
    %v3639 = vmul.f32 %v225, %v3591
    %v3640 = vmul.f32 %v226, %v3592
    %v3641 = vmul.f32 %v227, %v3593
    %v3642 = vmul.f32 %v228, %v3594
    %v3643 = vmul.f32 %v229, %v3595
    %v3644 = vmul.f32 %v230, %v3596
    %v3645 = vmul.f32 %v231, %v3597
    %v3646 = vmul.f32 %v232, %v3598
    %v3647 = vmul.f32 %v233, %v3599
    %v3648 = vmul.f32 %v234, %v3600
    %v3649 = vmul.f32 %v235, %v3601
    %v3650 = vmul.f32 %v236, %v3602
    %v3651 = vmul.f32 %v237, %v3603
    %v3652 = vmul.f32 %v238, %v3604
    %v3653 = vmul.f32 %v239, %v3605
    %v3654 = vmul.f32 %v240, %v3606
    %v3655 = vmul.f32 %v241, %v3607
    %v3656 = vmul.f32 %v242, %v3608
    %v3657 = vmul.f32 %v243, %v3609
    %v3658 = vmul.f32 %v244, %v3610
    %v3659 = vmul.f32 %v245, %v3563
    %v3660 = vmul.f32 %v246, %v3564
    %v3661 = vmul.f32 %v247, %v3565
    %v3662 = vmul.f32 %v248, %v3566
    %v3663 = vmul.f32 %v249, %v3567
    %v3664 = vmul.f32 %v250, %v3568
    %v3665 = vmul.f32 %v251, %v3569
    %v3666 = vmul.f32 %v252, %v3570
    %v3667 = vmul.f32 %v253, %v3571
    %v3668 = vmul.f32 %v254, %v3572
    %v3669 = vmul.f32 %v255, %v3573
    %v3670 = vmul.f32 %v256, %v3574
    %v3671 = vmul.f32 %v257, %v3575
    %v3672 = vmul.f32 %v258, %v3576
    %v3673 = vmul.f32 %v259, %v3577
    %v3674 = vmul.f32 %v260, %v3578
    %v3675 = vmul.f32 %v261, %v3579
    %v3676 = vmul.f32 %v262, %v3580
    %v3677 = vmul.f32 %v263, %v3581
    %v3678 = vmul.f32 %v264, %v3582
    %v3679 = vmul.f32 %v265, %v3583
    %v3680 = vmul.f32 %v266, %v3584
    %v3681 = vmul.f32 %v267, %v3585
    %v3682 = vmul.f32 %v268, %v3586
    %v3683 = vmul.f32 %v269, %v3587
    %v3684 = vmul.f32 %v270, %v3588
    %v3685 = vmul.f32 %v271, %v3589
    %v3686 = vmul.f32 %v272, %v3590
    %v3687 = vmul.f32 %v273, %v3591
    %v3688 = vmul.f32 %v274, %v3592
    %v3689 = vmul.f32 %v275, %v3593
    %v3690 = vmul.f32 %v276, %v3594
    %v3691 = vmul.f32 %v277, %v3595
    %v3692 = vmul.f32 %v278, %v3596
    %v3693 = vmul.f32 %v279, %v3597
    %v3694 = vmul.f32 %v280, %v3598
    %v3695 = vmul.f32 %v281, %v3599
    %v3696 = vmul.f32 %v282, %v3600
    %v3697 = vmul.f32 %v283, %v3601
    %v3698 = vmul.f32 %v284, %v3602
    %v3699 = vmul.f32 %v285, %v3603
    %v3700 = vmul.f32 %v286, %v3604
    %v3701 = vmul.f32 %v287, %v3605
    %v3702 = vmul.f32 %v288, %v3606
    %v3703 = vmul.f32 %v289, %v3607
    %v3704 = vmul.f32 %v290, %v3608
    %v3705 = vmul.f32 %v291, %v3609
    %v3706 = vmul.f32 %v292, %v3610
    %v3707 = vadd.f32 %v3611, %v3612
    %v3708 = vadd.f32 %v3707, %v3613
    %v3709 = vadd.f32 %v3708, %v3614
    %v3710 = vadd.f32 %v3709, %v3615
    %v3711 = vadd.f32 %v3710, %v3616
    %v3712 = vadd.f32 %v3711, %v3617
    %v3713 = vadd.f32 %v3712, %v3618
    %v3714 = vadd.f32 %v3713, %v3619
    %v3715 = vadd.f32 %v3714, %v3620
    %v3716 = vadd.f32 %v3715, %v3621
    %v3717 = vadd.f32 %v3716, %v3622
    %v3718 = vadd.f32 %v3717, %v3623
    %v3719 = vadd.f32 %v3718, %v3624
    %v3720 = vadd.f32 %v3719, %v3625
    %v3721 = vadd.f32 %v3720, %v3626
    %v3722 = vadd.f32 %v3721, %v3627
    %v3723 = vadd.f32 %v3722, %v3628
    %v3724 = vadd.f32 %v3723, %v3629
    %v3725 = vadd.f32 %v3724, %v3630
    %v3726 = vadd.f32 %v3725, %v3631
    %v3727 = vadd.f32 %v3726, %v3632
    %v3728 = vadd.f32 %v3727, %v3633
    %v3729 = vadd.f32 %v3728, %v3634
    %v3730 = vadd.f32 %v3729, %v3635
    %v3731 = vadd.f32 %v3730, %v3636
    %v3732 = vadd.f32 %v3731, %v3637
    %v3733 = vadd.f32 %v3732, %v3638
    %v3734 = vadd.f32 %v3733, %v3639
    %v3735 = vadd.f32 %v3734, %v3640
    %v3736 = vadd.f32 %v3735, %v3641
    %v3737 = vadd.f32 %v3736, %v3642
    %v3738 = vadd.f32 %v3737, %v3643
    %v3739 = vadd.f32 %v3738, %v3644
    %v3740 = vadd.f32 %v3739, %v3645
    %v3741 = vadd.f32 %v3740, %v3646
    %v3742 = vadd.f32 %v3741, %v3647
    %v3743 = vadd.f32 %v3742, %v3648
    %v3744 = vadd.f32 %v3743, %v3649
    %v3745 = vadd.f32 %v3744, %v3650
    %v3746 = vadd.f32 %v3745, %v3651
    %v3747 = vadd.f32 %v3746, %v3652
    %v3748 = vadd.f32 %v3747, %v3653
    %v3749 = vadd.f32 %v3748, %v3654
    %v3750 = vadd.f32 %v3749, %v3655
    %v3751 = vadd.f32 %v3750, %v3656
    %v3752 = vadd.f32 %v3751, %v3657
    %v3753 = vadd.f32 %v3752, %v3658
    %v3754 = vadd.f32 %v3753, %v3659
    %v3755 = vadd.f32 %v3754, %v3660
    %v3756 = vadd.f32 %v3755, %v3661
    %v3757 = vadd.f32 %v3756, %v3662
    %v3758 = vadd.f32 %v3757, %v3663
    %v3759 = vadd.f32 %v3758, %v3664
    %v3760 = vadd.f32 %v3759, %v3665
    %v3761 = vadd.f32 %v3760, %v3666
    %v3762 = vadd.f32 %v3761, %v3667
    %v3763 = vadd.f32 %v3762, %v3668
    %v3764 = vadd.f32 %v3763, %v3669
    %v3765 = vadd.f32 %v3764, %v3670
    %v3766 = vadd.f32 %v3765, %v3671
    %v3767 = vadd.f32 %v3766, %v3672
    %v3768 = vadd.f32 %v3767, %v3673
    %v3769 = vadd.f32 %v3768, %v3674
    %v3770 = vadd.f32 %v3769, %v3675
    %v3771 = vadd.f32 %v3770, %v3676
    %v3772 = vadd.f32 %v3771, %v3677
    %v3773 = vadd.f32 %v3772, %v3678
    %v3774 = vadd.f32 %v3773, %v3679
    %v3775 = vadd.f32 %v3774, %v3680
    %v3776 = vadd.f32 %v3775, %v3681
    %v3777 = vadd.f32 %v3776, %v3682
    %v3778 = vadd.f32 %v3777, %v3683
    %v3779 = vadd.f32 %v3778, %v3684
    %v3780 = vadd.f32 %v3779, %v3685
    %v3781 = vadd.f32 %v3780, %v3686
    %v3782 = vadd.f32 %v3781, %v3687
    %v3783 = vadd.f32 %v3782, %v3688
    %v3784 = vadd.f32 %v3783, %v3689
    %v3785 = vadd.f32 %v3784, %v3690
    %v3786 = vadd.f32 %v3785, %v3691
    %v3787 = vadd.f32 %v3786, %v3692
    %v3788 = vadd.f32 %v3787, %v3693
    %v3789 = vadd.f32 %v3788, %v3694
    %v3790 = vadd.f32 %v3789, %v3695
    %v3791 = vadd.f32 %v3790, %v3696
    %v3792 = vadd.f32 %v3791, %v3697
    %v3793 = vadd.f32 %v3792, %v3698
    %v3794 = vadd.f32 %v3793, %v3699
    %v3795 = vadd.f32 %v3794, %v3700
    %v3796 = vadd.f32 %v3795, %v3701
    %v3797 = vadd.f32 %v3796, %v3702
    %v3798 = vadd.f32 %v3797, %v3703
    %v3799 = vadd.f32 %v3798, %v3704
    %v3800 = vadd.f32 %v3799, %v3705
    %v3801 = vadd.f32 %v3800, %v3706
    %3802 = vadd.xlane.f32.xlu0 %v3801
    %v3803 = vpop.xlane.xlu0 %3802
    %v3804 = vrot.slane %v3803, 4
    %v3805 = vadd.f32 %v3803, %v3804
    %v3806 = vrot.slane %v3805, 2
    %v3807 = vadd.f32 %v3805, %v3806
    %v3808 = vrot.slane %v3807, 1
    %v3809 = vadd.f32 %v3807, %v3808
    %s3810 = vtos %v3809
    %s3811 = ssub.f32 0.0, %s3810
    %v3812 = vrcp.pop 2.0
    %s3813 = vtos %v3812
    %s3814 = smul.f32 %s3811, %s3813
    %s3815 = scalar_lea.smem [#allocation20], 3
    %3816 = sst [smem:[%s3815]] %s3814
    %s3817 = sld [smem:[#allocation2]]
    %s3818 = sld [smem:[#allocation6]]
    %v3819 = vstv %s3817
    %vm3820 = vcmp.ge.s32.totalorder %v691, %v3819
    %vm3821 = vcmp.ge.s32.totalorder %v692, %v3819
    %vm3822 = vcmp.ge.s32.totalorder %v693, %v3819
    %vm3823 = vcmp.ge.s32.totalorder %v694, %v3819
    %vm3824 = vcmp.ge.s32.totalorder %v695, %v3819
    %vm3825 = vcmp.ge.s32.totalorder %v696, %v3819
    %vm3826 = vcmp.ge.s32.totalorder %v697, %v3819
    %vm3827 = vcmp.ge.s32.totalorder %v698, %v3819
    %vm3828 = vcmp.ge.s32.totalorder %v699, %v3819
    %vm3829 = vcmp.ge.s32.totalorder %v700, %v3819
    %vm3830 = vcmp.ge.s32.totalorder %v701, %v3819
    %vm3831 = vcmp.ge.s32.totalorder %v702, %v3819
    %vm3832 = vcmp.ge.s32.totalorder %v703, %v3819
    %vm3833 = vcmp.ge.s32.totalorder %v704, %v3819
    %vm3834 = vcmp.ge.s32.totalorder %v705, %v3819
    %vm3835 = vcmp.ge.s32.totalorder %v706, %v3819
    %s3836 = sadd.s32 %s3817, 22
    %v3837 = vstv %s3836
    %vm3838 = vcmp.lt.s32.totalorder %v691, %v3837
    %vm3839 = vcmp.lt.s32.totalorder %v692, %v3837
    %vm3840 = vcmp.lt.s32.totalorder %v693, %v3837
    %vm3841 = vcmp.lt.s32.totalorder %v694, %v3837
    %vm3842 = vcmp.lt.s32.totalorder %v695, %v3837
    %vm3843 = vcmp.lt.s32.totalorder %v696, %v3837
    %vm3844 = vcmp.lt.s32.totalorder %v697, %v3837
    %vm3845 = vcmp.lt.s32.totalorder %v698, %v3837
    %vm3846 = vcmp.lt.s32.totalorder %v699, %v3837
    %vm3847 = vcmp.lt.s32.totalorder %v700, %v3837
    %vm3848 = vcmp.lt.s32.totalorder %v701, %v3837
    %vm3849 = vcmp.lt.s32.totalorder %v702, %v3837
    %vm3850 = vcmp.lt.s32.totalorder %v703, %v3837
    %vm3851 = vcmp.lt.s32.totalorder %v704, %v3837
    %vm3852 = vcmp.lt.s32.totalorder %v705, %v3837
    %vm3853 = vcmp.lt.s32.totalorder %v706, %v3837
    %vm3854 = vmand %vm3820, %vm3838
    %vm3855 = vmand %vm3821, %vm3839
    %vm3856 = vmand %vm3822, %vm3840
    %vm3857 = vmand %vm3823, %vm3841
    %vm3858 = vmand %vm3824, %vm3842
    %vm3859 = vmand %vm3825, %vm3843
    %vm3860 = vmand %vm3826, %vm3844
    %vm3861 = vmand %vm3827, %vm3845
    %vm3862 = vmand %vm3828, %vm3846
    %vm3863 = vmand %vm3829, %vm3847
    %vm3864 = vmand %vm3830, %vm3848
    %vm3865 = vmand %vm3831, %vm3849
    %vm3866 = vmand %vm3832, %vm3850
    %vm3867 = vmand %vm3833, %vm3851
    %vm3868 = vmand %vm3834, %vm3852
    %vm3869 = vmand %vm3835, %vm3853
    %v3870 = vstv %s3818
    %vm3871 = vcmp.ge.s32.totalorder %v708, %v3870
    %vm3872 = vmand %vm3854, %vm3871
    %vm3873 = vmand %vm3855, %vm3871
    %vm3874 = vmand %vm3856, %vm3871
    %vm3875 = vmand %vm3857, %vm3871
    %vm3876 = vmand %vm3858, %vm3871
    %vm3877 = vmand %vm3859, %vm3871
    %vm3878 = vmand %vm3860, %vm3871
    %vm3879 = vmand %vm3861, %vm3871
    %vm3880 = vmand %vm3862, %vm3871
    %vm3881 = vmand %vm3863, %vm3871
    %vm3882 = vmand %vm3864, %vm3871
    %vm3883 = vmand %vm3865, %vm3871
    %vm3884 = vmand %vm3866, %vm3871
    %vm3885 = vmand %vm3867, %vm3871
    %vm3886 = vmand %vm3868, %vm3871
    %vm3887 = vmand %vm3869, %vm3871
    %s3888 = sadd.s32 %s3818, 28
    %v3889 = vstv %s3888
    %vm3890 = vcmp.lt.s32.totalorder %v708, %v3889
    %vm3891 = vmand %vm3872, %vm3890
    %vm3892 = vmand %vm3873, %vm3890
    %vm3893 = vmand %vm3874, %vm3890
    %vm3894 = vmand %vm3875, %vm3890
    %vm3895 = vmand %vm3876, %vm3890
    %vm3896 = vmand %vm3877, %vm3890
    %vm3897 = vmand %vm3878, %vm3890
    %vm3898 = vmand %vm3879, %vm3890
    %vm3899 = vmand %vm3880, %vm3890
    %vm3900 = vmand %vm3881, %vm3890
    %vm3901 = vmand %vm3882, %vm3890
    %vm3902 = vmand %vm3883, %vm3890
    %vm3903 = vmand %vm3884, %vm3890
    %vm3904 = vmand %vm3885, %vm3890
    %vm3905 = vmand %vm3886, %vm3890
    %vm3906 = vmand %vm3887, %vm3890
    %v3907 = vsel %vm3891, 1, 0
    %v3908 = vsel %vm3892, 1, 0
    %v3909 = vsel %vm3893, 1, 0
    %v3910 = vsel %vm3894, 1, 0
    %v3911 = vsel %vm3895, 1, 0
    %v3912 = vsel %vm3896, 1, 0
    %v3913 = vsel %vm3897, 1, 0
    %v3914 = vsel %vm3898, 1, 0
    %v3915 = vsel %vm3899, 1, 0
    %v3916 = vsel %vm3900, 1, 0
    %v3917 = vsel %vm3901, 1, 0
    %v3918 = vsel %vm3902, 1, 0
    %v3919 = vsel %vm3903, 1, 0
    %v3920 = vsel %vm3904, 1, 0
    %v3921 = vsel %vm3905, 1, 0
    %v3922 = vsel %vm3906, 1, 0
    %vm3923 = vcmp.eq.s32.totalorder %v3907, 1
    %vm3924 = vcmp.eq.s32.totalorder %v3908, 1
    %vm3925 = vcmp.eq.s32.totalorder %v3909, 1
    %vm3926 = vcmp.eq.s32.totalorder %v3910, 1
    %vm3927 = vcmp.eq.s32.totalorder %v3911, 1
    %vm3928 = vcmp.eq.s32.totalorder %v3912, 1
    %vm3929 = vcmp.eq.s32.totalorder %v3913, 1
    %vm3930 = vcmp.eq.s32.totalorder %v3914, 1
    %vm3931 = vcmp.eq.s32.totalorder %v3915, 1
    %vm3932 = vcmp.eq.s32.totalorder %v3916, 1
    %vm3933 = vcmp.eq.s32.totalorder %v3917, 1
    %vm3934 = vcmp.eq.s32.totalorder %v3918, 1
    %vm3935 = vcmp.eq.s32.totalorder %v3919, 1
    %vm3936 = vcmp.eq.s32.totalorder %v3920, 1
    %vm3937 = vcmp.eq.s32.totalorder %v3921, 1
    %vm3938 = vcmp.eq.s32.totalorder %v3922, 1
    %v3939 = vsel %vm3923, %v485, 0.0
    %v3940 = vsel %vm3924, %v486, 0.0
    %v3941 = vsel %vm3925, %v487, 0.0
    %v3942 = vsel %vm3926, %v488, 0.0
    %v3943 = vsel %vm3927, %v489, 0.0
    %v3944 = vsel %vm3928, %v490, 0.0
    %v3945 = vsel %vm3929, %v491, 0.0
    %v3946 = vsel %vm3930, %v492, 0.0
    %v3947 = vsel %vm3931, %v493, 0.0
    %v3948 = vsel %vm3932, %v494, 0.0
    %v3949 = vsel %vm3933, %v495, 0.0
    %v3950 = vsel %vm3934, %v496, 0.0
    %v3951 = vsel %vm3935, %v497, 0.0
    %v3952 = vsel %vm3936, %v498, 0.0
    %v3953 = vsel %vm3937, %v499, 0.0
    %v3954 = vsel %vm3938, %v500, 0.0
    %v3955 = vsel %vm3923, %v501, 0.0
    %v3956 = vsel %vm3924, %v502, 0.0
    %v3957 = vsel %vm3925, %v503, 0.0
    %v3958 = vsel %vm3926, %v504, 0.0
    %v3959 = vsel %vm3927, %v505, 0.0
    %v3960 = vsel %vm3928, %v506, 0.0
    %v3961 = vsel %vm3929, %v507, 0.0
    %v3962 = vsel %vm3930, %v508, 0.0
    %v3963 = vsel %vm3931, %v509, 0.0
    %v3964 = vsel %vm3932, %v510, 0.0
    %v3965 = vsel %vm3933, %v511, 0.0
    %v3966 = vsel %vm3934, %v512, 0.0
    %v3967 = vsel %vm3935, %v513, 0.0
    %v3968 = vsel %vm3936, %v514, 0.0
    %v3969 = vsel %vm3937, %v515, 0.0
    %v3970 = vsel %vm3938, %v516, 0.0
    %v3971 = vsel %vm3923, %v517, 0.0
    %v3972 = vsel %vm3924, %v518, 0.0
    %v3973 = vsel %vm3925, %v519, 0.0
    %v3974 = vsel %vm3926, %v520, 0.0
    %v3975 = vsel %vm3927, %v521, 0.0
    %v3976 = vsel %vm3928, %v522, 0.0
    %v3977 = vsel %vm3929, %v523, 0.0
    %v3978 = vsel %vm3930, %v524, 0.0
    %v3979 = vsel %vm3931, %v525, 0.0
    %v3980 = vsel %vm3932, %v526, 0.0
    %v3981 = vsel %vm3933, %v527, 0.0
    %v3982 = vsel %vm3934, %v528, 0.0
    %v3983 = vsel %vm3935, %v529, 0.0
    %v3984 = vsel %vm3936, %v530, 0.0
    %v3985 = vsel %vm3937, %v531, 0.0
    %v3986 = vsel %vm3938, %v532, 0.0
    %v3987 = vadd.f32 %v3939, %v3940
    %v3988 = vadd.f32 %v3987, %v3941
    %v3989 = vadd.f32 %v3988, %v3942
    %v3990 = vadd.f32 %v3989, %v3943
    %v3991 = vadd.f32 %v3990, %v3944
    %v3992 = vadd.f32 %v3991, %v3945
    %v3993 = vadd.f32 %v3992, %v3946
    %v3994 = vadd.f32 %v3993, %v3947
    %v3995 = vadd.f32 %v3994, %v3948
    %v3996 = vadd.f32 %v3995, %v3949
    %v3997 = vadd.f32 %v3996, %v3950
    %v3998 = vadd.f32 %v3997, %v3951
    %v3999 = vadd.f32 %v3998, %v3952
    %v4000 = vadd.f32 %v3999, %v3953
    %v4001 = vadd.f32 %v4000, %v3954
    %v4002 = vadd.f32 %v4001, %v3955
    %v4003 = vadd.f32 %v4002, %v3956
    %v4004 = vadd.f32 %v4003, %v3957
    %v4005 = vadd.f32 %v4004, %v3958
    %v4006 = vadd.f32 %v4005, %v3959
    %v4007 = vadd.f32 %v4006, %v3960
    %v4008 = vadd.f32 %v4007, %v3961
    %v4009 = vadd.f32 %v4008, %v3962
    %v4010 = vadd.f32 %v4009, %v3963
    %v4011 = vadd.f32 %v4010, %v3964
    %v4012 = vadd.f32 %v4011, %v3965
    %v4013 = vadd.f32 %v4012, %v3966
    %v4014 = vadd.f32 %v4013, %v3967
    %v4015 = vadd.f32 %v4014, %v3968
    %v4016 = vadd.f32 %v4015, %v3969
    %v4017 = vadd.f32 %v4016, %v3970
    %v4018 = vadd.f32 %v4017, %v3971
    %v4019 = vadd.f32 %v4018, %v3972
    %v4020 = vadd.f32 %v4019, %v3973
    %v4021 = vadd.f32 %v4020, %v3974
    %v4022 = vadd.f32 %v4021, %v3975
    %v4023 = vadd.f32 %v4022, %v3976
    %v4024 = vadd.f32 %v4023, %v3977
    %v4025 = vadd.f32 %v4024, %v3978
    %v4026 = vadd.f32 %v4025, %v3979
    %v4027 = vadd.f32 %v4026, %v3980
    %v4028 = vadd.f32 %v4027, %v3981
    %v4029 = vadd.f32 %v4028, %v3982
    %v4030 = vadd.f32 %v4029, %v3983
    %v4031 = vadd.f32 %v4030, %v3984
    %v4032 = vadd.f32 %v4031, %v3985
    %v4033 = vadd.f32 %v4032, %v3986
    %4034 = vadd.xlane.f32.xlu0 %v4033
    %v4035 = vpop.xlane.xlu0 %4034
    %v4036 = vrot.slane %v4035, 4
    %v4037 = vadd.f32 %v4035, %v4036
    %v4038 = vrot.slane %v4037, 2
    %v4039 = vadd.f32 %v4037, %v4038
    %v4040 = vrot.slane %v4039, 1
    %v4041 = vadd.f32 %v4039, %v4040
    %s4042 = vtos %v4041
    %s4043 = sadd.f32 %s4042, 0.0
    %s4044 = sld [smem:[#allocation2 + $0x80]]
    %s4045 = sld [smem:[#allocation6 + $0x80]]
    %v4046 = vstv %s4044
    %vm4047 = vcmp.ge.s32.totalorder %v691, %v4046
    %vm4048 = vcmp.ge.s32.totalorder %v692, %v4046
    %vm4049 = vcmp.ge.s32.totalorder %v693, %v4046
    %vm4050 = vcmp.ge.s32.totalorder %v694, %v4046
    %vm4051 = vcmp.ge.s32.totalorder %v695, %v4046
    %vm4052 = vcmp.ge.s32.totalorder %v696, %v4046
    %vm4053 = vcmp.ge.s32.totalorder %v697, %v4046
    %vm4054 = vcmp.ge.s32.totalorder %v698, %v4046
    %vm4055 = vcmp.ge.s32.totalorder %v699, %v4046
    %vm4056 = vcmp.ge.s32.totalorder %v700, %v4046
    %vm4057 = vcmp.ge.s32.totalorder %v701, %v4046
    %vm4058 = vcmp.ge.s32.totalorder %v702, %v4046
    %vm4059 = vcmp.ge.s32.totalorder %v703, %v4046
    %vm4060 = vcmp.ge.s32.totalorder %v704, %v4046
    %vm4061 = vcmp.ge.s32.totalorder %v705, %v4046
    %vm4062 = vcmp.ge.s32.totalorder %v706, %v4046
    %s4063 = sadd.s32 %s4044, 22
    %v4064 = vstv %s4063
    %vm4065 = vcmp.lt.s32.totalorder %v691, %v4064
    %vm4066 = vcmp.lt.s32.totalorder %v692, %v4064
    %vm4067 = vcmp.lt.s32.totalorder %v693, %v4064
    %vm4068 = vcmp.lt.s32.totalorder %v694, %v4064
    %vm4069 = vcmp.lt.s32.totalorder %v695, %v4064
    %vm4070 = vcmp.lt.s32.totalorder %v696, %v4064
    %vm4071 = vcmp.lt.s32.totalorder %v697, %v4064
    %vm4072 = vcmp.lt.s32.totalorder %v698, %v4064
    %vm4073 = vcmp.lt.s32.totalorder %v699, %v4064
    %vm4074 = vcmp.lt.s32.totalorder %v700, %v4064
    %vm4075 = vcmp.lt.s32.totalorder %v701, %v4064
    %vm4076 = vcmp.lt.s32.totalorder %v702, %v4064
    %vm4077 = vcmp.lt.s32.totalorder %v703, %v4064
    %vm4078 = vcmp.lt.s32.totalorder %v704, %v4064
    %vm4079 = vcmp.lt.s32.totalorder %v705, %v4064
    %vm4080 = vcmp.lt.s32.totalorder %v706, %v4064
    %vm4081 = vmand %vm4047, %vm4065
    %vm4082 = vmand %vm4048, %vm4066
    %vm4083 = vmand %vm4049, %vm4067
    %vm4084 = vmand %vm4050, %vm4068
    %vm4085 = vmand %vm4051, %vm4069
    %vm4086 = vmand %vm4052, %vm4070
    %vm4087 = vmand %vm4053, %vm4071
    %vm4088 = vmand %vm4054, %vm4072
    %vm4089 = vmand %vm4055, %vm4073
    %vm4090 = vmand %vm4056, %vm4074
    %vm4091 = vmand %vm4057, %vm4075
    %vm4092 = vmand %vm4058, %vm4076
    %vm4093 = vmand %vm4059, %vm4077
    %vm4094 = vmand %vm4060, %vm4078
    %vm4095 = vmand %vm4061, %vm4079
    %vm4096 = vmand %vm4062, %vm4080
    %v4097 = vstv %s4045
    %vm4098 = vcmp.ge.s32.totalorder %v708, %v4097
    %vm4099 = vmand %vm4081, %vm4098
    %vm4100 = vmand %vm4082, %vm4098
    %vm4101 = vmand %vm4083, %vm4098
    %vm4102 = vmand %vm4084, %vm4098
    %vm4103 = vmand %vm4085, %vm4098
    %vm4104 = vmand %vm4086, %vm4098
    %vm4105 = vmand %vm4087, %vm4098
    %vm4106 = vmand %vm4088, %vm4098
    %vm4107 = vmand %vm4089, %vm4098
    %vm4108 = vmand %vm4090, %vm4098
    %vm4109 = vmand %vm4091, %vm4098
    %vm4110 = vmand %vm4092, %vm4098
    %vm4111 = vmand %vm4093, %vm4098
    %vm4112 = vmand %vm4094, %vm4098
    %vm4113 = vmand %vm4095, %vm4098
    %vm4114 = vmand %vm4096, %vm4098
    %s4115 = sadd.s32 %s4045, 28
    %v4116 = vstv %s4115
    %vm4117 = vcmp.lt.s32.totalorder %v708, %v4116
    %vm4118 = vmand %vm4099, %vm4117
    %vm4119 = vmand %vm4100, %vm4117
    %vm4120 = vmand %vm4101, %vm4117
    %vm4121 = vmand %vm4102, %vm4117
    %vm4122 = vmand %vm4103, %vm4117
    %vm4123 = vmand %vm4104, %vm4117
    %vm4124 = vmand %vm4105, %vm4117
    %vm4125 = vmand %vm4106, %vm4117
    %vm4126 = vmand %vm4107, %vm4117
    %vm4127 = vmand %vm4108, %vm4117
    %vm4128 = vmand %vm4109, %vm4117
    %vm4129 = vmand %vm4110, %vm4117
    %vm4130 = vmand %vm4111, %vm4117
    %vm4131 = vmand %vm4112, %vm4117
    %vm4132 = vmand %vm4113, %vm4117
    %vm4133 = vmand %vm4114, %vm4117
    %v4134 = vsel %vm4118, 1, 0
    %v4135 = vsel %vm4119, 1, 0
    %v4136 = vsel %vm4120, 1, 0
    %v4137 = vsel %vm4121, 1, 0
    %v4138 = vsel %vm4122, 1, 0
    %v4139 = vsel %vm4123, 1, 0
    %v4140 = vsel %vm4124, 1, 0
    %v4141 = vsel %vm4125, 1, 0
    %v4142 = vsel %vm4126, 1, 0
    %v4143 = vsel %vm4127, 1, 0
    %v4144 = vsel %vm4128, 1, 0
    %v4145 = vsel %vm4129, 1, 0
    %v4146 = vsel %vm4130, 1, 0
    %v4147 = vsel %vm4131, 1, 0
    %v4148 = vsel %vm4132, 1, 0
    %v4149 = vsel %vm4133, 1, 0
    %vm4150 = vcmp.eq.s32.totalorder %v4134, 1
    %vm4151 = vcmp.eq.s32.totalorder %v4135, 1
    %vm4152 = vcmp.eq.s32.totalorder %v4136, 1
    %vm4153 = vcmp.eq.s32.totalorder %v4137, 1
    %vm4154 = vcmp.eq.s32.totalorder %v4138, 1
    %vm4155 = vcmp.eq.s32.totalorder %v4139, 1
    %vm4156 = vcmp.eq.s32.totalorder %v4140, 1
    %vm4157 = vcmp.eq.s32.totalorder %v4141, 1
    %vm4158 = vcmp.eq.s32.totalorder %v4142, 1
    %vm4159 = vcmp.eq.s32.totalorder %v4143, 1
    %vm4160 = vcmp.eq.s32.totalorder %v4144, 1
    %vm4161 = vcmp.eq.s32.totalorder %v4145, 1
    %vm4162 = vcmp.eq.s32.totalorder %v4146, 1
    %vm4163 = vcmp.eq.s32.totalorder %v4147, 1
    %vm4164 = vcmp.eq.s32.totalorder %v4148, 1
    %vm4165 = vcmp.eq.s32.totalorder %v4149, 1
    %v4166 = vsel %vm4150, %v533, 0.0
    %v4167 = vsel %vm4151, %v534, 0.0
    %v4168 = vsel %vm4152, %v535, 0.0
    %v4169 = vsel %vm4153, %v536, 0.0
    %v4170 = vsel %vm4154, %v537, 0.0
    %v4171 = vsel %vm4155, %v538, 0.0
    %v4172 = vsel %vm4156, %v539, 0.0
    %v4173 = vsel %vm4157, %v540, 0.0
    %v4174 = vsel %vm4158, %v541, 0.0
    %v4175 = vsel %vm4159, %v542, 0.0
    %v4176 = vsel %vm4160, %v543, 0.0
    %v4177 = vsel %vm4161, %v544, 0.0
    %v4178 = vsel %vm4162, %v545, 0.0
    %v4179 = vsel %vm4163, %v546, 0.0
    %v4180 = vsel %vm4164, %v547, 0.0
    %v4181 = vsel %vm4165, %v548, 0.0
    %v4182 = vsel %vm4150, %v549, 0.0
    %v4183 = vsel %vm4151, %v550, 0.0
    %v4184 = vsel %vm4152, %v551, 0.0
    %v4185 = vsel %vm4153, %v552, 0.0
    %v4186 = vsel %vm4154, %v553, 0.0
    %v4187 = vsel %vm4155, %v554, 0.0
    %v4188 = vsel %vm4156, %v555, 0.0
    %v4189 = vsel %vm4157, %v556, 0.0
    %v4190 = vsel %vm4158, %v557, 0.0
    %v4191 = vsel %vm4159, %v558, 0.0
    %v4192 = vsel %vm4160, %v559, 0.0
    %v4193 = vsel %vm4161, %v560, 0.0
    %v4194 = vsel %vm4162, %v561, 0.0
    %v4195 = vsel %vm4163, %v562, 0.0
    %v4196 = vsel %vm4164, %v563, 0.0
    %v4197 = vsel %vm4165, %v564, 0.0
    %v4198 = vsel %vm4150, %v565, 0.0
    %v4199 = vsel %vm4151, %v566, 0.0
    %v4200 = vsel %vm4152, %v567, 0.0
    %v4201 = vsel %vm4153, %v568, 0.0
    %v4202 = vsel %vm4154, %v569, 0.0
    %v4203 = vsel %vm4155, %v570, 0.0
    %v4204 = vsel %vm4156, %v571, 0.0
    %v4205 = vsel %vm4157, %v572, 0.0
    %v4206 = vsel %vm4158, %v573, 0.0
    %v4207 = vsel %vm4159, %v574, 0.0
    %v4208 = vsel %vm4160, %v575, 0.0
    %v4209 = vsel %vm4161, %v576, 0.0
    %v4210 = vsel %vm4162, %v577, 0.0
    %v4211 = vsel %vm4163, %v578, 0.0
    %v4212 = vsel %vm4164, %v579, 0.0
    %v4213 = vsel %vm4165, %v580, 0.0
    %v4214 = vadd.f32 %v4166, %v4167
    %v4215 = vadd.f32 %v4214, %v4168
    %v4216 = vadd.f32 %v4215, %v4169
    %v4217 = vadd.f32 %v4216, %v4170
    %v4218 = vadd.f32 %v4217, %v4171
    %v4219 = vadd.f32 %v4218, %v4172
    %v4220 = vadd.f32 %v4219, %v4173
    %v4221 = vadd.f32 %v4220, %v4174
    %v4222 = vadd.f32 %v4221, %v4175
    %v4223 = vadd.f32 %v4222, %v4176
    %v4224 = vadd.f32 %v4223, %v4177
    %v4225 = vadd.f32 %v4224, %v4178
    %v4226 = vadd.f32 %v4225, %v4179
    %v4227 = vadd.f32 %v4226, %v4180
    %v4228 = vadd.f32 %v4227, %v4181
    %v4229 = vadd.f32 %v4228, %v4182
    %v4230 = vadd.f32 %v4229, %v4183
    %v4231 = vadd.f32 %v4230, %v4184
    %v4232 = vadd.f32 %v4231, %v4185
    %v4233 = vadd.f32 %v4232, %v4186
    %v4234 = vadd.f32 %v4233, %v4187
    %v4235 = vadd.f32 %v4234, %v4188
    %v4236 = vadd.f32 %v4235, %v4189
    %v4237 = vadd.f32 %v4236, %v4190
    %v4238 = vadd.f32 %v4237, %v4191
    %v4239 = vadd.f32 %v4238, %v4192
    %v4240 = vadd.f32 %v4239, %v4193
    %v4241 = vadd.f32 %v4240, %v4194
    %v4242 = vadd.f32 %v4241, %v4195
    %v4243 = vadd.f32 %v4242, %v4196
    %v4244 = vadd.f32 %v4243, %v4197
    %v4245 = vadd.f32 %v4244, %v4198
    %v4246 = vadd.f32 %v4245, %v4199
    %v4247 = vadd.f32 %v4246, %v4200
    %v4248 = vadd.f32 %v4247, %v4201
    %v4249 = vadd.f32 %v4248, %v4202
    %v4250 = vadd.f32 %v4249, %v4203
    %v4251 = vadd.f32 %v4250, %v4204
    %v4252 = vadd.f32 %v4251, %v4205
    %v4253 = vadd.f32 %v4252, %v4206
    %v4254 = vadd.f32 %v4253, %v4207
    %v4255 = vadd.f32 %v4254, %v4208
    %v4256 = vadd.f32 %v4255, %v4209
    %v4257 = vadd.f32 %v4256, %v4210
    %v4258 = vadd.f32 %v4257, %v4211
    %v4259 = vadd.f32 %v4258, %v4212
    %v4260 = vadd.f32 %v4259, %v4213
    %4261 = vadd.xlane.f32.xlu0 %v4260
    %v4262 = vpop.xlane.xlu0 %4261
    %v4263 = vrot.slane %v4262, 4
    %v4264 = vadd.f32 %v4262, %v4263
    %v4265 = vrot.slane %v4264, 2
    %v4266 = vadd.f32 %v4264, %v4265
    %v4267 = vrot.slane %v4266, 1
    %v4268 = vadd.f32 %v4266, %v4267
    %s4269 = vtos %v4268
    %s4270 = sadd.f32 %s4043, %s4269
    %v4271 = vrcp.pop 3696.0
    %s4272 = vtos %v4271
    %s4273 = smul.f32 %s4270, %s4272
    %s4274 = scalar_lea.smem [#allocation20], 4
    %4275 = sst [smem:[%s4274]] %s4273
    %s4276 = sld [smem:[#allocation2 + $0x1]]
    %s4277 = sld [smem:[#allocation6 + $0x1]]
    %v4278 = vstv %s4276
    %vm4279 = vcmp.ge.s32.totalorder %v691, %v4278
    %vm4280 = vcmp.ge.s32.totalorder %v692, %v4278
    %vm4281 = vcmp.ge.s32.totalorder %v693, %v4278
    %vm4282 = vcmp.ge.s32.totalorder %v694, %v4278
    %vm4283 = vcmp.ge.s32.totalorder %v695, %v4278
    %vm4284 = vcmp.ge.s32.totalorder %v696, %v4278
    %vm4285 = vcmp.ge.s32.totalorder %v697, %v4278
    %vm4286 = vcmp.ge.s32.totalorder %v698, %v4278
    %vm4287 = vcmp.ge.s32.totalorder %v699, %v4278
    %vm4288 = vcmp.ge.s32.totalorder %v700, %v4278
    %vm4289 = vcmp.ge.s32.totalorder %v701, %v4278
    %vm4290 = vcmp.ge.s32.totalorder %v702, %v4278
    %vm4291 = vcmp.ge.s32.totalorder %v703, %v4278
    %vm4292 = vcmp.ge.s32.totalorder %v704, %v4278
    %vm4293 = vcmp.ge.s32.totalorder %v705, %v4278
    %vm4294 = vcmp.ge.s32.totalorder %v706, %v4278
    %s4295 = sadd.s32 %s4276, 22
    %v4296 = vstv %s4295
    %vm4297 = vcmp.lt.s32.totalorder %v691, %v4296
    %vm4298 = vcmp.lt.s32.totalorder %v692, %v4296
    %vm4299 = vcmp.lt.s32.totalorder %v693, %v4296
    %vm4300 = vcmp.lt.s32.totalorder %v694, %v4296
    %vm4301 = vcmp.lt.s32.totalorder %v695, %v4296
    %vm4302 = vcmp.lt.s32.totalorder %v696, %v4296
    %vm4303 = vcmp.lt.s32.totalorder %v697, %v4296
    %vm4304 = vcmp.lt.s32.totalorder %v698, %v4296
    %vm4305 = vcmp.lt.s32.totalorder %v699, %v4296
    %vm4306 = vcmp.lt.s32.totalorder %v700, %v4296
    %vm4307 = vcmp.lt.s32.totalorder %v701, %v4296
    %vm4308 = vcmp.lt.s32.totalorder %v702, %v4296
    %vm4309 = vcmp.lt.s32.totalorder %v703, %v4296
    %vm4310 = vcmp.lt.s32.totalorder %v704, %v4296
    %vm4311 = vcmp.lt.s32.totalorder %v705, %v4296
    %vm4312 = vcmp.lt.s32.totalorder %v706, %v4296
    %vm4313 = vmand %vm4279, %vm4297
    %vm4314 = vmand %vm4280, %vm4298
    %vm4315 = vmand %vm4281, %vm4299
    %vm4316 = vmand %vm4282, %vm4300
    %vm4317 = vmand %vm4283, %vm4301
    %vm4318 = vmand %vm4284, %vm4302
    %vm4319 = vmand %vm4285, %vm4303
    %vm4320 = vmand %vm4286, %vm4304
    %vm4321 = vmand %vm4287, %vm4305
    %vm4322 = vmand %vm4288, %vm4306
    %vm4323 = vmand %vm4289, %vm4307
    %vm4324 = vmand %vm4290, %vm4308
    %vm4325 = vmand %vm4291, %vm4309
    %vm4326 = vmand %vm4292, %vm4310
    %vm4327 = vmand %vm4293, %vm4311
    %vm4328 = vmand %vm4294, %vm4312
    %v4329 = vstv %s4277
    %vm4330 = vcmp.ge.s32.totalorder %v708, %v4329
    %vm4331 = vmand %vm4313, %vm4330
    %vm4332 = vmand %vm4314, %vm4330
    %vm4333 = vmand %vm4315, %vm4330
    %vm4334 = vmand %vm4316, %vm4330
    %vm4335 = vmand %vm4317, %vm4330
    %vm4336 = vmand %vm4318, %vm4330
    %vm4337 = vmand %vm4319, %vm4330
    %vm4338 = vmand %vm4320, %vm4330
    %vm4339 = vmand %vm4321, %vm4330
    %vm4340 = vmand %vm4322, %vm4330
    %vm4341 = vmand %vm4323, %vm4330
    %vm4342 = vmand %vm4324, %vm4330
    %vm4343 = vmand %vm4325, %vm4330
    %vm4344 = vmand %vm4326, %vm4330
    %vm4345 = vmand %vm4327, %vm4330
    %vm4346 = vmand %vm4328, %vm4330
    %s4347 = sadd.s32 %s4277, 28
    %v4348 = vstv %s4347
    %vm4349 = vcmp.lt.s32.totalorder %v708, %v4348
    %vm4350 = vmand %vm4331, %vm4349
    %vm4351 = vmand %vm4332, %vm4349
    %vm4352 = vmand %vm4333, %vm4349
    %vm4353 = vmand %vm4334, %vm4349
    %vm4354 = vmand %vm4335, %vm4349
    %vm4355 = vmand %vm4336, %vm4349
    %vm4356 = vmand %vm4337, %vm4349
    %vm4357 = vmand %vm4338, %vm4349
    %vm4358 = vmand %vm4339, %vm4349
    %vm4359 = vmand %vm4340, %vm4349
    %vm4360 = vmand %vm4341, %vm4349
    %vm4361 = vmand %vm4342, %vm4349
    %vm4362 = vmand %vm4343, %vm4349
    %vm4363 = vmand %vm4344, %vm4349
    %vm4364 = vmand %vm4345, %vm4349
    %vm4365 = vmand %vm4346, %vm4349
    %v4366 = vsel %vm4350, 1, 0
    %v4367 = vsel %vm4351, 1, 0
    %v4368 = vsel %vm4352, 1, 0
    %v4369 = vsel %vm4353, 1, 0
    %v4370 = vsel %vm4354, 1, 0
    %v4371 = vsel %vm4355, 1, 0
    %v4372 = vsel %vm4356, 1, 0
    %v4373 = vsel %vm4357, 1, 0
    %v4374 = vsel %vm4358, 1, 0
    %v4375 = vsel %vm4359, 1, 0
    %v4376 = vsel %vm4360, 1, 0
    %v4377 = vsel %vm4361, 1, 0
    %v4378 = vsel %vm4362, 1, 0
    %v4379 = vsel %vm4363, 1, 0
    %v4380 = vsel %vm4364, 1, 0
    %v4381 = vsel %vm4365, 1, 0
    %vm4382 = vcmp.eq.s32.totalorder %v4366, 1
    %vm4383 = vcmp.eq.s32.totalorder %v4367, 1
    %vm4384 = vcmp.eq.s32.totalorder %v4368, 1
    %vm4385 = vcmp.eq.s32.totalorder %v4369, 1
    %vm4386 = vcmp.eq.s32.totalorder %v4370, 1
    %vm4387 = vcmp.eq.s32.totalorder %v4371, 1
    %vm4388 = vcmp.eq.s32.totalorder %v4372, 1
    %vm4389 = vcmp.eq.s32.totalorder %v4373, 1
    %vm4390 = vcmp.eq.s32.totalorder %v4374, 1
    %vm4391 = vcmp.eq.s32.totalorder %v4375, 1
    %vm4392 = vcmp.eq.s32.totalorder %v4376, 1
    %vm4393 = vcmp.eq.s32.totalorder %v4377, 1
    %vm4394 = vcmp.eq.s32.totalorder %v4378, 1
    %vm4395 = vcmp.eq.s32.totalorder %v4379, 1
    %vm4396 = vcmp.eq.s32.totalorder %v4380, 1
    %vm4397 = vcmp.eq.s32.totalorder %v4381, 1
    %v4398 = vsel %vm4382, %v485, 0.0
    %v4399 = vsel %vm4383, %v486, 0.0
    %v4400 = vsel %vm4384, %v487, 0.0
    %v4401 = vsel %vm4385, %v488, 0.0
    %v4402 = vsel %vm4386, %v489, 0.0
    %v4403 = vsel %vm4387, %v490, 0.0
    %v4404 = vsel %vm4388, %v491, 0.0
    %v4405 = vsel %vm4389, %v492, 0.0
    %v4406 = vsel %vm4390, %v493, 0.0
    %v4407 = vsel %vm4391, %v494, 0.0
    %v4408 = vsel %vm4392, %v495, 0.0
    %v4409 = vsel %vm4393, %v496, 0.0
    %v4410 = vsel %vm4394, %v497, 0.0
    %v4411 = vsel %vm4395, %v498, 0.0
    %v4412 = vsel %vm4396, %v499, 0.0
    %v4413 = vsel %vm4397, %v500, 0.0
    %v4414 = vsel %vm4382, %v501, 0.0
    %v4415 = vsel %vm4383, %v502, 0.0
    %v4416 = vsel %vm4384, %v503, 0.0
    %v4417 = vsel %vm4385, %v504, 0.0
    %v4418 = vsel %vm4386, %v505, 0.0
    %v4419 = vsel %vm4387, %v506, 0.0
    %v4420 = vsel %vm4388, %v507, 0.0
    %v4421 = vsel %vm4389, %v508, 0.0
    %v4422 = vsel %vm4390, %v509, 0.0
    %v4423 = vsel %vm4391, %v510, 0.0
    %v4424 = vsel %vm4392, %v511, 0.0
    %v4425 = vsel %vm4393, %v512, 0.0
    %v4426 = vsel %vm4394, %v513, 0.0
    %v4427 = vsel %vm4395, %v514, 0.0
    %v4428 = vsel %vm4396, %v515, 0.0
    %v4429 = vsel %vm4397, %v516, 0.0
    %v4430 = vsel %vm4382, %v517, 0.0
    %v4431 = vsel %vm4383, %v518, 0.0
    %v4432 = vsel %vm4384, %v519, 0.0
    %v4433 = vsel %vm4385, %v520, 0.0
    %v4434 = vsel %vm4386, %v521, 0.0
    %v4435 = vsel %vm4387, %v522, 0.0
    %v4436 = vsel %vm4388, %v523, 0.0
    %v4437 = vsel %vm4389, %v524, 0.0
    %v4438 = vsel %vm4390, %v525, 0.0
    %v4439 = vsel %vm4391, %v526, 0.0
    %v4440 = vsel %vm4392, %v527, 0.0
    %v4441 = vsel %vm4393, %v528, 0.0
    %v4442 = vsel %vm4394, %v529, 0.0
    %v4443 = vsel %vm4395, %v530, 0.0
    %v4444 = vsel %vm4396, %v531, 0.0
    %v4445 = vsel %vm4397, %v532, 0.0
    %v4446 = vadd.f32 %v4398, %v4399
    %v4447 = vadd.f32 %v4446, %v4400
    %v4448 = vadd.f32 %v4447, %v4401
    %v4449 = vadd.f32 %v4448, %v4402
    %v4450 = vadd.f32 %v4449, %v4403
    %v4451 = vadd.f32 %v4450, %v4404
    %v4452 = vadd.f32 %v4451, %v4405
    %v4453 = vadd.f32 %v4452, %v4406
    %v4454 = vadd.f32 %v4453, %v4407
    %v4455 = vadd.f32 %v4454, %v4408
    %v4456 = vadd.f32 %v4455, %v4409
    %v4457 = vadd.f32 %v4456, %v4410
    %v4458 = vadd.f32 %v4457, %v4411
    %v4459 = vadd.f32 %v4458, %v4412
    %v4460 = vadd.f32 %v4459, %v4413
    %v4461 = vadd.f32 %v4460, %v4414
    %v4462 = vadd.f32 %v4461, %v4415
    %v4463 = vadd.f32 %v4462, %v4416
    %v4464 = vadd.f32 %v4463, %v4417
    %v4465 = vadd.f32 %v4464, %v4418
    %v4466 = vadd.f32 %v4465, %v4419
    %v4467 = vadd.f32 %v4466, %v4420
    %v4468 = vadd.f32 %v4467, %v4421
    %v4469 = vadd.f32 %v4468, %v4422
    %v4470 = vadd.f32 %v4469, %v4423
    %v4471 = vadd.f32 %v4470, %v4424
    %v4472 = vadd.f32 %v4471, %v4425
    %v4473 = vadd.f32 %v4472, %v4426
    %v4474 = vadd.f32 %v4473, %v4427
    %v4475 = vadd.f32 %v4474, %v4428
    %v4476 = vadd.f32 %v4475, %v4429
    %v4477 = vadd.f32 %v4476, %v4430
    %v4478 = vadd.f32 %v4477, %v4431
    %v4479 = vadd.f32 %v4478, %v4432
    %v4480 = vadd.f32 %v4479, %v4433
    %v4481 = vadd.f32 %v4480, %v4434
    %v4482 = vadd.f32 %v4481, %v4435
    %v4483 = vadd.f32 %v4482, %v4436
    %v4484 = vadd.f32 %v4483, %v4437
    %v4485 = vadd.f32 %v4484, %v4438
    %v4486 = vadd.f32 %v4485, %v4439
    %v4487 = vadd.f32 %v4486, %v4440
    %v4488 = vadd.f32 %v4487, %v4441
    %v4489 = vadd.f32 %v4488, %v4442
    %v4490 = vadd.f32 %v4489, %v4443
    %v4491 = vadd.f32 %v4490, %v4444
    %v4492 = vadd.f32 %v4491, %v4445
    %4493 = vadd.xlane.f32.xlu0 %v4492
    %v4494 = vpop.xlane.xlu0 %4493
    %v4495 = vrot.slane %v4494, 4
    %v4496 = vadd.f32 %v4494, %v4495
    %v4497 = vrot.slane %v4496, 2
    %v4498 = vadd.f32 %v4496, %v4497
    %v4499 = vrot.slane %v4498, 1
    %v4500 = vadd.f32 %v4498, %v4499
    %s4501 = vtos %v4500
    %s4502 = sadd.f32 %s4501, 0.0
    %s4503 = sld [smem:[#allocation2 + $0x81]]
    %s4504 = sld [smem:[#allocation6 + $0x81]]
    %v4505 = vstv %s4503
    %vm4506 = vcmp.ge.s32.totalorder %v691, %v4505
    %vm4507 = vcmp.ge.s32.totalorder %v692, %v4505
    %vm4508 = vcmp.ge.s32.totalorder %v693, %v4505
    %vm4509 = vcmp.ge.s32.totalorder %v694, %v4505
    %vm4510 = vcmp.ge.s32.totalorder %v695, %v4505
    %vm4511 = vcmp.ge.s32.totalorder %v696, %v4505
    %vm4512 = vcmp.ge.s32.totalorder %v697, %v4505
    %vm4513 = vcmp.ge.s32.totalorder %v698, %v4505
    %vm4514 = vcmp.ge.s32.totalorder %v699, %v4505
    %vm4515 = vcmp.ge.s32.totalorder %v700, %v4505
    %vm4516 = vcmp.ge.s32.totalorder %v701, %v4505
    %vm4517 = vcmp.ge.s32.totalorder %v702, %v4505
    %vm4518 = vcmp.ge.s32.totalorder %v703, %v4505
    %vm4519 = vcmp.ge.s32.totalorder %v704, %v4505
    %vm4520 = vcmp.ge.s32.totalorder %v705, %v4505
    %vm4521 = vcmp.ge.s32.totalorder %v706, %v4505
    %s4522 = sadd.s32 %s4503, 22
    %v4523 = vstv %s4522
    %vm4524 = vcmp.lt.s32.totalorder %v691, %v4523
    %vm4525 = vcmp.lt.s32.totalorder %v692, %v4523
    %vm4526 = vcmp.lt.s32.totalorder %v693, %v4523
    %vm4527 = vcmp.lt.s32.totalorder %v694, %v4523
    %vm4528 = vcmp.lt.s32.totalorder %v695, %v4523
    %vm4529 = vcmp.lt.s32.totalorder %v696, %v4523
    %vm4530 = vcmp.lt.s32.totalorder %v697, %v4523
    %vm4531 = vcmp.lt.s32.totalorder %v698, %v4523
    %vm4532 = vcmp.lt.s32.totalorder %v699, %v4523
    %vm4533 = vcmp.lt.s32.totalorder %v700, %v4523
    %vm4534 = vcmp.lt.s32.totalorder %v701, %v4523
    %vm4535 = vcmp.lt.s32.totalorder %v702, %v4523
    %vm4536 = vcmp.lt.s32.totalorder %v703, %v4523
    %vm4537 = vcmp.lt.s32.totalorder %v704, %v4523
    %vm4538 = vcmp.lt.s32.totalorder %v705, %v4523
    %vm4539 = vcmp.lt.s32.totalorder %v706, %v4523
    %vm4540 = vmand %vm4506, %vm4524
    %vm4541 = vmand %vm4507, %vm4525
    %vm4542 = vmand %vm4508, %vm4526
    %vm4543 = vmand %vm4509, %vm4527
    %vm4544 = vmand %vm4510, %vm4528
    %vm4545 = vmand %vm4511, %vm4529
    %vm4546 = vmand %vm4512, %vm4530
    %vm4547 = vmand %vm4513, %vm4531
    %vm4548 = vmand %vm4514, %vm4532
    %vm4549 = vmand %vm4515, %vm4533
    %vm4550 = vmand %vm4516, %vm4534
    %vm4551 = vmand %vm4517, %vm4535
    %vm4552 = vmand %vm4518, %vm4536
    %vm4553 = vmand %vm4519, %vm4537
    %vm4554 = vmand %vm4520, %vm4538
    %vm4555 = vmand %vm4521, %vm4539
    %v4556 = vstv %s4504
    %vm4557 = vcmp.ge.s32.totalorder %v708, %v4556
    %vm4558 = vmand %vm4540, %vm4557
    %vm4559 = vmand %vm4541, %vm4557
    %vm4560 = vmand %vm4542, %vm4557
    %vm4561 = vmand %vm4543, %vm4557
    %vm4562 = vmand %vm4544, %vm4557
    %vm4563 = vmand %vm4545, %vm4557
    %vm4564 = vmand %vm4546, %vm4557
    %vm4565 = vmand %vm4547, %vm4557
    %vm4566 = vmand %vm4548, %vm4557
    %vm4567 = vmand %vm4549, %vm4557
    %vm4568 = vmand %vm4550, %vm4557
    %vm4569 = vmand %vm4551, %vm4557
    %vm4570 = vmand %vm4552, %vm4557
    %vm4571 = vmand %vm4553, %vm4557
    %vm4572 = vmand %vm4554, %vm4557
    %vm4573 = vmand %vm4555, %vm4557
    %s4574 = sadd.s32 %s4504, 28
    %v4575 = vstv %s4574
    %vm4576 = vcmp.lt.s32.totalorder %v708, %v4575
    %vm4577 = vmand %vm4558, %vm4576
    %vm4578 = vmand %vm4559, %vm4576
    %vm4579 = vmand %vm4560, %vm4576
    %vm4580 = vmand %vm4561, %vm4576
    %vm4581 = vmand %vm4562, %vm4576
    %vm4582 = vmand %vm4563, %vm4576
    %vm4583 = vmand %vm4564, %vm4576
    %vm4584 = vmand %vm4565, %vm4576
    %vm4585 = vmand %vm4566, %vm4576
    %vm4586 = vmand %vm4567, %vm4576
    %vm4587 = vmand %vm4568, %vm4576
    %vm4588 = vmand %vm4569, %vm4576
    %vm4589 = vmand %vm4570, %vm4576
    %vm4590 = vmand %vm4571, %vm4576
    %vm4591 = vmand %vm4572, %vm4576
    %vm4592 = vmand %vm4573, %vm4576
    %v4593 = vsel %vm4577, 1, 0
    %v4594 = vsel %vm4578, 1, 0
    %v4595 = vsel %vm4579, 1, 0
    %v4596 = vsel %vm4580, 1, 0
    %v4597 = vsel %vm4581, 1, 0
    %v4598 = vsel %vm4582, 1, 0
    %v4599 = vsel %vm4583, 1, 0
    %v4600 = vsel %vm4584, 1, 0
    %v4601 = vsel %vm4585, 1, 0
    %v4602 = vsel %vm4586, 1, 0
    %v4603 = vsel %vm4587, 1, 0
    %v4604 = vsel %vm4588, 1, 0
    %v4605 = vsel %vm4589, 1, 0
    %v4606 = vsel %vm4590, 1, 0
    %v4607 = vsel %vm4591, 1, 0
    %v4608 = vsel %vm4592, 1, 0
    %vm4609 = vcmp.eq.s32.totalorder %v4593, 1
    %vm4610 = vcmp.eq.s32.totalorder %v4594, 1
    %vm4611 = vcmp.eq.s32.totalorder %v4595, 1
    %vm4612 = vcmp.eq.s32.totalorder %v4596, 1
    %vm4613 = vcmp.eq.s32.totalorder %v4597, 1
    %vm4614 = vcmp.eq.s32.totalorder %v4598, 1
    %vm4615 = vcmp.eq.s32.totalorder %v4599, 1
    %vm4616 = vcmp.eq.s32.totalorder %v4600, 1
    %vm4617 = vcmp.eq.s32.totalorder %v4601, 1
    %vm4618 = vcmp.eq.s32.totalorder %v4602, 1
    %vm4619 = vcmp.eq.s32.totalorder %v4603, 1
    %vm4620 = vcmp.eq.s32.totalorder %v4604, 1
    %vm4621 = vcmp.eq.s32.totalorder %v4605, 1
    %vm4622 = vcmp.eq.s32.totalorder %v4606, 1
    %vm4623 = vcmp.eq.s32.totalorder %v4607, 1
    %vm4624 = vcmp.eq.s32.totalorder %v4608, 1
    %v4625 = vsel %vm4609, %v533, 0.0
    %v4626 = vsel %vm4610, %v534, 0.0
    %v4627 = vsel %vm4611, %v535, 0.0
    %v4628 = vsel %vm4612, %v536, 0.0
    %v4629 = vsel %vm4613, %v537, 0.0
    %v4630 = vsel %vm4614, %v538, 0.0
    %v4631 = vsel %vm4615, %v539, 0.0
    %v4632 = vsel %vm4616, %v540, 0.0
    %v4633 = vsel %vm4617, %v541, 0.0
    %v4634 = vsel %vm4618, %v542, 0.0
    %v4635 = vsel %vm4619, %v543, 0.0
    %v4636 = vsel %vm4620, %v544, 0.0
    %v4637 = vsel %vm4621, %v545, 0.0
    %v4638 = vsel %vm4622, %v546, 0.0
    %v4639 = vsel %vm4623, %v547, 0.0
    %v4640 = vsel %vm4624, %v548, 0.0
    %v4641 = vsel %vm4609, %v549, 0.0
    %v4642 = vsel %vm4610, %v550, 0.0
    %v4643 = vsel %vm4611, %v551, 0.0
    %v4644 = vsel %vm4612, %v552, 0.0
    %v4645 = vsel %vm4613, %v553, 0.0
    %v4646 = vsel %vm4614, %v554, 0.0
    %v4647 = vsel %vm4615, %v555, 0.0
    %v4648 = vsel %vm4616, %v556, 0.0
    %v4649 = vsel %vm4617, %v557, 0.0
    %v4650 = vsel %vm4618, %v558, 0.0
    %v4651 = vsel %vm4619, %v559, 0.0
    %v4652 = vsel %vm4620, %v560, 0.0
    %v4653 = vsel %vm4621, %v561, 0.0
    %v4654 = vsel %vm4622, %v562, 0.0
    %v4655 = vsel %vm4623, %v563, 0.0
    %v4656 = vsel %vm4624, %v564, 0.0
    %v4657 = vsel %vm4609, %v565, 0.0
    %v4658 = vsel %vm4610, %v566, 0.0
    %v4659 = vsel %vm4611, %v567, 0.0
    %v4660 = vsel %vm4612, %v568, 0.0
    %v4661 = vsel %vm4613, %v569, 0.0
    %v4662 = vsel %vm4614, %v570, 0.0
    %v4663 = vsel %vm4615, %v571, 0.0
    %v4664 = vsel %vm4616, %v572, 0.0
    %v4665 = vsel %vm4617, %v573, 0.0
    %v4666 = vsel %vm4618, %v574, 0.0
    %v4667 = vsel %vm4619, %v575, 0.0
    %v4668 = vsel %vm4620, %v576, 0.0
    %v4669 = vsel %vm4621, %v577, 0.0
    %v4670 = vsel %vm4622, %v578, 0.0
    %v4671 = vsel %vm4623, %v579, 0.0
    %v4672 = vsel %vm4624, %v580, 0.0
    %v4673 = vadd.f32 %v4625, %v4626
    %v4674 = vadd.f32 %v4673, %v4627
    %v4675 = vadd.f32 %v4674, %v4628
    %v4676 = vadd.f32 %v4675, %v4629
    %v4677 = vadd.f32 %v4676, %v4630
    %v4678 = vadd.f32 %v4677, %v4631
    %v4679 = vadd.f32 %v4678, %v4632
    %v4680 = vadd.f32 %v4679, %v4633
    %v4681 = vadd.f32 %v4680, %v4634
    %v4682 = vadd.f32 %v4681, %v4635
    %v4683 = vadd.f32 %v4682, %v4636
    %v4684 = vadd.f32 %v4683, %v4637
    %v4685 = vadd.f32 %v4684, %v4638
    %v4686 = vadd.f32 %v4685, %v4639
    %v4687 = vadd.f32 %v4686, %v4640
    %v4688 = vadd.f32 %v4687, %v4641
    %v4689 = vadd.f32 %v4688, %v4642
    %v4690 = vadd.f32 %v4689, %v4643
    %v4691 = vadd.f32 %v4690, %v4644
    %v4692 = vadd.f32 %v4691, %v4645
    %v4693 = vadd.f32 %v4692, %v4646
    %v4694 = vadd.f32 %v4693, %v4647
    %v4695 = vadd.f32 %v4694, %v4648
    %v4696 = vadd.f32 %v4695, %v4649
    %v4697 = vadd.f32 %v4696, %v4650
    %v4698 = vadd.f32 %v4697, %v4651
    %v4699 = vadd.f32 %v4698, %v4652
    %v4700 = vadd.f32 %v4699, %v4653
    %v4701 = vadd.f32 %v4700, %v4654
    %v4702 = vadd.f32 %v4701, %v4655
    %v4703 = vadd.f32 %v4702, %v4656
    %v4704 = vadd.f32 %v4703, %v4657
    %v4705 = vadd.f32 %v4704, %v4658
    %v4706 = vadd.f32 %v4705, %v4659
    %v4707 = vadd.f32 %v4706, %v4660
    %v4708 = vadd.f32 %v4707, %v4661
    %v4709 = vadd.f32 %v4708, %v4662
    %v4710 = vadd.f32 %v4709, %v4663
    %v4711 = vadd.f32 %v4710, %v4664
    %v4712 = vadd.f32 %v4711, %v4665
    %v4713 = vadd.f32 %v4712, %v4666
    %v4714 = vadd.f32 %v4713, %v4667
    %v4715 = vadd.f32 %v4714, %v4668
    %v4716 = vadd.f32 %v4715, %v4669
    %v4717 = vadd.f32 %v4716, %v4670
    %v4718 = vadd.f32 %v4717, %v4671
    %v4719 = vadd.f32 %v4718, %v4672
    %4720 = vadd.xlane.f32.xlu0 %v4719
    %v4721 = vpop.xlane.xlu0 %4720
    %v4722 = vrot.slane %v4721, 4
    %v4723 = vadd.f32 %v4721, %v4722
    %v4724 = vrot.slane %v4723, 2
    %v4725 = vadd.f32 %v4723, %v4724
    %v4726 = vrot.slane %v4725, 1
    %v4727 = vadd.f32 %v4725, %v4726
    %s4728 = vtos %v4727
    %s4729 = sadd.f32 %s4502, %s4728
    %v4730 = vrcp.pop 3696.0
    %s4731 = vtos %v4730
    %s4732 = smul.f32 %s4729, %s4731
    %s4733 = scalar_lea.smem [#allocation20], 5
    %4734 = sst [smem:[%s4733]] %s4732
    %s4735 = sld [smem:[#allocation2 + $0x2]]
    %s4736 = sld [smem:[#allocation6 + $0x2]]
    %v4737 = vstv %s4735
    %vm4738 = vcmp.ge.s32.totalorder %v691, %v4737
    %vm4739 = vcmp.ge.s32.totalorder %v692, %v4737
    %vm4740 = vcmp.ge.s32.totalorder %v693, %v4737
    %vm4741 = vcmp.ge.s32.totalorder %v694, %v4737
    %vm4742 = vcmp.ge.s32.totalorder %v695, %v4737
    %vm4743 = vcmp.ge.s32.totalorder %v696, %v4737
    %vm4744 = vcmp.ge.s32.totalorder %v697, %v4737
    %vm4745 = vcmp.ge.s32.totalorder %v698, %v4737
    %vm4746 = vcmp.ge.s32.totalorder %v699, %v4737
    %vm4747 = vcmp.ge.s32.totalorder %v700, %v4737
    %vm4748 = vcmp.ge.s32.totalorder %v701, %v4737
    %vm4749 = vcmp.ge.s32.totalorder %v702, %v4737
    %vm4750 = vcmp.ge.s32.totalorder %v703, %v4737
    %vm4751 = vcmp.ge.s32.totalorder %v704, %v4737
    %vm4752 = vcmp.ge.s32.totalorder %v705, %v4737
    %vm4753 = vcmp.ge.s32.totalorder %v706, %v4737
    %s4754 = sadd.s32 %s4735, 66
    %v4755 = vstv %s4754
    %vm4756 = vcmp.lt.s32.totalorder %v691, %v4755
    %vm4757 = vcmp.lt.s32.totalorder %v692, %v4755
    %vm4758 = vcmp.lt.s32.totalorder %v693, %v4755
    %vm4759 = vcmp.lt.s32.totalorder %v694, %v4755
    %vm4760 = vcmp.lt.s32.totalorder %v695, %v4755
    %vm4761 = vcmp.lt.s32.totalorder %v696, %v4755
    %vm4762 = vcmp.lt.s32.totalorder %v697, %v4755
    %vm4763 = vcmp.lt.s32.totalorder %v698, %v4755
    %vm4764 = vcmp.lt.s32.totalorder %v699, %v4755
    %vm4765 = vcmp.lt.s32.totalorder %v700, %v4755
    %vm4766 = vcmp.lt.s32.totalorder %v701, %v4755
    %vm4767 = vcmp.lt.s32.totalorder %v702, %v4755
    %vm4768 = vcmp.lt.s32.totalorder %v703, %v4755
    %vm4769 = vcmp.lt.s32.totalorder %v704, %v4755
    %vm4770 = vcmp.lt.s32.totalorder %v705, %v4755
    %vm4771 = vcmp.lt.s32.totalorder %v706, %v4755
    %vm4772 = vmand %vm4738, %vm4756
    %vm4773 = vmand %vm4739, %vm4757
    %vm4774 = vmand %vm4740, %vm4758
    %vm4775 = vmand %vm4741, %vm4759
    %vm4776 = vmand %vm4742, %vm4760
    %vm4777 = vmand %vm4743, %vm4761
    %vm4778 = vmand %vm4744, %vm4762
    %vm4779 = vmand %vm4745, %vm4763
    %vm4780 = vmand %vm4746, %vm4764
    %vm4781 = vmand %vm4747, %vm4765
    %vm4782 = vmand %vm4748, %vm4766
    %vm4783 = vmand %vm4749, %vm4767
    %vm4784 = vmand %vm4750, %vm4768
    %vm4785 = vmand %vm4751, %vm4769
    %vm4786 = vmand %vm4752, %vm4770
    %vm4787 = vmand %vm4753, %vm4771
    %v4788 = vstv %s4736
    %vm4789 = vcmp.ge.s32.totalorder %v708, %v4788
    %vm4790 = vmand %vm4772, %vm4789
    %vm4791 = vmand %vm4773, %vm4789
    %vm4792 = vmand %vm4774, %vm4789
    %vm4793 = vmand %vm4775, %vm4789
    %vm4794 = vmand %vm4776, %vm4789
    %vm4795 = vmand %vm4777, %vm4789
    %vm4796 = vmand %vm4778, %vm4789
    %vm4797 = vmand %vm4779, %vm4789
    %vm4798 = vmand %vm4780, %vm4789
    %vm4799 = vmand %vm4781, %vm4789
    %vm4800 = vmand %vm4782, %vm4789
    %vm4801 = vmand %vm4783, %vm4789
    %vm4802 = vmand %vm4784, %vm4789
    %vm4803 = vmand %vm4785, %vm4789
    %vm4804 = vmand %vm4786, %vm4789
    %vm4805 = vmand %vm4787, %vm4789
    %s4806 = sadd.s32 %s4736, 46
    %v4807 = vstv %s4806
    %vm4808 = vcmp.lt.s32.totalorder %v708, %v4807
    %vm4809 = vmand %vm4790, %vm4808
    %vm4810 = vmand %vm4791, %vm4808
    %vm4811 = vmand %vm4792, %vm4808
    %vm4812 = vmand %vm4793, %vm4808
    %vm4813 = vmand %vm4794, %vm4808
    %vm4814 = vmand %vm4795, %vm4808
    %vm4815 = vmand %vm4796, %vm4808
    %vm4816 = vmand %vm4797, %vm4808
    %vm4817 = vmand %vm4798, %vm4808
    %vm4818 = vmand %vm4799, %vm4808
    %vm4819 = vmand %vm4800, %vm4808
    %vm4820 = vmand %vm4801, %vm4808
    %vm4821 = vmand %vm4802, %vm4808
    %vm4822 = vmand %vm4803, %vm4808
    %vm4823 = vmand %vm4804, %vm4808
    %vm4824 = vmand %vm4805, %vm4808
    %v4825 = vsel %vm4809, 1, 0
    %v4826 = vsel %vm4810, 1, 0
    %v4827 = vsel %vm4811, 1, 0
    %v4828 = vsel %vm4812, 1, 0
    %v4829 = vsel %vm4813, 1, 0
    %v4830 = vsel %vm4814, 1, 0
    %v4831 = vsel %vm4815, 1, 0
    %v4832 = vsel %vm4816, 1, 0
    %v4833 = vsel %vm4817, 1, 0
    %v4834 = vsel %vm4818, 1, 0
    %v4835 = vsel %vm4819, 1, 0
    %v4836 = vsel %vm4820, 1, 0
    %v4837 = vsel %vm4821, 1, 0
    %v4838 = vsel %vm4822, 1, 0
    %v4839 = vsel %vm4823, 1, 0
    %v4840 = vsel %vm4824, 1, 0
    %vm4841 = vcmp.eq.s32.totalorder %v4825, 1
    %vm4842 = vcmp.eq.s32.totalorder %v4826, 1
    %vm4843 = vcmp.eq.s32.totalorder %v4827, 1
    %vm4844 = vcmp.eq.s32.totalorder %v4828, 1
    %vm4845 = vcmp.eq.s32.totalorder %v4829, 1
    %vm4846 = vcmp.eq.s32.totalorder %v4830, 1
    %vm4847 = vcmp.eq.s32.totalorder %v4831, 1
    %vm4848 = vcmp.eq.s32.totalorder %v4832, 1
    %vm4849 = vcmp.eq.s32.totalorder %v4833, 1
    %vm4850 = vcmp.eq.s32.totalorder %v4834, 1
    %vm4851 = vcmp.eq.s32.totalorder %v4835, 1
    %vm4852 = vcmp.eq.s32.totalorder %v4836, 1
    %vm4853 = vcmp.eq.s32.totalorder %v4837, 1
    %vm4854 = vcmp.eq.s32.totalorder %v4838, 1
    %vm4855 = vcmp.eq.s32.totalorder %v4839, 1
    %vm4856 = vcmp.eq.s32.totalorder %v4840, 1
    %v4857 = vsel %vm4841, %v485, 0.0
    %v4858 = vsel %vm4842, %v486, 0.0
    %v4859 = vsel %vm4843, %v487, 0.0
    %v4860 = vsel %vm4844, %v488, 0.0
    %v4861 = vsel %vm4845, %v489, 0.0
    %v4862 = vsel %vm4846, %v490, 0.0
    %v4863 = vsel %vm4847, %v491, 0.0
    %v4864 = vsel %vm4848, %v492, 0.0
    %v4865 = vsel %vm4849, %v493, 0.0
    %v4866 = vsel %vm4850, %v494, 0.0
    %v4867 = vsel %vm4851, %v495, 0.0
    %v4868 = vsel %vm4852, %v496, 0.0
    %v4869 = vsel %vm4853, %v497, 0.0
    %v4870 = vsel %vm4854, %v498, 0.0
    %v4871 = vsel %vm4855, %v499, 0.0
    %v4872 = vsel %vm4856, %v500, 0.0
    %v4873 = vsel %vm4841, %v501, 0.0
    %v4874 = vsel %vm4842, %v502, 0.0
    %v4875 = vsel %vm4843, %v503, 0.0
    %v4876 = vsel %vm4844, %v504, 0.0
    %v4877 = vsel %vm4845, %v505, 0.0
    %v4878 = vsel %vm4846, %v506, 0.0
    %v4879 = vsel %vm4847, %v507, 0.0
    %v4880 = vsel %vm4848, %v508, 0.0
    %v4881 = vsel %vm4849, %v509, 0.0
    %v4882 = vsel %vm4850, %v510, 0.0
    %v4883 = vsel %vm4851, %v511, 0.0
    %v4884 = vsel %vm4852, %v512, 0.0
    %v4885 = vsel %vm4853, %v513, 0.0
    %v4886 = vsel %vm4854, %v514, 0.0
    %v4887 = vsel %vm4855, %v515, 0.0
    %v4888 = vsel %vm4856, %v516, 0.0
    %v4889 = vsel %vm4841, %v517, 0.0
    %v4890 = vsel %vm4842, %v518, 0.0
    %v4891 = vsel %vm4843, %v519, 0.0
    %v4892 = vsel %vm4844, %v520, 0.0
    %v4893 = vsel %vm4845, %v521, 0.0
    %v4894 = vsel %vm4846, %v522, 0.0
    %v4895 = vsel %vm4847, %v523, 0.0
    %v4896 = vsel %vm4848, %v524, 0.0
    %v4897 = vsel %vm4849, %v525, 0.0
    %v4898 = vsel %vm4850, %v526, 0.0
    %v4899 = vsel %vm4851, %v527, 0.0
    %v4900 = vsel %vm4852, %v528, 0.0
    %v4901 = vsel %vm4853, %v529, 0.0
    %v4902 = vsel %vm4854, %v530, 0.0
    %v4903 = vsel %vm4855, %v531, 0.0
    %v4904 = vsel %vm4856, %v532, 0.0
    %v4905 = vadd.f32 %v4857, %v4858
    %v4906 = vadd.f32 %v4905, %v4859
    %v4907 = vadd.f32 %v4906, %v4860
    %v4908 = vadd.f32 %v4907, %v4861
    %v4909 = vadd.f32 %v4908, %v4862
    %v4910 = vadd.f32 %v4909, %v4863
    %v4911 = vadd.f32 %v4910, %v4864
    %v4912 = vadd.f32 %v4911, %v4865
    %v4913 = vadd.f32 %v4912, %v4866
    %v4914 = vadd.f32 %v4913, %v4867
    %v4915 = vadd.f32 %v4914, %v4868
    %v4916 = vadd.f32 %v4915, %v4869
    %v4917 = vadd.f32 %v4916, %v4870
    %v4918 = vadd.f32 %v4917, %v4871
    %v4919 = vadd.f32 %v4918, %v4872
    %v4920 = vadd.f32 %v4919, %v4873
    %v4921 = vadd.f32 %v4920, %v4874
    %v4922 = vadd.f32 %v4921, %v4875
    %v4923 = vadd.f32 %v4922, %v4876
    %v4924 = vadd.f32 %v4923, %v4877
    %v4925 = vadd.f32 %v4924, %v4878
    %v4926 = vadd.f32 %v4925, %v4879
    %v4927 = vadd.f32 %v4926, %v4880
    %v4928 = vadd.f32 %v4927, %v4881
    %v4929 = vadd.f32 %v4928, %v4882
    %v4930 = vadd.f32 %v4929, %v4883
    %v4931 = vadd.f32 %v4930, %v4884
    %v4932 = vadd.f32 %v4931, %v4885
    %v4933 = vadd.f32 %v4932, %v4886
    %v4934 = vadd.f32 %v4933, %v4887
    %v4935 = vadd.f32 %v4934, %v4888
    %v4936 = vadd.f32 %v4935, %v4889
    %v4937 = vadd.f32 %v4936, %v4890
    %v4938 = vadd.f32 %v4937, %v4891
    %v4939 = vadd.f32 %v4938, %v4892
    %v4940 = vadd.f32 %v4939, %v4893
    %v4941 = vadd.f32 %v4940, %v4894
    %v4942 = vadd.f32 %v4941, %v4895
    %v4943 = vadd.f32 %v4942, %v4896
    %v4944 = vadd.f32 %v4943, %v4897
    %v4945 = vadd.f32 %v4944, %v4898
    %v4946 = vadd.f32 %v4945, %v4899
    %v4947 = vadd.f32 %v4946, %v4900
    %v4948 = vadd.f32 %v4947, %v4901
    %v4949 = vadd.f32 %v4948, %v4902
    %v4950 = vadd.f32 %v4949, %v4903
    %v4951 = vadd.f32 %v4950, %v4904
    %4952 = vadd.xlane.f32.xlu0 %v4951
    %v4953 = vpop.xlane.xlu0 %4952
    %v4954 = vrot.slane %v4953, 4
    %v4955 = vadd.f32 %v4953, %v4954
    %v4956 = vrot.slane %v4955, 2
    %v4957 = vadd.f32 %v4955, %v4956
    %v4958 = vrot.slane %v4957, 1
    %v4959 = vadd.f32 %v4957, %v4958
    %s4960 = vtos %v4959
    %s4961 = sadd.f32 %s4960, 0.0
    %s4962 = sld [smem:[#allocation2 + $0x82]]
    %s4963 = sld [smem:[#allocation6 + $0x82]]
    %v4964 = vstv %s4962
    %vm4965 = vcmp.ge.s32.totalorder %v691, %v4964
    %vm4966 = vcmp.ge.s32.totalorder %v692, %v4964
    %vm4967 = vcmp.ge.s32.totalorder %v693, %v4964
    %vm4968 = vcmp.ge.s32.totalorder %v694, %v4964
    %vm4969 = vcmp.ge.s32.totalorder %v695, %v4964
    %vm4970 = vcmp.ge.s32.totalorder %v696, %v4964
    %vm4971 = vcmp.ge.s32.totalorder %v697, %v4964
    %vm4972 = vcmp.ge.s32.totalorder %v698, %v4964
    %vm4973 = vcmp.ge.s32.totalorder %v699, %v4964
    %vm4974 = vcmp.ge.s32.totalorder %v700, %v4964
    %vm4975 = vcmp.ge.s32.totalorder %v701, %v4964
    %vm4976 = vcmp.ge.s32.totalorder %v702, %v4964
    %vm4977 = vcmp.ge.s32.totalorder %v703, %v4964
    %vm4978 = vcmp.ge.s32.totalorder %v704, %v4964
    %vm4979 = vcmp.ge.s32.totalorder %v705, %v4964
    %vm4980 = vcmp.ge.s32.totalorder %v706, %v4964
    %s4981 = sadd.s32 %s4962, 66
    %v4982 = vstv %s4981
    %vm4983 = vcmp.lt.s32.totalorder %v691, %v4982
    %vm4984 = vcmp.lt.s32.totalorder %v692, %v4982
    %vm4985 = vcmp.lt.s32.totalorder %v693, %v4982
    %vm4986 = vcmp.lt.s32.totalorder %v694, %v4982
    %vm4987 = vcmp.lt.s32.totalorder %v695, %v4982
    %vm4988 = vcmp.lt.s32.totalorder %v696, %v4982
    %vm4989 = vcmp.lt.s32.totalorder %v697, %v4982
    %vm4990 = vcmp.lt.s32.totalorder %v698, %v4982
    %vm4991 = vcmp.lt.s32.totalorder %v699, %v4982
    %vm4992 = vcmp.lt.s32.totalorder %v700, %v4982
    %vm4993 = vcmp.lt.s32.totalorder %v701, %v4982
    %vm4994 = vcmp.lt.s32.totalorder %v702, %v4982
    %vm4995 = vcmp.lt.s32.totalorder %v703, %v4982
    %vm4996 = vcmp.lt.s32.totalorder %v704, %v4982
    %vm4997 = vcmp.lt.s32.totalorder %v705, %v4982
    %vm4998 = vcmp.lt.s32.totalorder %v706, %v4982
    %vm4999 = vmand %vm4965, %vm4983
    %vm5000 = vmand %vm4966, %vm4984
    %vm5001 = vmand %vm4967, %vm4985
    %vm5002 = vmand %vm4968, %vm4986
    %vm5003 = vmand %vm4969, %vm4987
    %vm5004 = vmand %vm4970, %vm4988
    %vm5005 = vmand %vm4971, %vm4989
    %vm5006 = vmand %vm4972, %vm4990
    %vm5007 = vmand %vm4973, %vm4991
    %vm5008 = vmand %vm4974, %vm4992
    %vm5009 = vmand %vm4975, %vm4993
    %vm5010 = vmand %vm4976, %vm4994
    %vm5011 = vmand %vm4977, %vm4995
    %vm5012 = vmand %vm4978, %vm4996
    %vm5013 = vmand %vm4979, %vm4997
    %vm5014 = vmand %vm4980, %vm4998
    %v5015 = vstv %s4963
    %vm5016 = vcmp.ge.s32.totalorder %v708, %v5015
    %vm5017 = vmand %vm4999, %vm5016
    %vm5018 = vmand %vm5000, %vm5016
    %vm5019 = vmand %vm5001, %vm5016
    %vm5020 = vmand %vm5002, %vm5016
    %vm5021 = vmand %vm5003, %vm5016
    %vm5022 = vmand %vm5004, %vm5016
    %vm5023 = vmand %vm5005, %vm5016
    %vm5024 = vmand %vm5006, %vm5016
    %vm5025 = vmand %vm5007, %vm5016
    %vm5026 = vmand %vm5008, %vm5016
    %vm5027 = vmand %vm5009, %vm5016
    %vm5028 = vmand %vm5010, %vm5016
    %vm5029 = vmand %vm5011, %vm5016
    %vm5030 = vmand %vm5012, %vm5016
    %vm5031 = vmand %vm5013, %vm5016
    %vm5032 = vmand %vm5014, %vm5016
    %s5033 = sadd.s32 %s4963, 46
    %v5034 = vstv %s5033
    %vm5035 = vcmp.lt.s32.totalorder %v708, %v5034
    %vm5036 = vmand %vm5017, %vm5035
    %vm5037 = vmand %vm5018, %vm5035
    %vm5038 = vmand %vm5019, %vm5035
    %vm5039 = vmand %vm5020, %vm5035
    %vm5040 = vmand %vm5021, %vm5035
    %vm5041 = vmand %vm5022, %vm5035
    %vm5042 = vmand %vm5023, %vm5035
    %vm5043 = vmand %vm5024, %vm5035
    %vm5044 = vmand %vm5025, %vm5035
    %vm5045 = vmand %vm5026, %vm5035
    %vm5046 = vmand %vm5027, %vm5035
    %vm5047 = vmand %vm5028, %vm5035
    %vm5048 = vmand %vm5029, %vm5035
    %vm5049 = vmand %vm5030, %vm5035
    %vm5050 = vmand %vm5031, %vm5035
    %vm5051 = vmand %vm5032, %vm5035
    %v5052 = vsel %vm5036, 1, 0
    %v5053 = vsel %vm5037, 1, 0
    %v5054 = vsel %vm5038, 1, 0
    %v5055 = vsel %vm5039, 1, 0
    %v5056 = vsel %vm5040, 1, 0
    %v5057 = vsel %vm5041, 1, 0
    %v5058 = vsel %vm5042, 1, 0
    %v5059 = vsel %vm5043, 1, 0
    %v5060 = vsel %vm5044, 1, 0
    %v5061 = vsel %vm5045, 1, 0
    %v5062 = vsel %vm5046, 1, 0
    %v5063 = vsel %vm5047, 1, 0
    %v5064 = vsel %vm5048, 1, 0
    %v5065 = vsel %vm5049, 1, 0
    %v5066 = vsel %vm5050, 1, 0
    %v5067 = vsel %vm5051, 1, 0
    %vm5068 = vcmp.eq.s32.totalorder %v5052, 1
    %vm5069 = vcmp.eq.s32.totalorder %v5053, 1
    %vm5070 = vcmp.eq.s32.totalorder %v5054, 1
    %vm5071 = vcmp.eq.s32.totalorder %v5055, 1
    %vm5072 = vcmp.eq.s32.totalorder %v5056, 1
    %vm5073 = vcmp.eq.s32.totalorder %v5057, 1
    %vm5074 = vcmp.eq.s32.totalorder %v5058, 1
    %vm5075 = vcmp.eq.s32.totalorder %v5059, 1
    %vm5076 = vcmp.eq.s32.totalorder %v5060, 1
    %vm5077 = vcmp.eq.s32.totalorder %v5061, 1
    %vm5078 = vcmp.eq.s32.totalorder %v5062, 1
    %vm5079 = vcmp.eq.s32.totalorder %v5063, 1
    %vm5080 = vcmp.eq.s32.totalorder %v5064, 1
    %vm5081 = vcmp.eq.s32.totalorder %v5065, 1
    %vm5082 = vcmp.eq.s32.totalorder %v5066, 1
    %vm5083 = vcmp.eq.s32.totalorder %v5067, 1
    %v5084 = vsel %vm5068, %v533, 0.0
    %v5085 = vsel %vm5069, %v534, 0.0
    %v5086 = vsel %vm5070, %v535, 0.0
    %v5087 = vsel %vm5071, %v536, 0.0
    %v5088 = vsel %vm5072, %v537, 0.0
    %v5089 = vsel %vm5073, %v538, 0.0
    %v5090 = vsel %vm5074, %v539, 0.0
    %v5091 = vsel %vm5075, %v540, 0.0
    %v5092 = vsel %vm5076, %v541, 0.0
    %v5093 = vsel %vm5077, %v542, 0.0
    %v5094 = vsel %vm5078, %v543, 0.0
    %v5095 = vsel %vm5079, %v544, 0.0
    %v5096 = vsel %vm5080, %v545, 0.0
    %v5097 = vsel %vm5081, %v546, 0.0
    %v5098 = vsel %vm5082, %v547, 0.0
    %v5099 = vsel %vm5083, %v548, 0.0
    %v5100 = vsel %vm5068, %v549, 0.0
    %v5101 = vsel %vm5069, %v550, 0.0
    %v5102 = vsel %vm5070, %v551, 0.0
    %v5103 = vsel %vm5071, %v552, 0.0
    %v5104 = vsel %vm5072, %v553, 0.0
    %v5105 = vsel %vm5073, %v554, 0.0
    %v5106 = vsel %vm5074, %v555, 0.0
    %v5107 = vsel %vm5075, %v556, 0.0
    %v5108 = vsel %vm5076, %v557, 0.0
    %v5109 = vsel %vm5077, %v558, 0.0
    %v5110 = vsel %vm5078, %v559, 0.0
    %v5111 = vsel %vm5079, %v560, 0.0
    %v5112 = vsel %vm5080, %v561, 0.0
    %v5113 = vsel %vm5081, %v562, 0.0
    %v5114 = vsel %vm5082, %v563, 0.0
    %v5115 = vsel %vm5083, %v564, 0.0
    %v5116 = vsel %vm5068, %v565, 0.0
    %v5117 = vsel %vm5069, %v566, 0.0
    %v5118 = vsel %vm5070, %v567, 0.0
    %v5119 = vsel %vm5071, %v568, 0.0
    %v5120 = vsel %vm5072, %v569, 0.0
    %v5121 = vsel %vm5073, %v570, 0.0
    %v5122 = vsel %vm5074, %v571, 0.0
    %v5123 = vsel %vm5075, %v572, 0.0
    %v5124 = vsel %vm5076, %v573, 0.0
    %v5125 = vsel %vm5077, %v574, 0.0
    %v5126 = vsel %vm5078, %v575, 0.0
    %v5127 = vsel %vm5079, %v576, 0.0
    %v5128 = vsel %vm5080, %v577, 0.0
    %v5129 = vsel %vm5081, %v578, 0.0
    %v5130 = vsel %vm5082, %v579, 0.0
    %v5131 = vsel %vm5083, %v580, 0.0
    %v5132 = vadd.f32 %v5084, %v5085
    %v5133 = vadd.f32 %v5132, %v5086
    %v5134 = vadd.f32 %v5133, %v5087
    %v5135 = vadd.f32 %v5134, %v5088
    %v5136 = vadd.f32 %v5135, %v5089
    %v5137 = vadd.f32 %v5136, %v5090
    %v5138 = vadd.f32 %v5137, %v5091
    %v5139 = vadd.f32 %v5138, %v5092
    %v5140 = vadd.f32 %v5139, %v5093
    %v5141 = vadd.f32 %v5140, %v5094
    %v5142 = vadd.f32 %v5141, %v5095
    %v5143 = vadd.f32 %v5142, %v5096
    %v5144 = vadd.f32 %v5143, %v5097
    %v5145 = vadd.f32 %v5144, %v5098
    %v5146 = vadd.f32 %v5145, %v5099
    %v5147 = vadd.f32 %v5146, %v5100
    %v5148 = vadd.f32 %v5147, %v5101
    %v5149 = vadd.f32 %v5148, %v5102
    %v5150 = vadd.f32 %v5149, %v5103
    %v5151 = vadd.f32 %v5150, %v5104
    %v5152 = vadd.f32 %v5151, %v5105
    %v5153 = vadd.f32 %v5152, %v5106
    %v5154 = vadd.f32 %v5153, %v5107
    %v5155 = vadd.f32 %v5154, %v5108
    %v5156 = vadd.f32 %v5155, %v5109
    %v5157 = vadd.f32 %v5156, %v5110
    %v5158 = vadd.f32 %v5157, %v5111
    %v5159 = vadd.f32 %v5158, %v5112
    %v5160 = vadd.f32 %v5159, %v5113
    %v5161 = vadd.f32 %v5160, %v5114
    %v5162 = vadd.f32 %v5161, %v5115
    %v5163 = vadd.f32 %v5162, %v5116
    %v5164 = vadd.f32 %v5163, %v5117
    %v5165 = vadd.f32 %v5164, %v5118
    %v5166 = vadd.f32 %v5165, %v5119
    %v5167 = vadd.f32 %v5166, %v5120
    %v5168 = vadd.f32 %v5167, %v5121
    %v5169 = vadd.f32 %v5168, %v5122
    %v5170 = vadd.f32 %v5169, %v5123
    %v5171 = vadd.f32 %v5170, %v5124
    %v5172 = vadd.f32 %v5171, %v5125
    %v5173 = vadd.f32 %v5172, %v5126
    %v5174 = vadd.f32 %v5173, %v5127
    %v5175 = vadd.f32 %v5174, %v5128
    %v5176 = vadd.f32 %v5175, %v5129
    %v5177 = vadd.f32 %v5176, %v5130
    %v5178 = vadd.f32 %v5177, %v5131
    %5179 = vadd.xlane.f32.xlu0 %v5178
    %v5180 = vpop.xlane.xlu0 %5179
    %v5181 = vrot.slane %v5180, 4
    %v5182 = vadd.f32 %v5180, %v5181
    %v5183 = vrot.slane %v5182, 2
    %v5184 = vadd.f32 %v5182, %v5183
    %v5185 = vrot.slane %v5184, 1
    %v5186 = vadd.f32 %v5184, %v5185
    %s5187 = vtos %v5186
    %s5188 = sadd.f32 %s4961, %s5187
    %v5189 = vrcp.pop 18216.0
    %s5190 = vtos %v5189
    %s5191 = smul.f32 %s5188, %s5190
    %s5192 = scalar_lea.smem [#allocation20], 6
    %5193 = sst [smem:[%s5192]] %s5191
    %s5194 = sld [smem:[#allocation2 + $0x3]]
    %s5195 = sld [smem:[#allocation6 + $0x3]]
    %v5196 = vstv %s5194
    %vm5197 = vcmp.ge.s32.totalorder %v691, %v5196
    %vm5198 = vcmp.ge.s32.totalorder %v692, %v5196
    %vm5199 = vcmp.ge.s32.totalorder %v693, %v5196
    %vm5200 = vcmp.ge.s32.totalorder %v694, %v5196
    %vm5201 = vcmp.ge.s32.totalorder %v695, %v5196
    %vm5202 = vcmp.ge.s32.totalorder %v696, %v5196
    %vm5203 = vcmp.ge.s32.totalorder %v697, %v5196
    %vm5204 = vcmp.ge.s32.totalorder %v698, %v5196
    %vm5205 = vcmp.ge.s32.totalorder %v699, %v5196
    %vm5206 = vcmp.ge.s32.totalorder %v700, %v5196
    %vm5207 = vcmp.ge.s32.totalorder %v701, %v5196
    %vm5208 = vcmp.ge.s32.totalorder %v702, %v5196
    %vm5209 = vcmp.ge.s32.totalorder %v703, %v5196
    %vm5210 = vcmp.ge.s32.totalorder %v704, %v5196
    %vm5211 = vcmp.ge.s32.totalorder %v705, %v5196
    %vm5212 = vcmp.ge.s32.totalorder %v706, %v5196
    %s5213 = sadd.s32 %s5194, 25
    %v5214 = vstv %s5213
    %vm5215 = vcmp.lt.s32.totalorder %v691, %v5214
    %vm5216 = vcmp.lt.s32.totalorder %v692, %v5214
    %vm5217 = vcmp.lt.s32.totalorder %v693, %v5214
    %vm5218 = vcmp.lt.s32.totalorder %v694, %v5214
    %vm5219 = vcmp.lt.s32.totalorder %v695, %v5214
    %vm5220 = vcmp.lt.s32.totalorder %v696, %v5214
    %vm5221 = vcmp.lt.s32.totalorder %v697, %v5214
    %vm5222 = vcmp.lt.s32.totalorder %v698, %v5214
    %vm5223 = vcmp.lt.s32.totalorder %v699, %v5214
    %vm5224 = vcmp.lt.s32.totalorder %v700, %v5214
    %vm5225 = vcmp.lt.s32.totalorder %v701, %v5214
    %vm5226 = vcmp.lt.s32.totalorder %v702, %v5214
    %vm5227 = vcmp.lt.s32.totalorder %v703, %v5214
    %vm5228 = vcmp.lt.s32.totalorder %v704, %v5214
    %vm5229 = vcmp.lt.s32.totalorder %v705, %v5214
    %vm5230 = vcmp.lt.s32.totalorder %v706, %v5214
    %vm5231 = vmand %vm5197, %vm5215
    %vm5232 = vmand %vm5198, %vm5216
    %vm5233 = vmand %vm5199, %vm5217
    %vm5234 = vmand %vm5200, %vm5218
    %vm5235 = vmand %vm5201, %vm5219
    %vm5236 = vmand %vm5202, %vm5220
    %vm5237 = vmand %vm5203, %vm5221
    %vm5238 = vmand %vm5204, %vm5222
    %vm5239 = vmand %vm5205, %vm5223
    %vm5240 = vmand %vm5206, %vm5224
    %vm5241 = vmand %vm5207, %vm5225
    %vm5242 = vmand %vm5208, %vm5226
    %vm5243 = vmand %vm5209, %vm5227
    %vm5244 = vmand %vm5210, %vm5228
    %vm5245 = vmand %vm5211, %vm5229
    %vm5246 = vmand %vm5212, %vm5230
    %v5247 = vstv %s5195
    %vm5248 = vcmp.ge.s32.totalorder %v708, %v5247
    %vm5249 = vmand %vm5231, %vm5248
    %vm5250 = vmand %vm5232, %vm5248
    %vm5251 = vmand %vm5233, %vm5248
    %vm5252 = vmand %vm5234, %vm5248
    %vm5253 = vmand %vm5235, %vm5248
    %vm5254 = vmand %vm5236, %vm5248
    %vm5255 = vmand %vm5237, %vm5248
    %vm5256 = vmand %vm5238, %vm5248
    %vm5257 = vmand %vm5239, %vm5248
    %vm5258 = vmand %vm5240, %vm5248
    %vm5259 = vmand %vm5241, %vm5248
    %vm5260 = vmand %vm5242, %vm5248
    %vm5261 = vmand %vm5243, %vm5248
    %vm5262 = vmand %vm5244, %vm5248
    %vm5263 = vmand %vm5245, %vm5248
    %vm5264 = vmand %vm5246, %vm5248
    %s5265 = sadd.s32 %s5195, 54
    %v5266 = vstv %s5265
    %vm5267 = vcmp.lt.s32.totalorder %v708, %v5266
    %vm5268 = vmand %vm5249, %vm5267
    %vm5269 = vmand %vm5250, %vm5267
    %vm5270 = vmand %vm5251, %vm5267
    %vm5271 = vmand %vm5252, %vm5267
    %vm5272 = vmand %vm5253, %vm5267
    %vm5273 = vmand %vm5254, %vm5267
    %vm5274 = vmand %vm5255, %vm5267
    %vm5275 = vmand %vm5256, %vm5267
    %vm5276 = vmand %vm5257, %vm5267
    %vm5277 = vmand %vm5258, %vm5267
    %vm5278 = vmand %vm5259, %vm5267
    %vm5279 = vmand %vm5260, %vm5267
    %vm5280 = vmand %vm5261, %vm5267
    %vm5281 = vmand %vm5262, %vm5267
    %vm5282 = vmand %vm5263, %vm5267
    %vm5283 = vmand %vm5264, %vm5267
    %v5284 = vsel %vm5268, 1, 0
    %v5285 = vsel %vm5269, 1, 0
    %v5286 = vsel %vm5270, 1, 0
    %v5287 = vsel %vm5271, 1, 0
    %v5288 = vsel %vm5272, 1, 0
    %v5289 = vsel %vm5273, 1, 0
    %v5290 = vsel %vm5274, 1, 0
    %v5291 = vsel %vm5275, 1, 0
    %v5292 = vsel %vm5276, 1, 0
    %v5293 = vsel %vm5277, 1, 0
    %v5294 = vsel %vm5278, 1, 0
    %v5295 = vsel %vm5279, 1, 0
    %v5296 = vsel %vm5280, 1, 0
    %v5297 = vsel %vm5281, 1, 0
    %v5298 = vsel %vm5282, 1, 0
    %v5299 = vsel %vm5283, 1, 0
    %vm5300 = vcmp.eq.s32.totalorder %v5284, 1
    %vm5301 = vcmp.eq.s32.totalorder %v5285, 1
    %vm5302 = vcmp.eq.s32.totalorder %v5286, 1
    %vm5303 = vcmp.eq.s32.totalorder %v5287, 1
    %vm5304 = vcmp.eq.s32.totalorder %v5288, 1
    %vm5305 = vcmp.eq.s32.totalorder %v5289, 1
    %vm5306 = vcmp.eq.s32.totalorder %v5290, 1
    %vm5307 = vcmp.eq.s32.totalorder %v5291, 1
    %vm5308 = vcmp.eq.s32.totalorder %v5292, 1
    %vm5309 = vcmp.eq.s32.totalorder %v5293, 1
    %vm5310 = vcmp.eq.s32.totalorder %v5294, 1
    %vm5311 = vcmp.eq.s32.totalorder %v5295, 1
    %vm5312 = vcmp.eq.s32.totalorder %v5296, 1
    %vm5313 = vcmp.eq.s32.totalorder %v5297, 1
    %vm5314 = vcmp.eq.s32.totalorder %v5298, 1
    %vm5315 = vcmp.eq.s32.totalorder %v5299, 1
    %v5316 = vsel %vm5300, %v485, 0.0
    %v5317 = vsel %vm5301, %v486, 0.0
    %v5318 = vsel %vm5302, %v487, 0.0
    %v5319 = vsel %vm5303, %v488, 0.0
    %v5320 = vsel %vm5304, %v489, 0.0
    %v5321 = vsel %vm5305, %v490, 0.0
    %v5322 = vsel %vm5306, %v491, 0.0
    %v5323 = vsel %vm5307, %v492, 0.0
    %v5324 = vsel %vm5308, %v493, 0.0
    %v5325 = vsel %vm5309, %v494, 0.0
    %v5326 = vsel %vm5310, %v495, 0.0
    %v5327 = vsel %vm5311, %v496, 0.0
    %v5328 = vsel %vm5312, %v497, 0.0
    %v5329 = vsel %vm5313, %v498, 0.0
    %v5330 = vsel %vm5314, %v499, 0.0
    %v5331 = vsel %vm5315, %v500, 0.0
    %v5332 = vsel %vm5300, %v501, 0.0
    %v5333 = vsel %vm5301, %v502, 0.0
    %v5334 = vsel %vm5302, %v503, 0.0
    %v5335 = vsel %vm5303, %v504, 0.0
    %v5336 = vsel %vm5304, %v505, 0.0
    %v5337 = vsel %vm5305, %v506, 0.0
    %v5338 = vsel %vm5306, %v507, 0.0
    %v5339 = vsel %vm5307, %v508, 0.0
    %v5340 = vsel %vm5308, %v509, 0.0
    %v5341 = vsel %vm5309, %v510, 0.0
    %v5342 = vsel %vm5310, %v511, 0.0
    %v5343 = vsel %vm5311, %v512, 0.0
    %v5344 = vsel %vm5312, %v513, 0.0
    %v5345 = vsel %vm5313, %v514, 0.0
    %v5346 = vsel %vm5314, %v515, 0.0
    %v5347 = vsel %vm5315, %v516, 0.0
    %v5348 = vsel %vm5300, %v517, 0.0
    %v5349 = vsel %vm5301, %v518, 0.0
    %v5350 = vsel %vm5302, %v519, 0.0
    %v5351 = vsel %vm5303, %v520, 0.0
    %v5352 = vsel %vm5304, %v521, 0.0
    %v5353 = vsel %vm5305, %v522, 0.0
    %v5354 = vsel %vm5306, %v523, 0.0
    %v5355 = vsel %vm5307, %v524, 0.0
    %v5356 = vsel %vm5308, %v525, 0.0
    %v5357 = vsel %vm5309, %v526, 0.0
    %v5358 = vsel %vm5310, %v527, 0.0
    %v5359 = vsel %vm5311, %v528, 0.0
    %v5360 = vsel %vm5312, %v529, 0.0
    %v5361 = vsel %vm5313, %v530, 0.0
    %v5362 = vsel %vm5314, %v531, 0.0
    %v5363 = vsel %vm5315, %v532, 0.0
    %v5364 = vadd.f32 %v5316, %v5317
    %v5365 = vadd.f32 %v5364, %v5318
    %v5366 = vadd.f32 %v5365, %v5319
    %v5367 = vadd.f32 %v5366, %v5320
    %v5368 = vadd.f32 %v5367, %v5321
    %v5369 = vadd.f32 %v5368, %v5322
    %v5370 = vadd.f32 %v5369, %v5323
    %v5371 = vadd.f32 %v5370, %v5324
    %v5372 = vadd.f32 %v5371, %v5325
    %v5373 = vadd.f32 %v5372, %v5326
    %v5374 = vadd.f32 %v5373, %v5327
    %v5375 = vadd.f32 %v5374, %v5328
    %v5376 = vadd.f32 %v5375, %v5329
    %v5377 = vadd.f32 %v5376, %v5330
    %v5378 = vadd.f32 %v5377, %v5331
    %v5379 = vadd.f32 %v5378, %v5332
    %v5380 = vadd.f32 %v5379, %v5333
    %v5381 = vadd.f32 %v5380, %v5334
    %v5382 = vadd.f32 %v5381, %v5335
    %v5383 = vadd.f32 %v5382, %v5336
    %v5384 = vadd.f32 %v5383, %v5337
    %v5385 = vadd.f32 %v5384, %v5338
    %v5386 = vadd.f32 %v5385, %v5339
    %v5387 = vadd.f32 %v5386, %v5340
    %v5388 = vadd.f32 %v5387, %v5341
    %v5389 = vadd.f32 %v5388, %v5342
    %v5390 = vadd.f32 %v5389, %v5343
    %v5391 = vadd.f32 %v5390, %v5344
    %v5392 = vadd.f32 %v5391, %v5345
    %v5393 = vadd.f32 %v5392, %v5346
    %v5394 = vadd.f32 %v5393, %v5347
    %v5395 = vadd.f32 %v5394, %v5348
    %v5396 = vadd.f32 %v5395, %v5349
    %v5397 = vadd.f32 %v5396, %v5350
    %v5398 = vadd.f32 %v5397, %v5351
    %v5399 = vadd.f32 %v5398, %v5352
    %v5400 = vadd.f32 %v5399, %v5353
    %v5401 = vadd.f32 %v5400, %v5354
    %v5402 = vadd.f32 %v5401, %v5355
    %v5403 = vadd.f32 %v5402, %v5356
    %v5404 = vadd.f32 %v5403, %v5357
    %v5405 = vadd.f32 %v5404, %v5358
    %v5406 = vadd.f32 %v5405, %v5359
    %v5407 = vadd.f32 %v5406, %v5360
    %v5408 = vadd.f32 %v5407, %v5361
    %v5409 = vadd.f32 %v5408, %v5362
    %v5410 = vadd.f32 %v5409, %v5363
    %5411 = vadd.xlane.f32.xlu0 %v5410
    %v5412 = vpop.xlane.xlu0 %5411
    %v5413 = vrot.slane %v5412, 4
    %v5414 = vadd.f32 %v5412, %v5413
    %v5415 = vrot.slane %v5414, 2
    %v5416 = vadd.f32 %v5414, %v5415
    %v5417 = vrot.slane %v5416, 1
    %v5418 = vadd.f32 %v5416, %v5417
    %s5419 = vtos %v5418
    %s5420 = sadd.f32 %s5419, 0.0
    %s5421 = sld [smem:[#allocation2 + $0x83]]
    %s5422 = sld [smem:[#allocation6 + $0x83]]
    %v5423 = vstv %s5421
    %vm5424 = vcmp.ge.s32.totalorder %v691, %v5423
    %vm5425 = vcmp.ge.s32.totalorder %v692, %v5423
    %vm5426 = vcmp.ge.s32.totalorder %v693, %v5423
    %vm5427 = vcmp.ge.s32.totalorder %v694, %v5423
    %vm5428 = vcmp.ge.s32.totalorder %v695, %v5423
    %vm5429 = vcmp.ge.s32.totalorder %v696, %v5423
    %vm5430 = vcmp.ge.s32.totalorder %v697, %v5423
    %vm5431 = vcmp.ge.s32.totalorder %v698, %v5423
    %vm5432 = vcmp.ge.s32.totalorder %v699, %v5423
    %vm5433 = vcmp.ge.s32.totalorder %v700, %v5423
    %vm5434 = vcmp.ge.s32.totalorder %v701, %v5423
    %vm5435 = vcmp.ge.s32.totalorder %v702, %v5423
    %vm5436 = vcmp.ge.s32.totalorder %v703, %v5423
    %vm5437 = vcmp.ge.s32.totalorder %v704, %v5423
    %vm5438 = vcmp.ge.s32.totalorder %v705, %v5423
    %vm5439 = vcmp.ge.s32.totalorder %v706, %v5423
    %s5440 = sadd.s32 %s5421, 25
    %v5441 = vstv %s5440
    %vm5442 = vcmp.lt.s32.totalorder %v691, %v5441
    %vm5443 = vcmp.lt.s32.totalorder %v692, %v5441
    %vm5444 = vcmp.lt.s32.totalorder %v693, %v5441
    %vm5445 = vcmp.lt.s32.totalorder %v694, %v5441
    %vm5446 = vcmp.lt.s32.totalorder %v695, %v5441
    %vm5447 = vcmp.lt.s32.totalorder %v696, %v5441
    %vm5448 = vcmp.lt.s32.totalorder %v697, %v5441
    %vm5449 = vcmp.lt.s32.totalorder %v698, %v5441
    %vm5450 = vcmp.lt.s32.totalorder %v699, %v5441
    %vm5451 = vcmp.lt.s32.totalorder %v700, %v5441
    %vm5452 = vcmp.lt.s32.totalorder %v701, %v5441
    %vm5453 = vcmp.lt.s32.totalorder %v702, %v5441
    %vm5454 = vcmp.lt.s32.totalorder %v703, %v5441
    %vm5455 = vcmp.lt.s32.totalorder %v704, %v5441
    %vm5456 = vcmp.lt.s32.totalorder %v705, %v5441
    %vm5457 = vcmp.lt.s32.totalorder %v706, %v5441
    %vm5458 = vmand %vm5424, %vm5442
    %vm5459 = vmand %vm5425, %vm5443
    %vm5460 = vmand %vm5426, %vm5444
    %vm5461 = vmand %vm5427, %vm5445
    %vm5462 = vmand %vm5428, %vm5446
    %vm5463 = vmand %vm5429, %vm5447
    %vm5464 = vmand %vm5430, %vm5448
    %vm5465 = vmand %vm5431, %vm5449
    %vm5466 = vmand %vm5432, %vm5450
    %vm5467 = vmand %vm5433, %vm5451
    %vm5468 = vmand %vm5434, %vm5452
    %vm5469 = vmand %vm5435, %vm5453
    %vm5470 = vmand %vm5436, %vm5454
    %vm5471 = vmand %vm5437, %vm5455
    %vm5472 = vmand %vm5438, %vm5456
    %vm5473 = vmand %vm5439, %vm5457
    %v5474 = vstv %s5422
    %vm5475 = vcmp.ge.s32.totalorder %v708, %v5474
    %vm5476 = vmand %vm5458, %vm5475
    %vm5477 = vmand %vm5459, %vm5475
    %vm5478 = vmand %vm5460, %vm5475
    %vm5479 = vmand %vm5461, %vm5475
    %vm5480 = vmand %vm5462, %vm5475
    %vm5481 = vmand %vm5463, %vm5475
    %vm5482 = vmand %vm5464, %vm5475
    %vm5483 = vmand %vm5465, %vm5475
    %vm5484 = vmand %vm5466, %vm5475
    %vm5485 = vmand %vm5467, %vm5475
    %vm5486 = vmand %vm5468, %vm5475
    %vm5487 = vmand %vm5469, %vm5475
    %vm5488 = vmand %vm5470, %vm5475
    %vm5489 = vmand %vm5471, %vm5475
    %vm5490 = vmand %vm5472, %vm5475
    %vm5491 = vmand %vm5473, %vm5475
    %s5492 = sadd.s32 %s5422, 54
    %v5493 = vstv %s5492
    %vm5494 = vcmp.lt.s32.totalorder %v708, %v5493
    %vm5495 = vmand %vm5476, %vm5494
    %vm5496 = vmand %vm5477, %vm5494
    %vm5497 = vmand %vm5478, %vm5494
    %vm5498 = vmand %vm5479, %vm5494
    %vm5499 = vmand %vm5480, %vm5494
    %vm5500 = vmand %vm5481, %vm5494
    %vm5501 = vmand %vm5482, %vm5494
    %vm5502 = vmand %vm5483, %vm5494
    %vm5503 = vmand %vm5484, %vm5494
    %vm5504 = vmand %vm5485, %vm5494
    %vm5505 = vmand %vm5486, %vm5494
    %vm5506 = vmand %vm5487, %vm5494
    %vm5507 = vmand %vm5488, %vm5494
    %vm5508 = vmand %vm5489, %vm5494
    %vm5509 = vmand %vm5490, %vm5494
    %vm5510 = vmand %vm5491, %vm5494
    %v5511 = vsel %vm5495, 1, 0
    %v5512 = vsel %vm5496, 1, 0
    %v5513 = vsel %vm5497, 1, 0
    %v5514 = vsel %vm5498, 1, 0
    %v5515 = vsel %vm5499, 1, 0
    %v5516 = vsel %vm5500, 1, 0
    %v5517 = vsel %vm5501, 1, 0
    %v5518 = vsel %vm5502, 1, 0
    %v5519 = vsel %vm5503, 1, 0
    %v5520 = vsel %vm5504, 1, 0
    %v5521 = vsel %vm5505, 1, 0
    %v5522 = vsel %vm5506, 1, 0
    %v5523 = vsel %vm5507, 1, 0
    %v5524 = vsel %vm5508, 1, 0
    %v5525 = vsel %vm5509, 1, 0
    %v5526 = vsel %vm5510, 1, 0
    %vm5527 = vcmp.eq.s32.totalorder %v5511, 1
    %vm5528 = vcmp.eq.s32.totalorder %v5512, 1
    %vm5529 = vcmp.eq.s32.totalorder %v5513, 1
    %vm5530 = vcmp.eq.s32.totalorder %v5514, 1
    %vm5531 = vcmp.eq.s32.totalorder %v5515, 1
    %vm5532 = vcmp.eq.s32.totalorder %v5516, 1
    %vm5533 = vcmp.eq.s32.totalorder %v5517, 1
    %vm5534 = vcmp.eq.s32.totalorder %v5518, 1
    %vm5535 = vcmp.eq.s32.totalorder %v5519, 1
    %vm5536 = vcmp.eq.s32.totalorder %v5520, 1
    %vm5537 = vcmp.eq.s32.totalorder %v5521, 1
    %vm5538 = vcmp.eq.s32.totalorder %v5522, 1
    %vm5539 = vcmp.eq.s32.totalorder %v5523, 1
    %vm5540 = vcmp.eq.s32.totalorder %v5524, 1
    %vm5541 = vcmp.eq.s32.totalorder %v5525, 1
    %vm5542 = vcmp.eq.s32.totalorder %v5526, 1
    %v5543 = vsel %vm5527, %v533, 0.0
    %v5544 = vsel %vm5528, %v534, 0.0
    %v5545 = vsel %vm5529, %v535, 0.0
    %v5546 = vsel %vm5530, %v536, 0.0
    %v5547 = vsel %vm5531, %v537, 0.0
    %v5548 = vsel %vm5532, %v538, 0.0
    %v5549 = vsel %vm5533, %v539, 0.0
    %v5550 = vsel %vm5534, %v540, 0.0
    %v5551 = vsel %vm5535, %v541, 0.0
    %v5552 = vsel %vm5536, %v542, 0.0
    %v5553 = vsel %vm5537, %v543, 0.0
    %v5554 = vsel %vm5538, %v544, 0.0
    %v5555 = vsel %vm5539, %v545, 0.0
    %v5556 = vsel %vm5540, %v546, 0.0
    %v5557 = vsel %vm5541, %v547, 0.0
    %v5558 = vsel %vm5542, %v548, 0.0
    %v5559 = vsel %vm5527, %v549, 0.0
    %v5560 = vsel %vm5528, %v550, 0.0
    %v5561 = vsel %vm5529, %v551, 0.0
    %v5562 = vsel %vm5530, %v552, 0.0
    %v5563 = vsel %vm5531, %v553, 0.0
    %v5564 = vsel %vm5532, %v554, 0.0
    %v5565 = vsel %vm5533, %v555, 0.0
    %v5566 = vsel %vm5534, %v556, 0.0
    %v5567 = vsel %vm5535, %v557, 0.0
    %v5568 = vsel %vm5536, %v558, 0.0
    %v5569 = vsel %vm5537, %v559, 0.0
    %v5570 = vsel %vm5538, %v560, 0.0
    %v5571 = vsel %vm5539, %v561, 0.0
    %v5572 = vsel %vm5540, %v562, 0.0
    %v5573 = vsel %vm5541, %v563, 0.0
    %v5574 = vsel %vm5542, %v564, 0.0
    %v5575 = vsel %vm5527, %v565, 0.0
    %v5576 = vsel %vm5528, %v566, 0.0
    %v5577 = vsel %vm5529, %v567, 0.0
    %v5578 = vsel %vm5530, %v568, 0.0
    %v5579 = vsel %vm5531, %v569, 0.0
    %v5580 = vsel %vm5532, %v570, 0.0
    %v5581 = vsel %vm5533, %v571, 0.0
    %v5582 = vsel %vm5534, %v572, 0.0
    %v5583 = vsel %vm5535, %v573, 0.0
    %v5584 = vsel %vm5536, %v574, 0.0
    %v5585 = vsel %vm5537, %v575, 0.0
    %v5586 = vsel %vm5538, %v576, 0.0
    %v5587 = vsel %vm5539, %v577, 0.0
    %v5588 = vsel %vm5540, %v578, 0.0
    %v5589 = vsel %vm5541, %v579, 0.0
    %v5590 = vsel %vm5542, %v580, 0.0
    %v5591 = vadd.f32 %v5543, %v5544
    %v5592 = vadd.f32 %v5591, %v5545
    %v5593 = vadd.f32 %v5592, %v5546
    %v5594 = vadd.f32 %v5593, %v5547
    %v5595 = vadd.f32 %v5594, %v5548
    %v5596 = vadd.f32 %v5595, %v5549
    %v5597 = vadd.f32 %v5596, %v5550
    %v5598 = vadd.f32 %v5597, %v5551
    %v5599 = vadd.f32 %v5598, %v5552
    %v5600 = vadd.f32 %v5599, %v5553
    %v5601 = vadd.f32 %v5600, %v5554
    %v5602 = vadd.f32 %v5601, %v5555
    %v5603 = vadd.f32 %v5602, %v5556
    %v5604 = vadd.f32 %v5603, %v5557
    %v5605 = vadd.f32 %v5604, %v5558
    %v5606 = vadd.f32 %v5605, %v5559
    %v5607 = vadd.f32 %v5606, %v5560
    %v5608 = vadd.f32 %v5607, %v5561
    %v5609 = vadd.f32 %v5608, %v5562
    %v5610 = vadd.f32 %v5609, %v5563
    %v5611 = vadd.f32 %v5610, %v5564
    %v5612 = vadd.f32 %v5611, %v5565
    %v5613 = vadd.f32 %v5612, %v5566
    %v5614 = vadd.f32 %v5613, %v5567
    %v5615 = vadd.f32 %v5614, %v5568
    %v5616 = vadd.f32 %v5615, %v5569
    %v5617 = vadd.f32 %v5616, %v5570
    %v5618 = vadd.f32 %v5617, %v5571
    %v5619 = vadd.f32 %v5618, %v5572
    %v5620 = vadd.f32 %v5619, %v5573
    %v5621 = vadd.f32 %v5620, %v5574
    %v5622 = vadd.f32 %v5621, %v5575
    %v5623 = vadd.f32 %v5622, %v5576
    %v5624 = vadd.f32 %v5623, %v5577
    %v5625 = vadd.f32 %v5624, %v5578
    %v5626 = vadd.f32 %v5625, %v5579
    %v5627 = vadd.f32 %v5626, %v5580
    %v5628 = vadd.f32 %v5627, %v5581
    %v5629 = vadd.f32 %v5628, %v5582
    %v5630 = vadd.f32 %v5629, %v5583
    %v5631 = vadd.f32 %v5630, %v5584
    %v5632 = vadd.f32 %v5631, %v5585
    %v5633 = vadd.f32 %v5632, %v5586
    %v5634 = vadd.f32 %v5633, %v5587
    %v5635 = vadd.f32 %v5634, %v5588
    %v5636 = vadd.f32 %v5635, %v5589
    %v5637 = vadd.f32 %v5636, %v5590
    %5638 = vadd.xlane.f32.xlu0 %v5637
    %v5639 = vpop.xlane.xlu0 %5638
    %v5640 = vrot.slane %v5639, 4
    %v5641 = vadd.f32 %v5639, %v5640
    %v5642 = vrot.slane %v5641, 2
    %v5643 = vadd.f32 %v5641, %v5642
    %v5644 = vrot.slane %v5643, 1
    %v5645 = vadd.f32 %v5643, %v5644
    %s5646 = vtos %v5645
    %s5647 = sadd.f32 %s5420, %s5646
    %v5648 = vrcp.pop 8100.0
    %s5649 = vtos %v5648
    %s5650 = smul.f32 %s5647, %s5649
    %s5651 = scalar_lea.smem [#allocation20], 7
    %5652 = sst [smem:[%s5651]] %s5650
    %v5653 = vld [vmem:[#allocation12] sm:$0xff]
    %v5654 = vld [vmem:[#allocation12 + $0x8] sm:$0xff]
    %v5655 = vld [vmem:[#allocation12 + $0x10] sm:$0xff]
    %v5656 = vld [vmem:[#allocation12 + $0x18] sm:$0xff]
    %v5657 = vld [vmem:[#allocation12 + $0x20] sm:$0xff]
    %v5658 = vld [vmem:[#allocation12 + $0x28] sm:$0xff]
    %v5659 = vld [vmem:[#allocation12 + $0x30] sm:$0xff]
    %v5660 = vld [vmem:[#allocation12 + $0x38] sm:$0xff]
    %v5661 = vld [vmem:[#allocation12 + $0x40] sm:$0xff]
    %v5662 = vld [vmem:[#allocation12 + $0x48] sm:$0xff]
    %v5663 = vld [vmem:[#allocation12 + $0x50] sm:$0xff]
    %v5664 = vld [vmem:[#allocation12 + $0x58] sm:$0xff]
    %v5665 = vld [vmem:[#allocation12 + $0x60] sm:$0xff]
    %v5666 = vld [vmem:[#allocation12 + $0x68] sm:$0xff]
    %v5667 = vld [vmem:[#allocation12 + $0x70] sm:$0xff]
    %v5668 = vld [vmem:[#allocation12 + $0x78] sm:$0xff]
    %v5669 = vld [vmem:[#allocation12 + $0x80] sm:$0xff]
    %v5670 = vld [vmem:[#allocation12 + $0x88] sm:$0xff]
    %v5671 = vld [vmem:[#allocation12 + $0x90] sm:$0xff]
    %v5672 = vld [vmem:[#allocation12 + $0x98] sm:$0xff]
    %v5673 = vld [vmem:[#allocation12 + $0xa0] sm:$0xff]
    %v5674 = vld [vmem:[#allocation12 + $0xa8] sm:$0xff]
    %v5675 = vld [vmem:[#allocation12 + $0xb0] sm:$0xff]
    %v5676 = vld [vmem:[#allocation12 + $0xb8] sm:$0xff]
    %v5677 = vld [vmem:[#allocation12 + $0xc0] sm:$0xff]
    %v5678 = vld [vmem:[#allocation12 + $0xc8] sm:$0xff]
    %v5679 = vld [vmem:[#allocation12 + $0xd0] sm:$0xff]
    %v5680 = vld [vmem:[#allocation12 + $0xd8] sm:$0xff]
    %v5681 = vld [vmem:[#allocation12 + $0xe0] sm:$0xff]
    %v5682 = vld [vmem:[#allocation12 + $0xe8] sm:$0xff]
    %v5683 = vld [vmem:[#allocation12 + $0xf0] sm:$0xff]
    %v5684 = vld [vmem:[#allocation12 + $0xf8] sm:$0xff]
    %v5685 = vld [vmem:[#allocation12 + $0x100] sm:$0xff]
    %v5686 = vld [vmem:[#allocation12 + $0x108] sm:$0xff]
    %v5687 = vld [vmem:[#allocation12 + $0x110] sm:$0xff]
    %v5688 = vld [vmem:[#allocation12 + $0x118] sm:$0xff]
    %v5689 = vld [vmem:[#allocation12 + $0x120] sm:$0xff]
    %v5690 = vld [vmem:[#allocation12 + $0x128] sm:$0xff]
    %v5691 = vld [vmem:[#allocation12 + $0x130] sm:$0xff]
    %v5692 = vld [vmem:[#allocation12 + $0x138] sm:$0xff]
    %v5693 = vld [vmem:[#allocation12 + $0x140] sm:$0xff]
    %v5694 = vld [vmem:[#allocation12 + $0x148] sm:$0xff]
    %v5695 = vld [vmem:[#allocation12 + $0x150] sm:$0xff]
    %v5696 = vld [vmem:[#allocation12 + $0x158] sm:$0xff]
    %v5697 = vld [vmem:[#allocation12 + $0x160] sm:$0xff]
    %v5698 = vld [vmem:[#allocation12 + $0x168] sm:$0xff]
    %v5699 = vld [vmem:[#allocation12 + $0x170] sm:$0xff]
    %v5700 = vld [vmem:[#allocation12 + $0x178] sm:$0xff]
    %v5701 = vld [vmem:[#allocation15] sm:$0xff]
    %v5702 = vld [vmem:[#allocation15 + $0x8] sm:$0xff]
    %v5703 = vld [vmem:[#allocation15 + $0x10] sm:$0xff]
    %v5704 = vld [vmem:[#allocation15 + $0x18] sm:$0xff]
    %v5705 = vld [vmem:[#allocation15 + $0x20] sm:$0xff]
    %v5706 = vld [vmem:[#allocation15 + $0x28] sm:$0xff]
    %v5707 = vld [vmem:[#allocation15 + $0x30] sm:$0xff]
    %v5708 = vld [vmem:[#allocation15 + $0x38] sm:$0xff]
    %v5709 = vld [vmem:[#allocation15 + $0x40] sm:$0xff]
    %v5710 = vld [vmem:[#allocation15 + $0x48] sm:$0xff]
    %v5711 = vld [vmem:[#allocation15 + $0x50] sm:$0xff]
    %v5712 = vld [vmem:[#allocation15 + $0x58] sm:$0xff]
    %v5713 = vld [vmem:[#allocation15 + $0x60] sm:$0xff]
    %v5714 = vld [vmem:[#allocation15 + $0x68] sm:$0xff]
    %v5715 = vld [vmem:[#allocation15 + $0x70] sm:$0xff]
    %v5716 = vld [vmem:[#allocation15 + $0x78] sm:$0xff]
    %v5717 = vld [vmem:[#allocation15 + $0x80] sm:$0xff]
    %v5718 = vld [vmem:[#allocation15 + $0x88] sm:$0xff]
    %v5719 = vld [vmem:[#allocation15 + $0x90] sm:$0xff]
    %v5720 = vld [vmem:[#allocation15 + $0x98] sm:$0xff]
    %v5721 = vld [vmem:[#allocation15 + $0xa0] sm:$0xff]
    %v5722 = vld [vmem:[#allocation15 + $0xa8] sm:$0xff]
    %v5723 = vld [vmem:[#allocation15 + $0xb0] sm:$0xff]
    %v5724 = vld [vmem:[#allocation15 + $0xb8] sm:$0xff]
    %v5725 = vld [vmem:[#allocation14] sm:$0xff]
    %v5726 = vld [vmem:[#allocation14 + $0x8] sm:$0xff]
    %v5727 = vld [vmem:[#allocation14 + $0x10] sm:$0xff]
    %v5728 = vld [vmem:[#allocation14 + $0x18] sm:$0xff]
    %v5729 = vld [vmem:[#allocation14 + $0x20] sm:$0xff]
    %v5730 = vld [vmem:[#allocation14 + $0x28] sm:$0xff]
    %v5731 = vld [vmem:[#allocation14 + $0x30] sm:$0xff]
    %v5732 = vld [vmem:[#allocation14 + $0x38] sm:$0xff]
    %v5733 = vld [vmem:[#allocation14 + $0x40] sm:$0xff]
    %v5734 = vld [vmem:[#allocation14 + $0x48] sm:$0xff]
    %v5735 = vld [vmem:[#allocation14 + $0x50] sm:$0xff]
    %v5736 = vld [vmem:[#allocation14 + $0x58] sm:$0xff]
    %v5737 = vld [vmem:[#allocation14 + $0x60] sm:$0xff]
    %v5738 = vld [vmem:[#allocation14 + $0x68] sm:$0xff]
    %v5739 = vld [vmem:[#allocation14 + $0x70] sm:$0xff]
    %v5740 = vld [vmem:[#allocation14 + $0x78] sm:$0xff]
    %v5741 = vld [vmem:[#allocation14 + $0x80] sm:$0xff]
    %v5742 = vld [vmem:[#allocation14 + $0x88] sm:$0xff]
    %v5743 = vld [vmem:[#allocation14 + $0x90] sm:$0xff]
    %v5744 = vld [vmem:[#allocation14 + $0x98] sm:$0xff]
    %v5745 = vld [vmem:[#allocation14 + $0xa0] sm:$0xff]
    %v5746 = vld [vmem:[#allocation14 + $0xa8] sm:$0xff]
    %v5747 = vld [vmem:[#allocation14 + $0xb0] sm:$0xff]
    %v5748 = vld [vmem:[#allocation14 + $0xb8] sm:$0xff]
    %v5749 = vld [vmem:[#allocation14 + $0xc0] sm:$0xff]
    %v5750 = vld [vmem:[#allocation14 + $0xc8] sm:$0xff]
    %v5751 = vld [vmem:[#allocation14 + $0xd0] sm:$0xff]
    %v5752 = vld [vmem:[#allocation14 + $0xd8] sm:$0xff]
    %v5753 = vld [vmem:[#allocation14 + $0xe0] sm:$0xff]
    %v5754 = vld [vmem:[#allocation14 + $0xe8] sm:$0xff]
    %v5755 = vld [vmem:[#allocation14 + $0xf0] sm:$0xff]
    %v5756 = vld [vmem:[#allocation14 + $0xf8] sm:$0xff]
    %v5757 = vld [vmem:[#allocation14 + $0x100] sm:$0xff]
    %v5758 = vld [vmem:[#allocation14 + $0x108] sm:$0xff]
    %v5759 = vld [vmem:[#allocation14 + $0x110] sm:$0xff]
    %v5760 = vld [vmem:[#allocation14 + $0x118] sm:$0xff]
    %v5761 = vld [vmem:[#allocation14 + $0x120] sm:$0xff]
    %v5762 = vld [vmem:[#allocation14 + $0x128] sm:$0xff]
    %v5763 = vld [vmem:[#allocation14 + $0x130] sm:$0xff]
    %v5764 = vld [vmem:[#allocation14 + $0x138] sm:$0xff]
    %v5765 = vld [vmem:[#allocation14 + $0x140] sm:$0xff]
    %v5766 = vld [vmem:[#allocation14 + $0x148] sm:$0xff]
    %v5767 = vld [vmem:[#allocation14 + $0x150] sm:$0xff]
    %v5768 = vld [vmem:[#allocation14 + $0x158] sm:$0xff]
    %v5769 = vld [vmem:[#allocation14 + $0x160] sm:$0xff]
    %v5770 = vld [vmem:[#allocation14 + $0x168] sm:$0xff]
    %v5771 = vld [vmem:[#allocation14 + $0x170] sm:$0xff]
    %v5772 = vld [vmem:[#allocation14 + $0x178] sm:$0xff]
    %v5773 = vsub.f32 %v5653, %v5725
    %v5774 = vsub.f32 %v5654, %v5726
    %v5775 = vsub.f32 %v5655, %v5727
    %v5776 = vsub.f32 %v5656, %v5728
    %v5777 = vsub.f32 %v5657, %v5729
    %v5778 = vsub.f32 %v5658, %v5730
    %v5779 = vsub.f32 %v5659, %v5731
    %v5780 = vsub.f32 %v5660, %v5732
    %v5781 = vsub.f32 %v5661, %v5733
    %v5782 = vsub.f32 %v5662, %v5734
    %v5783 = vsub.f32 %v5663, %v5735
    %v5784 = vsub.f32 %v5664, %v5736
    %v5785 = vsub.f32 %v5665, %v5737
    %v5786 = vsub.f32 %v5666, %v5738
    %v5787 = vsub.f32 %v5667, %v5739
    %v5788 = vsub.f32 %v5668, %v5740
    %v5789 = vsub.f32 %v5669, %v5741
    %v5790 = vsub.f32 %v5670, %v5742
    %v5791 = vsub.f32 %v5671, %v5743
    %v5792 = vsub.f32 %v5672, %v5744
    %v5793 = vsub.f32 %v5673, %v5745
    %v5794 = vsub.f32 %v5674, %v5746
    %v5795 = vsub.f32 %v5675, %v5747
    %v5796 = vsub.f32 %v5676, %v5748
    %v5797 = vsub.f32 %v5677, %v5749
    %v5798 = vsub.f32 %v5678, %v5750
    %v5799 = vsub.f32 %v5679, %v5751
    %v5800 = vsub.f32 %v5680, %v5752
    %v5801 = vsub.f32 %v5681, %v5753
    %v5802 = vsub.f32 %v5682, %v5754
    %v5803 = vsub.f32 %v5683, %v5755
    %v5804 = vsub.f32 %v5684, %v5756
    %v5805 = vsub.f32 %v5685, %v5757
    %v5806 = vsub.f32 %v5686, %v5758
    %v5807 = vsub.f32 %v5687, %v5759
    %v5808 = vsub.f32 %v5688, %v5760
    %v5809 = vsub.f32 %v5689, %v5761
    %v5810 = vsub.f32 %v5690, %v5762
    %v5811 = vsub.f32 %v5691, %v5763
    %v5812 = vsub.f32 %v5692, %v5764
    %v5813 = vsub.f32 %v5693, %v5765
    %v5814 = vsub.f32 %v5694, %v5766
    %v5815 = vsub.f32 %v5695, %v5767
    %v5816 = vsub.f32 %v5696, %v5768
    %v5817 = vsub.f32 %v5697, %v5769
    %v5818 = vsub.f32 %v5698, %v5770
    %v5819 = vsub.f32 %v5699, %v5771
    %v5820 = vsub.f32 %v5700, %v5772
    %v5821 = vand.u32 2147483647, %v5773
    %v5822 = vand.u32 2147483647, %v5774
    %v5823 = vand.u32 2147483647, %v5775
    %v5824 = vand.u32 2147483647, %v5776
    %v5825 = vand.u32 2147483647, %v5777
    %v5826 = vand.u32 2147483647, %v5778
    %v5827 = vand.u32 2147483647, %v5779
    %v5828 = vand.u32 2147483647, %v5780
    %v5829 = vand.u32 2147483647, %v5781
    %v5830 = vand.u32 2147483647, %v5782
    %v5831 = vand.u32 2147483647, %v5783
    %v5832 = vand.u32 2147483647, %v5784
    %v5833 = vand.u32 2147483647, %v5785
    %v5834 = vand.u32 2147483647, %v5786
    %v5835 = vand.u32 2147483647, %v5787
    %v5836 = vand.u32 2147483647, %v5788
    %v5837 = vand.u32 2147483647, %v5789
    %v5838 = vand.u32 2147483647, %v5790
    %v5839 = vand.u32 2147483647, %v5791
    %v5840 = vand.u32 2147483647, %v5792
    %v5841 = vand.u32 2147483647, %v5793
    %v5842 = vand.u32 2147483647, %v5794
    %v5843 = vand.u32 2147483647, %v5795
    %v5844 = vand.u32 2147483647, %v5796
    %v5845 = vand.u32 2147483647, %v5797
    %v5846 = vand.u32 2147483647, %v5798
    %v5847 = vand.u32 2147483647, %v5799
    %v5848 = vand.u32 2147483647, %v5800
    %v5849 = vand.u32 2147483647, %v5801
    %v5850 = vand.u32 2147483647, %v5802
    %v5851 = vand.u32 2147483647, %v5803
    %v5852 = vand.u32 2147483647, %v5804
    %v5853 = vand.u32 2147483647, %v5805
    %v5854 = vand.u32 2147483647, %v5806
    %v5855 = vand.u32 2147483647, %v5807
    %v5856 = vand.u32 2147483647, %v5808
    %v5857 = vand.u32 2147483647, %v5809
    %v5858 = vand.u32 2147483647, %v5810
    %v5859 = vand.u32 2147483647, %v5811
    %v5860 = vand.u32 2147483647, %v5812
    %v5861 = vand.u32 2147483647, %v5813
    %v5862 = vand.u32 2147483647, %v5814
    %v5863 = vand.u32 2147483647, %v5815
    %v5864 = vand.u32 2147483647, %v5816
    %v5865 = vand.u32 2147483647, %v5817
    %v5866 = vand.u32 2147483647, %v5818
    %v5867 = vand.u32 2147483647, %v5819
    %v5868 = vand.u32 2147483647, %v5820
    %vm5869 = vcmask 523264
    %v5870 = vsel %vm5869, %v5821, 0.0
    %v5871 = vsel %vm5869, %v5822, 0.0
    %v5872 = vadd.f32 %v5870, %v5871
    %v5873 = vsel %vm5869, %v5823, 0.0
    %v5874 = vadd.f32 %v5872, %v5873
    %v5875 = vsel %vm5869, %v5824, 0.0
    %v5876 = vadd.f32 %v5874, %v5875
    %v5877 = vsel %vm5869, %v5825, 0.0
    %v5878 = vadd.f32 %v5876, %v5877
    %v5879 = vsel %vm5869, %v5826, 0.0
    %v5880 = vadd.f32 %v5878, %v5879
    %v5881 = vsel %vm5869, %v5827, 0.0
    %v5882 = vadd.f32 %v5880, %v5881
    %v5883 = vsel %vm5869, %v5828, 0.0
    %v5884 = vadd.f32 %v5882, %v5883
    %v5885 = vsel %vm5869, %v5829, 0.0
    %v5886 = vadd.f32 %v5884, %v5885
    %v5887 = vsel %vm5869, %v5830, 0.0
    %v5888 = vadd.f32 %v5886, %v5887
    %v5889 = vsel %vm5869, %v5831, 0.0
    %v5890 = vadd.f32 %v5888, %v5889
    %v5891 = vsel %vm5869, %v5832, 0.0
    %v5892 = vadd.f32 %v5890, %v5891
    %v5893 = vsel %vm5869, %v5833, 0.0
    %v5894 = vadd.f32 %v5892, %v5893
    %v5895 = vsel %vm5869, %v5834, 0.0
    %v5896 = vadd.f32 %v5894, %v5895
    %v5897 = vsel %vm5869, %v5835, 0.0
    %v5898 = vadd.f32 %v5896, %v5897
    %v5899 = vsel %vm5869, %v5836, 0.0
    %v5900 = vadd.f32 %v5898, %v5899
    %v5901 = vsel %vm5869, %v5837, 0.0
    %v5902 = vadd.f32 %v5900, %v5901
    %v5903 = vsel %vm5869, %v5838, 0.0
    %v5904 = vadd.f32 %v5902, %v5903
    %v5905 = vsel %vm5869, %v5839, 0.0
    %v5906 = vadd.f32 %v5904, %v5905
    %v5907 = vsel %vm5869, %v5840, 0.0
    %v5908 = vadd.f32 %v5906, %v5907
    %v5909 = vsel %vm5869, %v5841, 0.0
    %v5910 = vadd.f32 %v5908, %v5909
    %v5911 = vsel %vm5869, %v5842, 0.0
    %v5912 = vadd.f32 %v5910, %v5911
    %v5913 = vsel %vm5869, %v5843, 0.0
    %v5914 = vadd.f32 %v5912, %v5913
    %v5915 = vsel %vm5869, %v5844, 0.0
    %v5916 = vadd.f32 %v5914, %v5915
    %v5917 = vsel %vm5869, %v5845, 0.0
    %v5918 = vadd.f32 %v5916, %v5917
    %v5919 = vsel %vm5869, %v5846, 0.0
    %v5920 = vadd.f32 %v5918, %v5919
    %v5921 = vsel %vm5869, %v5847, 0.0
    %v5922 = vadd.f32 %v5920, %v5921
    %v5923 = vsel %vm5869, %v5848, 0.0
    %v5924 = vadd.f32 %v5922, %v5923
    %v5925 = vsel %vm5869, %v5849, 0.0
    %v5926 = vadd.f32 %v5924, %v5925
    %v5927 = vsel %vm5869, %v5850, 0.0
    %v5928 = vadd.f32 %v5926, %v5927
    %v5929 = vsel %vm5869, %v5851, 0.0
    %v5930 = vadd.f32 %v5928, %v5929
    %v5931 = vsel %vm5869, %v5852, 0.0
    %v5932 = vadd.f32 %v5930, %v5931
    %v5933 = vsel %vm5869, %v5853, 0.0
    %v5934 = vadd.f32 %v5932, %v5933
    %v5935 = vsel %vm5869, %v5854, 0.0
    %v5936 = vadd.f32 %v5934, %v5935
    %v5937 = vsel %vm5869, %v5855, 0.0
    %v5938 = vadd.f32 %v5936, %v5937
    %v5939 = vsel %vm5869, %v5856, 0.0
    %v5940 = vadd.f32 %v5938, %v5939
    %v5941 = vsel %vm5869, %v5857, 0.0
    %v5942 = vadd.f32 %v5940, %v5941
    %v5943 = vsel %vm5869, %v5858, 0.0
    %v5944 = vadd.f32 %v5942, %v5943
    %v5945 = vsel %vm5869, %v5859, 0.0
    %v5946 = vadd.f32 %v5944, %v5945
    %v5947 = vsel %vm5869, %v5860, 0.0
    %v5948 = vadd.f32 %v5946, %v5947
    %v5949 = vsel %vm5869, %v5861, 0.0
    %v5950 = vadd.f32 %v5948, %v5949
    %v5951 = vsel %vm5869, %v5862, 0.0
    %v5952 = vadd.f32 %v5950, %v5951
    %v5953 = vsel %vm5869, %v5863, 0.0
    %v5954 = vadd.f32 %v5952, %v5953
    %v5955 = vsel %vm5869, %v5864, 0.0
    %v5956 = vadd.f32 %v5954, %v5955
    %v5957 = vsel %vm5869, %v5865, 0.0
    %v5958 = vadd.f32 %v5956, %v5957
    %v5959 = vsel %vm5869, %v5866, 0.0
    %v5960 = vadd.f32 %v5958, %v5959
    %v5961 = vsel %vm5869, %v5867, 0.0
    %v5962 = vadd.f32 %v5960, %v5961
    %v5963 = vsel %vm5869, %v5868, 0.0
    %v5964 = vadd.f32 %v5962, %v5963
    %5965 = vadd.xlane.f32.xlu0 %v5964
    %v5966 = vpop.xlane.xlu0 %5965
    %v5967 = vrot.slane %v5966, 4
    %v5968 = vadd.f32 %v5966, %v5967
    %v5969 = vrot.slane %v5968, 2
    %v5970 = vadd.f32 %v5968, %v5969
    %v5971 = vrot.slane %v5970, 1
    %v5972 = vadd.f32 %v5970, %v5971
    %s5973 = vtos %v5972
    %v5974 = vrcp.pop 24576.0
    %s5975 = vtos %v5974
    %s5976 = smul.f32 %s5973, %s5975
    %s5977 = scalar_lea.smem [#allocation20], 8
    %5978 = sst [smem:[%s5977]] %s5976
    %vm5979 = vcmp.eq.s32.totalorder %v709, 63
    %vm5980 = vcmp.eq.s32.totalorder %v710, 63
    %vm5981 = vcmp.eq.s32.totalorder %v711, 63
    %vm5982 = vcmp.eq.s32.totalorder %v712, 63
    %vm5983 = vcmp.eq.s32.totalorder %v713, 63
    %vm5984 = vcmp.eq.s32.totalorder %v714, 63
    %vm5985 = vcmp.eq.s32.totalorder %v715, 63
    %vm5986 = vcmp.eq.s32.totalorder %v716, 63
    %v5987 = vsel %vm5979, 1, 0
    %v5988 = vsel %vm5980, 1, 0
    %v5989 = vsel %vm5981, 1, 0
    %v5990 = vsel %vm5982, 1, 0
    %v5991 = vsel %vm5983, 1, 0
    %v5992 = vsel %vm5984, 1, 0
    %v5993 = vsel %vm5985, 1, 0
    %v5994 = vsel %vm5986, 1, 0
    %v5995 = vcvt.s32.f32 %v5987
    %v5996 = vcvt.s32.f32 %v5988
    %v5997 = vcvt.s32.f32 %v5989
    %v5998 = vcvt.s32.f32 %v5990
    %v5999 = vcvt.s32.f32 %v5991
    %v6000 = vcvt.s32.f32 %v5992
    %v6001 = vcvt.s32.f32 %v5993
    %v6002 = vcvt.s32.f32 %v5994
    %v6004 = vsel %vm5869, %v5653, 0
    %v6007 = vsel %vm5869, %v5654, 0
    %v6010 = vsel %vm5869, %v5655, 0
    %v6013 = vsel %vm5869, %v5656, 0
    %v6016 = vsel %vm5869, %v5657, 0
    %v6019 = vsel %vm5869, %v5658, 0
    %v6022 = vsel %vm5869, %v5659, 0
    %v6025 = vsel %vm5869, %v5660, 0
    %v6028 = vsel %vm5869, %v5661, 0
    %v6031 = vsel %vm5869, %v5662, 0
    %v6034 = vsel %vm5869, %v5663, 0
    %v6037 = vsel %vm5869, %v5664, 0
    %v6040 = vsel %vm5869, %v5665, 0
    %v6043 = vsel %vm5869, %v5666, 0
    %v6046 = vsel %vm5869, %v5667, 0
    %v6049 = vsel %vm5869, %v5668, 0
    %v6052 = vsel %vm5869, %v5669, 0
    %v6055 = vsel %vm5869, %v5670, 0
    %v6058 = vsel %vm5869, %v5671, 0
    %v6061 = vsel %vm5869, %v5672, 0
    %v6064 = vsel %vm5869, %v5673, 0
    %v6067 = vsel %vm5869, %v5674, 0
    %v6070 = vsel %vm5869, %v5675, 0
    %v6073 = vsel %vm5869, %v5676, 0
    %v6076 = vsel %vm5869, %v5677, 0
    %v6079 = vsel %vm5869, %v5678, 0
    %v6082 = vsel %vm5869, %v5679, 0
    %v6085 = vsel %vm5869, %v5680, 0
    %v6088 = vsel %vm5869, %v5681, 0
    %v6091 = vsel %vm5869, %v5682, 0
    %v6094 = vsel %vm5869, %v5683, 0
    %v6097 = vsel %vm5869, %v5684, 0
    %v6100 = vsel %vm5869, %v5685, 0
    %v6103 = vsel %vm5869, %v5686, 0
    %v6106 = vsel %vm5869, %v5687, 0
    %v6109 = vsel %vm5869, %v5688, 0
    %v6112 = vsel %vm5869, %v5689, 0
    %v6115 = vsel %vm5869, %v5690, 0
    %v6118 = vsel %vm5869, %v5691, 0
    %v6121 = vsel %vm5869, %v5692, 0
    %v6124 = vsel %vm5869, %v5693, 0
    %v6127 = vsel %vm5869, %v5694, 0
    %v6130 = vsel %vm5869, %v5695, 0
    %v6133 = vsel %vm5869, %v5696, 0
    %v6136 = vsel %vm5869, %v5697, 0
    %v6139 = vsel %vm5869, %v5698, 0
    %v6142 = vsel %vm5869, %v5699, 0
    %v6145 = vsel %vm5869, %v5700, 0
    %6147 = vmatprep.subr.mxu0 0.0
    %6148 = vmatpush1.msra.mxu0 0.0
    %6149 = vmatprep.subr.mxu0 0.0
    %6150 = vmatpush1.msra.mxu0 0.0
    %6151 = vmatprep.subr.mxu0 0.0
    %6152 = vmatpush1.msra.mxu0 0.0
    %6153 = vmatprep.subr.mxu0 0.0
    %6154 = vmatpush1.msra.mxu0 0.0
    %6155 = vmatprep.subr.mxu0 0.0
    %6156 = vmatpush1.msra.mxu0 0.0
    %6157 = vmatprep.subr.mxu0 0.0
    %6158 = vmatpush1.msra.mxu0 0.0
    %6159 = vmatprep.subr.mxu0 0.0
    %6160 = vmatpush1.msra.mxu0 0.0
    %6161 = vmatprep.subr.mxu0 0.0
    %6162 = vmatpush1.msra.mxu0 0.0
    %6163 = vmatprep.subr.mxu0 0.0
    %6164 = vmatpush1.msra.mxu0 %v6002
    %6165 = vmatprep.subr.mxu0 0.0
    %6166 = vmatpush1.msra.mxu0 %v6001
    %6167 = vmatprep.subr.mxu0 0.0
    %6168 = vmatpush1.msra.mxu0 %v6000
    %6169 = vmatprep.subr.mxu0 0.0
    %6170 = vmatpush1.msra.mxu0 %v5999
    %6171 = vmatprep.subr.mxu0 0.0
    %6172 = vmatpush1.msra.mxu0 %v5998
    %6173 = vmatprep.subr.mxu0 0.0
    %6174 = vmatpush1.msra.mxu0 %v5997
    %6175 = vmatprep.subr.mxu0 0.0
    %6176 = vmatpush1.msra.mxu0 %v5996
    %6177 = vmatprep.subr.mxu0 0.0
    %6178 = vmatpush1.msra.mxu0 %v5995
    %6179 = vmatprep.subr.mxu0 0.0
    %6180 = vmatpush2.msra.mxu0 0.0
    %6181 = vmatprep.subr.mxu0 0.0
    %6182 = vmatpush2.msra.mxu0 0.0
    %6183 = vmatprep.subr.mxu0 0.0
    %6184 = vmatpush2.msra.mxu0 0.0
    %6185 = vmatprep.subr.mxu0 0.0
    %6186 = vmatpush2.msra.mxu0 0.0
    %6187 = vmatprep.subr.mxu0 0.0
    %6188 = vmatpush2.msra.mxu0 0.0
    %6189 = vmatprep.subr.mxu0 0.0
    %6190 = vmatpush2.msra.mxu0 0.0
    %6191 = vmatprep.subr.mxu0 0.0
    %6192 = vmatpush2.msra.mxu0 0.0
    %6193 = vmatprep.subr.mxu0 0.0
    %6194 = vmatpush2.msra.mxu0 0.0
    %6195 = vmatprep.subr.mxu0 0.0
    %6196 = vmatpush2.msra.mxu0 0.0
    %6197 = vmatprep.subr.mxu0 0.0
    %6198 = vmatpush2.msra.mxu0 0.0
    %6199 = vmatprep.subr.mxu0 0.0
    %6200 = vmatpush2.msra.mxu0 0.0
    %6201 = vmatprep.subr.mxu0 0.0
    %6202 = vmatpush2.msra.mxu0 0.0
    %6203 = vmatprep.subr.mxu0 0.0
    %6204 = vmatpush2.msra.mxu0 0.0
    %6205 = vmatprep.subr.mxu0 0.0
    %6206 = vmatpush2.msra.mxu0 0.0
    %6207 = vmatprep.subr.mxu0 0.0
    %6208 = vmatpush2.msra.mxu0 0.0
    %6209 = vmatprep.subr.mxu0 0.0
    %6210 = vmatpush2.msra.mxu0 0.0
    %6211 = vmatprep.mubr.f32.mxu0 0.0
    %6212 = vmatmul.mubr.f32.gmra.mxu0 %v6004
    %v6213 = vpop.f32.mrf.mxu0
    %v6214 = vadd.f32 0.0, %v6213
    %v6215 = vpop.f32.mrf.mxu0
    %6216 = vmatprep.mubr.f32.mxu0 0.0
    %6217 = vmatmul.mubr.f32.gmra.mxu0 %v6007
    %v6218 = vpop.f32.mrf.mxu0
    %v6219 = vadd.f32 0.0, %v6218
    %v6220 = vpop.f32.mrf.mxu0
    %6221 = vmatprep.mubr.f32.mxu0 0.0
    %6222 = vmatmul.mubr.f32.gmra.mxu0 %v6010
    %v6223 = vpop.f32.mrf.mxu0
    %v6224 = vadd.f32 0.0, %v6223
    %v6225 = vpop.f32.mrf.mxu0
    %6226 = vmatprep.mubr.f32.mxu0 0.0
    %6227 = vmatmul.mubr.f32.gmra.mxu0 %v6013
    %v6228 = vpop.f32.mrf.mxu0
    %v6229 = vadd.f32 0.0, %v6228
    %v6230 = vpop.f32.mrf.mxu0
    %6231 = vmatprep.mubr.f32.mxu0 0.0
    %6232 = vmatmul.mubr.f32.gmra.mxu0 %v6016
    %v6233 = vpop.f32.mrf.mxu0
    %v6234 = vadd.f32 0.0, %v6233
    %v6235 = vpop.f32.mrf.mxu0
    %6236 = vmatprep.mubr.f32.mxu0 0.0
    %6237 = vmatmul.mubr.f32.gmra.mxu0 %v6019
    %v6238 = vpop.f32.mrf.mxu0
    %v6239 = vadd.f32 0.0, %v6238
    %v6240 = vpop.f32.mrf.mxu0
    %6241 = vmatprep.mubr.f32.mxu0 0.0
    %6242 = vmatmul.mubr.f32.gmra.mxu0 %v6022
    %v6243 = vpop.f32.mrf.mxu0
    %v6244 = vadd.f32 0.0, %v6243
    %v6245 = vpop.f32.mrf.mxu0
    %6246 = vmatprep.mubr.f32.mxu0 0.0
    %6247 = vmatmul.mubr.f32.gmra.mxu0 %v6025
    %v6248 = vpop.f32.mrf.mxu0
    %v6249 = vadd.f32 0.0, %v6248
    %v6250 = vpop.f32.mrf.mxu0
    %6251 = vmatprep.mubr.f32.mxu0 0.0
    %6252 = vmatmul.mubr.f32.gmra.mxu0 %v6028
    %v6253 = vpop.f32.mrf.mxu0
    %v6254 = vadd.f32 0.0, %v6253
    %v6255 = vpop.f32.mrf.mxu0
    %6256 = vmatprep.mubr.f32.mxu0 0.0
    %6257 = vmatmul.mubr.f32.gmra.mxu0 %v6031
    %v6258 = vpop.f32.mrf.mxu0
    %v6259 = vadd.f32 0.0, %v6258
    %v6260 = vpop.f32.mrf.mxu0
    %6261 = vmatprep.mubr.f32.mxu0 0.0
    %6262 = vmatmul.mubr.f32.gmra.mxu0 %v6034
    %v6263 = vpop.f32.mrf.mxu0
    %v6264 = vadd.f32 0.0, %v6263
    %v6265 = vpop.f32.mrf.mxu0
    %6266 = vmatprep.mubr.f32.mxu0 0.0
    %6267 = vmatmul.mubr.f32.gmra.mxu0 %v6037
    %v6268 = vpop.f32.mrf.mxu0
    %v6269 = vadd.f32 0.0, %v6268
    %v6270 = vpop.f32.mrf.mxu0
    %6271 = vmatprep.mubr.f32.mxu0 0.0
    %6272 = vmatmul.mubr.f32.gmra.mxu0 %v6040
    %v6273 = vpop.f32.mrf.mxu0
    %v6274 = vadd.f32 0.0, %v6273
    %v6275 = vpop.f32.mrf.mxu0
    %6276 = vmatprep.mubr.f32.mxu0 0.0
    %6277 = vmatmul.mubr.f32.gmra.mxu0 %v6043
    %v6278 = vpop.f32.mrf.mxu0
    %v6279 = vadd.f32 0.0, %v6278
    %v6280 = vpop.f32.mrf.mxu0
    %6281 = vmatprep.mubr.f32.mxu0 0.0
    %6282 = vmatmul.mubr.f32.gmra.mxu0 %v6046
    %v6283 = vpop.f32.mrf.mxu0
    %v6284 = vadd.f32 0.0, %v6283
    %v6285 = vpop.f32.mrf.mxu0
    %6286 = vmatprep.mubr.f32.mxu0 0.0
    %6287 = vmatmul.mubr.f32.gmra.mxu0 %v6049
    %v6288 = vpop.f32.mrf.mxu0
    %v6289 = vadd.f32 0.0, %v6288
    %v6290 = vpop.f32.mrf.mxu0
    %6291 = vmatprep.mubr.f32.mxu0 0.0
    %6292 = vmatmul.mubr.f32.gmra.mxu0 %v6052
    %v6293 = vpop.f32.mrf.mxu0
    %v6294 = vadd.f32 0.0, %v6293
    %v6295 = vpop.f32.mrf.mxu0
    %6296 = vmatprep.mubr.f32.mxu0 0.0
    %6297 = vmatmul.mubr.f32.gmra.mxu0 %v6055
    %v6298 = vpop.f32.mrf.mxu0
    %v6299 = vadd.f32 0.0, %v6298
    %v6300 = vpop.f32.mrf.mxu0
    %6301 = vmatprep.mubr.f32.mxu0 0.0
    %6302 = vmatmul.mubr.f32.gmra.mxu0 %v6058
    %v6303 = vpop.f32.mrf.mxu0
    %v6304 = vadd.f32 0.0, %v6303
    %v6305 = vpop.f32.mrf.mxu0
    %6306 = vmatprep.mubr.f32.mxu0 0.0
    %6307 = vmatmul.mubr.f32.gmra.mxu0 %v6061
    %v6308 = vpop.f32.mrf.mxu0
    %v6309 = vadd.f32 0.0, %v6308
    %v6310 = vpop.f32.mrf.mxu0
    %6311 = vmatprep.mubr.f32.mxu0 0.0
    %6312 = vmatmul.mubr.f32.gmra.mxu0 %v6064
    %v6313 = vpop.f32.mrf.mxu0
    %v6314 = vadd.f32 0.0, %v6313
    %v6315 = vpop.f32.mrf.mxu0
    %6316 = vmatprep.mubr.f32.mxu0 0.0
    %6317 = vmatmul.mubr.f32.gmra.mxu0 %v6067
    %v6318 = vpop.f32.mrf.mxu0
    %v6319 = vadd.f32 0.0, %v6318
    %v6320 = vpop.f32.mrf.mxu0
    %6321 = vmatprep.mubr.f32.mxu0 0.0
    %6322 = vmatmul.mubr.f32.gmra.mxu0 %v6070
    %v6323 = vpop.f32.mrf.mxu0
    %v6324 = vadd.f32 0.0, %v6323
    %v6325 = vpop.f32.mrf.mxu0
    %6326 = vmatprep.mubr.f32.mxu0 0.0
    %6327 = vmatmul.mubr.f32.gmra.mxu0 %v6073
    %v6328 = vpop.f32.mrf.mxu0
    %v6329 = vadd.f32 0.0, %v6328
    %v6330 = vpop.f32.mrf.mxu0
    %6331 = vmatprep.mubr.f32.mxu0 0.0
    %6332 = vmatmul.mubr.f32.gmra.mxu0 %v6076
    %v6333 = vpop.f32.mrf.mxu0
    %v6334 = vadd.f32 0.0, %v6333
    %v6335 = vpop.f32.mrf.mxu0
    %6336 = vmatprep.mubr.f32.mxu0 0.0
    %6337 = vmatmul.mubr.f32.gmra.mxu0 %v6079
    %v6338 = vpop.f32.mrf.mxu0
    %v6339 = vadd.f32 0.0, %v6338
    %v6340 = vpop.f32.mrf.mxu0
    %6341 = vmatprep.mubr.f32.mxu0 0.0
    %6342 = vmatmul.mubr.f32.gmra.mxu0 %v6082
    %v6343 = vpop.f32.mrf.mxu0
    %v6344 = vadd.f32 0.0, %v6343
    %v6345 = vpop.f32.mrf.mxu0
    %6346 = vmatprep.mubr.f32.mxu0 0.0
    %6347 = vmatmul.mubr.f32.gmra.mxu0 %v6085
    %v6348 = vpop.f32.mrf.mxu0
    %v6349 = vadd.f32 0.0, %v6348
    %v6350 = vpop.f32.mrf.mxu0
    %6351 = vmatprep.mubr.f32.mxu0 0.0
    %6352 = vmatmul.mubr.f32.gmra.mxu0 %v6088
    %v6353 = vpop.f32.mrf.mxu0
    %v6354 = vadd.f32 0.0, %v6353
    %v6355 = vpop.f32.mrf.mxu0
    %6356 = vmatprep.mubr.f32.mxu0 0.0
    %6357 = vmatmul.mubr.f32.gmra.mxu0 %v6091
    %v6358 = vpop.f32.mrf.mxu0
    %v6359 = vadd.f32 0.0, %v6358
    %v6360 = vpop.f32.mrf.mxu0
    %6361 = vmatprep.mubr.f32.mxu0 0.0
    %6362 = vmatmul.mubr.f32.gmra.mxu0 %v6094
    %v6363 = vpop.f32.mrf.mxu0
    %v6364 = vadd.f32 0.0, %v6363
    %v6365 = vpop.f32.mrf.mxu0
    %6366 = vmatprep.mubr.f32.mxu0 0.0
    %6367 = vmatmul.mubr.f32.gmra.mxu0 %v6097
    %v6368 = vpop.f32.mrf.mxu0
    %v6369 = vadd.f32 0.0, %v6368
    %v6370 = vpop.f32.mrf.mxu0
    %6371 = vmatprep.mubr.f32.mxu0 0.0
    %6372 = vmatmul.mubr.f32.gmra.mxu0 %v6100
    %v6373 = vpop.f32.mrf.mxu0
    %v6374 = vadd.f32 0.0, %v6373
    %v6375 = vpop.f32.mrf.mxu0
    %6376 = vmatprep.mubr.f32.mxu0 0.0
    %6377 = vmatmul.mubr.f32.gmra.mxu0 %v6103
    %v6378 = vpop.f32.mrf.mxu0
    %v6379 = vadd.f32 0.0, %v6378
    %v6380 = vpop.f32.mrf.mxu0
    %6381 = vmatprep.mubr.f32.mxu0 0.0
    %6382 = vmatmul.mubr.f32.gmra.mxu0 %v6106
    %v6383 = vpop.f32.mrf.mxu0
    %v6384 = vadd.f32 0.0, %v6383
    %v6385 = vpop.f32.mrf.mxu0
    %6386 = vmatprep.mubr.f32.mxu0 0.0
    %6387 = vmatmul.mubr.f32.gmra.mxu0 %v6109
    %v6388 = vpop.f32.mrf.mxu0
    %v6389 = vadd.f32 0.0, %v6388
    %v6390 = vpop.f32.mrf.mxu0
    %6391 = vmatprep.mubr.f32.mxu0 0.0
    %6392 = vmatmul.mubr.f32.gmra.mxu0 %v6112
    %v6393 = vpop.f32.mrf.mxu0
    %v6394 = vadd.f32 0.0, %v6393
    %v6395 = vpop.f32.mrf.mxu0
    %6396 = vmatprep.mubr.f32.mxu0 0.0
    %6397 = vmatmul.mubr.f32.gmra.mxu0 %v6115
    %v6398 = vpop.f32.mrf.mxu0
    %v6399 = vadd.f32 0.0, %v6398
    %v6400 = vpop.f32.mrf.mxu0
    %6401 = vmatprep.mubr.f32.mxu0 0.0
    %6402 = vmatmul.mubr.f32.gmra.mxu0 %v6118
    %v6403 = vpop.f32.mrf.mxu0
    %v6404 = vadd.f32 0.0, %v6403
    %v6405 = vpop.f32.mrf.mxu0
    %6406 = vmatprep.mubr.f32.mxu0 0.0
    %6407 = vmatmul.mubr.f32.gmra.mxu0 %v6121
    %v6408 = vpop.f32.mrf.mxu0
    %v6409 = vadd.f32 0.0, %v6408
    %v6410 = vpop.f32.mrf.mxu0
    %6411 = vmatprep.mubr.f32.mxu0 0.0
    %6412 = vmatmul.mubr.f32.gmra.mxu0 %v6124
    %v6413 = vpop.f32.mrf.mxu0
    %v6414 = vadd.f32 0.0, %v6413
    %v6415 = vpop.f32.mrf.mxu0
    %6416 = vmatprep.mubr.f32.mxu0 0.0
    %6417 = vmatmul.mubr.f32.gmra.mxu0 %v6127
    %v6418 = vpop.f32.mrf.mxu0
    %v6419 = vadd.f32 0.0, %v6418
    %v6420 = vpop.f32.mrf.mxu0
    %6421 = vmatprep.mubr.f32.mxu0 0.0
    %6422 = vmatmul.mubr.f32.gmra.mxu0 %v6130
    %v6423 = vpop.f32.mrf.mxu0
    %v6424 = vadd.f32 0.0, %v6423
    %v6425 = vpop.f32.mrf.mxu0
    %6426 = vmatprep.mubr.f32.mxu0 0.0
    %6427 = vmatmul.mubr.f32.gmra.mxu0 %v6133
    %v6428 = vpop.f32.mrf.mxu0
    %v6429 = vadd.f32 0.0, %v6428
    %v6430 = vpop.f32.mrf.mxu0
    %6431 = vmatprep.mubr.f32.mxu0 0.0
    %6432 = vmatmul.mubr.f32.gmra.mxu0 %v6136
    %v6433 = vpop.f32.mrf.mxu0
    %v6434 = vadd.f32 0.0, %v6433
    %v6435 = vpop.f32.mrf.mxu0
    %6436 = vmatprep.mubr.f32.mxu0 0.0
    %6437 = vmatmul.mubr.f32.gmra.mxu0 %v6139
    %v6438 = vpop.f32.mrf.mxu0
    %v6439 = vadd.f32 0.0, %v6438
    %v6440 = vpop.f32.mrf.mxu0
    %6441 = vmatprep.mubr.f32.mxu0 0.0
    %6442 = vmatmul.mubr.f32.gmra.mxu0 %v6142
    %v6443 = vpop.f32.mrf.mxu0
    %v6444 = vadd.f32 0.0, %v6443
    %v6445 = vpop.f32.mrf.mxu0
    %6446 = vmatprep.mubr.f32.mxu0 0.0
    %6447 = vmatmul.mubr.f32.gmra.mxu0 %v6145
    %v6448 = vpop.f32.mrf.mxu0
    %v6449 = vadd.f32 0.0, %v6448
    %v6450 = vpop.f32.mrf.mxu0
    %6451 = vdwg.mxu0
    %v6452 = vsub.f32 %v5653, %v6214
    %v6453 = vsub.f32 %v5654, %v6219
    %v6454 = vsub.f32 %v5655, %v6224
    %v6455 = vsub.f32 %v5656, %v6229
    %v6456 = vsub.f32 %v5657, %v6234
    %v6457 = vsub.f32 %v5658, %v6239
    %v6458 = vsub.f32 %v5659, %v6244
    %v6459 = vsub.f32 %v5660, %v6249
    %v6460 = vsub.f32 %v5661, %v6254
    %v6461 = vsub.f32 %v5662, %v6259
    %v6462 = vsub.f32 %v5663, %v6264
    %v6463 = vsub.f32 %v5664, %v6269
    %v6464 = vsub.f32 %v5665, %v6274
    %v6465 = vsub.f32 %v5666, %v6279
    %v6466 = vsub.f32 %v5667, %v6284
    %v6467 = vsub.f32 %v5668, %v6289
    %v6468 = vsub.f32 %v5669, %v6294
    %v6469 = vsub.f32 %v5670, %v6299
    %v6470 = vsub.f32 %v5671, %v6304
    %v6471 = vsub.f32 %v5672, %v6309
    %v6472 = vsub.f32 %v5673, %v6314
    %v6473 = vsub.f32 %v5674, %v6319
    %v6474 = vsub.f32 %v5675, %v6324
    %v6475 = vsub.f32 %v5676, %v6329
    %v6476 = vsub.f32 %v5677, %v6334
    %v6477 = vsub.f32 %v5678, %v6339
    %v6478 = vsub.f32 %v5679, %v6344
    %v6479 = vsub.f32 %v5680, %v6349
    %v6480 = vsub.f32 %v5681, %v6354
    %v6481 = vsub.f32 %v5682, %v6359
    %v6482 = vsub.f32 %v5683, %v6364
    %v6483 = vsub.f32 %v5684, %v6369
    %v6484 = vsub.f32 %v5685, %v6374
    %v6485 = vsub.f32 %v5686, %v6379
    %v6486 = vsub.f32 %v5687, %v6384
    %v6487 = vsub.f32 %v5688, %v6389
    %v6488 = vsub.f32 %v5689, %v6394
    %v6489 = vsub.f32 %v5690, %v6399
    %v6490 = vsub.f32 %v5691, %v6404
    %v6491 = vsub.f32 %v5692, %v6409
    %v6492 = vsub.f32 %v5693, %v6414
    %v6493 = vsub.f32 %v5694, %v6419
    %v6494 = vsub.f32 %v5695, %v6424
    %v6495 = vsub.f32 %v5696, %v6429
    %v6496 = vsub.f32 %v5697, %v6434
    %v6497 = vsub.f32 %v5698, %v6439
    %v6498 = vsub.f32 %v5699, %v6444
    %v6499 = vsub.f32 %v5700, %v6449
    %v6500 = vand.u32 2147483647, %v6452
    %v6501 = vand.u32 2147483647, %v6453
    %v6502 = vand.u32 2147483647, %v6454
    %v6503 = vand.u32 2147483647, %v6455
    %v6504 = vand.u32 2147483647, %v6456
    %v6505 = vand.u32 2147483647, %v6457
    %v6506 = vand.u32 2147483647, %v6458
    %v6507 = vand.u32 2147483647, %v6459
    %v6508 = vand.u32 2147483647, %v6460
    %v6509 = vand.u32 2147483647, %v6461
    %v6510 = vand.u32 2147483647, %v6462
    %v6511 = vand.u32 2147483647, %v6463
    %v6512 = vand.u32 2147483647, %v6464
    %v6513 = vand.u32 2147483647, %v6465
    %v6514 = vand.u32 2147483647, %v6466
    %v6515 = vand.u32 2147483647, %v6467
    %v6516 = vand.u32 2147483647, %v6468
    %v6517 = vand.u32 2147483647, %v6469
    %v6518 = vand.u32 2147483647, %v6470
    %v6519 = vand.u32 2147483647, %v6471
    %v6520 = vand.u32 2147483647, %v6472
    %v6521 = vand.u32 2147483647, %v6473
    %v6522 = vand.u32 2147483647, %v6474
    %v6523 = vand.u32 2147483647, %v6475
    %v6524 = vand.u32 2147483647, %v6476
    %v6525 = vand.u32 2147483647, %v6477
    %v6526 = vand.u32 2147483647, %v6478
    %v6527 = vand.u32 2147483647, %v6479
    %v6528 = vand.u32 2147483647, %v6480
    %v6529 = vand.u32 2147483647, %v6481
    %v6530 = vand.u32 2147483647, %v6482
    %v6531 = vand.u32 2147483647, %v6483
    %v6532 = vand.u32 2147483647, %v6484
    %v6533 = vand.u32 2147483647, %v6485
    %v6534 = vand.u32 2147483647, %v6486
    %v6535 = vand.u32 2147483647, %v6487
    %v6536 = vand.u32 2147483647, %v6488
    %v6537 = vand.u32 2147483647, %v6489
    %v6538 = vand.u32 2147483647, %v6490
    %v6539 = vand.u32 2147483647, %v6491
    %v6540 = vand.u32 2147483647, %v6492
    %v6541 = vand.u32 2147483647, %v6493
    %v6542 = vand.u32 2147483647, %v6494
    %v6543 = vand.u32 2147483647, %v6495
    %v6544 = vand.u32 2147483647, %v6496
    %v6545 = vand.u32 2147483647, %v6497
    %v6546 = vand.u32 2147483647, %v6498
    %v6547 = vand.u32 2147483647, %v6499
    %v6548 = vsel %vm5869, %v6500, 0.0
    %v6549 = vsel %vm5869, %v6501, 0.0
    %v6550 = vadd.f32 %v6548, %v6549
    %v6551 = vsel %vm5869, %v6502, 0.0
    %v6552 = vadd.f32 %v6550, %v6551
    %v6553 = vsel %vm5869, %v6503, 0.0
    %v6554 = vadd.f32 %v6552, %v6553
    %v6555 = vsel %vm5869, %v6504, 0.0
    %v6556 = vadd.f32 %v6554, %v6555
    %v6557 = vsel %vm5869, %v6505, 0.0
    %v6558 = vadd.f32 %v6556, %v6557
    %v6559 = vsel %vm5869, %v6506, 0.0
    %v6560 = vadd.f32 %v6558, %v6559
    %v6561 = vsel %vm5869, %v6507, 0.0
    %v6562 = vadd.f32 %v6560, %v6561
    %v6563 = vsel %vm5869, %v6508, 0.0
    %v6564 = vadd.f32 %v6562, %v6563
    %v6565 = vsel %vm5869, %v6509, 0.0
    %v6566 = vadd.f32 %v6564, %v6565
    %v6567 = vsel %vm5869, %v6510, 0.0
    %v6568 = vadd.f32 %v6566, %v6567
    %v6569 = vsel %vm5869, %v6511, 0.0
    %v6570 = vadd.f32 %v6568, %v6569
    %v6571 = vsel %vm5869, %v6512, 0.0
    %v6572 = vadd.f32 %v6570, %v6571
    %v6573 = vsel %vm5869, %v6513, 0.0
    %v6574 = vadd.f32 %v6572, %v6573
    %v6575 = vsel %vm5869, %v6514, 0.0
    %v6576 = vadd.f32 %v6574, %v6575
    %v6577 = vsel %vm5869, %v6515, 0.0
    %v6578 = vadd.f32 %v6576, %v6577
    %v6579 = vsel %vm5869, %v6516, 0.0
    %v6580 = vadd.f32 %v6578, %v6579
    %v6581 = vsel %vm5869, %v6517, 0.0
    %v6582 = vadd.f32 %v6580, %v6581
    %v6583 = vsel %vm5869, %v6518, 0.0
    %v6584 = vadd.f32 %v6582, %v6583
    %v6585 = vsel %vm5869, %v6519, 0.0
    %v6586 = vadd.f32 %v6584, %v6585
    %v6587 = vsel %vm5869, %v6520, 0.0
    %v6588 = vadd.f32 %v6586, %v6587
    %v6589 = vsel %vm5869, %v6521, 0.0
    %v6590 = vadd.f32 %v6588, %v6589
    %v6591 = vsel %vm5869, %v6522, 0.0
    %v6592 = vadd.f32 %v6590, %v6591
    %v6593 = vsel %vm5869, %v6523, 0.0
    %v6594 = vadd.f32 %v6592, %v6593
    %v6595 = vsel %vm5869, %v6524, 0.0
    %v6596 = vadd.f32 %v6594, %v6595
    %v6597 = vsel %vm5869, %v6525, 0.0
    %v6598 = vadd.f32 %v6596, %v6597
    %v6599 = vsel %vm5869, %v6526, 0.0
    %v6600 = vadd.f32 %v6598, %v6599
    %v6601 = vsel %vm5869, %v6527, 0.0
    %v6602 = vadd.f32 %v6600, %v6601
    %v6603 = vsel %vm5869, %v6528, 0.0
    %v6604 = vadd.f32 %v6602, %v6603
    %v6605 = vsel %vm5869, %v6529, 0.0
    %v6606 = vadd.f32 %v6604, %v6605
    %v6607 = vsel %vm5869, %v6530, 0.0
    %v6608 = vadd.f32 %v6606, %v6607
    %v6609 = vsel %vm5869, %v6531, 0.0
    %v6610 = vadd.f32 %v6608, %v6609
    %v6611 = vsel %vm5869, %v6532, 0.0
    %v6612 = vadd.f32 %v6610, %v6611
    %v6613 = vsel %vm5869, %v6533, 0.0
    %v6614 = vadd.f32 %v6612, %v6613
    %v6615 = vsel %vm5869, %v6534, 0.0
    %v6616 = vadd.f32 %v6614, %v6615
    %v6617 = vsel %vm5869, %v6535, 0.0
    %v6618 = vadd.f32 %v6616, %v6617
    %v6619 = vsel %vm5869, %v6536, 0.0
    %v6620 = vadd.f32 %v6618, %v6619
    %v6621 = vsel %vm5869, %v6537, 0.0
    %v6622 = vadd.f32 %v6620, %v6621
    %v6623 = vsel %vm5869, %v6538, 0.0
    %v6624 = vadd.f32 %v6622, %v6623
    %v6625 = vsel %vm5869, %v6539, 0.0
    %v6626 = vadd.f32 %v6624, %v6625
    %v6627 = vsel %vm5869, %v6540, 0.0
    %v6628 = vadd.f32 %v6626, %v6627
    %v6629 = vsel %vm5869, %v6541, 0.0
    %v6630 = vadd.f32 %v6628, %v6629
    %v6631 = vsel %vm5869, %v6542, 0.0
    %v6632 = vadd.f32 %v6630, %v6631
    %v6633 = vsel %vm5869, %v6543, 0.0
    %v6634 = vadd.f32 %v6632, %v6633
    %v6635 = vsel %vm5869, %v6544, 0.0
    %v6636 = vadd.f32 %v6634, %v6635
    %v6637 = vsel %vm5869, %v6545, 0.0
    %v6638 = vadd.f32 %v6636, %v6637
    %v6639 = vsel %vm5869, %v6546, 0.0
    %v6640 = vadd.f32 %v6638, %v6639
    %v6641 = vsel %vm5869, %v6547, 0.0
    %v6642 = vadd.f32 %v6640, %v6641
    %6643 = vadd.xlane.f32.xlu0 %v6642
    %v6644 = vpop.xlane.xlu0 %6643
    %v6645 = vrot.slane %v6644, 4
    %v6646 = vadd.f32 %v6644, %v6645
    %v6647 = vrot.slane %v6646, 2
    %v6648 = vadd.f32 %v6646, %v6647
    %v6649 = vrot.slane %v6648, 1
    %v6650 = vadd.f32 %v6648, %v6649
    %s6651 = vtos %v6650
    %v6652 = vrcp.pop 24576.0
    %s6653 = vtos %v6652
    %s6654 = smul.f32 %s6651, %s6653
    %s6655 = scalar_lea.smem [#allocation20], 9
    %6656 = sst [smem:[%s6655]] %s6654
    %v6657 = vld [vmem:[#allocation17] sm:$0xff]
    %v6658 = vld [vmem:[#allocation17 + $0x8] sm:$0xff]
    %v6659 = vld [vmem:[#allocation17 + $0x10] sm:$0xff]
    %v6660 = vld [vmem:[#allocation17 + $0x18] sm:$0xff]
    %v6661 = vld [vmem:[#allocation17 + $0x20] sm:$0xff]
    %v6662 = vld [vmem:[#allocation17 + $0x28] sm:$0xff]
    %v6663 = vld [vmem:[#allocation17 + $0x30] sm:$0xff]
    %v6664 = vld [vmem:[#allocation17 + $0x38] sm:$0xff]
    %v6665 = vld [vmem:[#allocation17 + $0x40] sm:$0xff]
    %v6666 = vld [vmem:[#allocation17 + $0x48] sm:$0xff]
    %v6667 = vld [vmem:[#allocation17 + $0x50] sm:$0xff]
    %v6668 = vld [vmem:[#allocation17 + $0x58] sm:$0xff]
    %v6669 = vld [vmem:[#allocation17 + $0x60] sm:$0xff]
    %v6670 = vld [vmem:[#allocation17 + $0x68] sm:$0xff]
    %v6671 = vld [vmem:[#allocation17 + $0x70] sm:$0xff]
    %v6672 = vld [vmem:[#allocation17 + $0x78] sm:$0xff]
    %v6673 = vld [vmem:[#allocation17 + $0x80] sm:$0xff]
    %v6674 = vld [vmem:[#allocation17 + $0x88] sm:$0xff]
    %v6675 = vld [vmem:[#allocation17 + $0x90] sm:$0xff]
    %v6676 = vld [vmem:[#allocation17 + $0x98] sm:$0xff]
    %v6677 = vld [vmem:[#allocation17 + $0xa0] sm:$0xff]
    %v6678 = vld [vmem:[#allocation17 + $0xa8] sm:$0xff]
    %v6679 = vld [vmem:[#allocation17 + $0xb0] sm:$0xff]
    %v6680 = vld [vmem:[#allocation17 + $0xb8] sm:$0xff]
    %v6681 = vsub.f32 %v5701, %v6657
    %v6682 = vsub.f32 %v5702, %v6658
    %v6683 = vsub.f32 %v5703, %v6659
    %v6684 = vsub.f32 %v5704, %v6660
    %v6685 = vsub.f32 %v5705, %v6661
    %v6686 = vsub.f32 %v5706, %v6662
    %v6687 = vsub.f32 %v5707, %v6663
    %v6688 = vsub.f32 %v5708, %v6664
    %v6689 = vsub.f32 %v5709, %v6665
    %v6690 = vsub.f32 %v5710, %v6666
    %v6691 = vsub.f32 %v5711, %v6667
    %v6692 = vsub.f32 %v5712, %v6668
    %v6693 = vsub.f32 %v5713, %v6669
    %v6694 = vsub.f32 %v5714, %v6670
    %v6695 = vsub.f32 %v5715, %v6671
    %v6696 = vsub.f32 %v5716, %v6672
    %v6697 = vsub.f32 %v5717, %v6673
    %v6698 = vsub.f32 %v5718, %v6674
    %v6699 = vsub.f32 %v5719, %v6675
    %v6700 = vsub.f32 %v5720, %v6676
    %v6701 = vsub.f32 %v5721, %v6677
    %v6702 = vsub.f32 %v5722, %v6678
    %v6703 = vsub.f32 %v5723, %v6679
    %v6704 = vsub.f32 %v5724, %v6680
    %v6705 = vand.u32 2147483647, %v6681
    %v6706 = vand.u32 2147483647, %v6682
    %v6707 = vand.u32 2147483647, %v6683
    %v6708 = vand.u32 2147483647, %v6684
    %v6709 = vand.u32 2147483647, %v6685
    %v6710 = vand.u32 2147483647, %v6686
    %v6711 = vand.u32 2147483647, %v6687
    %v6712 = vand.u32 2147483647, %v6688
    %v6713 = vand.u32 2147483647, %v6689
    %v6714 = vand.u32 2147483647, %v6690
    %v6715 = vand.u32 2147483647, %v6691
    %v6716 = vand.u32 2147483647, %v6692
    %v6717 = vand.u32 2147483647, %v6693
    %v6718 = vand.u32 2147483647, %v6694
    %v6719 = vand.u32 2147483647, %v6695
    %v6720 = vand.u32 2147483647, %v6696
    %v6721 = vand.u32 2147483647, %v6697
    %v6722 = vand.u32 2147483647, %v6698
    %v6723 = vand.u32 2147483647, %v6699
    %v6724 = vand.u32 2147483647, %v6700
    %v6725 = vand.u32 2147483647, %v6701
    %v6726 = vand.u32 2147483647, %v6702
    %v6727 = vand.u32 2147483647, %v6703
    %v6728 = vand.u32 2147483647, %v6704
    %vm6729 = vcmask 261120
    %v6730 = vsel %vm6729, %v6705, 0.0
    %v6731 = vsel %vm6729, %v6706, 0.0
    %v6732 = vadd.f32 %v6730, %v6731
    %v6733 = vsel %vm6729, %v6707, 0.0
    %v6734 = vadd.f32 %v6732, %v6733
    %v6735 = vsel %vm6729, %v6708, 0.0
    %v6736 = vadd.f32 %v6734, %v6735
    %v6737 = vsel %vm6729, %v6709, 0.0
    %v6738 = vadd.f32 %v6736, %v6737
    %v6739 = vsel %vm6729, %v6710, 0.0
    %v6740 = vadd.f32 %v6738, %v6739
    %v6741 = vsel %vm6729, %v6711, 0.0
    %v6742 = vadd.f32 %v6740, %v6741
    %v6743 = vsel %vm6729, %v6712, 0.0
    %v6744 = vadd.f32 %v6742, %v6743
    %v6745 = vsel %vm6729, %v6713, 0.0
    %v6746 = vadd.f32 %v6744, %v6745
    %v6747 = vsel %vm6729, %v6714, 0.0
    %v6748 = vadd.f32 %v6746, %v6747
    %v6749 = vsel %vm6729, %v6715, 0.0
    %v6750 = vadd.f32 %v6748, %v6749
    %v6751 = vsel %vm6729, %v6716, 0.0
    %v6752 = vadd.f32 %v6750, %v6751
    %v6753 = vsel %vm6729, %v6717, 0.0
    %v6754 = vadd.f32 %v6752, %v6753
    %v6755 = vsel %vm6729, %v6718, 0.0
    %v6756 = vadd.f32 %v6754, %v6755
    %v6757 = vsel %vm6729, %v6719, 0.0
    %v6758 = vadd.f32 %v6756, %v6757
    %v6759 = vsel %vm6729, %v6720, 0.0
    %v6760 = vadd.f32 %v6758, %v6759
    %v6761 = vsel %vm6729, %v6721, 0.0
    %v6762 = vadd.f32 %v6760, %v6761
    %v6763 = vsel %vm6729, %v6722, 0.0
    %v6764 = vadd.f32 %v6762, %v6763
    %v6765 = vsel %vm6729, %v6723, 0.0
    %v6766 = vadd.f32 %v6764, %v6765
    %v6767 = vsel %vm6729, %v6724, 0.0
    %v6768 = vadd.f32 %v6766, %v6767
    %v6769 = vsel %vm6729, %v6725, 0.0
    %v6770 = vadd.f32 %v6768, %v6769
    %v6771 = vsel %vm6729, %v6726, 0.0
    %v6772 = vadd.f32 %v6770, %v6771
    %v6773 = vsel %vm6729, %v6727, 0.0
    %v6774 = vadd.f32 %v6772, %v6773
    %v6775 = vsel %vm6729, %v6728, 0.0
    %v6776 = vadd.f32 %v6774, %v6775
    %6777 = vadd.xlane.f32.xlu0 %v6776
    %v6778 = vpop.xlane.xlu0 %6777
    %v6779 = vrot.slane %v6778, 4
    %v6780 = vadd.f32 %v6778, %v6779
    %v6781 = vrot.slane %v6780, 2
    %v6782 = vadd.f32 %v6780, %v6781
    %v6783 = vrot.slane %v6782, 1
    %v6784 = vadd.f32 %v6782, %v6783
    %s6785 = vtos %v6784
    %v6786 = vrcp.pop 6144.0
    %s6787 = vtos %v6786
    %s6788 = smul.f32 %s6785, %s6787
    %s6789 = scalar_lea.smem [#allocation20], 10
    %6790 = sst [smem:[%s6789]] %s6788
    %vm6791 = vcmp.eq.s32.totalorder %v709, 31
    %vm6792 = vcmp.eq.s32.totalorder %v710, 31
    %vm6793 = vcmp.eq.s32.totalorder %v711, 31
    %vm6794 = vcmp.eq.s32.totalorder %v712, 31
    %v6795 = vsel %vm6791, 1, 0
    %v6796 = vsel %vm6792, 1, 0
    %v6797 = vsel %vm6793, 1, 0
    %v6798 = vsel %vm6794, 1, 0
    %v6799 = vcvt.s32.f32 %v6795
    %v6800 = vcvt.s32.f32 %v6796
    %v6801 = vcvt.s32.f32 %v6797
    %v6802 = vcvt.s32.f32 %v6798
    %v6804 = vsel %vm6729, %v5701, 0
    %v6807 = vsel %vm6729, %v5702, 0
    %v6810 = vsel %vm6729, %v5703, 0
    %v6813 = vsel %vm6729, %v5704, 0
    %v6816 = vsel %vm6729, %v5705, 0
    %v6819 = vsel %vm6729, %v5706, 0
    %v6822 = vsel %vm6729, %v5707, 0
    %v6825 = vsel %vm6729, %v5708, 0
    %v6828 = vsel %vm6729, %v5709, 0
    %v6831 = vsel %vm6729, %v5710, 0
    %v6834 = vsel %vm6729, %v5711, 0
    %v6837 = vsel %vm6729, %v5712, 0
    %v6840 = vsel %vm6729, %v5713, 0
    %v6843 = vsel %vm6729, %v5714, 0
    %v6846 = vsel %vm6729, %v5715, 0
    %v6849 = vsel %vm6729, %v5716, 0
    %v6852 = vsel %vm6729, %v5717, 0
    %v6855 = vsel %vm6729, %v5718, 0
    %v6858 = vsel %vm6729, %v5719, 0
    %v6861 = vsel %vm6729, %v5720, 0
    %v6864 = vsel %vm6729, %v5721, 0
    %v6867 = vsel %vm6729, %v5722, 0
    %v6870 = vsel %vm6729, %v5723, 0
    %v6873 = vsel %vm6729, %v5724, 0
    %6875 = vmatprep.subr.mxu0 0.0
    %6876 = vmatpush1.msra.mxu0 0.0
    %6877 = vmatprep.subr.mxu0 0.0
    %6878 = vmatpush1.msra.mxu0 0.0
    %6879 = vmatprep.subr.mxu0 0.0
    %6880 = vmatpush1.msra.mxu0 0.0
    %6881 = vmatprep.subr.mxu0 0.0
    %6882 = vmatpush1.msra.mxu0 0.0
    %6883 = vmatprep.subr.mxu0 0.0
    %6884 = vmatpush1.msra.mxu0 0.0
    %6885 = vmatprep.subr.mxu0 0.0
    %6886 = vmatpush1.msra.mxu0 0.0
    %6887 = vmatprep.subr.mxu0 0.0
    %6888 = vmatpush1.msra.mxu0 0.0
    %6889 = vmatprep.subr.mxu0 0.0
    %6890 = vmatpush1.msra.mxu0 0.0
    %6891 = vmatprep.subr.mxu0 0.0
    %6892 = vmatpush1.msra.mxu0 0.0
    %6893 = vmatprep.subr.mxu0 0.0
    %6894 = vmatpush1.msra.mxu0 0.0
    %6895 = vmatprep.subr.mxu0 0.0
    %6896 = vmatpush1.msra.mxu0 0.0
    %6897 = vmatprep.subr.mxu0 0.0
    %6898 = vmatpush1.msra.mxu0 0.0
    %6899 = vmatprep.subr.mxu0 0.0
    %6900 = vmatpush1.msra.mxu0 %v6802
    %6901 = vmatprep.subr.mxu0 0.0
    %6902 = vmatpush1.msra.mxu0 %v6801
    %6903 = vmatprep.subr.mxu0 0.0
    %6904 = vmatpush1.msra.mxu0 %v6800
    %6905 = vmatprep.subr.mxu0 0.0
    %6906 = vmatpush1.msra.mxu0 %v6799
    %6907 = vmatprep.subr.mxu0 0.0
    %6908 = vmatpush2.msra.mxu0 0.0
    %6909 = vmatprep.subr.mxu0 0.0
    %6910 = vmatpush2.msra.mxu0 0.0
    %6911 = vmatprep.subr.mxu0 0.0
    %6912 = vmatpush2.msra.mxu0 0.0
    %6913 = vmatprep.subr.mxu0 0.0
    %6914 = vmatpush2.msra.mxu0 0.0
    %6915 = vmatprep.subr.mxu0 0.0
    %6916 = vmatpush2.msra.mxu0 0.0
    %6917 = vmatprep.subr.mxu0 0.0
    %6918 = vmatpush2.msra.mxu0 0.0
    %6919 = vmatprep.subr.mxu0 0.0
    %6920 = vmatpush2.msra.mxu0 0.0
    %6921 = vmatprep.subr.mxu0 0.0
    %6922 = vmatpush2.msra.mxu0 0.0
    %6923 = vmatprep.subr.mxu0 0.0
    %6924 = vmatpush2.msra.mxu0 0.0
    %6925 = vmatprep.subr.mxu0 0.0
    %6926 = vmatpush2.msra.mxu0 0.0
    %6927 = vmatprep.subr.mxu0 0.0
    %6928 = vmatpush2.msra.mxu0 0.0
    %6929 = vmatprep.subr.mxu0 0.0
    %6930 = vmatpush2.msra.mxu0 0.0
    %6931 = vmatprep.subr.mxu0 0.0
    %6932 = vmatpush2.msra.mxu0 0.0
    %6933 = vmatprep.subr.mxu0 0.0
    %6934 = vmatpush2.msra.mxu0 0.0
    %6935 = vmatprep.subr.mxu0 0.0
    %6936 = vmatpush2.msra.mxu0 0.0
    %6937 = vmatprep.subr.mxu0 0.0
    %6938 = vmatpush2.msra.mxu0 0.0
    %6939 = vmatprep.mubr.f32.mxu0 0.0
    %6940 = vmatmul.mubr.f32.gmra.mxu0 %v6804
    %v6941 = vpop.f32.mrf.mxu0
    %v6942 = vadd.f32 0.0, %v6941
    %v6943 = vpop.f32.mrf.mxu0
    %6944 = vmatprep.mubr.f32.mxu0 0.0
    %6945 = vmatmul.mubr.f32.gmra.mxu0 %v6807
    %v6946 = vpop.f32.mrf.mxu0
    %v6947 = vadd.f32 0.0, %v6946
    %v6948 = vpop.f32.mrf.mxu0
    %6949 = vmatprep.mubr.f32.mxu0 0.0
    %6950 = vmatmul.mubr.f32.gmra.mxu0 %v6810
    %v6951 = vpop.f32.mrf.mxu0
    %v6952 = vadd.f32 0.0, %v6951
    %v6953 = vpop.f32.mrf.mxu0
    %6954 = vmatprep.mubr.f32.mxu0 0.0
    %6955 = vmatmul.mubr.f32.gmra.mxu0 %v6813
    %v6956 = vpop.f32.mrf.mxu0
    %v6957 = vadd.f32 0.0, %v6956
    %v6958 = vpop.f32.mrf.mxu0
    %6959 = vmatprep.mubr.f32.mxu0 0.0
    %6960 = vmatmul.mubr.f32.gmra.mxu0 %v6816
    %v6961 = vpop.f32.mrf.mxu0
    %v6962 = vadd.f32 0.0, %v6961
    %v6963 = vpop.f32.mrf.mxu0
    %6964 = vmatprep.mubr.f32.mxu0 0.0
    %6965 = vmatmul.mubr.f32.gmra.mxu0 %v6819
    %v6966 = vpop.f32.mrf.mxu0
    %v6967 = vadd.f32 0.0, %v6966
    %v6968 = vpop.f32.mrf.mxu0
    %6969 = vmatprep.mubr.f32.mxu0 0.0
    %6970 = vmatmul.mubr.f32.gmra.mxu0 %v6822
    %v6971 = vpop.f32.mrf.mxu0
    %v6972 = vadd.f32 0.0, %v6971
    %v6973 = vpop.f32.mrf.mxu0
    %6974 = vmatprep.mubr.f32.mxu0 0.0
    %6975 = vmatmul.mubr.f32.gmra.mxu0 %v6825
    %v6976 = vpop.f32.mrf.mxu0
    %v6977 = vadd.f32 0.0, %v6976
    %v6978 = vpop.f32.mrf.mxu0
    %6979 = vmatprep.mubr.f32.mxu0 0.0
    %6980 = vmatmul.mubr.f32.gmra.mxu0 %v6828
    %v6981 = vpop.f32.mrf.mxu0
    %v6982 = vadd.f32 0.0, %v6981
    %v6983 = vpop.f32.mrf.mxu0
    %6984 = vmatprep.mubr.f32.mxu0 0.0
    %6985 = vmatmul.mubr.f32.gmra.mxu0 %v6831
    %v6986 = vpop.f32.mrf.mxu0
    %v6987 = vadd.f32 0.0, %v6986
    %v6988 = vpop.f32.mrf.mxu0
    %6989 = vmatprep.mubr.f32.mxu0 0.0
    %6990 = vmatmul.mubr.f32.gmra.mxu0 %v6834
    %v6991 = vpop.f32.mrf.mxu0
    %v6992 = vadd.f32 0.0, %v6991
    %v6993 = vpop.f32.mrf.mxu0
    %6994 = vmatprep.mubr.f32.mxu0 0.0
    %6995 = vmatmul.mubr.f32.gmra.mxu0 %v6837
    %v6996 = vpop.f32.mrf.mxu0
    %v6997 = vadd.f32 0.0, %v6996
    %v6998 = vpop.f32.mrf.mxu0
    %6999 = vmatprep.mubr.f32.mxu0 0.0
    %7000 = vmatmul.mubr.f32.gmra.mxu0 %v6840
    %v7001 = vpop.f32.mrf.mxu0
    %v7002 = vadd.f32 0.0, %v7001
    %v7003 = vpop.f32.mrf.mxu0
    %7004 = vmatprep.mubr.f32.mxu0 0.0
    %7005 = vmatmul.mubr.f32.gmra.mxu0 %v6843
    %v7006 = vpop.f32.mrf.mxu0
    %v7007 = vadd.f32 0.0, %v7006
    %v7008 = vpop.f32.mrf.mxu0
    %7009 = vmatprep.mubr.f32.mxu0 0.0
    %7010 = vmatmul.mubr.f32.gmra.mxu0 %v6846
    %v7011 = vpop.f32.mrf.mxu0
    %v7012 = vadd.f32 0.0, %v7011
    %v7013 = vpop.f32.mrf.mxu0
    %7014 = vmatprep.mubr.f32.mxu0 0.0
    %7015 = vmatmul.mubr.f32.gmra.mxu0 %v6849
    %v7016 = vpop.f32.mrf.mxu0
    %v7017 = vadd.f32 0.0, %v7016
    %v7018 = vpop.f32.mrf.mxu0
    %7019 = vmatprep.mubr.f32.mxu0 0.0
    %7020 = vmatmul.mubr.f32.gmra.mxu0 %v6852
    %v7021 = vpop.f32.mrf.mxu0
    %v7022 = vadd.f32 0.0, %v7021
    %v7023 = vpop.f32.mrf.mxu0
    %7024 = vmatprep.mubr.f32.mxu0 0.0
    %7025 = vmatmul.mubr.f32.gmra.mxu0 %v6855
    %v7026 = vpop.f32.mrf.mxu0
    %v7027 = vadd.f32 0.0, %v7026
    %v7028 = vpop.f32.mrf.mxu0
    %7029 = vmatprep.mubr.f32.mxu0 0.0
    %7030 = vmatmul.mubr.f32.gmra.mxu0 %v6858
    %v7031 = vpop.f32.mrf.mxu0
    %v7032 = vadd.f32 0.0, %v7031
    %v7033 = vpop.f32.mrf.mxu0
    %7034 = vmatprep.mubr.f32.mxu0 0.0
    %7035 = vmatmul.mubr.f32.gmra.mxu0 %v6861
    %v7036 = vpop.f32.mrf.mxu0
    %v7037 = vadd.f32 0.0, %v7036
    %v7038 = vpop.f32.mrf.mxu0
    %7039 = vmatprep.mubr.f32.mxu0 0.0
    %7040 = vmatmul.mubr.f32.gmra.mxu0 %v6864
    %v7041 = vpop.f32.mrf.mxu0
    %v7042 = vadd.f32 0.0, %v7041
    %v7043 = vpop.f32.mrf.mxu0
    %7044 = vmatprep.mubr.f32.mxu0 0.0
    %7045 = vmatmul.mubr.f32.gmra.mxu0 %v6867
    %v7046 = vpop.f32.mrf.mxu0
    %v7047 = vadd.f32 0.0, %v7046
    %v7048 = vpop.f32.mrf.mxu0
    %7049 = vmatprep.mubr.f32.mxu0 0.0
    %7050 = vmatmul.mubr.f32.gmra.mxu0 %v6870
    %v7051 = vpop.f32.mrf.mxu0
    %v7052 = vadd.f32 0.0, %v7051
    %v7053 = vpop.f32.mrf.mxu0
    %7054 = vmatprep.mubr.f32.mxu0 0.0
    %7055 = vmatmul.mubr.f32.gmra.mxu0 %v6873
    %v7056 = vpop.f32.mrf.mxu0
    %v7057 = vadd.f32 0.0, %v7056
    %v7058 = vpop.f32.mrf.mxu0
    %7059 = vdwg.mxu0
    %v7060 = vsub.f32 %v5701, %v6942
    %v7061 = vsub.f32 %v5702, %v6947
    %v7062 = vsub.f32 %v5703, %v6952
    %v7063 = vsub.f32 %v5704, %v6957
    %v7064 = vsub.f32 %v5705, %v6962
    %v7065 = vsub.f32 %v5706, %v6967
    %v7066 = vsub.f32 %v5707, %v6972
    %v7067 = vsub.f32 %v5708, %v6977
    %v7068 = vsub.f32 %v5709, %v6982
    %v7069 = vsub.f32 %v5710, %v6987
    %v7070 = vsub.f32 %v5711, %v6992
    %v7071 = vsub.f32 %v5712, %v6997
    %v7072 = vsub.f32 %v5713, %v7002
    %v7073 = vsub.f32 %v5714, %v7007
    %v7074 = vsub.f32 %v5715, %v7012
    %v7075 = vsub.f32 %v5716, %v7017
    %v7076 = vsub.f32 %v5717, %v7022
    %v7077 = vsub.f32 %v5718, %v7027
    %v7078 = vsub.f32 %v5719, %v7032
    %v7079 = vsub.f32 %v5720, %v7037
    %v7080 = vsub.f32 %v5721, %v7042
    %v7081 = vsub.f32 %v5722, %v7047
    %v7082 = vsub.f32 %v5723, %v7052
    %v7083 = vsub.f32 %v5724, %v7057
    %v7084 = vand.u32 2147483647, %v7060
    %v7085 = vand.u32 2147483647, %v7061
    %v7086 = vand.u32 2147483647, %v7062
    %v7087 = vand.u32 2147483647, %v7063
    %v7088 = vand.u32 2147483647, %v7064
    %v7089 = vand.u32 2147483647, %v7065
    %v7090 = vand.u32 2147483647, %v7066
    %v7091 = vand.u32 2147483647, %v7067
    %v7092 = vand.u32 2147483647, %v7068
    %v7093 = vand.u32 2147483647, %v7069
    %v7094 = vand.u32 2147483647, %v7070
    %v7095 = vand.u32 2147483647, %v7071
    %v7096 = vand.u32 2147483647, %v7072
    %v7097 = vand.u32 2147483647, %v7073
    %v7098 = vand.u32 2147483647, %v7074
    %v7099 = vand.u32 2147483647, %v7075
    %v7100 = vand.u32 2147483647, %v7076
    %v7101 = vand.u32 2147483647, %v7077
    %v7102 = vand.u32 2147483647, %v7078
    %v7103 = vand.u32 2147483647, %v7079
    %v7104 = vand.u32 2147483647, %v7080
    %v7105 = vand.u32 2147483647, %v7081
    %v7106 = vand.u32 2147483647, %v7082
    %v7107 = vand.u32 2147483647, %v7083
    %v7108 = vsel %vm6729, %v7084, 0.0
    %v7109 = vsel %vm6729, %v7085, 0.0
    %v7110 = vadd.f32 %v7108, %v7109
    %v7111 = vsel %vm6729, %v7086, 0.0
    %v7112 = vadd.f32 %v7110, %v7111
    %v7113 = vsel %vm6729, %v7087, 0.0
    %v7114 = vadd.f32 %v7112, %v7113
    %v7115 = vsel %vm6729, %v7088, 0.0
    %v7116 = vadd.f32 %v7114, %v7115
    %v7117 = vsel %vm6729, %v7089, 0.0
    %v7118 = vadd.f32 %v7116, %v7117
    %v7119 = vsel %vm6729, %v7090, 0.0
    %v7120 = vadd.f32 %v7118, %v7119
    %v7121 = vsel %vm6729, %v7091, 0.0
    %v7122 = vadd.f32 %v7120, %v7121
    %v7123 = vsel %vm6729, %v7092, 0.0
    %v7124 = vadd.f32 %v7122, %v7123
    %v7125 = vsel %vm6729, %v7093, 0.0
    %v7126 = vadd.f32 %v7124, %v7125
    %v7127 = vsel %vm6729, %v7094, 0.0
    %v7128 = vadd.f32 %v7126, %v7127
    %v7129 = vsel %vm6729, %v7095, 0.0
    %v7130 = vadd.f32 %v7128, %v7129
    %v7131 = vsel %vm6729, %v7096, 0.0
    %v7132 = vadd.f32 %v7130, %v7131
    %v7133 = vsel %vm6729, %v7097, 0.0
    %v7134 = vadd.f32 %v7132, %v7133
    %v7135 = vsel %vm6729, %v7098, 0.0
    %v7136 = vadd.f32 %v7134, %v7135
    %v7137 = vsel %vm6729, %v7099, 0.0
    %v7138 = vadd.f32 %v7136, %v7137
    %v7139 = vsel %vm6729, %v7100, 0.0
    %v7140 = vadd.f32 %v7138, %v7139
    %v7141 = vsel %vm6729, %v7101, 0.0
    %v7142 = vadd.f32 %v7140, %v7141
    %v7143 = vsel %vm6729, %v7102, 0.0
    %v7144 = vadd.f32 %v7142, %v7143
    %v7145 = vsel %vm6729, %v7103, 0.0
    %v7146 = vadd.f32 %v7144, %v7145
    %v7147 = vsel %vm6729, %v7104, 0.0
    %v7148 = vadd.f32 %v7146, %v7147
    %v7149 = vsel %vm6729, %v7105, 0.0
    %v7150 = vadd.f32 %v7148, %v7149
    %v7151 = vsel %vm6729, %v7106, 0.0
    %v7152 = vadd.f32 %v7150, %v7151
    %v7153 = vsel %vm6729, %v7107, 0.0
    %v7154 = vadd.f32 %v7152, %v7153
    %7155 = vadd.xlane.f32.xlu0 %v7154
    %v7156 = vpop.xlane.xlu0 %7155
    %v7157 = vrot.slane %v7156, 4
    %v7158 = vadd.f32 %v7156, %v7157
    %v7159 = vrot.slane %v7158, 2
    %v7160 = vadd.f32 %v7158, %v7159
    %v7161 = vrot.slane %v7160, 1
    %v7162 = vadd.f32 %v7160, %v7161
    %s7163 = vtos %v7162
    %v7164 = vrcp.pop 6144.0
    %s7165 = vtos %v7164
    %s7166 = smul.f32 %s7163, %s7165
    %s7167 = scalar_lea.smem [#allocation20], 11
    %7168 = sst [smem:[%s7167]] %s7166
    %v7169 = vld [vmem:[%s9] sm:$0xff]
    %v7170 = vld [vmem:[%s9 + $0x8] sm:$0xff]
    %v7171 = vld [vmem:[%s9 + $0x10] sm:$0x3f]
    %v7172 = vld [vmem:[%s9 + $0x18] sm:$0xff]
    %v7173 = vld [vmem:[%s9 + $0x20] sm:$0xff]
    %v7174 = vld [vmem:[%s9 + $0x28] sm:$0x3f]
    %v7175 = vld [vmem:[%s9 + $0x30] sm:$0xff]
    %v7176 = vld [vmem:[%s9 + $0x38] sm:$0xff]
    %v7177 = vld [vmem:[%s9 + $0x40] sm:$0x3f]
    %v7178 = vld [vmem:[%s9 + $0x48] sm:$0xff]
    %v7179 = vld [vmem:[%s9 + $0x50] sm:$0xff]
    %v7180 = vld [vmem:[%s9 + $0x58] sm:$0x3f]
    %v7181 = vld [vmem:[%s9 + $0x60] sm:$0xff]
    %v7182 = vld [vmem:[%s9 + $0x68] sm:$0xff]
    %v7183 = vld [vmem:[%s9 + $0x70] sm:$0x3f]
    %v7184 = vld [vmem:[%s9 + $0x78] sm:$0xff]
    %v7185 = vld [vmem:[%s9 + $0x80] sm:$0xff]
    %v7186 = vld [vmem:[%s9 + $0x88] sm:$0x3f]
    %v7187 = vld [vmem:[%s10] sm:$0xff]
    %v7188 = vld [vmem:[%s10 + $0x8] sm:$0xff]
    %v7189 = vld [vmem:[%s10 + $0x10] sm:$0x3f]
    %v7190 = vld [vmem:[%s10 + $0x18] sm:$0xff]
    %v7191 = vld [vmem:[%s10 + $0x20] sm:$0xff]
    %v7192 = vld [vmem:[%s10 + $0x28] sm:$0x3f]
    %v7193 = vld [vmem:[%s10 + $0x30] sm:$0xff]
    %v7194 = vld [vmem:[%s10 + $0x38] sm:$0xff]
    %v7195 = vld [vmem:[%s10 + $0x40] sm:$0x3f]
    %v7196 = vld [vmem:[%s10 + $0x48] sm:$0xff]
    %v7197 = vld [vmem:[%s10 + $0x50] sm:$0xff]
    %v7198 = vld [vmem:[%s10 + $0x58] sm:$0x3f]
    %v7199 = vld [vmem:[%s10 + $0x60] sm:$0xff]
    %v7200 = vld [vmem:[%s10 + $0x68] sm:$0xff]
    %v7201 = vld [vmem:[%s10 + $0x70] sm:$0x3f]
    %v7202 = vld [vmem:[%s10 + $0x78] sm:$0xff]
    %v7203 = vld [vmem:[%s10 + $0x80] sm:$0xff]
    %v7204 = vld [vmem:[%s10 + $0x88] sm:$0x3f]
    %v7205 = vsub.f32 %v7169, %v7187
    %v7206 = vsub.f32 %v7170, %v7188
    %v7207 = vsub.f32 %v7171, %v7189
    %v7208 = vsub.f32 %v7172, %v7190
    %v7209 = vsub.f32 %v7173, %v7191
    %v7210 = vsub.f32 %v7174, %v7192
    %v7211 = vsub.f32 %v7175, %v7193
    %v7212 = vsub.f32 %v7176, %v7194
    %v7213 = vsub.f32 %v7177, %v7195
    %v7214 = vsub.f32 %v7178, %v7196
    %v7215 = vsub.f32 %v7179, %v7197
    %v7216 = vsub.f32 %v7180, %v7198
    %v7217 = vsub.f32 %v7181, %v7199
    %v7218 = vsub.f32 %v7182, %v7200
    %v7219 = vsub.f32 %v7183, %v7201
    %v7220 = vsub.f32 %v7184, %v7202
    %v7221 = vsub.f32 %v7185, %v7203
    %v7222 = vsub.f32 %v7186, %v7204
    %v7223 = vand.u32 2147483647, %v7205
    %v7224 = vand.u32 2147483647, %v7206
    %v7225 = vand.u32 2147483647, %v7207
    %v7226 = vand.u32 2147483647, %v7208
    %v7227 = vand.u32 2147483647, %v7209
    %v7228 = vand.u32 2147483647, %v7210
    %v7229 = vand.u32 2147483647, %v7211
    %v7230 = vand.u32 2147483647, %v7212
    %v7231 = vand.u32 2147483647, %v7213
    %v7232 = vand.u32 2147483647, %v7214
    %v7233 = vand.u32 2147483647, %v7215
    %v7234 = vand.u32 2147483647, %v7216
    %v7235 = vand.u32 2147483647, %v7217
    %v7236 = vand.u32 2147483647, %v7218
    %v7237 = vand.u32 2147483647, %v7219
    %v7238 = vand.u32 2147483647, %v7220
    %v7239 = vand.u32 2147483647, %v7221
    %v7240 = vand.u32 2147483647, %v7222
    %vm7241 = vcmask 228352
    %v7242 = vsel %vm7241, %v7223, 0.0
    %v7243 = vsel %vm7241, %v7224, 0.0
    %v7244 = vadd.f32 %v7242, %v7243
    %vm7245 = vcmask 226304
    %v7246 = vsel %vm7245, %v7225, 0.0
    %v7247 = vadd.f32 %v7244, %v7246
    %v7248 = vsel %vm7241, %v7226, 0.0
    %v7249 = vadd.f32 %v7247, %v7248
    %v7250 = vsel %vm7241, %v7227, 0.0
    %v7251 = vadd.f32 %v7249, %v7250
    %v7252 = vsel %vm7245, %v7228, 0.0
    %v7253 = vadd.f32 %v7251, %v7252
    %v7254 = vsel %vm7241, %v7229, 0.0
    %v7255 = vadd.f32 %v7253, %v7254
    %v7256 = vsel %vm7241, %v7230, 0.0
    %v7257 = vadd.f32 %v7255, %v7256
    %v7258 = vsel %vm7245, %v7231, 0.0
    %v7259 = vadd.f32 %v7257, %v7258
    %v7260 = vsel %vm7241, %v7232, 0.0
    %v7261 = vadd.f32 %v7259, %v7260
    %v7262 = vsel %vm7241, %v7233, 0.0
    %v7263 = vadd.f32 %v7261, %v7262
    %v7264 = vsel %vm7245, %v7234, 0.0
    %v7265 = vadd.f32 %v7263, %v7264
    %v7266 = vsel %vm7241, %v7235, 0.0
    %v7267 = vadd.f32 %v7265, %v7266
    %v7268 = vsel %vm7241, %v7236, 0.0
    %v7269 = vadd.f32 %v7267, %v7268
    %v7270 = vsel %vm7245, %v7237, 0.0
    %v7271 = vadd.f32 %v7269, %v7270
    %v7272 = vsel %vm7241, %v7238, 0.0
    %v7273 = vadd.f32 %v7271, %v7272
    %v7274 = vsel %vm7241, %v7239, 0.0
    %v7275 = vadd.f32 %v7273, %v7274
    %v7276 = vsel %vm7245, %v7240, 0.0
    %v7277 = vadd.f32 %v7275, %v7276
    %7278 = vadd.xlane.f32.xlu0 %v7277
    %v7279 = vpop.xlane.xlu0 %7278
    %v7280 = vrot.slane %v7279, 4
    %v7281 = vadd.f32 %v7279, %v7280
    %v7282 = vrot.slane %v7281, 2
    %v7283 = vadd.f32 %v7281, %v7282
    %v7284 = vrot.slane %v7283, 1
    %v7285 = vadd.f32 %v7283, %v7284
    %s7286 = vtos %v7285
    %v7287 = vrcp.pop 3696.0
    %s7288 = vtos %v7287
    %s7289 = smul.f32 %s7286, %s7288
    %v7290 = vld [vmem:[%s11] sm:$0xff]
    %v7291 = vld [vmem:[%s11 + $0x8] sm:$0xff]
    %v7292 = vld [vmem:[%s11 + $0x10] sm:$0x3f]
    %v7293 = vld [vmem:[%s11 + $0x18] sm:$0xff]
    %v7294 = vld [vmem:[%s11 + $0x20] sm:$0xff]
    %v7295 = vld [vmem:[%s11 + $0x28] sm:$0x3f]
    %v7296 = vld [vmem:[%s11 + $0x30] sm:$0xff]
    %v7297 = vld [vmem:[%s11 + $0x38] sm:$0xff]
    %v7298 = vld [vmem:[%s11 + $0x40] sm:$0x3f]
    %v7299 = vld [vmem:[%s11 + $0x48] sm:$0xff]
    %v7300 = vld [vmem:[%s11 + $0x50] sm:$0xff]
    %v7301 = vld [vmem:[%s11 + $0x58] sm:$0x3f]
    %v7302 = vld [vmem:[%s11 + $0x60] sm:$0xff]
    %v7303 = vld [vmem:[%s11 + $0x68] sm:$0xff]
    %v7304 = vld [vmem:[%s11 + $0x70] sm:$0x3f]
    %v7305 = vld [vmem:[%s11 + $0x78] sm:$0xff]
    %v7306 = vld [vmem:[%s11 + $0x80] sm:$0xff]
    %v7307 = vld [vmem:[%s11 + $0x88] sm:$0x3f]
    %v7308 = vld [vmem:[%s12] sm:$0xff]
    %v7309 = vld [vmem:[%s12 + $0x8] sm:$0xff]
    %v7310 = vld [vmem:[%s12 + $0x10] sm:$0x3f]
    %v7311 = vld [vmem:[%s12 + $0x18] sm:$0xff]
    %v7312 = vld [vmem:[%s12 + $0x20] sm:$0xff]
    %v7313 = vld [vmem:[%s12 + $0x28] sm:$0x3f]
    %v7314 = vld [vmem:[%s12 + $0x30] sm:$0xff]
    %v7315 = vld [vmem:[%s12 + $0x38] sm:$0xff]
    %v7316 = vld [vmem:[%s12 + $0x40] sm:$0x3f]
    %v7317 = vld [vmem:[%s12 + $0x48] sm:$0xff]
    %v7318 = vld [vmem:[%s12 + $0x50] sm:$0xff]
    %v7319 = vld [vmem:[%s12 + $0x58] sm:$0x3f]
    %v7320 = vld [vmem:[%s12 + $0x60] sm:$0xff]
    %v7321 = vld [vmem:[%s12 + $0x68] sm:$0xff]
    %v7322 = vld [vmem:[%s12 + $0x70] sm:$0x3f]
    %v7323 = vld [vmem:[%s12 + $0x78] sm:$0xff]
    %v7324 = vld [vmem:[%s12 + $0x80] sm:$0xff]
    %v7325 = vld [vmem:[%s12 + $0x88] sm:$0x3f]
    %v7326 = vsub.f32 %v7290, %v7308
    %v7327 = vsub.f32 %v7291, %v7309
    %v7328 = vsub.f32 %v7292, %v7310
    %v7329 = vsub.f32 %v7293, %v7311
    %v7330 = vsub.f32 %v7294, %v7312
    %v7331 = vsub.f32 %v7295, %v7313
    %v7332 = vsub.f32 %v7296, %v7314
    %v7333 = vsub.f32 %v7297, %v7315
    %v7334 = vsub.f32 %v7298, %v7316
    %v7335 = vsub.f32 %v7299, %v7317
    %v7336 = vsub.f32 %v7300, %v7318
    %v7337 = vsub.f32 %v7301, %v7319
    %v7338 = vsub.f32 %v7302, %v7320
    %v7339 = vsub.f32 %v7303, %v7321
    %v7340 = vsub.f32 %v7304, %v7322
    %v7341 = vsub.f32 %v7305, %v7323
    %v7342 = vsub.f32 %v7306, %v7324
    %v7343 = vsub.f32 %v7307, %v7325
    %v7344 = vand.u32 2147483647, %v7326
    %v7345 = vand.u32 2147483647, %v7327
    %v7346 = vand.u32 2147483647, %v7328
    %v7347 = vand.u32 2147483647, %v7329
    %v7348 = vand.u32 2147483647, %v7330
    %v7349 = vand.u32 2147483647, %v7331
    %v7350 = vand.u32 2147483647, %v7332
    %v7351 = vand.u32 2147483647, %v7333
    %v7352 = vand.u32 2147483647, %v7334
    %v7353 = vand.u32 2147483647, %v7335
    %v7354 = vand.u32 2147483647, %v7336
    %v7355 = vand.u32 2147483647, %v7337
    %v7356 = vand.u32 2147483647, %v7338
    %v7357 = vand.u32 2147483647, %v7339
    %v7358 = vand.u32 2147483647, %v7340
    %v7359 = vand.u32 2147483647, %v7341
    %v7360 = vand.u32 2147483647, %v7342
    %v7361 = vand.u32 2147483647, %v7343
    %v7362 = vsel %vm7241, %v7344, 0.0
    %v7363 = vsel %vm7241, %v7345, 0.0
    %v7364 = vadd.f32 %v7362, %v7363
    %v7365 = vsel %vm7245, %v7346, 0.0
    %v7366 = vadd.f32 %v7364, %v7365
    %v7367 = vsel %vm7241, %v7347, 0.0
    %v7368 = vadd.f32 %v7366, %v7367
    %v7369 = vsel %vm7241, %v7348, 0.0
    %v7370 = vadd.f32 %v7368, %v7369
    %v7371 = vsel %vm7245, %v7349, 0.0
    %v7372 = vadd.f32 %v7370, %v7371
    %v7373 = vsel %vm7241, %v7350, 0.0
    %v7374 = vadd.f32 %v7372, %v7373
    %v7375 = vsel %vm7241, %v7351, 0.0
    %v7376 = vadd.f32 %v7374, %v7375
    %v7377 = vsel %vm7245, %v7352, 0.0
    %v7378 = vadd.f32 %v7376, %v7377
    %v7379 = vsel %vm7241, %v7353, 0.0
    %v7380 = vadd.f32 %v7378, %v7379
    %v7381 = vsel %vm7241, %v7354, 0.0
    %v7382 = vadd.f32 %v7380, %v7381
    %v7383 = vsel %vm7245, %v7355, 0.0
    %v7384 = vadd.f32 %v7382, %v7383
    %v7385 = vsel %vm7241, %v7356, 0.0
    %v7386 = vadd.f32 %v7384, %v7385
    %v7387 = vsel %vm7241, %v7357, 0.0
    %v7388 = vadd.f32 %v7386, %v7387
    %v7389 = vsel %vm7245, %v7358, 0.0
    %v7390 = vadd.f32 %v7388, %v7389
    %v7391 = vsel %vm7241, %v7359, 0.0
    %v7392 = vadd.f32 %v7390, %v7391
    %v7393 = vsel %vm7241, %v7360, 0.0
    %v7394 = vadd.f32 %v7392, %v7393
    %v7395 = vsel %vm7245, %v7361, 0.0
    %v7396 = vadd.f32 %v7394, %v7395
    %7397 = vadd.xlane.f32.xlu0 %v7396
    %v7398 = vpop.xlane.xlu0 %7397
    %v7399 = vrot.slane %v7398, 4
    %v7400 = vadd.f32 %v7398, %v7399
    %v7401 = vrot.slane %v7400, 2
    %v7402 = vadd.f32 %v7400, %v7401
    %v7403 = vrot.slane %v7402, 1
    %v7404 = vadd.f32 %v7402, %v7403
    %s7405 = vtos %v7404
    %v7406 = vrcp.pop 3696.0
    %s7407 = vtos %v7406
    %s7408 = smul.f32 %s7405, %s7407
    %s7409 = sadd.f32 %s7289, %s7408
    %v7410 = vld [vmem:[%s13] sm:$0xff]
    %v7411 = vld [vmem:[%s13 + $0x8] sm:$0xff]
    %v7412 = vld [vmem:[%s13 + $0x10] sm:$0xff]
    %v7413 = vld [vmem:[%s13 + $0x18] sm:$0xff]
    %v7414 = vld [vmem:[%s13 + $0x20] sm:$0xff]
    %v7415 = vld [vmem:[%s13 + $0x28] sm:$0xff]
    %v7416 = vld [vmem:[%s13 + $0x30] sm:$0xff]
    %v7417 = vld [vmem:[%s13 + $0x38] sm:$0xff]
    %v7418 = vld [vmem:[%s13 + $0x40] sm:$0x3]
    %v7419 = vld [vmem:[%s13 + $0x48] sm:$0xff]
    %v7420 = vld [vmem:[%s13 + $0x50] sm:$0xff]
    %v7421 = vld [vmem:[%s13 + $0x58] sm:$0xff]
    %v7422 = vld [vmem:[%s13 + $0x60] sm:$0xff]
    %v7423 = vld [vmem:[%s13 + $0x68] sm:$0xff]
    %v7424 = vld [vmem:[%s13 + $0x70] sm:$0xff]
    %v7425 = vld [vmem:[%s13 + $0x78] sm:$0xff]
    %v7426 = vld [vmem:[%s13 + $0x80] sm:$0xff]
    %v7427 = vld [vmem:[%s13 + $0x88] sm:$0x3]
    %v7428 = vld [vmem:[%s13 + $0x90] sm:$0xff]
    %v7429 = vld [vmem:[%s13 + $0x98] sm:$0xff]
    %v7430 = vld [vmem:[%s13 + $0xa0] sm:$0xff]
    %v7431 = vld [vmem:[%s13 + $0xa8] sm:$0xff]
    %v7432 = vld [vmem:[%s13 + $0xb0] sm:$0xff]
    %v7433 = vld [vmem:[%s13 + $0xb8] sm:$0xff]
    %v7434 = vld [vmem:[%s13 + $0xc0] sm:$0xff]
    %v7435 = vld [vmem:[%s13 + $0xc8] sm:$0xff]
    %v7436 = vld [vmem:[%s13 + $0xd0] sm:$0x3]
    %v7437 = vld [vmem:[%s13 + $0xd8] sm:$0xff]
    %v7438 = vld [vmem:[%s13 + $0xe0] sm:$0xff]
    %v7439 = vld [vmem:[%s13 + $0xe8] sm:$0xff]
    %v7440 = vld [vmem:[%s13 + $0xf0] sm:$0xff]
    %v7441 = vld [vmem:[%s13 + $0xf8] sm:$0xff]
    %v7442 = vld [vmem:[%s13 + $0x100] sm:$0xff]
    %v7443 = vld [vmem:[%s13 + $0x108] sm:$0xff]
    %v7444 = vld [vmem:[%s13 + $0x110] sm:$0xff]
    %v7445 = vld [vmem:[%s13 + $0x118] sm:$0x3]
    %v7446 = vld [vmem:[%s13 + $0x120] sm:$0xff]
    %v7447 = vld [vmem:[%s13 + $0x128] sm:$0xff]
    %v7448 = vld [vmem:[%s13 + $0x130] sm:$0xff]
    %v7449 = vld [vmem:[%s13 + $0x138] sm:$0xff]
    %v7450 = vld [vmem:[%s13 + $0x140] sm:$0xff]
    %v7451 = vld [vmem:[%s13 + $0x148] sm:$0xff]
    %v7452 = vld [vmem:[%s13 + $0x150] sm:$0xff]
    %v7453 = vld [vmem:[%s13 + $0x158] sm:$0xff]
    %v7454 = vld [vmem:[%s13 + $0x160] sm:$0x3]
    %v7455 = vld [vmem:[%s13 + $0x168] sm:$0xff]
    %v7456 = vld [vmem:[%s13 + $0x170] sm:$0xff]
    %v7457 = vld [vmem:[%s13 + $0x178] sm:$0xff]
    %v7458 = vld [vmem:[%s13 + $0x180] sm:$0xff]
    %v7459 = vld [vmem:[%s13 + $0x188] sm:$0xff]
    %v7460 = vld [vmem:[%s13 + $0x190] sm:$0xff]
    %v7461 = vld [vmem:[%s13 + $0x198] sm:$0xff]
    %v7462 = vld [vmem:[%s13 + $0x1a0] sm:$0xff]
    %v7463 = vld [vmem:[%s13 + $0x1a8] sm:$0x3]
    %v7464 = vld [vmem:[%s14] sm:$0xff]
    %v7465 = vld [vmem:[%s14 + $0x8] sm:$0xff]
    %v7466 = vld [vmem:[%s14 + $0x10] sm:$0xff]
    %v7467 = vld [vmem:[%s14 + $0x18] sm:$0xff]
    %v7468 = vld [vmem:[%s14 + $0x20] sm:$0xff]
    %v7469 = vld [vmem:[%s14 + $0x28] sm:$0xff]
    %v7470 = vld [vmem:[%s14 + $0x30] sm:$0xff]
    %v7471 = vld [vmem:[%s14 + $0x38] sm:$0xff]
    %v7472 = vld [vmem:[%s14 + $0x40] sm:$0x3]
    %v7473 = vld [vmem:[%s14 + $0x48] sm:$0xff]
    %v7474 = vld [vmem:[%s14 + $0x50] sm:$0xff]
    %v7475 = vld [vmem:[%s14 + $0x58] sm:$0xff]
    %v7476 = vld [vmem:[%s14 + $0x60] sm:$0xff]
    %v7477 = vld [vmem:[%s14 + $0x68] sm:$0xff]
    %v7478 = vld [vmem:[%s14 + $0x70] sm:$0xff]
    %v7479 = vld [vmem:[%s14 + $0x78] sm:$0xff]
    %v7480 = vld [vmem:[%s14 + $0x80] sm:$0xff]
    %v7481 = vld [vmem:[%s14 + $0x88] sm:$0x3]
    %v7482 = vld [vmem:[%s14 + $0x90] sm:$0xff]
    %v7483 = vld [vmem:[%s14 + $0x98] sm:$0xff]
    %v7484 = vld [vmem:[%s14 + $0xa0] sm:$0xff]
    %v7485 = vld [vmem:[%s14 + $0xa8] sm:$0xff]
    %v7486 = vld [vmem:[%s14 + $0xb0] sm:$0xff]
    %v7487 = vld [vmem:[%s14 + $0xb8] sm:$0xff]
    %v7488 = vld [vmem:[%s14 + $0xc0] sm:$0xff]
    %v7489 = vld [vmem:[%s14 + $0xc8] sm:$0xff]
    %v7490 = vld [vmem:[%s14 + $0xd0] sm:$0x3]
    %v7491 = vld [vmem:[%s14 + $0xd8] sm:$0xff]
    %v7492 = vld [vmem:[%s14 + $0xe0] sm:$0xff]
    %v7493 = vld [vmem:[%s14 + $0xe8] sm:$0xff]
    %v7494 = vld [vmem:[%s14 + $0xf0] sm:$0xff]
    %v7495 = vld [vmem:[%s14 + $0xf8] sm:$0xff]
    %v7496 = vld [vmem:[%s14 + $0x100] sm:$0xff]
    %v7497 = vld [vmem:[%s14 + $0x108] sm:$0xff]
    %v7498 = vld [vmem:[%s14 + $0x110] sm:$0xff]
    %v7499 = vld [vmem:[%s14 + $0x118] sm:$0x3]
    %v7500 = vld [vmem:[%s14 + $0x120] sm:$0xff]
    %v7501 = vld [vmem:[%s14 + $0x128] sm:$0xff]
    %v7502 = vld [vmem:[%s14 + $0x130] sm:$0xff]
    %v7503 = vld [vmem:[%s14 + $0x138] sm:$0xff]
    %v7504 = vld [vmem:[%s14 + $0x140] sm:$0xff]
    %v7505 = vld [vmem:[%s14 + $0x148] sm:$0xff]
    %v7506 = vld [vmem:[%s14 + $0x150] sm:$0xff]
    %v7507 = vld [vmem:[%s14 + $0x158] sm:$0xff]
    %v7508 = vld [vmem:[%s14 + $0x160] sm:$0x3]
    %v7509 = vld [vmem:[%s14 + $0x168] sm:$0xff]
    %v7510 = vld [vmem:[%s14 + $0x170] sm:$0xff]
    %v7511 = vld [vmem:[%s14 + $0x178] sm:$0xff]
    %v7512 = vld [vmem:[%s14 + $0x180] sm:$0xff]
    %v7513 = vld [vmem:[%s14 + $0x188] sm:$0xff]
    %v7514 = vld [vmem:[%s14 + $0x190] sm:$0xff]
    %v7515 = vld [vmem:[%s14 + $0x198] sm:$0xff]
    %v7516 = vld [vmem:[%s14 + $0x1a0] sm:$0xff]
    %v7517 = vld [vmem:[%s14 + $0x1a8] sm:$0x3]
    %v7518 = vsub.f32 %v7410, %v7464
    %v7519 = vsub.f32 %v7411, %v7465
    %v7520 = vsub.f32 %v7412, %v7466
    %v7521 = vsub.f32 %v7413, %v7467
    %v7522 = vsub.f32 %v7414, %v7468
    %v7523 = vsub.f32 %v7415, %v7469
    %v7524 = vsub.f32 %v7416, %v7470
    %v7525 = vsub.f32 %v7417, %v7471
    %v7526 = vsub.f32 %v7418, %v7472
    %v7527 = vsub.f32 %v7419, %v7473
    %v7528 = vsub.f32 %v7420, %v7474
    %v7529 = vsub.f32 %v7421, %v7475
    %v7530 = vsub.f32 %v7422, %v7476
    %v7531 = vsub.f32 %v7423, %v7477
    %v7532 = vsub.f32 %v7424, %v7478
    %v7533 = vsub.f32 %v7425, %v7479
    %v7534 = vsub.f32 %v7426, %v7480
    %v7535 = vsub.f32 %v7427, %v7481
    %v7536 = vsub.f32 %v7428, %v7482
    %v7537 = vsub.f32 %v7429, %v7483
    %v7538 = vsub.f32 %v7430, %v7484
    %v7539 = vsub.f32 %v7431, %v7485
    %v7540 = vsub.f32 %v7432, %v7486
    %v7541 = vsub.f32 %v7433, %v7487
    %v7542 = vsub.f32 %v7434, %v7488
    %v7543 = vsub.f32 %v7435, %v7489
    %v7544 = vsub.f32 %v7436, %v7490
    %v7545 = vsub.f32 %v7437, %v7491
    %v7546 = vsub.f32 %v7438, %v7492
    %v7547 = vsub.f32 %v7439, %v7493
    %v7548 = vsub.f32 %v7440, %v7494
    %v7549 = vsub.f32 %v7441, %v7495
    %v7550 = vsub.f32 %v7442, %v7496
    %v7551 = vsub.f32 %v7443, %v7497
    %v7552 = vsub.f32 %v7444, %v7498
    %v7553 = vsub.f32 %v7445, %v7499
    %v7554 = vsub.f32 %v7446, %v7500
    %v7555 = vsub.f32 %v7447, %v7501
    %v7556 = vsub.f32 %v7448, %v7502
    %v7557 = vsub.f32 %v7449, %v7503
    %v7558 = vsub.f32 %v7450, %v7504
    %v7559 = vsub.f32 %v7451, %v7505
    %v7560 = vsub.f32 %v7452, %v7506
    %v7561 = vsub.f32 %v7453, %v7507
    %v7562 = vsub.f32 %v7454, %v7508
    %v7563 = vsub.f32 %v7455, %v7509
    %v7564 = vsub.f32 %v7456, %v7510
    %v7565 = vsub.f32 %v7457, %v7511
    %v7566 = vsub.f32 %v7458, %v7512
    %v7567 = vsub.f32 %v7459, %v7513
    %v7568 = vsub.f32 %v7460, %v7514
    %v7569 = vsub.f32 %v7461, %v7515
    %v7570 = vsub.f32 %v7462, %v7516
    %v7571 = vsub.f32 %v7463, %v7517
    %v7572 = vand.u32 2147483647, %v7518
    %v7573 = vand.u32 2147483647, %v7519
    %v7574 = vand.u32 2147483647, %v7520
    %v7575 = vand.u32 2147483647, %v7521
    %v7576 = vand.u32 2147483647, %v7522
    %v7577 = vand.u32 2147483647, %v7523
    %v7578 = vand.u32 2147483647, %v7524
    %v7579 = vand.u32 2147483647, %v7525
    %v7580 = vand.u32 2147483647, %v7526
    %v7581 = vand.u32 2147483647, %v7527
    %v7582 = vand.u32 2147483647, %v7528
    %v7583 = vand.u32 2147483647, %v7529
    %v7584 = vand.u32 2147483647, %v7530
    %v7585 = vand.u32 2147483647, %v7531
    %v7586 = vand.u32 2147483647, %v7532
    %v7587 = vand.u32 2147483647, %v7533
    %v7588 = vand.u32 2147483647, %v7534
    %v7589 = vand.u32 2147483647, %v7535
    %v7590 = vand.u32 2147483647, %v7536
    %v7591 = vand.u32 2147483647, %v7537
    %v7592 = vand.u32 2147483647, %v7538
    %v7593 = vand.u32 2147483647, %v7539
    %v7594 = vand.u32 2147483647, %v7540
    %v7595 = vand.u32 2147483647, %v7541
    %v7596 = vand.u32 2147483647, %v7542
    %v7597 = vand.u32 2147483647, %v7543
    %v7598 = vand.u32 2147483647, %v7544
    %v7599 = vand.u32 2147483647, %v7545
    %v7600 = vand.u32 2147483647, %v7546
    %v7601 = vand.u32 2147483647, %v7547
    %v7602 = vand.u32 2147483647, %v7548
    %v7603 = vand.u32 2147483647, %v7549
    %v7604 = vand.u32 2147483647, %v7550
    %v7605 = vand.u32 2147483647, %v7551
    %v7606 = vand.u32 2147483647, %v7552
    %v7607 = vand.u32 2147483647, %v7553
    %v7608 = vand.u32 2147483647, %v7554
    %v7609 = vand.u32 2147483647, %v7555
    %v7610 = vand.u32 2147483647, %v7556
    %v7611 = vand.u32 2147483647, %v7557
    %v7612 = vand.u32 2147483647, %v7558
    %v7613 = vand.u32 2147483647, %v7559
    %v7614 = vand.u32 2147483647, %v7560
    %v7615 = vand.u32 2147483647, %v7561
    %v7616 = vand.u32 2147483647, %v7562
    %v7617 = vand.u32 2147483647, %v7563
    %v7618 = vand.u32 2147483647, %v7564
    %v7619 = vand.u32 2147483647, %v7565
    %v7620 = vand.u32 2147483647, %v7566
    %v7621 = vand.u32 2147483647, %v7567
    %v7622 = vand.u32 2147483647, %v7568
    %v7623 = vand.u32 2147483647, %v7569
    %v7624 = vand.u32 2147483647, %v7570
    %v7625 = vand.u32 2147483647, %v7571
    %vm7626 = vcmask 375808
    %v7627 = vsel %vm7626, %v7572, 0.0
    %v7628 = vsel %vm7626, %v7573, 0.0
    %v7629 = vadd.f32 %v7627, %v7628
    %v7630 = vsel %vm7626, %v7574, 0.0
    %v7631 = vadd.f32 %v7629, %v7630
    %v7632 = vsel %vm7626, %v7575, 0.0
    %v7633 = vadd.f32 %v7631, %v7632
    %v7634 = vsel %vm7626, %v7576, 0.0
    %v7635 = vadd.f32 %v7633, %v7634
    %v7636 = vsel %vm7626, %v7577, 0.0
    %v7637 = vadd.f32 %v7635, %v7636
    %v7638 = vsel %vm7626, %v7578, 0.0
    %v7639 = vadd.f32 %v7637, %v7638
    %v7640 = vsel %vm7626, %v7579, 0.0
    %v7641 = vadd.f32 %v7639, %v7640
    %vm7642 = vcmask 369664
    %v7643 = vsel %vm7642, %v7580, 0.0
    %v7644 = vadd.f32 %v7641, %v7643
    %v7645 = vsel %vm7626, %v7581, 0.0
    %v7646 = vadd.f32 %v7644, %v7645
    %v7647 = vsel %vm7626, %v7582, 0.0
    %v7648 = vadd.f32 %v7646, %v7647
    %v7649 = vsel %vm7626, %v7583, 0.0
    %v7650 = vadd.f32 %v7648, %v7649
    %v7651 = vsel %vm7626, %v7584, 0.0
    %v7652 = vadd.f32 %v7650, %v7651
    %v7653 = vsel %vm7626, %v7585, 0.0
    %v7654 = vadd.f32 %v7652, %v7653
    %v7655 = vsel %vm7626, %v7586, 0.0
    %v7656 = vadd.f32 %v7654, %v7655
    %v7657 = vsel %vm7626, %v7587, 0.0
    %v7658 = vadd.f32 %v7656, %v7657
    %v7659 = vsel %vm7626, %v7588, 0.0
    %v7660 = vadd.f32 %v7658, %v7659
    %v7661 = vsel %vm7642, %v7589, 0.0
    %v7662 = vadd.f32 %v7660, %v7661
    %v7663 = vsel %vm7626, %v7590, 0.0
    %v7664 = vadd.f32 %v7662, %v7663
    %v7665 = vsel %vm7626, %v7591, 0.0
    %v7666 = vadd.f32 %v7664, %v7665
    %v7667 = vsel %vm7626, %v7592, 0.0
    %v7668 = vadd.f32 %v7666, %v7667
    %v7669 = vsel %vm7626, %v7593, 0.0
    %v7670 = vadd.f32 %v7668, %v7669
    %v7671 = vsel %vm7626, %v7594, 0.0
    %v7672 = vadd.f32 %v7670, %v7671
    %v7673 = vsel %vm7626, %v7595, 0.0
    %v7674 = vadd.f32 %v7672, %v7673
    %v7675 = vsel %vm7626, %v7596, 0.0
    %v7676 = vadd.f32 %v7674, %v7675
    %v7677 = vsel %vm7626, %v7597, 0.0
    %v7678 = vadd.f32 %v7676, %v7677
    %v7679 = vsel %vm7642, %v7598, 0.0
    %v7680 = vadd.f32 %v7678, %v7679
    %v7681 = vsel %vm7626, %v7599, 0.0
    %v7682 = vadd.f32 %v7680, %v7681
    %v7683 = vsel %vm7626, %v7600, 0.0
    %v7684 = vadd.f32 %v7682, %v7683
    %v7685 = vsel %vm7626, %v7601, 0.0
    %v7686 = vadd.f32 %v7684, %v7685
    %v7687 = vsel %vm7626, %v7602, 0.0
    %v7688 = vadd.f32 %v7686, %v7687
    %v7689 = vsel %vm7626, %v7603, 0.0
    %v7690 = vadd.f32 %v7688, %v7689
    %v7691 = vsel %vm7626, %v7604, 0.0
    %v7692 = vadd.f32 %v7690, %v7691
    %v7693 = vsel %vm7626, %v7605, 0.0
    %v7694 = vadd.f32 %v7692, %v7693
    %v7695 = vsel %vm7626, %v7606, 0.0
    %v7696 = vadd.f32 %v7694, %v7695
    %v7697 = vsel %vm7642, %v7607, 0.0
    %v7698 = vadd.f32 %v7696, %v7697
    %v7699 = vsel %vm7626, %v7608, 0.0
    %v7700 = vadd.f32 %v7698, %v7699
    %v7701 = vsel %vm7626, %v7609, 0.0
    %v7702 = vadd.f32 %v7700, %v7701
    %v7703 = vsel %vm7626, %v7610, 0.0
    %v7704 = vadd.f32 %v7702, %v7703
    %v7705 = vsel %vm7626, %v7611, 0.0
    %v7706 = vadd.f32 %v7704, %v7705
    %v7707 = vsel %vm7626, %v7612, 0.0
    %v7708 = vadd.f32 %v7706, %v7707
    %v7709 = vsel %vm7626, %v7613, 0.0
    %v7710 = vadd.f32 %v7708, %v7709
    %v7711 = vsel %vm7626, %v7614, 0.0
    %v7712 = vadd.f32 %v7710, %v7711
    %v7713 = vsel %vm7626, %v7615, 0.0
    %v7714 = vadd.f32 %v7712, %v7713
    %v7715 = vsel %vm7642, %v7616, 0.0
    %v7716 = vadd.f32 %v7714, %v7715
    %v7717 = vsel %vm7626, %v7617, 0.0
    %v7718 = vadd.f32 %v7716, %v7717
    %v7719 = vsel %vm7626, %v7618, 0.0
    %v7720 = vadd.f32 %v7718, %v7719
    %v7721 = vsel %vm7626, %v7619, 0.0
    %v7722 = vadd.f32 %v7720, %v7721
    %v7723 = vsel %vm7626, %v7620, 0.0
    %v7724 = vadd.f32 %v7722, %v7723
    %v7725 = vsel %vm7626, %v7621, 0.0
    %v7726 = vadd.f32 %v7724, %v7725
    %v7727 = vsel %vm7626, %v7622, 0.0
    %v7728 = vadd.f32 %v7726, %v7727
    %v7729 = vsel %vm7626, %v7623, 0.0
    %v7730 = vadd.f32 %v7728, %v7729
    %v7731 = vsel %vm7626, %v7624, 0.0
    %v7732 = vadd.f32 %v7730, %v7731
    %v7733 = vsel %vm7642, %v7625, 0.0
    %v7734 = vadd.f32 %v7732, %v7733
    %7735 = vadd.xlane.f32.xlu0 %v7734
    %v7736 = vpop.xlane.xlu0 %7735
    %v7737 = vrot.slane %v7736, 4
    %v7738 = vadd.f32 %v7736, %v7737
    %v7739 = vrot.slane %v7738, 2
    %v7740 = vadd.f32 %v7738, %v7739
    %v7741 = vrot.slane %v7740, 1
    %v7742 = vadd.f32 %v7740, %v7741
    %s7743 = vtos %v7742
    %v7744 = vrcp.pop 18216.0
    %s7745 = vtos %v7744
    %s7746 = smul.f32 %s7743, %s7745
    %s7747 = sadd.f32 %s7409, %s7746
    %v7748 = vld [vmem:[%s15] sm:$0xff]
    %v7749 = vld [vmem:[%s15 + $0x8] sm:$0xff]
    %v7750 = vld [vmem:[%s15 + $0x10] sm:$0xff]
    %v7751 = vld [vmem:[%s15 + $0x18] sm:$0x1]
    %v7752 = vld [vmem:[%s15 + $0x20] sm:$0xff]
    %v7753 = vld [vmem:[%s15 + $0x28] sm:$0xff]
    %v7754 = vld [vmem:[%s15 + $0x30] sm:$0xff]
    %v7755 = vld [vmem:[%s15 + $0x38] sm:$0x1]
    %v7756 = vld [vmem:[%s15 + $0x40] sm:$0xff]
    %v7757 = vld [vmem:[%s15 + $0x48] sm:$0xff]
    %v7758 = vld [vmem:[%s15 + $0x50] sm:$0xff]
    %v7759 = vld [vmem:[%s15 + $0x58] sm:$0x1]
    %v7760 = vld [vmem:[%s15 + $0x60] sm:$0xff]
    %v7761 = vld [vmem:[%s15 + $0x68] sm:$0xff]
    %v7762 = vld [vmem:[%s15 + $0x70] sm:$0xff]
    %v7763 = vld [vmem:[%s15 + $0x78] sm:$0x1]
    %v7764 = vld [vmem:[%s15 + $0x80] sm:$0xff]
    %v7765 = vld [vmem:[%s15 + $0x88] sm:$0xff]
    %v7766 = vld [vmem:[%s15 + $0x90] sm:$0xff]
    %v7767 = vld [vmem:[%s15 + $0x98] sm:$0x1]
    %v7768 = vld [vmem:[%s15 + $0xa0] sm:$0xff]
    %v7769 = vld [vmem:[%s15 + $0xa8] sm:$0xff]
    %v7770 = vld [vmem:[%s15 + $0xb0] sm:$0xff]
    %v7771 = vld [vmem:[%s15 + $0xb8] sm:$0x1]
    %v7772 = vld [vmem:[%s16] sm:$0xff]
    %v7773 = vld [vmem:[%s16 + $0x8] sm:$0xff]
    %v7774 = vld [vmem:[%s16 + $0x10] sm:$0xff]
    %v7775 = vld [vmem:[%s16 + $0x18] sm:$0x1]
    %v7776 = vld [vmem:[%s16 + $0x20] sm:$0xff]
    %v7777 = vld [vmem:[%s16 + $0x28] sm:$0xff]
    %v7778 = vld [vmem:[%s16 + $0x30] sm:$0xff]
    %v7779 = vld [vmem:[%s16 + $0x38] sm:$0x1]
    %v7780 = vld [vmem:[%s16 + $0x40] sm:$0xff]
    %v7781 = vld [vmem:[%s16 + $0x48] sm:$0xff]
    %v7782 = vld [vmem:[%s16 + $0x50] sm:$0xff]
    %v7783 = vld [vmem:[%s16 + $0x58] sm:$0x1]
    %v7784 = vld [vmem:[%s16 + $0x60] sm:$0xff]
    %v7785 = vld [vmem:[%s16 + $0x68] sm:$0xff]
    %v7786 = vld [vmem:[%s16 + $0x70] sm:$0xff]
    %v7787 = vld [vmem:[%s16 + $0x78] sm:$0x1]
    %v7788 = vld [vmem:[%s16 + $0x80] sm:$0xff]
    %v7789 = vld [vmem:[%s16 + $0x88] sm:$0xff]
    %v7790 = vld [vmem:[%s16 + $0x90] sm:$0xff]
    %v7791 = vld [vmem:[%s16 + $0x98] sm:$0x1]
    %v7792 = vld [vmem:[%s16 + $0xa0] sm:$0xff]
    %v7793 = vld [vmem:[%s16 + $0xa8] sm:$0xff]
    %v7794 = vld [vmem:[%s16 + $0xb0] sm:$0xff]
    %v7795 = vld [vmem:[%s16 + $0xb8] sm:$0x1]
    %v7796 = vsub.f32 %v7748, %v7772
    %v7797 = vsub.f32 %v7749, %v7773
    %v7798 = vsub.f32 %v7750, %v7774
    %v7799 = vsub.f32 %v7751, %v7775
    %v7800 = vsub.f32 %v7752, %v7776
    %v7801 = vsub.f32 %v7753, %v7777
    %v7802 = vsub.f32 %v7754, %v7778
    %v7803 = vsub.f32 %v7755, %v7779
    %v7804 = vsub.f32 %v7756, %v7780
    %v7805 = vsub.f32 %v7757, %v7781
    %v7806 = vsub.f32 %v7758, %v7782
    %v7807 = vsub.f32 %v7759, %v7783
    %v7808 = vsub.f32 %v7760, %v7784
    %v7809 = vsub.f32 %v7761, %v7785
    %v7810 = vsub.f32 %v7762, %v7786
    %v7811 = vsub.f32 %v7763, %v7787
    %v7812 = vsub.f32 %v7764, %v7788
    %v7813 = vsub.f32 %v7765, %v7789
    %v7814 = vsub.f32 %v7766, %v7790
    %v7815 = vsub.f32 %v7767, %v7791
    %v7816 = vsub.f32 %v7768, %v7792
    %v7817 = vsub.f32 %v7769, %v7793
    %v7818 = vsub.f32 %v7770, %v7794
    %v7819 = vsub.f32 %v7771, %v7795
    %v7820 = vand.u32 2147483647, %v7796
    %v7821 = vand.u32 2147483647, %v7797
    %v7822 = vand.u32 2147483647, %v7798
    %v7823 = vand.u32 2147483647, %v7799
    %v7824 = vand.u32 2147483647, %v7800
    %v7825 = vand.u32 2147483647, %v7801
    %v7826 = vand.u32 2147483647, %v7802
    %v7827 = vand.u32 2147483647, %v7803
    %v7828 = vand.u32 2147483647, %v7804
    %v7829 = vand.u32 2147483647, %v7805
    %v7830 = vand.u32 2147483647, %v7806
    %v7831 = vand.u32 2147483647, %v7807
    %v7832 = vand.u32 2147483647, %v7808
    %v7833 = vand.u32 2147483647, %v7809
    %v7834 = vand.u32 2147483647, %v7810
    %v7835 = vand.u32 2147483647, %v7811
    %v7836 = vand.u32 2147483647, %v7812
    %v7837 = vand.u32 2147483647, %v7813
    %v7838 = vand.u32 2147483647, %v7814
    %v7839 = vand.u32 2147483647, %v7815
    %v7840 = vand.u32 2147483647, %v7816
    %v7841 = vand.u32 2147483647, %v7817
    %v7842 = vand.u32 2147483647, %v7818
    %v7843 = vand.u32 2147483647, %v7819
    %vm7844 = vcmask 441344
    %v7845 = vsel %vm7844, %v7820, 0.0
    %v7846 = vsel %vm7844, %v7821, 0.0
    %v7847 = vadd.f32 %v7845, %v7846
    %v7848 = vsel %vm7844, %v7822, 0.0
    %v7849 = vadd.f32 %v7847, %v7848
    %vm7850 = vcmask 434176
    %v7851 = vsel %vm7850, %v7823, 0.0
    %v7852 = vadd.f32 %v7849, %v7851
    %v7853 = vsel %vm7844, %v7824, 0.0
    %v7854 = vadd.f32 %v7852, %v7853
    %v7855 = vsel %vm7844, %v7825, 0.0
    %v7856 = vadd.f32 %v7854, %v7855
    %v7857 = vsel %vm7844, %v7826, 0.0
    %v7858 = vadd.f32 %v7856, %v7857
    %v7859 = vsel %vm7850, %v7827, 0.0
    %v7860 = vadd.f32 %v7858, %v7859
    %v7861 = vsel %vm7844, %v7828, 0.0
    %v7862 = vadd.f32 %v7860, %v7861
    %v7863 = vsel %vm7844, %v7829, 0.0
    %v7864 = vadd.f32 %v7862, %v7863
    %v7865 = vsel %vm7844, %v7830, 0.0
    %v7866 = vadd.f32 %v7864, %v7865
    %v7867 = vsel %vm7850, %v7831, 0.0
    %v7868 = vadd.f32 %v7866, %v7867
    %v7869 = vsel %vm7844, %v7832, 0.0
    %v7870 = vadd.f32 %v7868, %v7869
    %v7871 = vsel %vm7844, %v7833, 0.0
    %v7872 = vadd.f32 %v7870, %v7871
    %v7873 = vsel %vm7844, %v7834, 0.0
    %v7874 = vadd.f32 %v7872, %v7873
    %v7875 = vsel %vm7850, %v7835, 0.0
    %v7876 = vadd.f32 %v7874, %v7875
    %v7877 = vsel %vm7844, %v7836, 0.0
    %v7878 = vadd.f32 %v7876, %v7877
    %v7879 = vsel %vm7844, %v7837, 0.0
    %v7880 = vadd.f32 %v7878, %v7879
    %v7881 = vsel %vm7844, %v7838, 0.0
    %v7882 = vadd.f32 %v7880, %v7881
    %v7883 = vsel %vm7850, %v7839, 0.0
    %v7884 = vadd.f32 %v7882, %v7883
    %v7885 = vsel %vm7844, %v7840, 0.0
    %v7886 = vadd.f32 %v7884, %v7885
    %v7887 = vsel %vm7844, %v7841, 0.0
    %v7888 = vadd.f32 %v7886, %v7887
    %v7889 = vsel %vm7844, %v7842, 0.0
    %v7890 = vadd.f32 %v7888, %v7889
    %v7891 = vsel %vm7850, %v7843, 0.0
    %v7892 = vadd.f32 %v7890, %v7891
    %7893 = vadd.xlane.f32.xlu0 %v7892
    %v7894 = vpop.xlane.xlu0 %7893
    %v7895 = vrot.slane %v7894, 4
    %v7896 = vadd.f32 %v7894, %v7895
    %v7897 = vrot.slane %v7896, 2
    %v7898 = vadd.f32 %v7896, %v7897
    %v7899 = vrot.slane %v7898, 1
    %v7900 = vadd.f32 %v7898, %v7899
    %s7901 = vtos %v7900
    %v7902 = vrcp.pop 8100.0
    %s7903 = vtos %v7902
    %s7904 = smul.f32 %s7901, %s7903
    %s7905 = sadd.f32 %s7747, %s7904
    %s7906 = scalar_lea.smem [#allocation20], 12
    %7907 = sst [smem:[%s7906]] %s7905
    %v7908 = vld [vmem:[#allocation18] sm:$0xff]
    %v7909 = vld [vmem:[%s18] sm:$0x3]
    %v7911 = vcombine.high %v7908, %v7908
    %v7913 = vunpack.c.l.s4 1983009808
    %v7914 = vunpack.c.0.s8 %v7913
    %v7915 = vlaneseq
    %v7916 = vshrl.u32 %v7915, 7
    %v7917 = vsub.s32 %v7914, %v7916
    %v7918 = vrot.slane %v7908, %v7917
    %v7920 = vunpack.c.l.s4 1983009808
    %v7921 = vunpack.c.0.s8 %v7920
    %v7922 = vlaneseq
    %v7923 = vshrl.u32 %v7922, 7
    %v7924 = vsub.s32 %v7921, %v7923
    %v7925 = vrot.slane %v7911, %v7924
    %v7926 = vcombine.high %v7918, %v7918
    %v7927 = vcombine.high %v7925, %v7925
    %vm7932 = vcmask 1041408
    %v7933 = vsel %vm7932, %v7918, -inf
    %v7934 = vsel %vm7932, %v7926, -inf
    %v7935 = vsel %vm7932, %v7925, -inf
    %v7936 = vsel %vm7932, %v7927, -inf
    %v7937 = vmax.f32 %v7933, %v7934
    %v7938 = vmax.f32 %v7935, %v7936
    %v7939 = vmax.f32 %v7937, %v7938
    %7940 = vmax.xlane.f32.xlu0 %v7939
    %v7941 = vpop.xlane.xlu0 %7940
    %v7944 = vunpack.c.l.s4 269488144
    %v7945 = vunpack.c.0.s8 %v7944
    %v7946 = vlaneseq
    %v7947 = vshrl.u32 %v7946, 7
    %v7948 = vsub.s32 %v7945, %v7947
    %v7949 = vrot.slane %v7941, %v7948
    %v7951 = vsub.f32 %v7908, %v7949
    %v7952 = vmul.f32 %v7951, 1.442695
    %v7953 = vpow.pop %v7952
    %v7955 = vcombine.high %v7953, %v7953
    %v7957 = vunpack.c.l.s4 1983009808
    %v7958 = vunpack.c.0.s8 %v7957
    %v7959 = vlaneseq
    %v7960 = vshrl.u32 %v7959, 7
    %v7961 = vsub.s32 %v7958, %v7960
    %v7962 = vrot.slane %v7953, %v7961
    %v7964 = vunpack.c.l.s4 1983009808
    %v7965 = vunpack.c.0.s8 %v7964
    %v7966 = vlaneseq
    %v7967 = vshrl.u32 %v7966, 7
    %v7968 = vsub.s32 %v7965, %v7967
    %v7969 = vrot.slane %v7955, %v7968
    %v7970 = vcombine.high %v7962, %v7962
    %v7971 = vcombine.high %v7969, %v7969
    %v7976 = vsel %vm7932, %v7962, 0.0
    %v7977 = vsel %vm7932, %v7970, 0.0
    %v7978 = vadd.f32 %v7976, %v7977
    %v7979 = vsel %vm7932, %v7969, 0.0
    %v7980 = vadd.f32 %v7978, %v7979
    %v7981 = vsel %vm7932, %v7971, 0.0
    %v7982 = vadd.f32 %v7980, %v7981
    %7983 = vadd.xlane.f32.xlu0 %v7982
    %v7984 = vpop.xlane.xlu0 %7983
    %v7985 = vlog2.pop %v7984
    %v7986 = vmul.f32 %v7985, 0.6931472
    %v7987 = vadd.f32 %v7941, %v7986
    %v7988 = vadd.s32 %v708, 128
    %v7989 = vadd.s32 %v708, 256
    %v7990 = vadd.s32 %v708, 384
    %7991 = vset.pattern.permute.xlu0 0
    %7992 = vperm.xlu0 %7991, %v7909
    %v7993 = vpop.permute.xlu0 %7992
    %vm7994 = vcmp.eq.s32.totalorder %v708, %v7993
    %vm7995 = vcmp.eq.s32.totalorder %v7988, %v7993
    %vm7996 = vcmp.eq.s32.totalorder %v7989, %v7993
    %vm7997 = vcmp.eq.s32.totalorder %v7990, %v7993
    %v7998 = vsel %vm7994, %v7918, 0.0
    %v7999 = vsel %vm7995, %v7926, 0.0
    %v8000 = vsel %vm7996, %v7925, 0.0
    %v8001 = vsel %vm7997, %v7927, 0.0
    %v8002 = vsel %vm7932, %v7998, 0.0
    %v8003 = vsel %vm7932, %v7999, 0.0
    %v8004 = vadd.f32 %v8002, %v8003
    %v8005 = vsel %vm7932, %v8000, 0.0
    %v8006 = vadd.f32 %v8004, %v8005
    %v8007 = vsel %vm7932, %v8001, 0.0
    %v8008 = vadd.f32 %v8006, %v8007
    %8009 = vadd.xlane.f32.xlu0 %v8008
    %v8010 = vpop.xlane.xlu0 %8009
    %v8011 = vsub.f32 %v7987, %v8010
    %vm8012 = vcmask 1024
    %v8013 = vsel %vm8012, %v8011, 0.0
    %8014 = vadd.xlane.f32.xlu0 %v8013
    %v8015 = vpop.xlane.xlu0 %8014
    %v8016 = vrot.slane %v8015, 4
    %v8017 = vadd.f32 %v8015, %v8016
    %v8018 = vrot.slane %v8017, 2
    %v8019 = vadd.f32 %v8017, %v8018
    %v8020 = vrot.slane %v8019, 1
    %v8021 = vadd.f32 %v8019, %v8020
    %s8022 = vtos %v8021
    %v8023 = vrcp.pop 2.0
    %s8024 = vtos %v8023
    %s8025 = smul.f32 %s8022, %s8024
    %s8026 = scalar_lea.smem [#allocation20], 13
    %8027 = sst [smem:[%s8026]] %s8025
    %v8028 = vmul.f32 %v197, 0.2126
    %v8029 = vmul.f32 %v198, 0.2126
    %v8030 = vmul.f32 %v199, 0.2126
    %v8031 = vmul.f32 %v200, 0.2126
    %v8032 = vmul.f32 %v201, 0.2126
    %v8033 = vmul.f32 %v202, 0.2126
    %v8034 = vmul.f32 %v203, 0.2126
    %v8035 = vmul.f32 %v204, 0.2126
    %v8036 = vmul.f32 %v205, 0.2126
    %v8037 = vmul.f32 %v206, 0.2126
    %v8038 = vmul.f32 %v207, 0.2126
    %v8039 = vmul.f32 %v208, 0.2126
    %v8040 = vmul.f32 %v209, 0.2126
    %v8041 = vmul.f32 %v210, 0.2126
    %v8042 = vmul.f32 %v211, 0.2126
    %v8043 = vmul.f32 %v212, 0.2126
    %v8044 = vmul.f32 %v245, 0.2126
    %v8045 = vmul.f32 %v246, 0.2126
    %v8046 = vmul.f32 %v247, 0.2126
    %v8047 = vmul.f32 %v248, 0.2126
    %v8048 = vmul.f32 %v249, 0.2126
    %v8049 = vmul.f32 %v250, 0.2126
    %v8050 = vmul.f32 %v251, 0.2126
    %v8051 = vmul.f32 %v252, 0.2126
    %v8052 = vmul.f32 %v253, 0.2126
    %v8053 = vmul.f32 %v254, 0.2126
    %v8054 = vmul.f32 %v255, 0.2126
    %v8055 = vmul.f32 %v256, 0.2126
    %v8056 = vmul.f32 %v257, 0.2126
    %v8057 = vmul.f32 %v258, 0.2126
    %v8058 = vmul.f32 %v259, 0.2126
    %v8059 = vmul.f32 %v260, 0.2126
    %v8060 = vmul.f32 %v197, 0.7152
    %v8061 = vmul.f32 %v198, 0.7152
    %v8062 = vmul.f32 %v199, 0.7152
    %v8063 = vmul.f32 %v200, 0.7152
    %v8064 = vmul.f32 %v201, 0.7152
    %v8065 = vmul.f32 %v202, 0.7152
    %v8066 = vmul.f32 %v203, 0.7152
    %v8067 = vmul.f32 %v204, 0.7152
    %v8068 = vmul.f32 %v205, 0.7152
    %v8069 = vmul.f32 %v206, 0.7152
    %v8070 = vmul.f32 %v207, 0.7152
    %v8071 = vmul.f32 %v208, 0.7152
    %v8072 = vmul.f32 %v209, 0.7152
    %v8073 = vmul.f32 %v210, 0.7152
    %v8074 = vmul.f32 %v211, 0.7152
    %v8075 = vmul.f32 %v212, 0.7152
    %v8076 = vmul.f32 %v245, 0.7152
    %v8077 = vmul.f32 %v246, 0.7152
    %v8078 = vmul.f32 %v247, 0.7152
    %v8079 = vmul.f32 %v248, 0.7152
    %v8080 = vmul.f32 %v249, 0.7152
    %v8081 = vmul.f32 %v250, 0.7152
    %v8082 = vmul.f32 %v251, 0.7152
    %v8083 = vmul.f32 %v252, 0.7152
    %v8084 = vmul.f32 %v253, 0.7152
    %v8085 = vmul.f32 %v254, 0.7152
    %v8086 = vmul.f32 %v255, 0.7152
    %v8087 = vmul.f32 %v256, 0.7152
    %v8088 = vmul.f32 %v257, 0.7152
    %v8089 = vmul.f32 %v258, 0.7152
    %v8090 = vmul.f32 %v259, 0.7152
    %v8091 = vmul.f32 %v260, 0.7152
    %v8092 = vadd.f32 %v8028, %v8060
    %v8093 = vadd.f32 %v8029, %v8061
    %v8094 = vadd.f32 %v8030, %v8062
    %v8095 = vadd.f32 %v8031, %v8063
    %v8096 = vadd.f32 %v8032, %v8064
    %v8097 = vadd.f32 %v8033, %v8065
    %v8098 = vadd.f32 %v8034, %v8066
    %v8099 = vadd.f32 %v8035, %v8067
    %v8100 = vadd.f32 %v8036, %v8068
    %v8101 = vadd.f32 %v8037, %v8069
    %v8102 = vadd.f32 %v8038, %v8070
    %v8103 = vadd.f32 %v8039, %v8071
    %v8104 = vadd.f32 %v8040, %v8072
    %v8105 = vadd.f32 %v8041, %v8073
    %v8106 = vadd.f32 %v8042, %v8074
    %v8107 = vadd.f32 %v8043, %v8075
    %v8108 = vadd.f32 %v8044, %v8076
    %v8109 = vadd.f32 %v8045, %v8077
    %v8110 = vadd.f32 %v8046, %v8078
    %v8111 = vadd.f32 %v8047, %v8079
    %v8112 = vadd.f32 %v8048, %v8080
    %v8113 = vadd.f32 %v8049, %v8081
    %v8114 = vadd.f32 %v8050, %v8082
    %v8115 = vadd.f32 %v8051, %v8083
    %v8116 = vadd.f32 %v8052, %v8084
    %v8117 = vadd.f32 %v8053, %v8085
    %v8118 = vadd.f32 %v8054, %v8086
    %v8119 = vadd.f32 %v8055, %v8087
    %v8120 = vadd.f32 %v8056, %v8088
    %v8121 = vadd.f32 %v8057, %v8089
    %v8122 = vadd.f32 %v8058, %v8090
    %v8123 = vadd.f32 %v8059, %v8091
    %v8124 = vmul.f32 %v197, 0.0722
    %v8125 = vmul.f32 %v198, 0.0722
    %v8126 = vmul.f32 %v199, 0.0722
    %v8127 = vmul.f32 %v200, 0.0722
    %v8128 = vmul.f32 %v201, 0.0722
    %v8129 = vmul.f32 %v202, 0.0722
    %v8130 = vmul.f32 %v203, 0.0722
    %v8131 = vmul.f32 %v204, 0.0722
    %v8132 = vmul.f32 %v205, 0.0722
    %v8133 = vmul.f32 %v206, 0.0722
    %v8134 = vmul.f32 %v207, 0.0722
    %v8135 = vmul.f32 %v208, 0.0722
    %v8136 = vmul.f32 %v209, 0.0722
    %v8137 = vmul.f32 %v210, 0.0722
    %v8138 = vmul.f32 %v211, 0.0722
    %v8139 = vmul.f32 %v212, 0.0722
    %v8140 = vmul.f32 %v245, 0.0722
    %v8141 = vmul.f32 %v246, 0.0722
    %v8142 = vmul.f32 %v247, 0.0722
    %v8143 = vmul.f32 %v248, 0.0722
    %v8144 = vmul.f32 %v249, 0.0722
    %v8145 = vmul.f32 %v250, 0.0722
    %v8146 = vmul.f32 %v251, 0.0722
    %v8147 = vmul.f32 %v252, 0.0722
    %v8148 = vmul.f32 %v253, 0.0722
    %v8149 = vmul.f32 %v254, 0.0722
    %v8150 = vmul.f32 %v255, 0.0722
    %v8151 = vmul.f32 %v256, 0.0722
    %v8152 = vmul.f32 %v257, 0.0722
    %v8153 = vmul.f32 %v258, 0.0722
    %v8154 = vmul.f32 %v259, 0.0722
    %v8155 = vmul.f32 %v260, 0.0722
    %v8156 = vadd.f32 %v8092, %v8124
    %v8157 = vadd.f32 %v8093, %v8125
    %v8158 = vadd.f32 %v8094, %v8126
    %v8159 = vadd.f32 %v8095, %v8127
    %v8160 = vadd.f32 %v8096, %v8128
    %v8161 = vadd.f32 %v8097, %v8129
    %v8162 = vadd.f32 %v8098, %v8130
    %v8163 = vadd.f32 %v8099, %v8131
    %v8164 = vadd.f32 %v8100, %v8132
    %v8165 = vadd.f32 %v8101, %v8133
    %v8166 = vadd.f32 %v8102, %v8134
    %v8167 = vadd.f32 %v8103, %v8135
    %v8168 = vadd.f32 %v8104, %v8136
    %v8169 = vadd.f32 %v8105, %v8137
    %v8170 = vadd.f32 %v8106, %v8138
    %v8171 = vadd.f32 %v8107, %v8139
    %v8172 = vadd.f32 %v8108, %v8140
    %v8173 = vadd.f32 %v8109, %v8141
    %v8174 = vadd.f32 %v8110, %v8142
    %v8175 = vadd.f32 %v8111, %v8143
    %v8176 = vadd.f32 %v8112, %v8144
    %v8177 = vadd.f32 %v8113, %v8145
    %v8178 = vadd.f32 %v8114, %v8146
    %v8179 = vadd.f32 %v8115, %v8147
    %v8180 = vadd.f32 %v8116, %v8148
    %v8181 = vadd.f32 %v8117, %v8149
    %v8182 = vadd.f32 %v8118, %v8150
    %v8183 = vadd.f32 %v8119, %v8151
    %v8184 = vadd.f32 %v8120, %v8152
    %v8185 = vadd.f32 %v8121, %v8153
    %v8186 = vadd.f32 %v8122, %v8154
    %v8187 = vadd.f32 %v8123, %v8155
    %v8188 = vmul.f32 %v293, 0.2126
    %v8189 = vmul.f32 %v294, 0.2126
    %v8190 = vmul.f32 %v295, 0.2126
    %v8191 = vmul.f32 %v296, 0.2126
    %v8192 = vmul.f32 %v297, 0.2126
    %v8193 = vmul.f32 %v298, 0.2126
    %v8194 = vmul.f32 %v299, 0.2126
    %v8195 = vmul.f32 %v300, 0.2126
    %v8196 = vmul.f32 %v301, 0.2126
    %v8197 = vmul.f32 %v302, 0.2126
    %v8198 = vmul.f32 %v303, 0.2126
    %v8199 = vmul.f32 %v304, 0.2126
    %v8200 = vmul.f32 %v305, 0.2126
    %v8201 = vmul.f32 %v306, 0.2126
    %v8202 = vmul.f32 %v307, 0.2126
    %v8203 = vmul.f32 %v308, 0.2126
    %v8204 = vmul.f32 %v341, 0.2126
    %v8205 = vmul.f32 %v342, 0.2126
    %v8206 = vmul.f32 %v343, 0.2126
    %v8207 = vmul.f32 %v344, 0.2126
    %v8208 = vmul.f32 %v345, 0.2126
    %v8209 = vmul.f32 %v346, 0.2126
    %v8210 = vmul.f32 %v347, 0.2126
    %v8211 = vmul.f32 %v348, 0.2126
    %v8212 = vmul.f32 %v349, 0.2126
    %v8213 = vmul.f32 %v350, 0.2126
    %v8214 = vmul.f32 %v351, 0.2126
    %v8215 = vmul.f32 %v352, 0.2126
    %v8216 = vmul.f32 %v353, 0.2126
    %v8217 = vmul.f32 %v354, 0.2126
    %v8218 = vmul.f32 %v355, 0.2126
    %v8219 = vmul.f32 %v356, 0.2126
    %v8220 = vmul.f32 %v293, 0.7152
    %v8221 = vmul.f32 %v294, 0.7152
    %v8222 = vmul.f32 %v295, 0.7152
    %v8223 = vmul.f32 %v296, 0.7152
    %v8224 = vmul.f32 %v297, 0.7152
    %v8225 = vmul.f32 %v298, 0.7152
    %v8226 = vmul.f32 %v299, 0.7152
    %v8227 = vmul.f32 %v300, 0.7152
    %v8228 = vmul.f32 %v301, 0.7152
    %v8229 = vmul.f32 %v302, 0.7152
    %v8230 = vmul.f32 %v303, 0.7152
    %v8231 = vmul.f32 %v304, 0.7152
    %v8232 = vmul.f32 %v305, 0.7152
    %v8233 = vmul.f32 %v306, 0.7152
    %v8234 = vmul.f32 %v307, 0.7152
    %v8235 = vmul.f32 %v308, 0.7152
    %v8236 = vmul.f32 %v341, 0.7152
    %v8237 = vmul.f32 %v342, 0.7152
    %v8238 = vmul.f32 %v343, 0.7152
    %v8239 = vmul.f32 %v344, 0.7152
    %v8240 = vmul.f32 %v345, 0.7152
    %v8241 = vmul.f32 %v346, 0.7152
    %v8242 = vmul.f32 %v347, 0.7152
    %v8243 = vmul.f32 %v348, 0.7152
    %v8244 = vmul.f32 %v349, 0.7152
    %v8245 = vmul.f32 %v350, 0.7152
    %v8246 = vmul.f32 %v351, 0.7152
    %v8247 = vmul.f32 %v352, 0.7152
    %v8248 = vmul.f32 %v353, 0.7152
    %v8249 = vmul.f32 %v354, 0.7152
    %v8250 = vmul.f32 %v355, 0.7152
    %v8251 = vmul.f32 %v356, 0.7152
    %v8252 = vadd.f32 %v8188, %v8220
    %v8253 = vadd.f32 %v8189, %v8221
    %v8254 = vadd.f32 %v8190, %v8222
    %v8255 = vadd.f32 %v8191, %v8223
    %v8256 = vadd.f32 %v8192, %v8224
    %v8257 = vadd.f32 %v8193, %v8225
    %v8258 = vadd.f32 %v8194, %v8226
    %v8259 = vadd.f32 %v8195, %v8227
    %v8260 = vadd.f32 %v8196, %v8228
    %v8261 = vadd.f32 %v8197, %v8229
    %v8262 = vadd.f32 %v8198, %v8230
    %v8263 = vadd.f32 %v8199, %v8231
    %v8264 = vadd.f32 %v8200, %v8232
    %v8265 = vadd.f32 %v8201, %v8233
    %v8266 = vadd.f32 %v8202, %v8234
    %v8267 = vadd.f32 %v8203, %v8235
    %v8268 = vadd.f32 %v8204, %v8236
    %v8269 = vadd.f32 %v8205, %v8237
    %v8270 = vadd.f32 %v8206, %v8238
    %v8271 = vadd.f32 %v8207, %v8239
    %v8272 = vadd.f32 %v8208, %v8240
    %v8273 = vadd.f32 %v8209, %v8241
    %v8274 = vadd.f32 %v8210, %v8242
    %v8275 = vadd.f32 %v8211, %v8243
    %v8276 = vadd.f32 %v8212, %v8244
    %v8277 = vadd.f32 %v8213, %v8245
    %v8278 = vadd.f32 %v8214, %v8246
    %v8279 = vadd.f32 %v8215, %v8247
    %v8280 = vadd.f32 %v8216, %v8248
    %v8281 = vadd.f32 %v8217, %v8249
    %v8282 = vadd.f32 %v8218, %v8250
    %v8283 = vadd.f32 %v8219, %v8251
    %v8284 = vmul.f32 %v293, 0.0722
    %v8285 = vmul.f32 %v294, 0.0722
    %v8286 = vmul.f32 %v295, 0.0722
    %v8287 = vmul.f32 %v296, 0.0722
    %v8288 = vmul.f32 %v297, 0.0722
    %v8289 = vmul.f32 %v298, 0.0722
    %v8290 = vmul.f32 %v299, 0.0722
    %v8291 = vmul.f32 %v300, 0.0722
    %v8292 = vmul.f32 %v301, 0.0722
    %v8293 = vmul.f32 %v302, 0.0722
    %v8294 = vmul.f32 %v303, 0.0722
    %v8295 = vmul.f32 %v304, 0.0722
    %v8296 = vmul.f32 %v305, 0.0722
    %v8297 = vmul.f32 %v306, 0.0722
    %v8298 = vmul.f32 %v307, 0.0722
    %v8299 = vmul.f32 %v308, 0.0722
    %v8300 = vmul.f32 %v341, 0.0722
    %v8301 = vmul.f32 %v342, 0.0722
    %v8302 = vmul.f32 %v343, 0.0722
    %v8303 = vmul.f32 %v344, 0.0722
    %v8304 = vmul.f32 %v345, 0.0722
    %v8305 = vmul.f32 %v346, 0.0722
    %v8306 = vmul.f32 %v347, 0.0722
    %v8307 = vmul.f32 %v348, 0.0722
    %v8308 = vmul.f32 %v349, 0.0722
    %v8309 = vmul.f32 %v350, 0.0722
    %v8310 = vmul.f32 %v351, 0.0722
    %v8311 = vmul.f32 %v352, 0.0722
    %v8312 = vmul.f32 %v353, 0.0722
    %v8313 = vmul.f32 %v354, 0.0722
    %v8314 = vmul.f32 %v355, 0.0722
    %v8315 = vmul.f32 %v356, 0.0722
    %v8316 = vadd.f32 %v8252, %v8284
    %v8317 = vadd.f32 %v8253, %v8285
    %v8318 = vadd.f32 %v8254, %v8286
    %v8319 = vadd.f32 %v8255, %v8287
    %v8320 = vadd.f32 %v8256, %v8288
    %v8321 = vadd.f32 %v8257, %v8289
    %v8322 = vadd.f32 %v8258, %v8290
    %v8323 = vadd.f32 %v8259, %v8291
    %v8324 = vadd.f32 %v8260, %v8292
    %v8325 = vadd.f32 %v8261, %v8293
    %v8326 = vadd.f32 %v8262, %v8294
    %v8327 = vadd.f32 %v8263, %v8295
    %v8328 = vadd.f32 %v8264, %v8296
    %v8329 = vadd.f32 %v8265, %v8297
    %v8330 = vadd.f32 %v8266, %v8298
    %v8331 = vadd.f32 %v8267, %v8299
    %v8332 = vadd.f32 %v8268, %v8300
    %v8333 = vadd.f32 %v8269, %v8301
    %v8334 = vadd.f32 %v8270, %v8302
    %v8335 = vadd.f32 %v8271, %v8303
    %v8336 = vadd.f32 %v8272, %v8304
    %v8337 = vadd.f32 %v8273, %v8305
    %v8338 = vadd.f32 %v8274, %v8306
    %v8339 = vadd.f32 %v8275, %v8307
    %v8340 = vadd.f32 %v8276, %v8308
    %v8341 = vadd.f32 %v8277, %v8309
    %v8342 = vadd.f32 %v8278, %v8310
    %v8343 = vadd.f32 %v8279, %v8311
    %v8344 = vadd.f32 %v8280, %v8312
    %v8345 = vadd.f32 %v8281, %v8313
    %v8346 = vadd.f32 %v8282, %v8314
    %v8347 = vadd.f32 %v8283, %v8315
    %v8348 = vpack.c.bf16 %v8157, %v8156
    %v8349 = vpack.c.bf16 %v8159, %v8158
    %v8350 = vpack.c.bf16 %v8161, %v8160
    %v8351 = vpack.c.bf16 %v8163, %v8162
    %v8352 = vpack.c.bf16 %v8165, %v8164
    %v8353 = vpack.c.bf16 %v8167, %v8166
    %v8354 = vpack.c.bf16 %v8169, %v8168
    %v8355 = vpack.c.bf16 %v8171, %v8170
    %v8356 = vpack.c.bf16 %v8173, %v8172
    %v8357 = vpack.c.bf16 %v8175, %v8174
    %v8358 = vpack.c.bf16 %v8177, %v8176
    %v8359 = vpack.c.bf16 %v8179, %v8178
    %v8360 = vpack.c.bf16 %v8181, %v8180
    %v8361 = vpack.c.bf16 %v8183, %v8182
    %v8362 = vpack.c.bf16 %v8185, %v8184
    %v8363 = vpack.c.bf16 %v8187, %v8186
    %v8380 = vunpack.c.l.b16 %v8348
    %v8381 = vunpack.c.h.b16 %v8348
    %v8382 = vunpack.c.l.b16 %v8349
    %v8383 = vunpack.c.h.b16 %v8349
    %v8384 = vunpack.c.l.b16 %v8350
    %v8385 = vunpack.c.h.b16 %v8350
    %v8386 = vunpack.c.l.b16 %v8351
    %v8387 = vunpack.c.h.b16 %v8351
    %v8388 = vunpack.c.l.b16 %v8352
    %v8389 = vunpack.c.h.b16 %v8352
    %v8390 = vunpack.c.l.b16 %v8353
    %v8391 = vunpack.c.h.b16 %v8353
    %v8392 = vunpack.c.l.b16 %v8354
    %v8393 = vunpack.c.h.b16 %v8354
    %v8394 = vunpack.c.l.b16 %v8355
    %v8395 = vunpack.c.h.b16 %v8355
    %v8396 = vunpack.c.l.b16 %v8356
    %v8397 = vunpack.c.h.b16 %v8356
    %v8398 = vunpack.c.l.b16 %v8357
    %v8399 = vunpack.c.h.b16 %v8357
    %v8400 = vunpack.c.l.b16 %v8358
    %v8401 = vunpack.c.h.b16 %v8358
    %v8402 = vunpack.c.l.b16 %v8359
    %v8403 = vunpack.c.h.b16 %v8359
    %v8404 = vunpack.c.l.b16 %v8360
    %v8405 = vunpack.c.h.b16 %v8360
    %v8406 = vunpack.c.l.b16 %v8361
    %v8407 = vunpack.c.h.b16 %v8361
    %v8408 = vunpack.c.l.b16 %v8362
    %v8409 = vunpack.c.h.b16 %v8362
    %v8410 = vunpack.c.l.b16 %v8363
    %v8411 = vunpack.c.h.b16 %v8363
    %v8412 = vpack.c.b16 %v8380, %v8380
    %v8413 = vpack.c.b16 %v8381, %v8381
    %v8414 = vpack.c.b16 %v8382, %v8382
    %v8415 = vpack.c.b16 %v8383, %v8383
    %v8416 = vpack.c.b16 %v8384, %v8384
    %v8417 = vpack.c.b16 %v8385, %v8385
    %v8418 = vpack.c.b16 %v8386, %v8386
    %v8419 = vpack.c.b16 %v8387, %v8387
    %v8420 = vpack.c.b16 %v8388, %v8388
    %v8421 = vpack.c.b16 %v8389, %v8389
    %v8422 = vpack.c.b16 %v8390, %v8390
    %v8423 = vpack.c.b16 %v8391, %v8391
    %v8424 = vpack.c.b16 %v8392, %v8392
    %v8425 = vpack.c.b16 %v8393, %v8393
    %v8426 = vpack.c.b16 %v8394, %v8394
    %v8427 = vpack.c.b16 %v8395, %v8395
    %v8428 = vpack.c.b16 %v8396, %v8396
    %v8429 = vpack.c.b16 %v8397, %v8397
    %v8430 = vpack.c.b16 %v8398, %v8398
    %v8431 = vpack.c.b16 %v8399, %v8399
    %v8432 = vpack.c.b16 %v8400, %v8400
    %v8433 = vpack.c.b16 %v8401, %v8401
    %v8434 = vpack.c.b16 %v8402, %v8402
    %v8435 = vpack.c.b16 %v8403, %v8403
    %v8436 = vpack.c.b16 %v8404, %v8404
    %v8437 = vpack.c.b16 %v8405, %v8405
    %v8438 = vpack.c.b16 %v8406, %v8406
    %v8439 = vpack.c.b16 %v8407, %v8407
    %v8440 = vpack.c.b16 %v8408, %v8408
    %v8441 = vpack.c.b16 %v8409, %v8409
    %v8442 = vpack.c.b16 %v8410, %v8410
    %v8443 = vpack.c.b16 %v8411, %v8411
    %8476 = vst [vmem:[%s20] sm:$0xf] %v8412
    %8477 = vst [vmem:[%s20 + $0x4] sm:$0xf] %v8413
    %8478 = vst [vmem:[%s20 + $0x8] sm:$0xf] %v8414
    %8479 = vst [vmem:[%s20 + $0xc] sm:$0xf] %v8415
    %8480 = vst [vmem:[%s20 + $0x10] sm:$0xf] %v8416
    %8481 = vst [vmem:[%s20 + $0x14] sm:$0xf] %v8417
    %8482 = vst [vmem:[%s20 + $0x18] sm:$0xf] %v8418
    %8483 = vst [vmem:[%s20 + $0x1c] sm:$0xf] %v8419
    %8484 = vst [vmem:[%s20 + $0x20] sm:$0xf] %v8420
    %8485 = vst [vmem:[%s20 + $0x24] sm:$0xf] %v8421
    %8486 = vst [vmem:[%s20 + $0x28] sm:$0xf] %v8422
    %8487 = vst [vmem:[%s20 + $0x2c] sm:$0xf] %v8423
    %8488 = vst [vmem:[%s20 + $0x30] sm:$0xf] %v8424
    %8489 = vst [vmem:[%s20 + $0x34] sm:$0xf] %v8425
    %8490 = vst [vmem:[%s20 + $0x38] sm:$0xf] %v8426
    %8491 = vst [vmem:[%s20 + $0x3c] sm:$0xf] %v8427
    %8492 = vst [vmem:[%s20 + $0x40] sm:$0xf] %v8428
    %8493 = vst [vmem:[%s20 + $0x44] sm:$0xf] %v8429
    %8494 = vst [vmem:[%s20 + $0x48] sm:$0xf] %v8430
    %8495 = vst [vmem:[%s20 + $0x4c] sm:$0xf] %v8431
    %8496 = vst [vmem:[%s20 + $0x50] sm:$0xf] %v8432
    %8497 = vst [vmem:[%s20 + $0x54] sm:$0xf] %v8433
    %8498 = vst [vmem:[%s20 + $0x58] sm:$0xf] %v8434
    %8499 = vst [vmem:[%s20 + $0x5c] sm:$0xf] %v8435
    %8500 = vst [vmem:[%s20 + $0x60] sm:$0xf] %v8436
    %8501 = vst [vmem:[%s20 + $0x64] sm:$0xf] %v8437
    %8502 = vst [vmem:[%s20 + $0x68] sm:$0xf] %v8438
    %8503 = vst [vmem:[%s20 + $0x6c] sm:$0xf] %v8439
    %8504 = vst [vmem:[%s20 + $0x70] sm:$0xf] %v8440
    %8505 = vst [vmem:[%s20 + $0x74] sm:$0xf] %v8441
    %8506 = vst [vmem:[%s20 + $0x78] sm:$0xf] %v8442
    %8507 = vst [vmem:[%s20 + $0x7c] sm:$0xf] %v8443
    %v8508 = vpack.c.bf16 %v8317, %v8316
    %v8509 = vpack.c.bf16 %v8319, %v8318
    %v8510 = vpack.c.bf16 %v8321, %v8320
    %v8511 = vpack.c.bf16 %v8323, %v8322
    %v8512 = vpack.c.bf16 %v8325, %v8324
    %v8513 = vpack.c.bf16 %v8327, %v8326
    %v8514 = vpack.c.bf16 %v8329, %v8328
    %v8515 = vpack.c.bf16 %v8331, %v8330
    %v8516 = vpack.c.bf16 %v8333, %v8332
    %v8517 = vpack.c.bf16 %v8335, %v8334
    %v8518 = vpack.c.bf16 %v8337, %v8336
    %v8519 = vpack.c.bf16 %v8339, %v8338
    %v8520 = vpack.c.bf16 %v8341, %v8340
    %v8521 = vpack.c.bf16 %v8343, %v8342
    %v8522 = vpack.c.bf16 %v8345, %v8344
    %v8523 = vpack.c.bf16 %v8347, %v8346
    %v8540 = vunpack.c.l.b16 %v8508
    %v8541 = vunpack.c.h.b16 %v8508
    %v8542 = vunpack.c.l.b16 %v8509
    %v8543 = vunpack.c.h.b16 %v8509
    %v8544 = vunpack.c.l.b16 %v8510
    %v8545 = vunpack.c.h.b16 %v8510
    %v8546 = vunpack.c.l.b16 %v8511
    %v8547 = vunpack.c.h.b16 %v8511
    %v8548 = vunpack.c.l.b16 %v8512
    %v8549 = vunpack.c.h.b16 %v8512
    %v8550 = vunpack.c.l.b16 %v8513
    %v8551 = vunpack.c.h.b16 %v8513
    %v8552 = vunpack.c.l.b16 %v8514
    %v8553 = vunpack.c.h.b16 %v8514
    %v8554 = vunpack.c.l.b16 %v8515
    %v8555 = vunpack.c.h.b16 %v8515
    %v8556 = vunpack.c.l.b16 %v8516
    %v8557 = vunpack.c.h.b16 %v8516
    %v8558 = vunpack.c.l.b16 %v8517
    %v8559 = vunpack.c.h.b16 %v8517
    %v8560 = vunpack.c.l.b16 %v8518
    %v8561 = vunpack.c.h.b16 %v8518
    %v8562 = vunpack.c.l.b16 %v8519
    %v8563 = vunpack.c.h.b16 %v8519
    %v8564 = vunpack.c.l.b16 %v8520
    %v8565 = vunpack.c.h.b16 %v8520
    %v8566 = vunpack.c.l.b16 %v8521
    %v8567 = vunpack.c.h.b16 %v8521
    %v8568 = vunpack.c.l.b16 %v8522
    %v8569 = vunpack.c.h.b16 %v8522
    %v8570 = vunpack.c.l.b16 %v8523
    %v8571 = vunpack.c.h.b16 %v8523
    %v8572 = vpack.c.b16 %v8540, %v8540
    %v8573 = vpack.c.b16 %v8541, %v8541
    %v8574 = vpack.c.b16 %v8542, %v8542
    %v8575 = vpack.c.b16 %v8543, %v8543
    %v8576 = vpack.c.b16 %v8544, %v8544
    %v8577 = vpack.c.b16 %v8545, %v8545
    %v8578 = vpack.c.b16 %v8546, %v8546
    %v8579 = vpack.c.b16 %v8547, %v8547
    %v8580 = vpack.c.b16 %v8548, %v8548
    %v8581 = vpack.c.b16 %v8549, %v8549
    %v8582 = vpack.c.b16 %v8550, %v8550
    %v8583 = vpack.c.b16 %v8551, %v8551
    %v8584 = vpack.c.b16 %v8552, %v8552
    %v8585 = vpack.c.b16 %v8553, %v8553
    %v8586 = vpack.c.b16 %v8554, %v8554
    %v8587 = vpack.c.b16 %v8555, %v8555
    %v8588 = vpack.c.b16 %v8556, %v8556
    %v8589 = vpack.c.b16 %v8557, %v8557
    %v8590 = vpack.c.b16 %v8558, %v8558
    %v8591 = vpack.c.b16 %v8559, %v8559
    %v8592 = vpack.c.b16 %v8560, %v8560
    %v8593 = vpack.c.b16 %v8561, %v8561
    %v8594 = vpack.c.b16 %v8562, %v8562
    %v8595 = vpack.c.b16 %v8563, %v8563
    %v8596 = vpack.c.b16 %v8564, %v8564
    %v8597 = vpack.c.b16 %v8565, %v8565
    %v8598 = vpack.c.b16 %v8566, %v8566
    %v8599 = vpack.c.b16 %v8567, %v8567
    %v8600 = vpack.c.b16 %v8568, %v8568
    %v8601 = vpack.c.b16 %v8569, %v8569
    %v8602 = vpack.c.b16 %v8570, %v8570
    %v8603 = vpack.c.b16 %v8571, %v8571
    %s8636 = scalar_lea.vmem %s20, 128
    %8637 = vst [vmem:[%s8636] sm:$0xf] %v8572
    %8638 = vst [vmem:[%s8636 + $0x4] sm:$0xf] %v8573
    %8639 = vst [vmem:[%s8636 + $0x8] sm:$0xf] %v8574
    %8640 = vst [vmem:[%s8636 + $0xc] sm:$0xf] %v8575
    %8641 = vst [vmem:[%s8636 + $0x10] sm:$0xf] %v8576
    %8642 = vst [vmem:[%s8636 + $0x14] sm:$0xf] %v8577
    %8643 = vst [vmem:[%s8636 + $0x18] sm:$0xf] %v8578
    %8644 = vst [vmem:[%s8636 + $0x1c] sm:$0xf] %v8579
    %8645 = vst [vmem:[%s8636 + $0x20] sm:$0xf] %v8580
    %8646 = vst [vmem:[%s8636 + $0x24] sm:$0xf] %v8581
    %8647 = vst [vmem:[%s8636 + $0x28] sm:$0xf] %v8582
    %8648 = vst [vmem:[%s8636 + $0x2c] sm:$0xf] %v8583
    %8649 = vst [vmem:[%s8636 + $0x30] sm:$0xf] %v8584
    %8650 = vst [vmem:[%s8636 + $0x34] sm:$0xf] %v8585
    %8651 = vst [vmem:[%s8636 + $0x38] sm:$0xf] %v8586
    %8652 = vst [vmem:[%s8636 + $0x3c] sm:$0xf] %v8587
    %8653 = vst [vmem:[%s8636 + $0x40] sm:$0xf] %v8588
    %8654 = vst [vmem:[%s8636 + $0x44] sm:$0xf] %v8589
    %8655 = vst [vmem:[%s8636 + $0x48] sm:$0xf] %v8590
    %8656 = vst [vmem:[%s8636 + $0x4c] sm:$0xf] %v8591
    %8657 = vst [vmem:[%s8636 + $0x50] sm:$0xf] %v8592
    %8658 = vst [vmem:[%s8636 + $0x54] sm:$0xf] %v8593
    %8659 = vst [vmem:[%s8636 + $0x58] sm:$0xf] %v8594
    %8660 = vst [vmem:[%s8636 + $0x5c] sm:$0xf] %v8595
    %8661 = vst [vmem:[%s8636 + $0x60] sm:$0xf] %v8596
    %8662 = vst [vmem:[%s8636 + $0x64] sm:$0xf] %v8597
    %8663 = vst [vmem:[%s8636 + $0x68] sm:$0xf] %v8598
    %8664 = vst [vmem:[%s8636 + $0x6c] sm:$0xf] %v8599
    %8665 = vst [vmem:[%s8636 + $0x70] sm:$0xf] %v8600
    %8666 = vst [vmem:[%s8636 + $0x74] sm:$0xf] %v8601
    %8667 = vst [vmem:[%s8636 + $0x78] sm:$0xf] %v8602
    %8668 = vst [vmem:[%s8636 + $0x7c] sm:$0xf] %v8603
    // Predicated region
    $region118: #{loss_generator_forward.2} parent=1 // pred_check
      _
    $region119: #{loss_generator_forward.2} parent=1 // pred_check_branch
      %8670 = sbr.rel (0) target = $region121
    $region120: #{loss_generator_forward.2} parent=1 // pred_region
      %s8672 = ssub.s32 16, 16
      %8673 = vsyncadd [#allocation5], %s8672
      %s8675 = sshll.u32 %s19, 4
      %s8676 = int_to_ptr.vmem [resolvable:$true] %s8675
      %8678 = dma.smem_to_vmem [#allocation20], 16, %s8676, [#allocation5]
    $region121: #{loss_generator_forward.2} parent=1 // pred_fallthru
      _
    // Predicated region
    $region122: #{loss_generator_forward.2} parent=1 // pred_check
      _
    $region123: #{loss_generator_forward.2} parent=1 // pred_check_branch
      %8680 = sbr.rel (0) target = $region125
    $region124: #{loss_generator_forward.2} parent=1 // pred_region
      _
    $region125: #{loss_generator_forward.2} parent=1 // pred_fallthru
      _
    // Predicated region
    $region126: #{loss_generator_forward.2} parent=1 // pred_check
      _
    $region127: #{loss_generator_forward.2} parent=1 // pred_check_branch
      %8682 = sbr.rel (0) target = $region129
    $region128: #{loss_generator_forward.2} parent=1 // pred_region
      %8683 = dma.done [#allocation5], 16
    $region129: #{loss_generator_forward.2} parent=1 // pred_fallthru
      _
    // Predicated region
    $region130: #{loss_generator_forward.2} parent=1 // pred_check
      _
    $region131: #{loss_generator_forward.2} parent=1 // pred_check_branch
      %8685 = sbr.rel (0) target = $region133
    $region132: #{loss_generator_forward.2} parent=1 // pred_region
      _
    $region133: #{loss_generator_forward.2} parent=1 // pred_fallthru
      _
    %8686 = sfence
    %8687 = vsyncpa [#allocation3], 1
    %8688 = vsyncpa [#allocation10], 1
    %8689 = vsyncpa [#allocation13], 1
    %8690 = vsyncpa [#allocation16], 1
    %8691 = vsyncpa [#allocation19], 1
    %8692 = vsyncpa [#allocation4], 1
    %8693 = vsyncpa [#allocation7], 1
    %8694 = vsyncpa [#allocation5], 1

</llo_original>
